<compile_context>
chip_gen: v7x
topology: tpu7x:2x2x1
jax: 0.10.0
libtpu: 0.0.40
codegen_flags: <defaults>
</compile_context>

<pallas_src>
import math
import functools
from dataclasses import dataclass

import numpy as np
import jax
import jax.numpy as jnp
from jax.experimental import pallas as pl
from jax.experimental.pallas import tpu as pltpu


# ----------------------------------------------------------------------------- config
@dataclass(frozen=True)
class ModelConfig:
    vocab_size: int = 14      # piece ids 0..13
    squares_size: int = 65    # [turn-ish token] + 64 squares
    special_size: int = 13    # 4 castling + 9 en-passant tokens
    n_embd: int = 64
    n_head: int = 4
    n_layer: int = 2
    dropout: float = 0.0      # inference: dropout is identity

POLICY_SIZE = 1968
POLICY_PAD = 2048             # lane-dense (multiple of 128) width used inside the kernel


# ----------------------------------------------------------------------------- move dictionary (pure python, no `chess` dependency)
class MoveDictionary:
    def __init__(self):
        all_moves = self.generate_all_moves()
        self.move_index_dict = {m: i for i, m in enumerate(all_moves)}
        self.index_move_dict = {i: m for i, m in enumerate(all_moves)}

    def generate_all_squares(self):
        return [f + r for f in 'abcdefgh' for r in '12345678']

    def is_within_board(self, file, rank):
        return 'a' <= file <= 'h' and '1' <= rank <= '8'

    def move_in_direction(self, start_square, file_step, rank_step, steps=8):
        moves = []
        sf, sr = start_square[0], start_square[1]
        for step in range(1, steps + 1):
            nf = chr(ord(sf) + file_step * step)
            nr = chr(ord(sr) + rank_step * step)
            if self.is_within_board(nf, nr):
                moves.append(nf + nr)
            else:
                break
        return moves

    def generate_fairy_moves(self, start_square):
        directions = [(1, 0), (-1, 0), (0, 1), (0, -1), (1, 1), (1, -1), (-1, 1), (-1, -1),
                      (2, 1), (2, -1), (-2, 1), (-2, -1), (1, 2), (1, -2), (-1, 2), (-1, -2)]
        moves = []
        for fs_, rs_ in directions:
            if abs(fs_) == 2 or abs(rs_) == 2:
                moves.extend(self.move_in_direction(start_square, fs_, rs_, steps=1))
            else:
                moves.extend(self.move_in_direction(start_square, fs_, rs_))
        return moves

    def generate_promotion_moves(self, start_square, end_square):
        return [start_square + end_square + p for p in ['b', 'n', 'r', 'q']]

    def generate_all_moves(self):
        all_moves = []
        for s in self.generate_all_squares():
            for e in self.generate_fairy_moves(s):
                all_moves.append(s + e)
                if s[1] == '7' and e[1] == '8' and abs(ord(s[0]) - ord(e[0])) <= 1:
                    all_moves.extend(self.generate_promotion_moves(s, e))
                if s[1] == '2' and e[1] == '1' and abs(ord(s[0]) - ord(e[0])) <= 1:
                    all_moves.extend(self.generate_promotion_moves(s, e))
        return all_moves


# ----------------------------------------------------------------------------- host-side FEN handling (same semantics as Chess.fen_to_vector / flip_uci)
def fen_to_vector(fen):
    fen_parts = fen.split(' ')
    rows = fen_parts[0].split('/')
    turn = fen_parts[1]
    if fen_parts[1] == 'b':
        rows = [row.swapcase() for row in rows][::-1]
        fen_parts[2] = fen_parts[2].swapcase()
    position = [0]
    piece_dict = {' ': 1, 'p': 2, 'n': 3, 'b': 4, 'r': 5, 'q': 6, 'k': 7,
                  'P': 8, 'N': 9, 'B': 10, 'R': 11, 'Q': 12, 'K': 13}
    for row in rows:
        for square in row:
            if square.isalpha():
                position.append(piece_dict[square])
            else:
                position.extend([1] * int(square))
    castling_rights = fen_parts[2]
    special_tokens = [0, 0, 0, 0]
    for c in castling_rights:
        if c == 'K':
            special_tokens[0] = 1
        elif c == 'Q':
            special_tokens[1] = 1
        elif c == 'k':
            special_tokens[2] = 1
        elif c == 'q':
            special_tokens[3] = 1
    en_passant = fen_parts[3]
    if en_passant == '-':
        special_tokens.extend([0] * 9)
    else:
        file_index = ord(en_passant[0]) - 97
        special_tokens.extend([1] + [0] * file_index + [1] + [0] * (7 - file_index))
    board_state = jnp.asarray(np.array(position, dtype=np.int32))[None, :]
    special = jnp.asarray(np.array(special_tokens, dtype=np.int32))[None, :]
    return board_state, special, turn


def flip_uci(uci):
    out = uci[0] + str(9 - int(uci[1])) + uci[2] + str(9 - int(uci[3]))
    if len(uci) == 5:
        out += uci[4]
    return out


# ----------------------------------------------------------------------------- Pallas kernel (fully fused forward)
def _ln(x, g, b, eps=1e-5):
    mu = jnp.mean(x, axis=-1, keepdims=True)
    var = jnp.mean((x - mu) ** 2, axis=-1, keepdims=True)
    return (x - mu) * jax.lax.rsqrt(var + eps) * g + b


def _fused_forward_kernel(x_ref,
                          ln1_g_ref, ln1_b_ref,
                          wq_ref, bq_ref, wk_ref, bk_ref, wv_ref, bv_ref,
                          wo_ref, bo_ref,
                          ln2_g_ref, ln2_b_ref,
                          wfc_ref, bfc_ref, wfc2_ref, bfc2_ref,
                          lnf_g_ref, lnf_b_ref, wp_ref, bp_ref,
                          o_ref,
                          *, n_head, n_layer, t_valid):
    x = x_ref[...]                                   # (Tp, C) f32, stays on-chip throughout
    Tp, C = x.shape

    # additive key-padding mask, (1, Tp), computed once; broadcast over query rows.
    kidx = jax.lax.broadcasted_iota(jnp.int32, (1, Tp), 1)
    kmask_add = jnp.where(kidx < t_valid, 0.0, -1e30).astype(jnp.float32)

    inv_sqrt2 = 1.0 / math.sqrt(2.0)

    for l in range(n_layer):                         # static unroll over layers
        # --- attention branch -------------------------------------------------
        h1 = _ln(x, ln1_g_ref[l], ln1_b_ref[l])
        y = jnp.zeros((Tp, C), jnp.float32)
        for hh in range(n_head):                     # static, small head count
            # per-head Q/K/V straight out of their own (C, hd) matmuls: no lane slicing
            qh = jnp.dot(h1, wq_ref[l, hh], preferred_element_type=jnp.float32) + bq_ref[l, hh]
            kh = jnp.dot(h1, wk_ref[l, hh], preferred_element_type=jnp.float32) + bk_ref[l, hh]
            vh = jnp.dot(h1, wv_ref[l, hh], preferred_element_type=jnp.float32) + bv_ref[l, hh]
            # scores: 1/sqrt(hd) already folded into wq/bq host-side
            s = jax.lax.dot_general(qh, kh, (((1,), (1,)), ((), ())),
                                    preferred_element_type=jnp.float32)
            s = s + kmask_add                        # mask padded key positions
            s = s - jnp.max(s, axis=-1, keepdims=True)
            p = jnp.exp(s)
            p = p * pl.reciprocal(jnp.sum(p, axis=-1, keepdims=True), approx=True)
            oh = jnp.dot(p, vh, preferred_element_type=jnp.float32)        # (Tp, hd)
            # fold the head concat into the projection: accumulate oh @ wproj_head
            y = y + jnp.dot(oh, wo_ref[l, hh], preferred_element_type=jnp.float32)
        x = x + y + bo_ref[l]                        # residual (dropout p=0 -> identity)

        # --- MLP branch --------------------------------------------------------
        h2 = _ln(x, ln2_g_ref[l], ln2_b_ref[l])
        m = jnp.dot(h2, wfc_ref[l], preferred_element_type=jnp.float32) + bfc_ref[l]
        m = 0.5 * m * (1.0 + jax.lax.erf(m * inv_sqrt2))                   # exact GELU (nn.GELU default)
        m = jnp.dot(m, wfc2_ref[l], preferred_element_type=jnp.float32) + bfc2_ref[l]
        x = x + m

    # --- policy head (ln_f on row 0 only; identical to ln_f(x)[0] since LN is row-wise)
    x0 = x[0:1, :]
    h0 = _ln(x0, lnf_g_ref[...], lnf_b_ref[...])
    o_ref[...] = jnp.dot(h0, wp_ref[...], preferred_element_type=jnp.float32) + bp_ref[...]


def _full_spec(shape):
    nd = len(shape)
    return pl.BlockSpec(shape, lambda i, _nd=nd: (0,) * _nd)


def fused_forward(x, fp, cfg, t_valid):
    args = [x,
            fp['ln1_g'], fp['ln1_b'],
            fp['wq'], fp['bq'], fp['wk'], fp['bk'], fp['wv'], fp['bv'],
            fp['wo'], fp['bo'],
            fp['ln2_g'], fp['ln2_b'],
            fp['wfc'], fp['bfc'], fp['wfc2'], fp['bfc2'],
            fp['lnf_g'], fp['lnf_b'], fp['wp'], fp['bp']]
    kern = functools.partial(_fused_forward_kernel, n_head=cfg.n_head,
                             n_layer=cfg.n_layer, t_valid=t_valid)
    return pl.pallas_call(
        kern,
        out_shape=jax.ShapeDtypeStruct((1, POLICY_PAD), jnp.float32),
        grid=(1,),
        in_specs=[_full_spec(a.shape) for a in args],
        out_specs=_full_spec((1, POLICY_PAD)),
        compiler_params=pltpu.CompilerParams(dimension_semantics=("arbitrary",)),
    )(*args)


# ----------------------------------------------------------------------------- parameter init (deterministic, synthetic, PyTorch-like layout)
def init_params(cfg, key):
    C = cfg.n_embd

    def nrm(k, shape):
        return 0.02 * jax.random.normal(k, shape, jnp.float32)

    keys = jax.random.split(key, 4 + 5 * cfg.n_layer)
    params = {
        'wte': nrm(keys[0], (cfg.vocab_size, C)),
        'wpe': nrm(keys[1], (cfg.squares_size, C)),
        'lnf_g': jnp.ones((1, C), jnp.float32),
        'lnf_b': jnp.zeros((1, C), jnp.float32),
        # policy head: PyTorch Linear weight is (out,in); stored transposed (in,out)
        'wp': nrm(keys[2], (C, POLICY_SIZE)),
        'bp': jnp.zeros((1, POLICY_SIZE), jnp.float32),
        'layers': [],
    }
    kidx = 3
    for _ in range(cfg.n_layer):
        lp = {
            'ln1_g': jnp.ones((1, C), jnp.float32), 'ln1_b': jnp.zeros((1, C), jnp.float32),
            'wqkv': nrm(keys[kidx + 0], (C, 3 * C)), 'bqkv': jnp.zeros((1, 3 * C), jnp.float32),
            'wproj': nrm(keys[kidx + 1], (C, C)),    'bproj': jnp.zeros((1, C), jnp.float32),
            'ln2_g': jnp.ones((1, C), jnp.float32), 'ln2_b': jnp.zeros((1, C), jnp.float32),
            'wfc': nrm(keys[kidx + 2], (C, 4 * C)),  'bfc': jnp.zeros((1, 4 * C), jnp.float32),
            'wfc2': nrm(keys[kidx + 3], (4 * C, C)), 'bfc2': jnp.zeros((1, C), jnp.float32),
        }
        params['layers'].append(lp)
        kidx += 5
    return params


# ----------------------------------------------------------------------------- one-time host-side weight prep for the fused kernel
def prepare_fused_params(params, cfg):
    C, H, L = cfg.n_embd, cfg.n_head, cfg.n_layer
    hd = C // H
    scale = 1.0 / math.sqrt(hd)

    def split_heads_w(w):                       # (C, C) columns -> (H, C, hd)
        return jnp.transpose(w.reshape(C, H, hd), (1, 0, 2))

    def split_heads_b(b):                       # (1, C) -> (H, 1, hd)
        return jnp.transpose(b.reshape(1, H, hd), (1, 0, 2))

    acc = {k: [] for k in ['ln1_g', 'ln1_b', 'wq', 'bq', 'wk', 'bk', 'wv', 'bv',
                           'wo', 'bo', 'ln2_g', 'ln2_b', 'wfc', 'bfc', 'wfc2', 'bfc2']}
    for lp in params['layers']:
        wqkv, bqkv = lp['wqkv'], lp['bqkv']
        # fold the 1/sqrt(head_dim) attention scale into Q weights AND bias
        acc['wq'].append(split_heads_w(wqkv[:, 0:C]) * scale)
        acc['bq'].append(split_heads_b(bqkv[:, 0:C]) * scale)
        acc['wk'].append(split_heads_w(wqkv[:, C:2 * C]))
        acc['bk'].append(split_heads_b(bqkv[:, C:2 * C]))
        acc['wv'].append(split_heads_w(wqkv[:, 2 * C:3 * C]))
        acc['bv'].append(split_heads_b(bqkv[:, 2 * C:3 * C]))
        # projection split per input-head block: y = sum_h oh @ wproj[h*hd:(h+1)*hd, :]
        acc['wo'].append(lp['wproj'].reshape(H, hd, C))
        acc['bo'].append(lp['bproj'])
        acc['ln1_g'].append(lp['ln1_g']); acc['ln1_b'].append(lp['ln1_b'])
        acc['ln2_g'].append(lp['ln2_g']); acc['ln2_b'].append(lp['ln2_b'])
        acc['wfc'].append(lp['wfc']);   acc['bfc'].append(lp['bfc'])
        acc['wfc2'].append(lp['wfc2']); acc['bfc2'].append(lp['bfc2'])

    fused = {k: jnp.stack(v) for k, v in acc.items()}   # leading (n_layer, ...) axis
    fused['wte'] = params['wte']
    fused['wpe'] = params['wpe']
    fused['lnf_g'] = params['lnf_g']
    fused['lnf_b'] = params['lnf_b']
    # lane-dense policy head: pad 1968 -> 2048 with zeros (sliced back outside the kernel)
    fused['wp'] = jnp.pad(params['wp'], ((0, 0), (0, POLICY_PAD - POLICY_SIZE)))
    fused['bp'] = jnp.pad(params['bp'], ((0, 0), (0, POLICY_PAD - POLICY_SIZE)))
    return fused


# ----------------------------------------------------------------------------- jitted numeric path (one XLA dispatch: embed -> fused kernel -> slice -> top_k)
@functools.partial(jax.jit, static_argnames=("cfg", "move_rank"))
def _logits_and_topk(fp, board_ids, special, cfg, move_rank):
    T = board_ids.shape[1]
    tok_emb = fp['wte'][board_ids[0]]                         # (65, C) gather (plain JAX)
    pos_emb = fp['wpe'][jnp.arange(T)]                        # (65, C)
    special_emb = jnp.broadcast_to(
        special[0][:, None].astype(jnp.float32), (cfg.special_size, cfg.n_embd))
    x = jnp.concatenate([tok_emb + pos_emb, special_emb], axis=0)   # (78, C)

    t_valid = T + cfg.special_size                            # 78
    t_pad = 8 * ((t_valid + 7) // 8)                          # 80
    x = jnp.pad(x, ((0, t_pad - t_valid), (0, 0)))            # (80, C)

    logits_pad = fused_forward(x, fp, cfg, t_valid)           # (1, 2048)
    logits = logits_pad[0, :POLICY_SIZE]                      # (1968,)
    _, indices = jax.lax.top_k(logits, move_rank)
    return logits, indices


# ----------------------------------------------------------------------------- Chess.forward equivalent
def chess_forward(fused_params, cfg, index_to_move, fen, move_rank):
    board_ids, special, turn = fen_to_vector(fen)             # (1,65) int, (1,13) int
    assert board_ids.shape[1] <= cfg.squares_size

    logits, indices = _logits_and_topk(fused_params, board_ids, special, cfg, move_rank)

    # top-k last index -> UCI decode is host-side control flow (like torch.topk + dict lookup)
    max_index = int(jax.device_get(indices)[-1])
    uci_move = index_to_move[max_index]
    if turn == 'b':
        uci_move = flip_uci(uci_move)
    return uci_move, logits


# ----------------------------------------------------------------------------- pure-JAX reference of the PyTorch forward (for correctness check)
def reference_logits(params, cfg, board_ids, special):
    C, H = cfg.n_embd, cfg.n_head
    hd = C // H
    T = board_ids.shape[1]
    tok = params['wte'][board_ids[0]]
    pos = params['wpe'][jnp.arange(T)]
    sp = jnp.broadcast_to(special[0][:, None].astype(jnp.float32), (cfg.special_size, C))
    x = jnp.concatenate([tok + pos, sp], axis=0)              # (78, C)

    def ln(v, g, b, eps=1e-5):
        mu = v.mean(-1, keepdims=True)
        var = ((v - mu) ** 2).mean(-1, keepdims=True)
        return (v - mu) / jnp.sqrt(var + eps) * g + b

    for lp in params['layers']:
        h = ln(x, lp['ln1_g'], lp['ln1_b'])
        qkv = h @ lp['wqkv'] + lp['bqkv']
        q, k, v = jnp.split(qkv, 3, axis=-1)
        q = q.reshape(-1, H, hd).transpose(1, 0, 2)
        k = k.reshape(-1, H, hd).transpose(1, 0, 2)
        v = v.reshape(-1, H, hd).transpose(1, 0, 2)
        s = jnp.einsum('htd,hsd->hts', q, k) / math.sqrt(hd)  # non-causal SDPA
        p = jax.nn.softmax(s, axis=-1)
        y = jnp.einsum('hts,hsd->htd', p, v).transpose(1, 0, 2).reshape(-1, C)
        x = x + y @ lp['wproj'] + lp['bproj']
        h = ln(x, lp['ln2_g'], lp['ln2_b'])
        m = h @ lp['wfc'] + lp['bfc']
        m = 0.5 * m * (1.0 + jax.lax.erf(m / math.sqrt(2.0)))
        x = x + m @ lp['wfc2'] + lp['bfc2']
    x0 = ln(x[0:1], params['lnf_g'], params['lnf_b'])
    return (x0 @ params['wp'] + params['bp'])[0]              # (1968,)


# ----------------------------------------------------------------------------- main
if __name__ == "__main__":
    cfg = ModelConfig()
    params = init_params(cfg, jax.random.PRNGKey(0))
    fused_params = prepare_fused_params(params, cfg)
    index_to_move = MoveDictionary().index_move_dict

    # TODO(synk): original module loads a trained .pth checkpoint; here weights are
    # synthetic (deterministic PRNGKey(0) init), so the chosen move is arbitrary.
    fen = "rnbqkbnr/pppppppp/8/8/8/8/PPPPPPPP/RNBQKBNR w KQkq - 0 1"

    uci_move, logits = chess_forward(fused_params, cfg, index_to_move, fen, move_rank=1)
    logits = jax.block_until_ready(logits)

    # correctness check against a pure-JAX replica of the PyTorch forward
    board_ids, special, _ = fen_to_vector(fen)
    ref = jax.block_until_ready(reference_logits(params, cfg, board_ids, special))
    np.testing.assert_allclose(np.asarray(logits), np.asarray(ref), rtol=2e-3, atol=2e-3)

    assert logits.shape == (POLICY_SIZE,)
    assert bool(jnp.isfinite(logits).all())
    assert isinstance(uci_move, str) and len(uci_move) in (4, 5)

    print("KERNEL_OK")
</pallas_src>

<mosaic_0001>
module attributes {stable_mosaic.version = 11 : i64} {
  func.func @_fused_forward_kernel(%arg0: i32, %arg1: memref<80x64xf32, #tpu.memory_space<vmem>>, %arg2: memref<2x1x64xf32, #tpu.memory_space<vmem>>, %arg3: memref<2x1x64xf32, #tpu.memory_space<vmem>>, %arg4: memref<2x4x64x16xf32, #tpu.memory_space<vmem>>, %arg5: memref<2x4x1x16xf32, #tpu.memory_space<vmem>>, %arg6: memref<2x4x64x16xf32, #tpu.memory_space<vmem>>, %arg7: memref<2x4x1x16xf32, #tpu.memory_space<vmem>>, %arg8: memref<2x4x64x16xf32, #tpu.memory_space<vmem>>, %arg9: memref<2x4x1x16xf32, #tpu.memory_space<vmem>>, %arg10: memref<2x4x16x64xf32, #tpu.memory_space<vmem>>, %arg11: memref<2x1x64xf32, #tpu.memory_space<vmem>>, %arg12: memref<2x1x64xf32, #tpu.memory_space<vmem>>, %arg13: memref<2x1x64xf32, #tpu.memory_space<vmem>>, %arg14: memref<2x64x256xf32, #tpu.memory_space<vmem>>, %arg15: memref<2x1x256xf32, #tpu.memory_space<vmem>>, %arg16: memref<2x256x64xf32, #tpu.memory_space<vmem>>, %arg17: memref<2x1x64xf32, #tpu.memory_space<vmem>>, %arg18: memref<1x64xf32, #tpu.memory_space<vmem>>, %arg19: memref<1x64xf32, #tpu.memory_space<vmem>>, %arg20: memref<64x2048xf32, #tpu.memory_space<vmem>>, %arg21: memref<1x2048xf32, #tpu.memory_space<vmem>>, %arg22: memref<1x2048xf32, #tpu.memory_space<vmem>>) attributes {dimension_semantics = [#tpu.dimension_semantics<arbitrary>], iteration_bounds = array<i64: 1>, scalar_prefetch = 0 : i64, scratch_operands = 0 : i64, tpu.core_type = #tpu.core_type<tc>, window_params = [{pipeline_mode = #tpu.pipeline_mode<synchronous>, transform_indices = @transform_0, window_bounds = array<i64: 80, 64>}, {pipeline_mode = #tpu.pipeline_mode<synchronous>, transform_indices = @transform_1, window_bounds = array<i64: 2, 1, 64>}, {pipeline_mode = #tpu.pipeline_mode<synchronous>, transform_indices = @transform_2, window_bounds = array<i64: 2, 1, 64>}, {pipeline_mode = #tpu.pipeline_mode<synchronous>, transform_indices = @transform_3, window_bounds = array<i64: 2, 4, 64, 16>}, {pipeline_mode = #tpu.pipeline_mode<synchronous>, transform_indices = @transform_4, window_bounds = array<i64: 2, 4, 1, 16>}, {pipeline_mode = #tpu.pipeline_mode<synchronous>, transform_indices = @transform_5, window_bounds = array<i64: 2, 4, 64, 16>}, {pipeline_mode = #tpu.pipeline_mode<synchronous>, transform_indices = @transform_6, window_bounds = array<i64: 2, 4, 1, 16>}, {pipeline_mode = #tpu.pipeline_mode<synchronous>, transform_indices = @transform_7, window_bounds = array<i64: 2, 4, 64, 16>}, {pipeline_mode = #tpu.pipeline_mode<synchronous>, transform_indices = @transform_8, window_bounds = array<i64: 2, 4, 1, 16>}, {pipeline_mode = #tpu.pipeline_mode<synchronous>, transform_indices = @transform_9, window_bounds = array<i64: 2, 4, 16, 64>}, {pipeline_mode = #tpu.pipeline_mode<synchronous>, transform_indices = @transform_10, window_bounds = array<i64: 2, 1, 64>}, {pipeline_mode = #tpu.pipeline_mode<synchronous>, transform_indices = @transform_11, window_bounds = array<i64: 2, 1, 64>}, {pipeline_mode = #tpu.pipeline_mode<synchronous>, transform_indices = @transform_12, window_bounds = array<i64: 2, 1, 64>}, {pipeline_mode = #tpu.pipeline_mode<synchronous>, transform_indices = @transform_13, window_bounds = array<i64: 2, 64, 256>}, {pipeline_mode = #tpu.pipeline_mode<synchronous>, transform_indices = @transform_14, window_bounds = array<i64: 2, 1, 256>}, {pipeline_mode = #tpu.pipeline_mode<synchronous>, transform_indices = @transform_15, window_bounds = array<i64: 2, 256, 64>}, {pipeline_mode = #tpu.pipeline_mode<synchronous>, transform_indices = @transform_16, window_bounds = array<i64: 2, 1, 64>}, {pipeline_mode = #tpu.pipeline_mode<synchronous>, transform_indices = @transform_17, window_bounds = array<i64: 1, 64>}, {pipeline_mode = #tpu.pipeline_mode<synchronous>, transform_indices = @transform_18, window_bounds = array<i64: 1, 64>}, {pipeline_mode = #tpu.pipeline_mode<synchronous>, transform_indices = @transform_19, window_bounds = array<i64: 64, 2048>}, {pipeline_mode = #tpu.pipeline_mode<synchronous>, transform_indices = @transform_20, window_bounds = array<i64: 1, 2048>}, {pipeline_mode = #tpu.pipeline_mode<synchronous>, transform_indices = @transform_21, window_bounds = array<i64: 1, 2048>}]} {
    %c0 = arith.constant 0 : index
    %c0_0 = arith.constant 0 : index
    %0 = vector.load %arg1[%c0, %c0_0] : memref<80x64xf32, #tpu.memory_space<vmem>>, vector<80x64xf32>
    %1 = tpu.iota {dimensions = array<i32: 1>} : vector<1x80xi32>
    %c78_i32 = arith.constant 78 : i32
    %2 = vector.broadcast %c78_i32 : i32 to vector<1x80xi32>
    %3 = arith.cmpi slt, %1, %2 : vector<1x80xi32>
    %cst = arith.constant 0.000000e+00 : f32
    %cst_1 = arith.constant -1.000000e+30 : f32
    %4 = vector.broadcast %cst : f32 to vector<1x80xf32>
    %5 = vector.broadcast %cst_1 : f32 to vector<1x80xf32>
    %6 = arith.select %3, %4, %5 : vector<1x80xi1>, vector<1x80xf32>
    %c0_2 = arith.constant 0 : index
    %c0_3 = arith.constant 0 : index
    %c0_4 = arith.constant 0 : index
    %7 = vector.load %arg2[%c0_2, %c0_3, %c0_4] : memref<2x1x64xf32, #tpu.memory_space<vmem>>, vector<1x1x64xf32>
    %8 = vector.shape_cast %7 : vector<1x1x64xf32> to vector<1x64xf32>
    %c0_5 = arith.constant 0 : index
    %c0_6 = arith.constant 0 : index
    %c0_7 = arith.constant 0 : index
    %9 = vector.load %arg3[%c0_5, %c0_6, %c0_7] : memref<2x1x64xf32, #tpu.memory_space<vmem>>, vector<1x1x64xf32>
    %10 = vector.shape_cast %9 : vector<1x1x64xf32> to vector<1x64xf32>
    %cst_8 = arith.constant dense<0.000000e+00> : vector<80xf32>
    %11 = vector.multi_reduction <add>, %0, %cst_8 [1] : vector<80x64xf32> to vector<80xf32>
    %12 = vector.shape_cast %11 : vector<80xf32> to vector<80x1xf32>
    %cst_9 = arith.constant 6.400000e+01 : f32
    %13 = vector.broadcast %cst_9 : f32 to vector<80x1xf32>
    %14 = arith.divf %12, %13 : vector<80x1xf32>
    %15 = vector.broadcast %14 : vector<80x1xf32> to vector<80x64xf32>
    %16 = arith.subf %0, %15 : vector<80x64xf32>
    %17 = arith.mulf %16, %16 : vector<80x64xf32>
    %cst_10 = arith.constant dense<0.000000e+00> : vector<80xf32>
    %18 = vector.multi_reduction <add>, %17, %cst_10 [1] : vector<80x64xf32> to vector<80xf32>
    %19 = vector.shape_cast %18 : vector<80xf32> to vector<80x1xf32>
    %cst_11 = arith.constant 6.400000e+01 : f32
    %20 = vector.broadcast %cst_11 : f32 to vector<80x1xf32>
    %21 = arith.divf %19, %20 : vector<80x1xf32>
    %22 = vector.broadcast %14 : vector<80x1xf32> to vector<80x64xf32>
    %23 = arith.subf %0, %22 : vector<80x64xf32>
    %cst_12 = arith.constant 9.99999974E-6 : f32
    %24 = vector.broadcast %cst_12 : f32 to vector<80x1xf32>
    %25 = arith.addf %21, %24 : vector<80x1xf32>
    %26 = math.rsqrt %25 : vector<80x1xf32>
    %27 = vector.broadcast %26 : vector<80x1xf32> to vector<80x64xf32>
    %28 = arith.mulf %23, %27 : vector<80x64xf32>
    %29 = vector.broadcast %8 : vector<1x64xf32> to vector<80x64xf32>
    %30 = arith.mulf %28, %29 : vector<80x64xf32>
    %31 = vector.broadcast %10 : vector<1x64xf32> to vector<80x64xf32>
    %32 = arith.addf %30, %31 : vector<80x64xf32>
    %cst_13 = arith.constant 0.000000e+00 : f32
    %33 = vector.broadcast %cst_13 : f32 to vector<80x64xf32>
    %c0_14 = arith.constant 0 : index
    %c0_15 = arith.constant 0 : index
    %c0_16 = arith.constant 0 : index
    %c0_17 = arith.constant 0 : index
    %34 = vector.load %arg4[%c0_14, %c0_15, %c0_16, %c0_17] : memref<2x4x64x16xf32, #tpu.memory_space<vmem>>, vector<1x1x64x16xf32>
    %35 = vector.shape_cast %34 : vector<1x1x64x16xf32> to vector<64x16xf32>
    %cst_18 = arith.constant dense<0.000000e+00> : vector<80x16xf32>
    %36 = tpu.matmul %32, %35, %cst_18 {dimension_numbers = #tpu.dot_dimension_numbers<[1], [0], [0], [1], [0, 0, 1, 1], [], []>} : vector<80x64xf32>, vector<64x16xf32>, vector<80x16xf32> -> vector<80x16xf32>
    %c0_19 = arith.constant 0 : index
    %c0_20 = arith.constant 0 : index
    %c0_21 = arith.constant 0 : index
    %c0_22 = arith.constant 0 : index
    %37 = vector.load %arg5[%c0_19, %c0_20, %c0_21, %c0_22] : memref<2x4x1x16xf32, #tpu.memory_space<vmem>>, vector<1x1x1x16xf32>
    %38 = vector.shape_cast %37 : vector<1x1x1x16xf32> to vector<1x16xf32>
    %39 = vector.broadcast %38 : vector<1x16xf32> to vector<80x16xf32>
    %40 = arith.addf %36, %39 : vector<80x16xf32>
    %c0_23 = arith.constant 0 : index
    %c0_24 = arith.constant 0 : index
    %c0_25 = arith.constant 0 : index
    %c0_26 = arith.constant 0 : index
    %41 = vector.load %arg6[%c0_23, %c0_24, %c0_25, %c0_26] : memref<2x4x64x16xf32, #tpu.memory_space<vmem>>, vector<1x1x64x16xf32>
    %42 = vector.shape_cast %41 : vector<1x1x64x16xf32> to vector<64x16xf32>
    %cst_27 = arith.constant dense<0.000000e+00> : vector<80x16xf32>
    %43 = tpu.matmul %32, %42, %cst_27 {dimension_numbers = #tpu.dot_dimension_numbers<[1], [0], [0], [1], [0, 0, 1, 1], [], []>} : vector<80x64xf32>, vector<64x16xf32>, vector<80x16xf32> -> vector<80x16xf32>
    %c0_28 = arith.constant 0 : index
    %c0_29 = arith.constant 0 : index
    %c0_30 = arith.constant 0 : index
    %c0_31 = arith.constant 0 : index
    %44 = vector.load %arg7[%c0_28, %c0_29, %c0_30, %c0_31] : memref<2x4x1x16xf32, #tpu.memory_space<vmem>>, vector<1x1x1x16xf32>
    %45 = vector.shape_cast %44 : vector<1x1x1x16xf32> to vector<1x16xf32>
    %46 = vector.broadcast %45 : vector<1x16xf32> to vector<80x16xf32>
    %47 = arith.addf %43, %46 : vector<80x16xf32>
    %c0_32 = arith.constant 0 : index
    %c0_33 = arith.constant 0 : index
    %c0_34 = arith.constant 0 : index
    %c0_35 = arith.constant 0 : index
    %48 = vector.load %arg8[%c0_32, %c0_33, %c0_34, %c0_35] : memref<2x4x64x16xf32, #tpu.memory_space<vmem>>, vector<1x1x64x16xf32>
    %49 = vector.shape_cast %48 : vector<1x1x64x16xf32> to vector<64x16xf32>
    %cst_36 = arith.constant dense<0.000000e+00> : vector<80x16xf32>
    %50 = tpu.matmul %32, %49, %cst_36 {dimension_numbers = #tpu.dot_dimension_numbers<[1], [0], [0], [1], [0, 0, 1, 1], [], []>} : vector<80x64xf32>, vector<64x16xf32>, vector<80x16xf32> -> vector<80x16xf32>
    %c0_37 = arith.constant 0 : index
    %c0_38 = arith.constant 0 : index
    %c0_39 = arith.constant 0 : index
    %c0_40 = arith.constant 0 : index
    %51 = vector.load %arg9[%c0_37, %c0_38, %c0_39, %c0_40] : memref<2x4x1x16xf32, #tpu.memory_space<vmem>>, vector<1x1x1x16xf32>
    %52 = vector.shape_cast %51 : vector<1x1x1x16xf32> to vector<1x16xf32>
    %53 = vector.broadcast %52 : vector<1x16xf32> to vector<80x16xf32>
    %54 = arith.addf %50, %53 : vector<80x16xf32>
    %cst_41 = arith.constant dense<0.000000e+00> : vector<80x80xf32>
    %55 = tpu.matmul %40, %47, %cst_41 {dimension_numbers = #tpu.dot_dimension_numbers<[1], [1], [0], [0], [0, 0, 1, 0], [], []>} : vector<80x16xf32>, vector<80x16xf32>, vector<80x80xf32> -> vector<80x80xf32>
    %56 = vector.broadcast %6 : vector<1x80xf32> to vector<80x80xf32>
    %57 = arith.addf %55, %56 : vector<80x80xf32>
    %cst_42 = arith.constant dense<0xFF800000> : vector<80xf32>
    %58 = vector.multi_reduction <maximumf>, %57, %cst_42 [1] : vector<80x80xf32> to vector<80xf32>
    %59 = vector.shape_cast %58 : vector<80xf32> to vector<80x1xf32>
    %60 = vector.broadcast %59 : vector<80x1xf32> to vector<80x80xf32>
    %61 = arith.subf %57, %60 : vector<80x80xf32>
    %62 = math.exp %61 : vector<80x80xf32>
    %cst_43 = arith.constant dense<0.000000e+00> : vector<80xf32>
    %63 = vector.multi_reduction <add>, %62, %cst_43 [1] : vector<80x80xf32> to vector<80xf32>
    %64 = vector.shape_cast %63 : vector<80xf32> to vector<80x1xf32>
    %65 = tpu.reciprocal %64 {approx = true} : vector<80x1xf32> -> vector<80x1xf32>
    %66 = vector.broadcast %65 : vector<80x1xf32> to vector<80x80xf32>
    %67 = arith.mulf %62, %66 : vector<80x80xf32>
    %cst_44 = arith.constant dense<0.000000e+00> : vector<80x16xf32>
    %68 = tpu.matmul %67, %54, %cst_44 {dimension_numbers = #tpu.dot_dimension_numbers<[1], [0], [0], [1], [0, 0, 1, 1], [], []>} : vector<80x80xf32>, vector<80x16xf32>, vector<80x16xf32> -> vector<80x16xf32>
    %c0_45 = arith.constant 0 : index
    %c0_46 = arith.constant 0 : index
    %c0_47 = arith.constant 0 : index
    %c0_48 = arith.constant 0 : index
    %69 = vector.load %arg10[%c0_45, %c0_46, %c0_47, %c0_48] : memref<2x4x16x64xf32, #tpu.memory_space<vmem>>, vector<1x1x16x64xf32>
    %70 = vector.shape_cast %69 : vector<1x1x16x64xf32> to vector<16x64xf32>
    %cst_49 = arith.constant dense<0.000000e+00> : vector<80x64xf32>
    %71 = tpu.matmul %68, %70, %cst_49 {dimension_numbers = #tpu.dot_dimension_numbers<[1], [0], [0], [1], [0, 0, 1, 1], [], []>} : vector<80x16xf32>, vector<16x64xf32>, vector<80x64xf32> -> vector<80x64xf32>
    %72 = arith.addf %33, %71 : vector<80x64xf32>
    %c0_50 = arith.constant 0 : index
    %c1 = arith.constant 1 : index
    %c0_51 = arith.constant 0 : index
    %c0_52 = arith.constant 0 : index
    %73 = vector.load %arg4[%c0_50, %c1, %c0_51, %c0_52] : memref<2x4x64x16xf32, #tpu.memory_space<vmem>>, vector<1x1x64x16xf32>
    %74 = vector.shape_cast %73 : vector<1x1x64x16xf32> to vector<64x16xf32>
    %cst_53 = arith.constant dense<0.000000e+00> : vector<80x16xf32>
    %75 = tpu.matmul %32, %74, %cst_53 {dimension_numbers = #tpu.dot_dimension_numbers<[1], [0], [0], [1], [0, 0, 1, 1], [], []>} : vector<80x64xf32>, vector<64x16xf32>, vector<80x16xf32> -> vector<80x16xf32>
    %c0_54 = arith.constant 0 : index
    %c1_55 = arith.constant 1 : index
    %c0_56 = arith.constant 0 : index
    %c0_57 = arith.constant 0 : index
    %76 = vector.load %arg5[%c0_54, %c1_55, %c0_56, %c0_57] : memref<2x4x1x16xf32, #tpu.memory_space<vmem>>, vector<1x1x1x16xf32>
    %77 = vector.shape_cast %76 : vector<1x1x1x16xf32> to vector<1x16xf32>
    %78 = vector.broadcast %77 : vector<1x16xf32> to vector<80x16xf32>
    %79 = arith.addf %75, %78 : vector<80x16xf32>
    %c0_58 = arith.constant 0 : index
    %c1_59 = arith.constant 1 : index
    %c0_60 = arith.constant 0 : index
    %c0_61 = arith.constant 0 : index
    %80 = vector.load %arg6[%c0_58, %c1_59, %c0_60, %c0_61] : memref<2x4x64x16xf32, #tpu.memory_space<vmem>>, vector<1x1x64x16xf32>
    %81 = vector.shape_cast %80 : vector<1x1x64x16xf32> to vector<64x16xf32>
    %cst_62 = arith.constant dense<0.000000e+00> : vector<80x16xf32>
    %82 = tpu.matmul %32, %81, %cst_62 {dimension_numbers = #tpu.dot_dimension_numbers<[1], [0], [0], [1], [0, 0, 1, 1], [], []>} : vector<80x64xf32>, vector<64x16xf32>, vector<80x16xf32> -> vector<80x16xf32>
    %c0_63 = arith.constant 0 : index
    %c1_64 = arith.constant 1 : index
    %c0_65 = arith.constant 0 : index
    %c0_66 = arith.constant 0 : index
    %83 = vector.load %arg7[%c0_63, %c1_64, %c0_65, %c0_66] : memref<2x4x1x16xf32, #tpu.memory_space<vmem>>, vector<1x1x1x16xf32>
    %84 = vector.shape_cast %83 : vector<1x1x1x16xf32> to vector<1x16xf32>
    %85 = vector.broadcast %84 : vector<1x16xf32> to vector<80x16xf32>
    %86 = arith.addf %82, %85 : vector<80x16xf32>
    %c0_67 = arith.constant 0 : index
    %c1_68 = arith.constant 1 : index
    %c0_69 = arith.constant 0 : index
    %c0_70 = arith.constant 0 : index
    %87 = vector.load %arg8[%c0_67, %c1_68, %c0_69, %c0_70] : memref<2x4x64x16xf32, #tpu.memory_space<vmem>>, vector<1x1x64x16xf32>
    %88 = vector.shape_cast %87 : vector<1x1x64x16xf32> to vector<64x16xf32>
    %cst_71 = arith.constant dense<0.000000e+00> : vector<80x16xf32>
    %89 = tpu.matmul %32, %88, %cst_71 {dimension_numbers = #tpu.dot_dimension_numbers<[1], [0], [0], [1], [0, 0, 1, 1], [], []>} : vector<80x64xf32>, vector<64x16xf32>, vector<80x16xf32> -> vector<80x16xf32>
    %c0_72 = arith.constant 0 : index
    %c1_73 = arith.constant 1 : index
    %c0_74 = arith.constant 0 : index
    %c0_75 = arith.constant 0 : index
    %90 = vector.load %arg9[%c0_72, %c1_73, %c0_74, %c0_75] : memref<2x4x1x16xf32, #tpu.memory_space<vmem>>, vector<1x1x1x16xf32>
    %91 = vector.shape_cast %90 : vector<1x1x1x16xf32> to vector<1x16xf32>
    %92 = vector.broadcast %91 : vector<1x16xf32> to vector<80x16xf32>
    %93 = arith.addf %89, %92 : vector<80x16xf32>
    %cst_76 = arith.constant dense<0.000000e+00> : vector<80x80xf32>
    %94 = tpu.matmul %79, %86, %cst_76 {dimension_numbers = #tpu.dot_dimension_numbers<[1], [1], [0], [0], [0, 0, 1, 0], [], []>} : vector<80x16xf32>, vector<80x16xf32>, vector<80x80xf32> -> vector<80x80xf32>
    %95 = vector.broadcast %6 : vector<1x80xf32> to vector<80x80xf32>
    %96 = arith.addf %94, %95 : vector<80x80xf32>
    %cst_77 = arith.constant dense<0xFF800000> : vector<80xf32>
    %97 = vector.multi_reduction <maximumf>, %96, %cst_77 [1] : vector<80x80xf32> to vector<80xf32>
    %98 = vector.shape_cast %97 : vector<80xf32> to vector<80x1xf32>
    %99 = vector.broadcast %98 : vector<80x1xf32> to vector<80x80xf32>
    %100 = arith.subf %96, %99 : vector<80x80xf32>
    %101 = math.exp %100 : vector<80x80xf32>
    %cst_78 = arith.constant dense<0.000000e+00> : vector<80xf32>
    %102 = vector.multi_reduction <add>, %101, %cst_78 [1] : vector<80x80xf32> to vector<80xf32>
    %103 = vector.shape_cast %102 : vector<80xf32> to vector<80x1xf32>
    %104 = tpu.reciprocal %103 {approx = true} : vector<80x1xf32> -> vector<80x1xf32>
    %105 = vector.broadcast %104 : vector<80x1xf32> to vector<80x80xf32>
    %106 = arith.mulf %101, %105 : vector<80x80xf32>
    %cst_79 = arith.constant dense<0.000000e+00> : vector<80x16xf32>
    %107 = tpu.matmul %106, %93, %cst_79 {dimension_numbers = #tpu.dot_dimension_numbers<[1], [0], [0], [1], [0, 0, 1, 1], [], []>} : vector<80x80xf32>, vector<80x16xf32>, vector<80x16xf32> -> vector<80x16xf32>
    %c0_80 = arith.constant 0 : index
    %c1_81 = arith.constant 1 : index
    %c0_82 = arith.constant 0 : index
    %c0_83 = arith.constant 0 : index
    %108 = vector.load %arg10[%c0_80, %c1_81, %c0_82, %c0_83] : memref<2x4x16x64xf32, #tpu.memory_space<vmem>>, vector<1x1x16x64xf32>
    %109 = vector.shape_cast %108 : vector<1x1x16x64xf32> to vector<16x64xf32>
    %cst_84 = arith.constant dense<0.000000e+00> : vector<80x64xf32>
    %110 = tpu.matmul %107, %109, %cst_84 {dimension_numbers = #tpu.dot_dimension_numbers<[1], [0], [0], [1], [0, 0, 1, 1], [], []>} : vector<80x16xf32>, vector<16x64xf32>, vector<80x64xf32> -> vector<80x64xf32>
    %111 = arith.addf %72, %110 : vector<80x64xf32>
    %c0_85 = arith.constant 0 : index
    %c2 = arith.constant 2 : index
    %c0_86 = arith.constant 0 : index
    %c0_87 = arith.constant 0 : index
    %112 = vector.load %arg4[%c0_85, %c2, %c0_86, %c0_87] : memref<2x4x64x16xf32, #tpu.memory_space<vmem>>, vector<1x1x64x16xf32>
    %113 = vector.shape_cast %112 : vector<1x1x64x16xf32> to vector<64x16xf32>
    %cst_88 = arith.constant dense<0.000000e+00> : vector<80x16xf32>
    %114 = tpu.matmul %32, %113, %cst_88 {dimension_numbers = #tpu.dot_dimension_numbers<[1], [0], [0], [1], [0, 0, 1, 1], [], []>} : vector<80x64xf32>, vector<64x16xf32>, vector<80x16xf32> -> vector<80x16xf32>
    %c0_89 = arith.constant 0 : index
    %c2_90 = arith.constant 2 : index
    %c0_91 = arith.constant 0 : index
    %c0_92 = arith.constant 0 : index
    %115 = vector.load %arg5[%c0_89, %c2_90, %c0_91, %c0_92] : memref<2x4x1x16xf32, #tpu.memory_space<vmem>>, vector<1x1x1x16xf32>
    %116 = vector.shape_cast %115 : vector<1x1x1x16xf32> to vector<1x16xf32>
    %117 = vector.broadcast %116 : vector<1x16xf32> to vector<80x16xf32>
    %118 = arith.addf %114, %117 : vector<80x16xf32>
    %c0_93 = arith.constant 0 : index
    %c2_94 = arith.constant 2 : index
    %c0_95 = arith.constant 0 : index
    %c0_96 = arith.constant 0 : index
    %119 = vector.load %arg6[%c0_93, %c2_94, %c0_95, %c0_96] : memref<2x4x64x16xf32, #tpu.memory_space<vmem>>, vector<1x1x64x16xf32>
    %120 = vector.shape_cast %119 : vector<1x1x64x16xf32> to vector<64x16xf32>
    %cst_97 = arith.constant dense<0.000000e+00> : vector<80x16xf32>
    %121 = tpu.matmul %32, %120, %cst_97 {dimension_numbers = #tpu.dot_dimension_numbers<[1], [0], [0], [1], [0, 0, 1, 1], [], []>} : vector<80x64xf32>, vector<64x16xf32>, vector<80x16xf32> -> vector<80x16xf32>
    %c0_98 = arith.constant 0 : index
    %c2_99 = arith.constant 2 : index
    %c0_100 = arith.constant 0 : index
    %c0_101 = arith.constant 0 : index
    %122 = vector.load %arg7[%c0_98, %c2_99, %c0_100, %c0_101] : memref<2x4x1x16xf32, #tpu.memory_space<vmem>>, vector<1x1x1x16xf32>
    %123 = vector.shape_cast %122 : vector<1x1x1x16xf32> to vector<1x16xf32>
    %124 = vector.broadcast %123 : vector<1x16xf32> to vector<80x16xf32>
    %125 = arith.addf %121, %124 : vector<80x16xf32>
    %c0_102 = arith.constant 0 : index
    %c2_103 = arith.constant 2 : index
    %c0_104 = arith.constant 0 : index
    %c0_105 = arith.constant 0 : index
    %126 = vector.load %arg8[%c0_102, %c2_103, %c0_104, %c0_105] : memref<2x4x64x16xf32, #tpu.memory_space<vmem>>, vector<1x1x64x16xf32>
    %127 = vector.shape_cast %126 : vector<1x1x64x16xf32> to vector<64x16xf32>
    %cst_106 = arith.constant dense<0.000000e+00> : vector<80x16xf32>
    %128 = tpu.matmul %32, %127, %cst_106 {dimension_numbers = #tpu.dot_dimension_numbers<[1], [0], [0], [1], [0, 0, 1, 1], [], []>} : vector<80x64xf32>, vector<64x16xf32>, vector<80x16xf32> -> vector<80x16xf32>
    %c0_107 = arith.constant 0 : index
    %c2_108 = arith.constant 2 : index
    %c0_109 = arith.constant 0 : index
    %c0_110 = arith.constant 0 : index
    %129 = vector.load %arg9[%c0_107, %c2_108, %c0_109, %c0_110] : memref<2x4x1x16xf32, #tpu.memory_space<vmem>>, vector<1x1x1x16xf32>
    %130 = vector.shape_cast %129 : vector<1x1x1x16xf32> to vector<1x16xf32>
    %131 = vector.broadcast %130 : vector<1x16xf32> to vector<80x16xf32>
    %132 = arith.addf %128, %131 : vector<80x16xf32>
    %cst_111 = arith.constant dense<0.000000e+00> : vector<80x80xf32>
    %133 = tpu.matmul %118, %125, %cst_111 {dimension_numbers = #tpu.dot_dimension_numbers<[1], [1], [0], [0], [0, 0, 1, 0], [], []>} : vector<80x16xf32>, vector<80x16xf32>, vector<80x80xf32> -> vector<80x80xf32>
    %134 = vector.broadcast %6 : vector<1x80xf32> to vector<80x80xf32>
    %135 = arith.addf %133, %134 : vector<80x80xf32>
    %cst_112 = arith.constant dense<0xFF800000> : vector<80xf32>
    %136 = vector.multi_reduction <maximumf>, %135, %cst_112 [1] : vector<80x80xf32> to vector<80xf32>
    %137 = vector.shape_cast %136 : vector<80xf32> to vector<80x1xf32>
    %138 = vector.broadcast %137 : vector<80x1xf32> to vector<80x80xf32>
    %139 = arith.subf %135, %138 : vector<80x80xf32>
    %140 = math.exp %139 : vector<80x80xf32>
    %cst_113 = arith.constant dense<0.000000e+00> : vector<80xf32>
    %141 = vector.multi_reduction <add>, %140, %cst_113 [1] : vector<80x80xf32> to vector<80xf32>
    %142 = vector.shape_cast %141 : vector<80xf32> to vector<80x1xf32>
    %143 = tpu.reciprocal %142 {approx = true} : vector<80x1xf32> -> vector<80x1xf32>
    %144 = vector.broadcast %143 : vector<80x1xf32> to vector<80x80xf32>
    %145 = arith.mulf %140, %144 : vector<80x80xf32>
    %cst_114 = arith.constant dense<0.000000e+00> : vector<80x16xf32>
    %146 = tpu.matmul %145, %132, %cst_114 {dimension_numbers = #tpu.dot_dimension_numbers<[1], [0], [0], [1], [0, 0, 1, 1], [], []>} : vector<80x80xf32>, vector<80x16xf32>, vector<80x16xf32> -> vector<80x16xf32>
    %c0_115 = arith.constant 0 : index
    %c2_116 = arith.constant 2 : index
    %c0_117 = arith.constant 0 : index
    %c0_118 = arith.constant 0 : index
    %147 = vector.load %arg10[%c0_115, %c2_116, %c0_117, %c0_118] : memref<2x4x16x64xf32, #tpu.memory_space<vmem>>, vector<1x1x16x64xf32>
    %148 = vector.shape_cast %147 : vector<1x1x16x64xf32> to vector<16x64xf32>
    %cst_119 = arith.constant dense<0.000000e+00> : vector<80x64xf32>
    %149 = tpu.matmul %146, %148, %cst_119 {dimension_numbers = #tpu.dot_dimension_numbers<[1], [0], [0], [1], [0, 0, 1, 1], [], []>} : vector<80x16xf32>, vector<16x64xf32>, vector<80x64xf32> -> vector<80x64xf32>
    %150 = arith.addf %111, %149 : vector<80x64xf32>
    %c0_120 = arith.constant 0 : index
    %c3 = arith.constant 3 : index
    %c0_121 = arith.constant 0 : index
    %c0_122 = arith.constant 0 : index
    %151 = vector.load %arg4[%c0_120, %c3, %c0_121, %c0_122] : memref<2x4x64x16xf32, #tpu.memory_space<vmem>>, vector<1x1x64x16xf32>
    %152 = vector.shape_cast %151 : vector<1x1x64x16xf32> to vector<64x16xf32>
    %cst_123 = arith.constant dense<0.000000e+00> : vector<80x16xf32>
    %153 = tpu.matmul %32, %152, %cst_123 {dimension_numbers = #tpu.dot_dimension_numbers<[1], [0], [0], [1], [0, 0, 1, 1], [], []>} : vector<80x64xf32>, vector<64x16xf32>, vector<80x16xf32> -> vector<80x16xf32>
    %c0_124 = arith.constant 0 : index
    %c3_125 = arith.constant 3 : index
    %c0_126 = arith.constant 0 : index
    %c0_127 = arith.constant 0 : index
    %154 = vector.load %arg5[%c0_124, %c3_125, %c0_126, %c0_127] : memref<2x4x1x16xf32, #tpu.memory_space<vmem>>, vector<1x1x1x16xf32>
    %155 = vector.shape_cast %154 : vector<1x1x1x16xf32> to vector<1x16xf32>
    %156 = vector.broadcast %155 : vector<1x16xf32> to vector<80x16xf32>
    %157 = arith.addf %153, %156 : vector<80x16xf32>
    %c0_128 = arith.constant 0 : index
    %c3_129 = arith.constant 3 : index
    %c0_130 = arith.constant 0 : index
    %c0_131 = arith.constant 0 : index
    %158 = vector.load %arg6[%c0_128, %c3_129, %c0_130, %c0_131] : memref<2x4x64x16xf32, #tpu.memory_space<vmem>>, vector<1x1x64x16xf32>
    %159 = vector.shape_cast %158 : vector<1x1x64x16xf32> to vector<64x16xf32>
    %cst_132 = arith.constant dense<0.000000e+00> : vector<80x16xf32>
    %160 = tpu.matmul %32, %159, %cst_132 {dimension_numbers = #tpu.dot_dimension_numbers<[1], [0], [0], [1], [0, 0, 1, 1], [], []>} : vector<80x64xf32>, vector<64x16xf32>, vector<80x16xf32> -> vector<80x16xf32>
    %c0_133 = arith.constant 0 : index
    %c3_134 = arith.constant 3 : index
    %c0_135 = arith.constant 0 : index
    %c0_136 = arith.constant 0 : index
    %161 = vector.load %arg7[%c0_133, %c3_134, %c0_135, %c0_136] : memref<2x4x1x16xf32, #tpu.memory_space<vmem>>, vector<1x1x1x16xf32>
    %162 = vector.shape_cast %161 : vector<1x1x1x16xf32> to vector<1x16xf32>
    %163 = vector.broadcast %162 : vector<1x16xf32> to vector<80x16xf32>
    %164 = arith.addf %160, %163 : vector<80x16xf32>
    %c0_137 = arith.constant 0 : index
    %c3_138 = arith.constant 3 : index
    %c0_139 = arith.constant 0 : index
    %c0_140 = arith.constant 0 : index
    %165 = vector.load %arg8[%c0_137, %c3_138, %c0_139, %c0_140] : memref<2x4x64x16xf32, #tpu.memory_space<vmem>>, vector<1x1x64x16xf32>
    %166 = vector.shape_cast %165 : vector<1x1x64x16xf32> to vector<64x16xf32>
    %cst_141 = arith.constant dense<0.000000e+00> : vector<80x16xf32>
    %167 = tpu.matmul %32, %166, %cst_141 {dimension_numbers = #tpu.dot_dimension_numbers<[1], [0], [0], [1], [0, 0, 1, 1], [], []>} : vector<80x64xf32>, vector<64x16xf32>, vector<80x16xf32> -> vector<80x16xf32>
    %c0_142 = arith.constant 0 : index
    %c3_143 = arith.constant 3 : index
    %c0_144 = arith.constant 0 : index
    %c0_145 = arith.constant 0 : index
    %168 = vector.load %arg9[%c0_142, %c3_143, %c0_144, %c0_145] : memref<2x4x1x16xf32, #tpu.memory_space<vmem>>, vector<1x1x1x16xf32>
    %169 = vector.shape_cast %168 : vector<1x1x1x16xf32> to vector<1x16xf32>
    %170 = vector.broadcast %169 : vector<1x16xf32> to vector<80x16xf32>
    %171 = arith.addf %167, %170 : vector<80x16xf32>
    %cst_146 = arith.constant dense<0.000000e+00> : vector<80x80xf32>
    %172 = tpu.matmul %157, %164, %cst_146 {dimension_numbers = #tpu.dot_dimension_numbers<[1], [1], [0], [0], [0, 0, 1, 0], [], []>} : vector<80x16xf32>, vector<80x16xf32>, vector<80x80xf32> -> vector<80x80xf32>
    %173 = vector.broadcast %6 : vector<1x80xf32> to vector<80x80xf32>
    %174 = arith.addf %172, %173 : vector<80x80xf32>
    %cst_147 = arith.constant dense<0xFF800000> : vector<80xf32>
    %175 = vector.multi_reduction <maximumf>, %174, %cst_147 [1] : vector<80x80xf32> to vector<80xf32>
    %176 = vector.shape_cast %175 : vector<80xf32> to vector<80x1xf32>
    %177 = vector.broadcast %176 : vector<80x1xf32> to vector<80x80xf32>
    %178 = arith.subf %174, %177 : vector<80x80xf32>
    %179 = math.exp %178 : vector<80x80xf32>
    %cst_148 = arith.constant dense<0.000000e+00> : vector<80xf32>
    %180 = vector.multi_reduction <add>, %179, %cst_148 [1] : vector<80x80xf32> to vector<80xf32>
    %181 = vector.shape_cast %180 : vector<80xf32> to vector<80x1xf32>
    %182 = tpu.reciprocal %181 {approx = true} : vector<80x1xf32> -> vector<80x1xf32>
    %183 = vector.broadcast %182 : vector<80x1xf32> to vector<80x80xf32>
    %184 = arith.mulf %179, %183 : vector<80x80xf32>
    %cst_149 = arith.constant dense<0.000000e+00> : vector<80x16xf32>
    %185 = tpu.matmul %184, %171, %cst_149 {dimension_numbers = #tpu.dot_dimension_numbers<[1], [0], [0], [1], [0, 0, 1, 1], [], []>} : vector<80x80xf32>, vector<80x16xf32>, vector<80x16xf32> -> vector<80x16xf32>
    %c0_150 = arith.constant 0 : index
    %c3_151 = arith.constant 3 : index
    %c0_152 = arith.constant 0 : index
    %c0_153 = arith.constant 0 : index
    %186 = vector.load %arg10[%c0_150, %c3_151, %c0_152, %c0_153] : memref<2x4x16x64xf32, #tpu.memory_space<vmem>>, vector<1x1x16x64xf32>
    %187 = vector.shape_cast %186 : vector<1x1x16x64xf32> to vector<16x64xf32>
    %cst_154 = arith.constant dense<0.000000e+00> : vector<80x64xf32>
    %188 = tpu.matmul %185, %187, %cst_154 {dimension_numbers = #tpu.dot_dimension_numbers<[1], [0], [0], [1], [0, 0, 1, 1], [], []>} : vector<80x16xf32>, vector<16x64xf32>, vector<80x64xf32> -> vector<80x64xf32>
    %189 = arith.addf %150, %188 : vector<80x64xf32>
    %190 = arith.addf %0, %189 : vector<80x64xf32>
    %c0_155 = arith.constant 0 : index
    %c0_156 = arith.constant 0 : index
    %c0_157 = arith.constant 0 : index
    %191 = vector.load %arg11[%c0_155, %c0_156, %c0_157] : memref<2x1x64xf32, #tpu.memory_space<vmem>>, vector<1x1x64xf32>
    %192 = vector.shape_cast %191 : vector<1x1x64xf32> to vector<1x64xf32>
    %193 = vector.broadcast %192 : vector<1x64xf32> to vector<80x64xf32>
    %194 = arith.addf %190, %193 : vector<80x64xf32>
    %c0_158 = arith.constant 0 : index
    %c0_159 = arith.constant 0 : index
    %c0_160 = arith.constant 0 : index
    %195 = vector.load %arg12[%c0_158, %c0_159, %c0_160] : memref<2x1x64xf32, #tpu.memory_space<vmem>>, vector<1x1x64xf32>
    %196 = vector.shape_cast %195 : vector<1x1x64xf32> to vector<1x64xf32>
    %c0_161 = arith.constant 0 : index
    %c0_162 = arith.constant 0 : index
    %c0_163 = arith.constant 0 : index
    %197 = vector.load %arg13[%c0_161, %c0_162, %c0_163] : memref<2x1x64xf32, #tpu.memory_space<vmem>>, vector<1x1x64xf32>
    %198 = vector.shape_cast %197 : vector<1x1x64xf32> to vector<1x64xf32>
    %cst_164 = arith.constant dense<0.000000e+00> : vector<80xf32>
    %199 = vector.multi_reduction <add>, %194, %cst_164 [1] : vector<80x64xf32> to vector<80xf32>
    %200 = vector.shape_cast %199 : vector<80xf32> to vector<80x1xf32>
    %cst_165 = arith.constant 6.400000e+01 : f32
    %201 = vector.broadcast %cst_165 : f32 to vector<80x1xf32>
    %202 = arith.divf %200, %201 : vector<80x1xf32>
    %203 = vector.broadcast %202 : vector<80x1xf32> to vector<80x64xf32>
    %204 = arith.subf %194, %203 : vector<80x64xf32>
    %205 = arith.mulf %204, %204 : vector<80x64xf32>
    %cst_166 = arith.constant dense<0.000000e+00> : vector<80xf32>
    %206 = vector.multi_reduction <add>, %205, %cst_166 [1] : vector<80x64xf32> to vector<80xf32>
    %207 = vector.shape_cast %206 : vector<80xf32> to vector<80x1xf32>
    %cst_167 = arith.constant 6.400000e+01 : f32
    %208 = vector.broadcast %cst_167 : f32 to vector<80x1xf32>
    %209 = arith.divf %207, %208 : vector<80x1xf32>
    %210 = vector.broadcast %202 : vector<80x1xf32> to vector<80x64xf32>
    %211 = arith.subf %194, %210 : vector<80x64xf32>
    %cst_168 = arith.constant 9.99999974E-6 : f32
    %212 = vector.broadcast %cst_168 : f32 to vector<80x1xf32>
    %213 = arith.addf %209, %212 : vector<80x1xf32>
    %214 = math.rsqrt %213 : vector<80x1xf32>
    %215 = vector.broadcast %214 : vector<80x1xf32> to vector<80x64xf32>
    %216 = arith.mulf %211, %215 : vector<80x64xf32>
    %217 = vector.broadcast %196 : vector<1x64xf32> to vector<80x64xf32>
    %218 = arith.mulf %216, %217 : vector<80x64xf32>
    %219 = vector.broadcast %198 : vector<1x64xf32> to vector<80x64xf32>
    %220 = arith.addf %218, %219 : vector<80x64xf32>
    %c0_169 = arith.constant 0 : index
    %c0_170 = arith.constant 0 : index
    %c0_171 = arith.constant 0 : index
    %221 = vector.load %arg14[%c0_169, %c0_170, %c0_171] : memref<2x64x256xf32, #tpu.memory_space<vmem>>, vector<1x64x256xf32>
    %222 = vector.shape_cast %221 : vector<1x64x256xf32> to vector<64x256xf32>
    %cst_172 = arith.constant dense<0.000000e+00> : vector<80x256xf32>
    %223 = tpu.matmul %220, %222, %cst_172 {dimension_numbers = #tpu.dot_dimension_numbers<[1], [0], [0], [1], [0, 0, 1, 1], [], []>} : vector<80x64xf32>, vector<64x256xf32>, vector<80x256xf32> -> vector<80x256xf32>
    %c0_173 = arith.constant 0 : index
    %c0_174 = arith.constant 0 : index
    %c0_175 = arith.constant 0 : index
    %224 = vector.load %arg15[%c0_173, %c0_174, %c0_175] : memref<2x1x256xf32, #tpu.memory_space<vmem>>, vector<1x1x256xf32>
    %225 = vector.shape_cast %224 : vector<1x1x256xf32> to vector<1x256xf32>
    %226 = vector.broadcast %225 : vector<1x256xf32> to vector<80x256xf32>
    %227 = arith.addf %223, %226 : vector<80x256xf32>
    %cst_176 = arith.constant 5.000000e-01 : f32
    %228 = vector.broadcast %cst_176 : f32 to vector<80x256xf32>
    %229 = arith.mulf %228, %227 : vector<80x256xf32>
    %cst_177 = arith.constant 0.707106769 : f32
    %230 = vector.broadcast %cst_177 : f32 to vector<80x256xf32>
    %231 = arith.mulf %227, %230 : vector<80x256xf32>
    %232 = math.erf %231 : vector<80x256xf32>
    %cst_178 = arith.constant 1.000000e+00 : f32
    %233 = vector.broadcast %cst_178 : f32 to vector<80x256xf32>
    %234 = arith.addf %233, %232 : vector<80x256xf32>
    %235 = arith.mulf %229, %234 : vector<80x256xf32>
    %c0_179 = arith.constant 0 : index
    %c0_180 = arith.constant 0 : index
    %c0_181 = arith.constant 0 : index
    %236 = vector.load %arg16[%c0_179, %c0_180, %c0_181] : memref<2x256x64xf32, #tpu.memory_space<vmem>>, vector<1x256x64xf32>
    %237 = vector.shape_cast %236 : vector<1x256x64xf32> to vector<256x64xf32>
    %cst_182 = arith.constant dense<0.000000e+00> : vector<80x64xf32>
    %238 = tpu.matmul %235, %237, %cst_182 {dimension_numbers = #tpu.dot_dimension_numbers<[1], [0], [0], [1], [0, 0, 1, 1], [], []>} : vector<80x256xf32>, vector<256x64xf32>, vector<80x64xf32> -> vector<80x64xf32>
    %c0_183 = arith.constant 0 : index
    %c0_184 = arith.constant 0 : index
    %c0_185 = arith.constant 0 : index
    %239 = vector.load %arg17[%c0_183, %c0_184, %c0_185] : memref<2x1x64xf32, #tpu.memory_space<vmem>>, vector<1x1x64xf32>
    %240 = vector.shape_cast %239 : vector<1x1x64xf32> to vector<1x64xf32>
    %241 = vector.broadcast %240 : vector<1x64xf32> to vector<80x64xf32>
    %242 = arith.addf %238, %241 : vector<80x64xf32>
    %243 = arith.addf %194, %242 : vector<80x64xf32>
    %c1_186 = arith.constant 1 : index
    %c0_187 = arith.constant 0 : index
    %c0_188 = arith.constant 0 : index
    %244 = vector.load %arg2[%c1_186, %c0_187, %c0_188] : memref<2x1x64xf32, #tpu.memory_space<vmem>>, vector<1x1x64xf32>
    %245 = vector.shape_cast %244 : vector<1x1x64xf32> to vector<1x64xf32>
    %c1_189 = arith.constant 1 : index
    %c0_190 = arith.constant 0 : index
    %c0_191 = arith.constant 0 : index
    %246 = vector.load %arg3[%c1_189, %c0_190, %c0_191] : memref<2x1x64xf32, #tpu.memory_space<vmem>>, vector<1x1x64xf32>
    %247 = vector.shape_cast %246 : vector<1x1x64xf32> to vector<1x64xf32>
    %cst_192 = arith.constant dense<0.000000e+00> : vector<80xf32>
    %248 = vector.multi_reduction <add>, %243, %cst_192 [1] : vector<80x64xf32> to vector<80xf32>
    %249 = vector.shape_cast %248 : vector<80xf32> to vector<80x1xf32>
    %cst_193 = arith.constant 6.400000e+01 : f32
    %250 = vector.broadcast %cst_193 : f32 to vector<80x1xf32>
    %251 = arith.divf %249, %250 : vector<80x1xf32>
    %252 = vector.broadcast %251 : vector<80x1xf32> to vector<80x64xf32>
    %253 = arith.subf %243, %252 : vector<80x64xf32>
    %254 = arith.mulf %253, %253 : vector<80x64xf32>
    %cst_194 = arith.constant dense<0.000000e+00> : vector<80xf32>
    %255 = vector.multi_reduction <add>, %254, %cst_194 [1] : vector<80x64xf32> to vector<80xf32>
    %256 = vector.shape_cast %255 : vector<80xf32> to vector<80x1xf32>
    %cst_195 = arith.constant 6.400000e+01 : f32
    %257 = vector.broadcast %cst_195 : f32 to vector<80x1xf32>
    %258 = arith.divf %256, %257 : vector<80x1xf32>
    %259 = vector.broadcast %251 : vector<80x1xf32> to vector<80x64xf32>
    %260 = arith.subf %243, %259 : vector<80x64xf32>
    %cst_196 = arith.constant 9.99999974E-6 : f32
    %261 = vector.broadcast %cst_196 : f32 to vector<80x1xf32>
    %262 = arith.addf %258, %261 : vector<80x1xf32>
    %263 = math.rsqrt %262 : vector<80x1xf32>
    %264 = vector.broadcast %263 : vector<80x1xf32> to vector<80x64xf32>
    %265 = arith.mulf %260, %264 : vector<80x64xf32>
    %266 = vector.broadcast %245 : vector<1x64xf32> to vector<80x64xf32>
    %267 = arith.mulf %265, %266 : vector<80x64xf32>
    %268 = vector.broadcast %247 : vector<1x64xf32> to vector<80x64xf32>
    %269 = arith.addf %267, %268 : vector<80x64xf32>
    %cst_197 = arith.constant 0.000000e+00 : f32
    %270 = vector.broadcast %cst_197 : f32 to vector<80x64xf32>
    %c1_198 = arith.constant 1 : index
    %c0_199 = arith.constant 0 : index
    %c0_200 = arith.constant 0 : index
    %c0_201 = arith.constant 0 : index
    %271 = vector.load %arg4[%c1_198, %c0_199, %c0_200, %c0_201] : memref<2x4x64x16xf32, #tpu.memory_space<vmem>>, vector<1x1x64x16xf32>
    %272 = vector.shape_cast %271 : vector<1x1x64x16xf32> to vector<64x16xf32>
    %cst_202 = arith.constant dense<0.000000e+00> : vector<80x16xf32>
    %273 = tpu.matmul %269, %272, %cst_202 {dimension_numbers = #tpu.dot_dimension_numbers<[1], [0], [0], [1], [0, 0, 1, 1], [], []>} : vector<80x64xf32>, vector<64x16xf32>, vector<80x16xf32> -> vector<80x16xf32>
    %c1_203 = arith.constant 1 : index
    %c0_204 = arith.constant 0 : index
    %c0_205 = arith.constant 0 : index
    %c0_206 = arith.constant 0 : index
    %274 = vector.load %arg5[%c1_203, %c0_204, %c0_205, %c0_206] : memref<2x4x1x16xf32, #tpu.memory_space<vmem>>, vector<1x1x1x16xf32>
    %275 = vector.shape_cast %274 : vector<1x1x1x16xf32> to vector<1x16xf32>
    %276 = vector.broadcast %275 : vector<1x16xf32> to vector<80x16xf32>
    %277 = arith.addf %273, %276 : vector<80x16xf32>
    %c1_207 = arith.constant 1 : index
    %c0_208 = arith.constant 0 : index
    %c0_209 = arith.constant 0 : index
    %c0_210 = arith.constant 0 : index
    %278 = vector.load %arg6[%c1_207, %c0_208, %c0_209, %c0_210] : memref<2x4x64x16xf32, #tpu.memory_space<vmem>>, vector<1x1x64x16xf32>
    %279 = vector.shape_cast %278 : vector<1x1x64x16xf32> to vector<64x16xf32>
    %cst_211 = arith.constant dense<0.000000e+00> : vector<80x16xf32>
    %280 = tpu.matmul %269, %279, %cst_211 {dimension_numbers = #tpu.dot_dimension_numbers<[1], [0], [0], [1], [0, 0, 1, 1], [], []>} : vector<80x64xf32>, vector<64x16xf32>, vector<80x16xf32> -> vector<80x16xf32>
    %c1_212 = arith.constant 1 : index
    %c0_213 = arith.constant 0 : index
    %c0_214 = arith.constant 0 : index
    %c0_215 = arith.constant 0 : index
    %281 = vector.load %arg7[%c1_212, %c0_213, %c0_214, %c0_215] : memref<2x4x1x16xf32, #tpu.memory_space<vmem>>, vector<1x1x1x16xf32>
    %282 = vector.shape_cast %281 : vector<1x1x1x16xf32> to vector<1x16xf32>
    %283 = vector.broadcast %282 : vector<1x16xf32> to vector<80x16xf32>
    %284 = arith.addf %280, %283 : vector<80x16xf32>
    %c1_216 = arith.constant 1 : index
    %c0_217 = arith.constant 0 : index
    %c0_218 = arith.constant 0 : index
    %c0_219 = arith.constant 0 : index
    %285 = vector.load %arg8[%c1_216, %c0_217, %c0_218, %c0_219] : memref<2x4x64x16xf32, #tpu.memory_space<vmem>>, vector<1x1x64x16xf32>
    %286 = vector.shape_cast %285 : vector<1x1x64x16xf32> to vector<64x16xf32>
    %cst_220 = arith.constant dense<0.000000e+00> : vector<80x16xf32>
    %287 = tpu.matmul %269, %286, %cst_220 {dimension_numbers = #tpu.dot_dimension_numbers<[1], [0], [0], [1], [0, 0, 1, 1], [], []>} : vector<80x64xf32>, vector<64x16xf32>, vector<80x16xf32> -> vector<80x16xf32>
    %c1_221 = arith.constant 1 : index
    %c0_222 = arith.constant 0 : index
    %c0_223 = arith.constant 0 : index
    %c0_224 = arith.constant 0 : index
    %288 = vector.load %arg9[%c1_221, %c0_222, %c0_223, %c0_224] : memref<2x4x1x16xf32, #tpu.memory_space<vmem>>, vector<1x1x1x16xf32>
    %289 = vector.shape_cast %288 : vector<1x1x1x16xf32> to vector<1x16xf32>
    %290 = vector.broadcast %289 : vector<1x16xf32> to vector<80x16xf32>
    %291 = arith.addf %287, %290 : vector<80x16xf32>
    %cst_225 = arith.constant dense<0.000000e+00> : vector<80x80xf32>
    %292 = tpu.matmul %277, %284, %cst_225 {dimension_numbers = #tpu.dot_dimension_numbers<[1], [1], [0], [0], [0, 0, 1, 0], [], []>} : vector<80x16xf32>, vector<80x16xf32>, vector<80x80xf32> -> vector<80x80xf32>
    %293 = vector.broadcast %6 : vector<1x80xf32> to vector<80x80xf32>
    %294 = arith.addf %292, %293 : vector<80x80xf32>
    %cst_226 = arith.constant dense<0xFF800000> : vector<80xf32>
    %295 = vector.multi_reduction <maximumf>, %294, %cst_226 [1] : vector<80x80xf32> to vector<80xf32>
    %296 = vector.shape_cast %295 : vector<80xf32> to vector<80x1xf32>
    %297 = vector.broadcast %296 : vector<80x1xf32> to vector<80x80xf32>
    %298 = arith.subf %294, %297 : vector<80x80xf32>
    %299 = math.exp %298 : vector<80x80xf32>
    %cst_227 = arith.constant dense<0.000000e+00> : vector<80xf32>
    %300 = vector.multi_reduction <add>, %299, %cst_227 [1] : vector<80x80xf32> to vector<80xf32>
    %301 = vector.shape_cast %300 : vector<80xf32> to vector<80x1xf32>
    %302 = tpu.reciprocal %301 {approx = true} : vector<80x1xf32> -> vector<80x1xf32>
    %303 = vector.broadcast %302 : vector<80x1xf32> to vector<80x80xf32>
    %304 = arith.mulf %299, %303 : vector<80x80xf32>
    %cst_228 = arith.constant dense<0.000000e+00> : vector<80x16xf32>
    %305 = tpu.matmul %304, %291, %cst_228 {dimension_numbers = #tpu.dot_dimension_numbers<[1], [0], [0], [1], [0, 0, 1, 1], [], []>} : vector<80x80xf32>, vector<80x16xf32>, vector<80x16xf32> -> vector<80x16xf32>
    %c1_229 = arith.constant 1 : index
    %c0_230 = arith.constant 0 : index
    %c0_231 = arith.constant 0 : index
    %c0_232 = arith.constant 0 : index
    %306 = vector.load %arg10[%c1_229, %c0_230, %c0_231, %c0_232] : memref<2x4x16x64xf32, #tpu.memory_space<vmem>>, vector<1x1x16x64xf32>
    %307 = vector.shape_cast %306 : vector<1x1x16x64xf32> to vector<16x64xf32>
    %cst_233 = arith.constant dense<0.000000e+00> : vector<80x64xf32>
    %308 = tpu.matmul %305, %307, %cst_233 {dimension_numbers = #tpu.dot_dimension_numbers<[1], [0], [0], [1], [0, 0, 1, 1], [], []>} : vector<80x16xf32>, vector<16x64xf32>, vector<80x64xf32> -> vector<80x64xf32>
    %309 = arith.addf %270, %308 : vector<80x64xf32>
    %c1_234 = arith.constant 1 : index
    %c1_235 = arith.constant 1 : index
    %c0_236 = arith.constant 0 : index
    %c0_237 = arith.constant 0 : index
    %310 = vector.load %arg4[%c1_234, %c1_235, %c0_236, %c0_237] : memref<2x4x64x16xf32, #tpu.memory_space<vmem>>, vector<1x1x64x16xf32>
    %311 = vector.shape_cast %310 : vector<1x1x64x16xf32> to vector<64x16xf32>
    %cst_238 = arith.constant dense<0.000000e+00> : vector<80x16xf32>
    %312 = tpu.matmul %269, %311, %cst_238 {dimension_numbers = #tpu.dot_dimension_numbers<[1], [0], [0], [1], [0, 0, 1, 1], [], []>} : vector<80x64xf32>, vector<64x16xf32>, vector<80x16xf32> -> vector<80x16xf32>
    %c1_239 = arith.constant 1 : index
    %c1_240 = arith.constant 1 : index
    %c0_241 = arith.constant 0 : index
    %c0_242 = arith.constant 0 : index
    %313 = vector.load %arg5[%c1_239, %c1_240, %c0_241, %c0_242] : memref<2x4x1x16xf32, #tpu.memory_space<vmem>>, vector<1x1x1x16xf32>
    %314 = vector.shape_cast %313 : vector<1x1x1x16xf32> to vector<1x16xf32>
    %315 = vector.broadcast %314 : vector<1x16xf32> to vector<80x16xf32>
    %316 = arith.addf %312, %315 : vector<80x16xf32>
    %c1_243 = arith.constant 1 : index
    %c1_244 = arith.constant 1 : index
    %c0_245 = arith.constant 0 : index
    %c0_246 = arith.constant 0 : index
    %317 = vector.load %arg6[%c1_243, %c1_244, %c0_245, %c0_246] : memref<2x4x64x16xf32, #tpu.memory_space<vmem>>, vector<1x1x64x16xf32>
    %318 = vector.shape_cast %317 : vector<1x1x64x16xf32> to vector<64x16xf32>
    %cst_247 = arith.constant dense<0.000000e+00> : vector<80x16xf32>
    %319 = tpu.matmul %269, %318, %cst_247 {dimension_numbers = #tpu.dot_dimension_numbers<[1], [0], [0], [1], [0, 0, 1, 1], [], []>} : vector<80x64xf32>, vector<64x16xf32>, vector<80x16xf32> -> vector<80x16xf32>
    %c1_248 = arith.constant 1 : index
    %c1_249 = arith.constant 1 : index
    %c0_250 = arith.constant 0 : index
    %c0_251 = arith.constant 0 : index
    %320 = vector.load %arg7[%c1_248, %c1_249, %c0_250, %c0_251] : memref<2x4x1x16xf32, #tpu.memory_space<vmem>>, vector<1x1x1x16xf32>
    %321 = vector.shape_cast %320 : vector<1x1x1x16xf32> to vector<1x16xf32>
    %322 = vector.broadcast %321 : vector<1x16xf32> to vector<80x16xf32>
    %323 = arith.addf %319, %322 : vector<80x16xf32>
    %c1_252 = arith.constant 1 : index
    %c1_253 = arith.constant 1 : index
    %c0_254 = arith.constant 0 : index
    %c0_255 = arith.constant 0 : index
    %324 = vector.load %arg8[%c1_252, %c1_253, %c0_254, %c0_255] : memref<2x4x64x16xf32, #tpu.memory_space<vmem>>, vector<1x1x64x16xf32>
    %325 = vector.shape_cast %324 : vector<1x1x64x16xf32> to vector<64x16xf32>
    %cst_256 = arith.constant dense<0.000000e+00> : vector<80x16xf32>
    %326 = tpu.matmul %269, %325, %cst_256 {dimension_numbers = #tpu.dot_dimension_numbers<[1], [0], [0], [1], [0, 0, 1, 1], [], []>} : vector<80x64xf32>, vector<64x16xf32>, vector<80x16xf32> -> vector<80x16xf32>
    %c1_257 = arith.constant 1 : index
    %c1_258 = arith.constant 1 : index
    %c0_259 = arith.constant 0 : index
    %c0_260 = arith.constant 0 : index
    %327 = vector.load %arg9[%c1_257, %c1_258, %c0_259, %c0_260] : memref<2x4x1x16xf32, #tpu.memory_space<vmem>>, vector<1x1x1x16xf32>
    %328 = vector.shape_cast %327 : vector<1x1x1x16xf32> to vector<1x16xf32>
    %329 = vector.broadcast %328 : vector<1x16xf32> to vector<80x16xf32>
    %330 = arith.addf %326, %329 : vector<80x16xf32>
    %cst_261 = arith.constant dense<0.000000e+00> : vector<80x80xf32>
    %331 = tpu.matmul %316, %323, %cst_261 {dimension_numbers = #tpu.dot_dimension_numbers<[1], [1], [0], [0], [0, 0, 1, 0], [], []>} : vector<80x16xf32>, vector<80x16xf32>, vector<80x80xf32> -> vector<80x80xf32>
    %332 = vector.broadcast %6 : vector<1x80xf32> to vector<80x80xf32>
    %333 = arith.addf %331, %332 : vector<80x80xf32>
    %cst_262 = arith.constant dense<0xFF800000> : vector<80xf32>
    %334 = vector.multi_reduction <maximumf>, %333, %cst_262 [1] : vector<80x80xf32> to vector<80xf32>
    %335 = vector.shape_cast %334 : vector<80xf32> to vector<80x1xf32>
    %336 = vector.broadcast %335 : vector<80x1xf32> to vector<80x80xf32>
    %337 = arith.subf %333, %336 : vector<80x80xf32>
    %338 = math.exp %337 : vector<80x80xf32>
    %cst_263 = arith.constant dense<0.000000e+00> : vector<80xf32>
    %339 = vector.multi_reduction <add>, %338, %cst_263 [1] : vector<80x80xf32> to vector<80xf32>
    %340 = vector.shape_cast %339 : vector<80xf32> to vector<80x1xf32>
    %341 = tpu.reciprocal %340 {approx = true} : vector<80x1xf32> -> vector<80x1xf32>
    %342 = vector.broadcast %341 : vector<80x1xf32> to vector<80x80xf32>
    %343 = arith.mulf %338, %342 : vector<80x80xf32>
    %cst_264 = arith.constant dense<0.000000e+00> : vector<80x16xf32>
    %344 = tpu.matmul %343, %330, %cst_264 {dimension_numbers = #tpu.dot_dimension_numbers<[1], [0], [0], [1], [0, 0, 1, 1], [], []>} : vector<80x80xf32>, vector<80x16xf32>, vector<80x16xf32> -> vector<80x16xf32>
    %c1_265 = arith.constant 1 : index
    %c1_266 = arith.constant 1 : index
    %c0_267 = arith.constant 0 : index
    %c0_268 = arith.constant 0 : index
    %345 = vector.load %arg10[%c1_265, %c1_266, %c0_267, %c0_268] : memref<2x4x16x64xf32, #tpu.memory_space<vmem>>, vector<1x1x16x64xf32>
    %346 = vector.shape_cast %345 : vector<1x1x16x64xf32> to vector<16x64xf32>
    %cst_269 = arith.constant dense<0.000000e+00> : vector<80x64xf32>
    %347 = tpu.matmul %344, %346, %cst_269 {dimension_numbers = #tpu.dot_dimension_numbers<[1], [0], [0], [1], [0, 0, 1, 1], [], []>} : vector<80x16xf32>, vector<16x64xf32>, vector<80x64xf32> -> vector<80x64xf32>
    %348 = arith.addf %309, %347 : vector<80x64xf32>
    %c1_270 = arith.constant 1 : index
    %c2_271 = arith.constant 2 : index
    %c0_272 = arith.constant 0 : index
    %c0_273 = arith.constant 0 : index
    %349 = vector.load %arg4[%c1_270, %c2_271, %c0_272, %c0_273] : memref<2x4x64x16xf32, #tpu.memory_space<vmem>>, vector<1x1x64x16xf32>
    %350 = vector.shape_cast %349 : vector<1x1x64x16xf32> to vector<64x16xf32>
    %cst_274 = arith.constant dense<0.000000e+00> : vector<80x16xf32>
    %351 = tpu.matmul %269, %350, %cst_274 {dimension_numbers = #tpu.dot_dimension_numbers<[1], [0], [0], [1], [0, 0, 1, 1], [], []>} : vector<80x64xf32>, vector<64x16xf32>, vector<80x16xf32> -> vector<80x16xf32>
    %c1_275 = arith.constant 1 : index
    %c2_276 = arith.constant 2 : index
    %c0_277 = arith.constant 0 : index
    %c0_278 = arith.constant 0 : index
    %352 = vector.load %arg5[%c1_275, %c2_276, %c0_277, %c0_278] : memref<2x4x1x16xf32, #tpu.memory_space<vmem>>, vector<1x1x1x16xf32>
    %353 = vector.shape_cast %352 : vector<1x1x1x16xf32> to vector<1x16xf32>
    %354 = vector.broadcast %353 : vector<1x16xf32> to vector<80x16xf32>
    %355 = arith.addf %351, %354 : vector<80x16xf32>
    %c1_279 = arith.constant 1 : index
    %c2_280 = arith.constant 2 : index
    %c0_281 = arith.constant 0 : index
    %c0_282 = arith.constant 0 : index
    %356 = vector.load %arg6[%c1_279, %c2_280, %c0_281, %c0_282] : memref<2x4x64x16xf32, #tpu.memory_space<vmem>>, vector<1x1x64x16xf32>
    %357 = vector.shape_cast %356 : vector<1x1x64x16xf32> to vector<64x16xf32>
    %cst_283 = arith.constant dense<0.000000e+00> : vector<80x16xf32>
    %358 = tpu.matmul %269, %357, %cst_283 {dimension_numbers = #tpu.dot_dimension_numbers<[1], [0], [0], [1], [0, 0, 1, 1], [], []>} : vector<80x64xf32>, vector<64x16xf32>, vector<80x16xf32> -> vector<80x16xf32>
    %c1_284 = arith.constant 1 : index
    %c2_285 = arith.constant 2 : index
    %c0_286 = arith.constant 0 : index
    %c0_287 = arith.constant 0 : index
    %359 = vector.load %arg7[%c1_284, %c2_285, %c0_286, %c0_287] : memref<2x4x1x16xf32, #tpu.memory_space<vmem>>, vector<1x1x1x16xf32>
    %360 = vector.shape_cast %359 : vector<1x1x1x16xf32> to vector<1x16xf32>
    %361 = vector.broadcast %360 : vector<1x16xf32> to vector<80x16xf32>
    %362 = arith.addf %358, %361 : vector<80x16xf32>
    %c1_288 = arith.constant 1 : index
    %c2_289 = arith.constant 2 : index
    %c0_290 = arith.constant 0 : index
    %c0_291 = arith.constant 0 : index
    %363 = vector.load %arg8[%c1_288, %c2_289, %c0_290, %c0_291] : memref<2x4x64x16xf32, #tpu.memory_space<vmem>>, vector<1x1x64x16xf32>
    %364 = vector.shape_cast %363 : vector<1x1x64x16xf32> to vector<64x16xf32>
    %cst_292 = arith.constant dense<0.000000e+00> : vector<80x16xf32>
    %365 = tpu.matmul %269, %364, %cst_292 {dimension_numbers = #tpu.dot_dimension_numbers<[1], [0], [0], [1], [0, 0, 1, 1], [], []>} : vector<80x64xf32>, vector<64x16xf32>, vector<80x16xf32> -> vector<80x16xf32>
    %c1_293 = arith.constant 1 : index
    %c2_294 = arith.constant 2 : index
    %c0_295 = arith.constant 0 : index
    %c0_296 = arith.constant 0 : index
    %366 = vector.load %arg9[%c1_293, %c2_294, %c0_295, %c0_296] : memref<2x4x1x16xf32, #tpu.memory_space<vmem>>, vector<1x1x1x16xf32>
    %367 = vector.shape_cast %366 : vector<1x1x1x16xf32> to vector<1x16xf32>
    %368 = vector.broadcast %367 : vector<1x16xf32> to vector<80x16xf32>
    %369 = arith.addf %365, %368 : vector<80x16xf32>
    %cst_297 = arith.constant dense<0.000000e+00> : vector<80x80xf32>
    %370 = tpu.matmul %355, %362, %cst_297 {dimension_numbers = #tpu.dot_dimension_numbers<[1], [1], [0], [0], [0, 0, 1, 0], [], []>} : vector<80x16xf32>, vector<80x16xf32>, vector<80x80xf32> -> vector<80x80xf32>
    %371 = vector.broadcast %6 : vector<1x80xf32> to vector<80x80xf32>
    %372 = arith.addf %370, %371 : vector<80x80xf32>
    %cst_298 = arith.constant dense<0xFF800000> : vector<80xf32>
    %373 = vector.multi_reduction <maximumf>, %372, %cst_298 [1] : vector<80x80xf32> to vector<80xf32>
    %374 = vector.shape_cast %373 : vector<80xf32> to vector<80x1xf32>
    %375 = vector.broadcast %374 : vector<80x1xf32> to vector<80x80xf32>
    %376 = arith.subf %372, %375 : vector<80x80xf32>
    %377 = math.exp %376 : vector<80x80xf32>
    %cst_299 = arith.constant dense<0.000000e+00> : vector<80xf32>
    %378 = vector.multi_reduction <add>, %377, %cst_299 [1] : vector<80x80xf32> to vector<80xf32>
    %379 = vector.shape_cast %378 : vector<80xf32> to vector<80x1xf32>
    %380 = tpu.reciprocal %379 {approx = true} : vector<80x1xf32> -> vector<80x1xf32>
    %381 = vector.broadcast %380 : vector<80x1xf32> to vector<80x80xf32>
    %382 = arith.mulf %377, %381 : vector<80x80xf32>
    %cst_300 = arith.constant dense<0.000000e+00> : vector<80x16xf32>
    %383 = tpu.matmul %382, %369, %cst_300 {dimension_numbers = #tpu.dot_dimension_numbers<[1], [0], [0], [1], [0, 0, 1, 1], [], []>} : vector<80x80xf32>, vector<80x16xf32>, vector<80x16xf32> -> vector<80x16xf32>
    %c1_301 = arith.constant 1 : index
    %c2_302 = arith.constant 2 : index
    %c0_303 = arith.constant 0 : index
    %c0_304 = arith.constant 0 : index
    %384 = vector.load %arg10[%c1_301, %c2_302, %c0_303, %c0_304] : memref<2x4x16x64xf32, #tpu.memory_space<vmem>>, vector<1x1x16x64xf32>
    %385 = vector.shape_cast %384 : vector<1x1x16x64xf32> to vector<16x64xf32>
    %cst_305 = arith.constant dense<0.000000e+00> : vector<80x64xf32>
    %386 = tpu.matmul %383, %385, %cst_305 {dimension_numbers = #tpu.dot_dimension_numbers<[1], [0], [0], [1], [0, 0, 1, 1], [], []>} : vector<80x16xf32>, vector<16x64xf32>, vector<80x64xf32> -> vector<80x64xf32>
    %387 = arith.addf %348, %386 : vector<80x64xf32>
    %c1_306 = arith.constant 1 : index
    %c3_307 = arith.constant 3 : index
    %c0_308 = arith.constant 0 : index
    %c0_309 = arith.constant 0 : index
    %388 = vector.load %arg4[%c1_306, %c3_307, %c0_308, %c0_309] : memref<2x4x64x16xf32, #tpu.memory_space<vmem>>, vector<1x1x64x16xf32>
    %389 = vector.shape_cast %388 : vector<1x1x64x16xf32> to vector<64x16xf32>
    %cst_310 = arith.constant dense<0.000000e+00> : vector<80x16xf32>
    %390 = tpu.matmul %269, %389, %cst_310 {dimension_numbers = #tpu.dot_dimension_numbers<[1], [0], [0], [1], [0, 0, 1, 1], [], []>} : vector<80x64xf32>, vector<64x16xf32>, vector<80x16xf32> -> vector<80x16xf32>
    %c1_311 = arith.constant 1 : index
    %c3_312 = arith.constant 3 : index
    %c0_313 = arith.constant 0 : index
    %c0_314 = arith.constant 0 : index
    %391 = vector.load %arg5[%c1_311, %c3_312, %c0_313, %c0_314] : memref<2x4x1x16xf32, #tpu.memory_space<vmem>>, vector<1x1x1x16xf32>
    %392 = vector.shape_cast %391 : vector<1x1x1x16xf32> to vector<1x16xf32>
    %393 = vector.broadcast %392 : vector<1x16xf32> to vector<80x16xf32>
    %394 = arith.addf %390, %393 : vector<80x16xf32>
    %c1_315 = arith.constant 1 : index
    %c3_316 = arith.constant 3 : index
    %c0_317 = arith.constant 0 : index
    %c0_318 = arith.constant 0 : index
    %395 = vector.load %arg6[%c1_315, %c3_316, %c0_317, %c0_318] : memref<2x4x64x16xf32, #tpu.memory_space<vmem>>, vector<1x1x64x16xf32>
    %396 = vector.shape_cast %395 : vector<1x1x64x16xf32> to vector<64x16xf32>
    %cst_319 = arith.constant dense<0.000000e+00> : vector<80x16xf32>
    %397 = tpu.matmul %269, %396, %cst_319 {dimension_numbers = #tpu.dot_dimension_numbers<[1], [0], [0], [1], [0, 0, 1, 1], [], []>} : vector<80x64xf32>, vector<64x16xf32>, vector<80x16xf32> -> vector<80x16xf32>
    %c1_320 = arith.constant 1 : index
    %c3_321 = arith.constant 3 : index
    %c0_322 = arith.constant 0 : index
    %c0_323 = arith.constant 0 : index
    %398 = vector.load %arg7[%c1_320, %c3_321, %c0_322, %c0_323] : memref<2x4x1x16xf32, #tpu.memory_space<vmem>>, vector<1x1x1x16xf32>
    %399 = vector.shape_cast %398 : vector<1x1x1x16xf32> to vector<1x16xf32>
    %400 = vector.broadcast %399 : vector<1x16xf32> to vector<80x16xf32>
    %401 = arith.addf %397, %400 : vector<80x16xf32>
    %c1_324 = arith.constant 1 : index
    %c3_325 = arith.constant 3 : index
    %c0_326 = arith.constant 0 : index
    %c0_327 = arith.constant 0 : index
    %402 = vector.load %arg8[%c1_324, %c3_325, %c0_326, %c0_327] : memref<2x4x64x16xf32, #tpu.memory_space<vmem>>, vector<1x1x64x16xf32>
    %403 = vector.shape_cast %402 : vector<1x1x64x16xf32> to vector<64x16xf32>
    %cst_328 = arith.constant dense<0.000000e+00> : vector<80x16xf32>
    %404 = tpu.matmul %269, %403, %cst_328 {dimension_numbers = #tpu.dot_dimension_numbers<[1], [0], [0], [1], [0, 0, 1, 1], [], []>} : vector<80x64xf32>, vector<64x16xf32>, vector<80x16xf32> -> vector<80x16xf32>
    %c1_329 = arith.constant 1 : index
    %c3_330 = arith.constant 3 : index
    %c0_331 = arith.constant 0 : index
    %c0_332 = arith.constant 0 : index
    %405 = vector.load %arg9[%c1_329, %c3_330, %c0_331, %c0_332] : memref<2x4x1x16xf32, #tpu.memory_space<vmem>>, vector<1x1x1x16xf32>
    %406 = vector.shape_cast %405 : vector<1x1x1x16xf32> to vector<1x16xf32>
    %407 = vector.broadcast %406 : vector<1x16xf32> to vector<80x16xf32>
    %408 = arith.addf %404, %407 : vector<80x16xf32>
    %cst_333 = arith.constant dense<0.000000e+00> : vector<80x80xf32>
    %409 = tpu.matmul %394, %401, %cst_333 {dimension_numbers = #tpu.dot_dimension_numbers<[1], [1], [0], [0], [0, 0, 1, 0], [], []>} : vector<80x16xf32>, vector<80x16xf32>, vector<80x80xf32> -> vector<80x80xf32>
    %410 = vector.broadcast %6 : vector<1x80xf32> to vector<80x80xf32>
    %411 = arith.addf %409, %410 : vector<80x80xf32>
    %cst_334 = arith.constant dense<0xFF800000> : vector<80xf32>
    %412 = vector.multi_reduction <maximumf>, %411, %cst_334 [1] : vector<80x80xf32> to vector<80xf32>
    %413 = vector.shape_cast %412 : vector<80xf32> to vector<80x1xf32>
    %414 = vector.broadcast %413 : vector<80x1xf32> to vector<80x80xf32>
    %415 = arith.subf %411, %414 : vector<80x80xf32>
    %416 = math.exp %415 : vector<80x80xf32>
    %cst_335 = arith.constant dense<0.000000e+00> : vector<80xf32>
    %417 = vector.multi_reduction <add>, %416, %cst_335 [1] : vector<80x80xf32> to vector<80xf32>
    %418 = vector.shape_cast %417 : vector<80xf32> to vector<80x1xf32>
    %419 = tpu.reciprocal %418 {approx = true} : vector<80x1xf32> -> vector<80x1xf32>
    %420 = vector.broadcast %419 : vector<80x1xf32> to vector<80x80xf32>
    %421 = arith.mulf %416, %420 : vector<80x80xf32>
    %cst_336 = arith.constant dense<0.000000e+00> : vector<80x16xf32>
    %422 = tpu.matmul %421, %408, %cst_336 {dimension_numbers = #tpu.dot_dimension_numbers<[1], [0], [0], [1], [0, 0, 1, 1], [], []>} : vector<80x80xf32>, vector<80x16xf32>, vector<80x16xf32> -> vector<80x16xf32>
    %c1_337 = arith.constant 1 : index
    %c3_338 = arith.constant 3 : index
    %c0_339 = arith.constant 0 : index
    %c0_340 = arith.constant 0 : index
    %423 = vector.load %arg10[%c1_337, %c3_338, %c0_339, %c0_340] : memref<2x4x16x64xf32, #tpu.memory_space<vmem>>, vector<1x1x16x64xf32>
    %424 = vector.shape_cast %423 : vector<1x1x16x64xf32> to vector<16x64xf32>
    %cst_341 = arith.constant dense<0.000000e+00> : vector<80x64xf32>
    %425 = tpu.matmul %422, %424, %cst_341 {dimension_numbers = #tpu.dot_dimension_numbers<[1], [0], [0], [1], [0, 0, 1, 1], [], []>} : vector<80x16xf32>, vector<16x64xf32>, vector<80x64xf32> -> vector<80x64xf32>
    %426 = arith.addf %387, %425 : vector<80x64xf32>
    %427 = arith.addf %243, %426 : vector<80x64xf32>
    %c1_342 = arith.constant 1 : index
    %c0_343 = arith.constant 0 : index
    %c0_344 = arith.constant 0 : index
    %428 = vector.load %arg11[%c1_342, %c0_343, %c0_344] : memref<2x1x64xf32, #tpu.memory_space<vmem>>, vector<1x1x64xf32>
    %429 = vector.shape_cast %428 : vector<1x1x64xf32> to vector<1x64xf32>
    %430 = vector.broadcast %429 : vector<1x64xf32> to vector<80x64xf32>
    %431 = arith.addf %427, %430 : vector<80x64xf32>
    %c1_345 = arith.constant 1 : index
    %c0_346 = arith.constant 0 : index
    %c0_347 = arith.constant 0 : index
    %432 = vector.load %arg12[%c1_345, %c0_346, %c0_347] : memref<2x1x64xf32, #tpu.memory_space<vmem>>, vector<1x1x64xf32>
    %433 = vector.shape_cast %432 : vector<1x1x64xf32> to vector<1x64xf32>
    %c1_348 = arith.constant 1 : index
    %c0_349 = arith.constant 0 : index
    %c0_350 = arith.constant 0 : index
    %434 = vector.load %arg13[%c1_348, %c0_349, %c0_350] : memref<2x1x64xf32, #tpu.memory_space<vmem>>, vector<1x1x64xf32>
    %435 = vector.shape_cast %434 : vector<1x1x64xf32> to vector<1x64xf32>
    %cst_351 = arith.constant dense<0.000000e+00> : vector<80xf32>
    %436 = vector.multi_reduction <add>, %431, %cst_351 [1] : vector<80x64xf32> to vector<80xf32>
    %437 = vector.shape_cast %436 : vector<80xf32> to vector<80x1xf32>
    %cst_352 = arith.constant 6.400000e+01 : f32
    %438 = vector.broadcast %cst_352 : f32 to vector<80x1xf32>
    %439 = arith.divf %437, %438 : vector<80x1xf32>
    %440 = vector.broadcast %439 : vector<80x1xf32> to vector<80x64xf32>
    %441 = arith.subf %431, %440 : vector<80x64xf32>
    %442 = arith.mulf %441, %441 : vector<80x64xf32>
    %cst_353 = arith.constant dense<0.000000e+00> : vector<80xf32>
    %443 = vector.multi_reduction <add>, %442, %cst_353 [1] : vector<80x64xf32> to vector<80xf32>
    %444 = vector.shape_cast %443 : vector<80xf32> to vector<80x1xf32>
    %cst_354 = arith.constant 6.400000e+01 : f32
    %445 = vector.broadcast %cst_354 : f32 to vector<80x1xf32>
    %446 = arith.divf %444, %445 : vector<80x1xf32>
    %447 = vector.broadcast %439 : vector<80x1xf32> to vector<80x64xf32>
    %448 = arith.subf %431, %447 : vector<80x64xf32>
    %cst_355 = arith.constant 9.99999974E-6 : f32
    %449 = vector.broadcast %cst_355 : f32 to vector<80x1xf32>
    %450 = arith.addf %446, %449 : vector<80x1xf32>
    %451 = math.rsqrt %450 : vector<80x1xf32>
    %452 = vector.broadcast %451 : vector<80x1xf32> to vector<80x64xf32>
    %453 = arith.mulf %448, %452 : vector<80x64xf32>
    %454 = vector.broadcast %433 : vector<1x64xf32> to vector<80x64xf32>
    %455 = arith.mulf %453, %454 : vector<80x64xf32>
    %456 = vector.broadcast %435 : vector<1x64xf32> to vector<80x64xf32>
    %457 = arith.addf %455, %456 : vector<80x64xf32>
    %c1_356 = arith.constant 1 : index
    %c0_357 = arith.constant 0 : index
    %c0_358 = arith.constant 0 : index
    %458 = vector.load %arg14[%c1_356, %c0_357, %c0_358] : memref<2x64x256xf32, #tpu.memory_space<vmem>>, vector<1x64x256xf32>
    %459 = vector.shape_cast %458 : vector<1x64x256xf32> to vector<64x256xf32>
    %cst_359 = arith.constant dense<0.000000e+00> : vector<80x256xf32>
    %460 = tpu.matmul %457, %459, %cst_359 {dimension_numbers = #tpu.dot_dimension_numbers<[1], [0], [0], [1], [0, 0, 1, 1], [], []>} : vector<80x64xf32>, vector<64x256xf32>, vector<80x256xf32> -> vector<80x256xf32>
    %c1_360 = arith.constant 1 : index
    %c0_361 = arith.constant 0 : index
    %c0_362 = arith.constant 0 : index
    %461 = vector.load %arg15[%c1_360, %c0_361, %c0_362] : memref<2x1x256xf32, #tpu.memory_space<vmem>>, vector<1x1x256xf32>
    %462 = vector.shape_cast %461 : vector<1x1x256xf32> to vector<1x256xf32>
    %463 = vector.broadcast %462 : vector<1x256xf32> to vector<80x256xf32>
    %464 = arith.addf %460, %463 : vector<80x256xf32>
    %cst_363 = arith.constant 5.000000e-01 : f32
    %465 = vector.broadcast %cst_363 : f32 to vector<80x256xf32>
    %466 = arith.mulf %465, %464 : vector<80x256xf32>
    %cst_364 = arith.constant 0.707106769 : f32
    %467 = vector.broadcast %cst_364 : f32 to vector<80x256xf32>
    %468 = arith.mulf %464, %467 : vector<80x256xf32>
    %469 = math.erf %468 : vector<80x256xf32>
    %cst_365 = arith.constant 1.000000e+00 : f32
    %470 = vector.broadcast %cst_365 : f32 to vector<80x256xf32>
    %471 = arith.addf %470, %469 : vector<80x256xf32>
    %472 = arith.mulf %466, %471 : vector<80x256xf32>
    %c1_366 = arith.constant 1 : index
    %c0_367 = arith.constant 0 : index
    %c0_368 = arith.constant 0 : index
    %473 = vector.load %arg16[%c1_366, %c0_367, %c0_368] : memref<2x256x64xf32, #tpu.memory_space<vmem>>, vector<1x256x64xf32>
    %474 = vector.shape_cast %473 : vector<1x256x64xf32> to vector<256x64xf32>
    %cst_369 = arith.constant dense<0.000000e+00> : vector<80x64xf32>
    %475 = tpu.matmul %472, %474, %cst_369 {dimension_numbers = #tpu.dot_dimension_numbers<[1], [0], [0], [1], [0, 0, 1, 1], [], []>} : vector<80x256xf32>, vector<256x64xf32>, vector<80x64xf32> -> vector<80x64xf32>
    %c1_370 = arith.constant 1 : index
    %c0_371 = arith.constant 0 : index
    %c0_372 = arith.constant 0 : index
    %476 = vector.load %arg17[%c1_370, %c0_371, %c0_372] : memref<2x1x64xf32, #tpu.memory_space<vmem>>, vector<1x1x64xf32>
    %477 = vector.shape_cast %476 : vector<1x1x64xf32> to vector<1x64xf32>
    %478 = vector.broadcast %477 : vector<1x64xf32> to vector<80x64xf32>
    %479 = arith.addf %475, %478 : vector<80x64xf32>
    %480 = arith.addf %431, %479 : vector<80x64xf32>
    %481 = vector.extract_strided_slice %480 {offsets = [0, 0], sizes = [1, 64], strides = [1, 1]} : vector<80x64xf32> to vector<1x64xf32>
    %c0_373 = arith.constant 0 : index
    %c0_374 = arith.constant 0 : index
    %482 = vector.load %arg18[%c0_373, %c0_374] : memref<1x64xf32, #tpu.memory_space<vmem>>, vector<1x64xf32>
    %c0_375 = arith.constant 0 : index
    %c0_376 = arith.constant 0 : index
    %483 = vector.load %arg19[%c0_375, %c0_376] : memref<1x64xf32, #tpu.memory_space<vmem>>, vector<1x64xf32>
    %cst_377 = arith.constant dense<0.000000e+00> : vector<1xf32>
    %484 = vector.multi_reduction <add>, %481, %cst_377 [1] : vector<1x64xf32> to vector<1xf32>
    %485 = vector.shape_cast %484 : vector<1xf32> to vector<1x1xf32>
    %cst_378 = arith.constant 6.400000e+01 : f32
    %486 = vector.broadcast %cst_378 : f32 to vector<1x1xf32>
    %487 = arith.divf %485, %486 : vector<1x1xf32>
    %488 = vector.broadcast %487 : vector<1x1xf32> to vector<1x64xf32>
    %489 = arith.subf %481, %488 : vector<1x64xf32>
    %490 = arith.mulf %489, %489 : vector<1x64xf32>
    %cst_379 = arith.constant dense<0.000000e+00> : vector<1xf32>
    %491 = vector.multi_reduction <add>, %490, %cst_379 [1] : vector<1x64xf32> to vector<1xf32>
    %492 = vector.shape_cast %491 : vector<1xf32> to vector<1x1xf32>
    %cst_380 = arith.constant 6.400000e+01 : f32
    %493 = vector.broadcast %cst_380 : f32 to vector<1x1xf32>
    %494 = arith.divf %492, %493 : vector<1x1xf32>
    %495 = vector.broadcast %487 : vector<1x1xf32> to vector<1x64xf32>
    %496 = arith.subf %481, %495 : vector<1x64xf32>
    %cst_381 = arith.constant 9.99999974E-6 : f32
    %497 = vector.broadcast %cst_381 : f32 to vector<1x1xf32>
    %498 = arith.addf %494, %497 : vector<1x1xf32>
    %499 = math.rsqrt %498 : vector<1x1xf32>
    %500 = vector.broadcast %499 : vector<1x1xf32> to vector<1x64xf32>
    %501 = arith.mulf %496, %500 : vector<1x64xf32>
    %502 = arith.mulf %501, %482 : vector<1x64xf32>
    %503 = arith.addf %502, %483 : vector<1x64xf32>
    %c0_382 = arith.constant 0 : index
    %c0_383 = arith.constant 0 : index
    %504 = vector.load %arg20[%c0_382, %c0_383] : memref<64x2048xf32, #tpu.memory_space<vmem>>, vector<64x2048xf32>
    %cst_384 = arith.constant dense<0.000000e+00> : vector<1x2048xf32>
    %505 = tpu.matmul %503, %504, %cst_384 {dimension_numbers = #tpu.dot_dimension_numbers<[1], [0], [0], [1], [0, 0, 1, 1], [], []>} : vector<1x64xf32>, vector<64x2048xf32>, vector<1x2048xf32> -> vector<1x2048xf32>
    %c0_385 = arith.constant 0 : index
    %c0_386 = arith.constant 0 : index
    %506 = vector.load %arg21[%c0_385, %c0_386] : memref<1x2048xf32, #tpu.memory_space<vmem>>, vector<1x2048xf32>
    %507 = arith.addf %505, %506 : vector<1x2048xf32>
    %c0_387 = arith.constant 0 : index
    %c0_388 = arith.constant 0 : index
    %508 = vector.load %arg22[%c0_387, %c0_388] : memref<1x2048xf32, #tpu.memory_space<vmem>>, vector<1x2048xf32>
    tpu.vector_store %arg22[%c0_387, %c0_388], %507 {strides = array<i32>} : memref<1x2048xf32, #tpu.memory_space<vmem>>, vector<1x2048xf32>,
    return
  }
  func.func @transform_0(%arg0: i32) -> (i32, i32) {
    %c0_i32 = arith.constant 0 : i32
    %c0_i32_0 = arith.constant 0 : i32
    %c0_i32_1 = arith.constant 0 : i32
    return %c0_i32, %c0_i32_0 : i32, i32
  }
  func.func @transform_1(%arg0: i32) -> (i32, i32, i32) {
    %c0_i32 = arith.constant 0 : i32
    %c0_i32_0 = arith.constant 0 : i32
    %c0_i32_1 = arith.constant 0 : i32
    %c0_i32_2 = arith.constant 0 : i32
    return %c0_i32, %c0_i32_0, %c0_i32_1 : i32, i32, i32
  }
  func.func @transform_2(%arg0: i32) -> (i32, i32, i32) {
    %c0_i32 = arith.constant 0 : i32
    %c0_i32_0 = arith.constant 0 : i32
    %c0_i32_1 = arith.constant 0 : i32
    %c0_i32_2 = arith.constant 0 : i32
    return %c0_i32, %c0_i32_0, %c0_i32_1 : i32, i32, i32
  }
  func.func @transform_3(%arg0: i32) -> (i32, i32, i32, i32) {
    %c0_i32 = arith.constant 0 : i32
    %c0_i32_0 = arith.constant 0 : i32
    %c0_i32_1 = arith.constant 0 : i32
    %c0_i32_2 = arith.constant 0 : i32
    %c0_i32_3 = arith.constant 0 : i32
    return %c0_i32, %c0_i32_0, %c0_i32_1, %c0_i32_2 : i32, i32, i32, i32
  }
  func.func @transform_4(%arg0: i32) -> (i32, i32, i32, i32) {
    %c0_i32 = arith.constant 0 : i32
    %c0_i32_0 = arith.constant 0 : i32
    %c0_i32_1 = arith.constant 0 : i32
    %c0_i32_2 = arith.constant 0 : i32
    %c0_i32_3 = arith.constant 0 : i32
    return %c0_i32, %c0_i32_0, %c0_i32_1, %c0_i32_2 : i32, i32, i32, i32
  }
  func.func @transform_5(%arg0: i32) -> (i32, i32, i32, i32) {
    %c0_i32 = arith.constant 0 : i32
    %c0_i32_0 = arith.constant 0 : i32
    %c0_i32_1 = arith.constant 0 : i32
    %c0_i32_2 = arith.constant 0 : i32
    %c0_i32_3 = arith.constant 0 : i32
    return %c0_i32, %c0_i32_0, %c0_i32_1, %c0_i32_2 : i32, i32, i32, i32
  }
  func.func @transform_6(%arg0: i32) -> (i32, i32, i32, i32) {
    %c0_i32 = arith.constant 0 : i32
    %c0_i32_0 = arith.constant 0 : i32
    %c0_i32_1 = arith.constant 0 : i32
    %c0_i32_2 = arith.constant 0 : i32
    %c0_i32_3 = arith.constant 0 : i32
    return %c0_i32, %c0_i32_0, %c0_i32_1, %c0_i32_2 : i32, i32, i32, i32
  }
  func.func @transform_7(%arg0: i32) -> (i32, i32, i32, i32) {
    %c0_i32 = arith.constant 0 : i32
    %c0_i32_0 = arith.constant 0 : i32
    %c0_i32_1 = arith.constant 0 : i32
    %c0_i32_2 = arith.constant 0 : i32
    %c0_i32_3 = arith.constant 0 : i32
    return %c0_i32, %c0_i32_0, %c0_i32_1, %c0_i32_2 : i32, i32, i32, i32
  }
  func.func @transform_8(%arg0: i32) -> (i32, i32, i32, i32) {
    %c0_i32 = arith.constant 0 : i32
    %c0_i32_0 = arith.constant 0 : i32
    %c0_i32_1 = arith.constant 0 : i32
    %c0_i32_2 = arith.constant 0 : i32
    %c0_i32_3 = arith.constant 0 : i32
    return %c0_i32, %c0_i32_0, %c0_i32_1, %c0_i32_2 : i32, i32, i32, i32
  }
  func.func @transform_9(%arg0: i32) -> (i32, i32, i32, i32) {
    %c0_i32 = arith.constant 0 : i32
    %c0_i32_0 = arith.constant 0 : i32
    %c0_i32_1 = arith.constant 0 : i32
    %c0_i32_2 = arith.constant 0 : i32
    %c0_i32_3 = arith.constant 0 : i32
    return %c0_i32, %c0_i32_0, %c0_i32_1, %c0_i32_2 : i32, i32, i32, i32
  }
  func.func @transform_10(%arg0: i32) -> (i32, i32, i32) {
    %c0_i32 = arith.constant 0 : i32
    %c0_i32_0 = arith.constant 0 : i32
    %c0_i32_1 = arith.constant 0 : i32
    %c0_i32_2 = arith.constant 0 : i32
    return %c0_i32, %c0_i32_0, %c0_i32_1 : i32, i32, i32
  }
  func.func @transform_11(%arg0: i32) -> (i32, i32, i32) {
    %c0_i32 = arith.constant 0 : i32
    %c0_i32_0 = arith.constant 0 : i32
    %c0_i32_1 = arith.constant 0 : i32
    %c0_i32_2 = arith.constant 0 : i32
    return %c0_i32, %c0_i32_0, %c0_i32_1 : i32, i32, i32
  }
  func.func @transform_12(%arg0: i32) -> (i32, i32, i32) {
    %c0_i32 = arith.constant 0 : i32
    %c0_i32_0 = arith.constant 0 : i32
    %c0_i32_1 = arith.constant 0 : i32
    %c0_i32_2 = arith.constant 0 : i32
    return %c0_i32, %c0_i32_0, %c0_i32_1 : i32, i32, i32
  }
  func.func @transform_13(%arg0: i32) -> (i32, i32, i32) {
    %c0_i32 = arith.constant 0 : i32
    %c0_i32_0 = arith.constant 0 : i32
    %c0_i32_1 = arith.constant 0 : i32
    %c0_i32_2 = arith.constant 0 : i32
    return %c0_i32, %c0_i32_0, %c0_i32_1 : i32, i32, i32
  }
  func.func @transform_14(%arg0: i32) -> (i32, i32, i32) {
    %c0_i32 = arith.constant 0 : i32
    %c0_i32_0 = arith.constant 0 : i32
    %c0_i32_1 = arith.constant 0 : i32
    %c0_i32_2 = arith.constant 0 : i32
    return %c0_i32, %c0_i32_0, %c0_i32_1 : i32, i32, i32
  }
  func.func @transform_15(%arg0: i32) -> (i32, i32, i32) {
    %c0_i32 = arith.constant 0 : i32
    %c0_i32_0 = arith.constant 0 : i32
    %c0_i32_1 = arith.constant 0 : i32
    %c0_i32_2 = arith.constant 0 : i32
    return %c0_i32, %c0_i32_0, %c0_i32_1 : i32, i32, i32
  }
  func.func @transform_16(%arg0: i32) -> (i32, i32, i32) {
    %c0_i32 = arith.constant 0 : i32
    %c0_i32_0 = arith.constant 0 : i32
    %c0_i32_1 = arith.constant 0 : i32
    %c0_i32_2 = arith.constant 0 : i32
    return %c0_i32, %c0_i32_0, %c0_i32_1 : i32, i32, i32
  }
  func.func @transform_17(%arg0: i32) -> (i32, i32) {
    %c0_i32 = arith.constant 0 : i32
    %c0_i32_0 = arith.constant 0 : i32
    %c0_i32_1 = arith.constant 0 : i32
    return %c0_i32, %c0_i32_0 : i32, i32
  }
  func.func @transform_18(%arg0: i32) -> (i32, i32) {
    %c0_i32 = arith.constant 0 : i32
    %c0_i32_0 = arith.constant 0 : i32
    %c0_i32_1 = arith.constant 0 : i32
    return %c0_i32, %c0_i32_0 : i32, i32
  }
  func.func @transform_19(%arg0: i32) -> (i32, i32) {
    %c0_i32 = arith.constant 0 : i32
    %c0_i32_0 = arith.constant 0 : i32
    %c0_i32_1 = arith.constant 0 : i32
    return %c0_i32, %c0_i32_0 : i32, i32
  }
  func.func @transform_20(%arg0: i32) -> (i32, i32) {
    %c0_i32 = arith.constant 0 : i32
    %c0_i32_0 = arith.constant 0 : i32
    %c0_i32_1 = arith.constant 0 : i32
    return %c0_i32, %c0_i32_0 : i32, i32
  }
  func.func @transform_21(%arg0: i32) -> (i32, i32) {
    %c0_i32 = arith.constant 0 : i32
    %c0_i32_0 = arith.constant 0 : i32
    %c0_i32_1 = arith.constant 0 : i32
    return %c0_i32, %c0_i32_0 : i32, i32
  }
}

</mosaic_0001>

<llo_original>
// kernel: _logits_and_topk.1
$region0: #{_logits_and_topk.1}
  #allocation0 [shape = 'u32[]', space=smem, size = 0x4, offset = 0x4, fixed_abs, tag = 'smem constant byte address 0x4 - core index']
  #allocation1 [shape = 'u32[144,128]{1,0:T(1,128)}', space=vmem, size = 0x12000, scoped, tag = 'internal scratch']
  %s0 = inlined_call_operand.vmem [shape: f32[80,64], index: 0, kind: input, shape index: {}]
  %s1 = inlined_call_operand.vmem [shape: f32[2,1,64], index: 1, kind: input, shape index: {}]
  %s2 = inlined_call_operand.vmem [shape: f32[2,1,64], index: 2, kind: input, shape index: {}]
  %s3 = inlined_call_operand.vmem [shape: f32[2,4,64,16], index: 3, kind: input, shape index: {}]
  %s4 = inlined_call_operand.vmem [shape: f32[2,4,1,16], index: 4, kind: input, shape index: {}]
  %s5 = inlined_call_operand.vmem [shape: f32[2,4,64,16], index: 5, kind: input, shape index: {}]
  %s6 = inlined_call_operand.vmem [shape: f32[2,4,1,16], index: 6, kind: input, shape index: {}]
  %s7 = inlined_call_operand.vmem [shape: f32[2,4,64,16], index: 7, kind: input, shape index: {}]
  %s8 = inlined_call_operand.vmem [shape: f32[2,4,1,16], index: 8, kind: input, shape index: {}]
  %s9 = inlined_call_operand.vmem [shape: f32[2,4,16,64], index: 9, kind: input, shape index: {}]
  %s10 = inlined_call_operand.vmem [shape: f32[2,1,64], index: 10, kind: input, shape index: {}]
  %s11 = inlined_call_operand.vmem [shape: f32[2,1,64], index: 11, kind: input, shape index: {}]
  %s12 = inlined_call_operand.vmem [shape: f32[2,1,64], index: 12, kind: input, shape index: {}]
  %s13 = inlined_call_operand.vmem [shape: f32[2,64,256], index: 13, kind: input, shape index: {}]
  %s14 = inlined_call_operand.vmem [shape: f32[2,1,256], index: 14, kind: input, shape index: {}]
  %s15 = inlined_call_operand.vmem [shape: f32[2,256,64], index: 15, kind: input, shape index: {}]
  %s16 = inlined_call_operand.vmem [shape: f32[2,1,64], index: 16, kind: input, shape index: {}]
  %s17 = inlined_call_operand.vmem [shape: f32[1,64], index: 17, kind: input, shape index: {}]
  %s18 = inlined_call_operand.vmem [shape: f32[1,64], index: 18, kind: input, shape index: {}]
  %s19 = inlined_call_operand.vmem [shape: f32[64,2048], index: 19, kind: input, shape index: {}]
  %s20 = inlined_call_operand.vmem [shape: f32[1,2048], index: 20, kind: input, shape index: {}]
  %s21 = inlined_call_operand.vmem [shape: f32[1,2048], index: 21, kind: output, shape index: {}]
  %s22 = sld [smem:[#allocation0]]
  $region94: #{_logits_and_topk.1} parent=0
    _
  %s24 = ssub.s32 1, %s22
  %s25 = scalar_select 0, %s24, %s22
  // Predicated region
  $region2: #{_logits_and_topk.1} parent=0 // pred_check
    _
  $region3: #{_logits_and_topk.1} parent=0 // pred_check_branch
    %27 = sbr.rel (0) target = $region5
  $region4: #{_logits_and_topk.1} parent=0 // pred_region
    _
  $region5: #{_logits_and_topk.1} parent=0 // pred_fallthru
    _
  // Predicated region
  $region6: #{_logits_and_topk.1} parent=0 // pred_check
    _
  $region7: #{_logits_and_topk.1} parent=0 // pred_check_branch
    %29 = sbr.rel (0) target = $region9
  $region8: #{_logits_and_topk.1} parent=0 // pred_region
    _
  $region9: #{_logits_and_topk.1} parent=0 // pred_fallthru
    _
  // Predicated region
  $region10: #{_logits_and_topk.1} parent=0 // pred_check
    _
  $region11: #{_logits_and_topk.1} parent=0 // pred_check_branch
    %31 = sbr.rel (0) target = $region13
  $region12: #{_logits_and_topk.1} parent=0 // pred_region
    _
  $region13: #{_logits_and_topk.1} parent=0 // pred_fallthru
    _
  // Predicated region
  $region14: #{_logits_and_topk.1} parent=0 // pred_check
    _
  $region15: #{_logits_and_topk.1} parent=0 // pred_check_branch
    %33 = sbr.rel (0) target = $region17
  $region16: #{_logits_and_topk.1} parent=0 // pred_region
    _
  $region17: #{_logits_and_topk.1} parent=0 // pred_fallthru
    _
  // Predicated region
  $region18: #{_logits_and_topk.1} parent=0 // pred_check
    _
  $region19: #{_logits_and_topk.1} parent=0 // pred_check_branch
    %35 = sbr.rel (0) target = $region21
  $region20: #{_logits_and_topk.1} parent=0 // pred_region
    _
  $region21: #{_logits_and_topk.1} parent=0 // pred_fallthru
    _
  // Predicated region
  $region22: #{_logits_and_topk.1} parent=0 // pred_check
    _
  $region23: #{_logits_and_topk.1} parent=0 // pred_check_branch
    %37 = sbr.rel (0) target = $region25
  $region24: #{_logits_and_topk.1} parent=0 // pred_region
    _
  $region25: #{_logits_and_topk.1} parent=0 // pred_fallthru
    _
  // Predicated region
  $region26: #{_logits_and_topk.1} parent=0 // pred_check
    _
  $region27: #{_logits_and_topk.1} parent=0 // pred_check_branch
    %39 = sbr.rel (0) target = $region29
  $region28: #{_logits_and_topk.1} parent=0 // pred_region
    _
  $region29: #{_logits_and_topk.1} parent=0 // pred_fallthru
    _
  // Predicated region
  $region30: #{_logits_and_topk.1} parent=0 // pred_check
    _
  $region31: #{_logits_and_topk.1} parent=0 // pred_check_branch
    %41 = sbr.rel (0) target = $region33
  $region32: #{_logits_and_topk.1} parent=0 // pred_region
    _
  $region33: #{_logits_and_topk.1} parent=0 // pred_fallthru
    _
  // Predicated region
  $region34: #{_logits_and_topk.1} parent=0 // pred_check
    _
  $region35: #{_logits_and_topk.1} parent=0 // pred_check_branch
    %43 = sbr.rel (0) target = $region37
  $region36: #{_logits_and_topk.1} parent=0 // pred_region
    _
  $region37: #{_logits_and_topk.1} parent=0 // pred_fallthru
    _
  // Predicated region
  $region38: #{_logits_and_topk.1} parent=0 // pred_check
    _
  $region39: #{_logits_and_topk.1} parent=0 // pred_check_branch
    %45 = sbr.rel (0) target = $region41
  $region40: #{_logits_and_topk.1} parent=0 // pred_region
    _
  $region41: #{_logits_and_topk.1} parent=0 // pred_fallthru
    _
  // Predicated region
  $region42: #{_logits_and_topk.1} parent=0 // pred_check
    _
  $region43: #{_logits_and_topk.1} parent=0 // pred_check_branch
    %47 = sbr.rel (0) target = $region45
  $region44: #{_logits_and_topk.1} parent=0 // pred_region
    _
  $region45: #{_logits_and_topk.1} parent=0 // pred_fallthru
    _
  // Predicated region
  $region46: #{_logits_and_topk.1} parent=0 // pred_check
    _
  $region47: #{_logits_and_topk.1} parent=0 // pred_check_branch
    %49 = sbr.rel (0) target = $region49
  $region48: #{_logits_and_topk.1} parent=0 // pred_region
    _
  $region49: #{_logits_and_topk.1} parent=0 // pred_fallthru
    _
  // Predicated region
  $region50: #{_logits_and_topk.1} parent=0 // pred_check
    _
  $region51: #{_logits_and_topk.1} parent=0 // pred_check_branch
    %51 = sbr.rel (0) target = $region53
  $region52: #{_logits_and_topk.1} parent=0 // pred_region
    _
  $region53: #{_logits_and_topk.1} parent=0 // pred_fallthru
    _
  // Predicated region
  $region54: #{_logits_and_topk.1} parent=0 // pred_check
    _
  $region55: #{_logits_and_topk.1} parent=0 // pred_check_branch
    %53 = sbr.rel (0) target = $region57
  $region56: #{_logits_and_topk.1} parent=0 // pred_region
    _
  $region57: #{_logits_and_topk.1} parent=0 // pred_fallthru
    _
  // Predicated region
  $region58: #{_logits_and_topk.1} parent=0 // pred_check
    _
  $region59: #{_logits_and_topk.1} parent=0 // pred_check_branch
    %55 = sbr.rel (0) target = $region61
  $region60: #{_logits_and_topk.1} parent=0 // pred_region
    _
  $region61: #{_logits_and_topk.1} parent=0 // pred_fallthru
    _
  // Predicated region
  $region62: #{_logits_and_topk.1} parent=0 // pred_check
    _
  $region63: #{_logits_and_topk.1} parent=0 // pred_check_branch
    %57 = sbr.rel (0) target = $region65
  $region64: #{_logits_and_topk.1} parent=0 // pred_region
    _
  $region65: #{_logits_and_topk.1} parent=0 // pred_fallthru
    _
  // Predicated region
  $region66: #{_logits_and_topk.1} parent=0 // pred_check
    _
  $region67: #{_logits_and_topk.1} parent=0 // pred_check_branch
    %59 = sbr.rel (0) target = $region69
  $region68: #{_logits_and_topk.1} parent=0 // pred_region
    _
  $region69: #{_logits_and_topk.1} parent=0 // pred_fallthru
    _
  // Predicated region
  $region70: #{_logits_and_topk.1} parent=0 // pred_check
    _
  $region71: #{_logits_and_topk.1} parent=0 // pred_check_branch
    %61 = sbr.rel (0) target = $region73
  $region72: #{_logits_and_topk.1} parent=0 // pred_region
    _
  $region73: #{_logits_and_topk.1} parent=0 // pred_fallthru
    _
  // Predicated region
  $region74: #{_logits_and_topk.1} parent=0 // pred_check
    _
  $region75: #{_logits_and_topk.1} parent=0 // pred_check_branch
    %63 = sbr.rel (0) target = $region77
  $region76: #{_logits_and_topk.1} parent=0 // pred_region
    _
  $region77: #{_logits_and_topk.1} parent=0 // pred_fallthru
    _
  // Predicated region
  $region78: #{_logits_and_topk.1} parent=0 // pred_check
    _
  $region79: #{_logits_and_topk.1} parent=0 // pred_check_branch
    %65 = sbr.rel (0) target = $region81
  $region80: #{_logits_and_topk.1} parent=0 // pred_region
    _
  $region81: #{_logits_and_topk.1} parent=0 // pred_fallthru
    _
  // Predicated region
  $region82: #{_logits_and_topk.1} parent=0 // pred_check
    _
  $region83: #{_logits_and_topk.1} parent=0 // pred_check_branch
    %67 = sbr.rel (0) target = $region85
  $region84: #{_logits_and_topk.1} parent=0 // pred_region
    _
  $region85: #{_logits_and_topk.1} parent=0 // pred_fallthru
    _
  %v68 = vld [vmem:[%s0] sm:$0xff]
  %v69 = vld [vmem:[%s0 + $0x8] sm:$0xff]
  %v70 = vld [vmem:[%s0 + $0x10] sm:$0xff]
  %v71 = vld [vmem:[%s0 + $0x18] sm:$0xff]
  %v72 = vld [vmem:[%s0 + $0x20] sm:$0xff]
  %v73 = vld [vmem:[%s0 + $0x28] sm:$0xff]
  %v74 = vld [vmem:[%s0 + $0x30] sm:$0xff]
  %v75 = vld [vmem:[%s0 + $0x38] sm:$0xff]
  %v76 = vld [vmem:[%s0 + $0x40] sm:$0xff]
  %v77 = vld [vmem:[%s0 + $0x48] sm:$0xff]
  %v78 = vlaneseq
  %v79 = vand.u32 %v78, 127
  %vm80 = vcmp.lt.s32.totalorder %v79, 78
  %v81 = vsel %vm80, 0.0, -1e+30
  %v82 = vld [vmem:[%s1] sm:$0x1]
  %v83 = vld [vmem:[%s2] sm:$0x1]
  %vm84 = vcmask 523264
  %v85 = vsel %vm84, %v68, 0.0
  %86 = vadd.xlane.f32.xlu0 %v85
  %v87 = vpop.xlane.xlu0 %86
  %v88 = vsel %vm84, %v69, 0.0
  %89 = vadd.xlane.f32.xlu0 %v88
  %v90 = vpop.xlane.xlu0 %89
  %v91 = vsel %vm84, %v70, 0.0
  %92 = vadd.xlane.f32.xlu0 %v91
  %v93 = vpop.xlane.xlu0 %92
  %v94 = vsel %vm84, %v71, 0.0
  %95 = vadd.xlane.f32.xlu0 %v94
  %v96 = vpop.xlane.xlu0 %95
  %v97 = vsel %vm84, %v72, 0.0
  %98 = vadd.xlane.f32.xlu0 %v97
  %v99 = vpop.xlane.xlu0 %98
  %v100 = vsel %vm84, %v73, 0.0
  %101 = vadd.xlane.f32.xlu0 %v100
  %v102 = vpop.xlane.xlu0 %101
  %v103 = vsel %vm84, %v74, 0.0
  %104 = vadd.xlane.f32.xlu0 %v103
  %v105 = vpop.xlane.xlu0 %104
  %v106 = vsel %vm84, %v75, 0.0
  %107 = vadd.xlane.f32.xlu0 %v106
  %v108 = vpop.xlane.xlu0 %107
  %v109 = vsel %vm84, %v76, 0.0
  %110 = vadd.xlane.f32.xlu0 %v109
  %v111 = vpop.xlane.xlu0 %110
  %v112 = vsel %vm84, %v77, 0.0
  %113 = vadd.xlane.f32.xlu0 %v112
  %v114 = vpop.xlane.xlu0 %113
  %v115 = vrcp.pop 64.0
  %v116 = vmul.f32 %v87, %v115
  %v117 = vmul.f32 %v90, %v115
  %v118 = vmul.f32 %v93, %v115
  %v119 = vmul.f32 %v96, %v115
  %v120 = vmul.f32 %v99, %v115
  %v121 = vmul.f32 %v102, %v115
  %v122 = vmul.f32 %v105, %v115
  %v123 = vmul.f32 %v108, %v115
  %v124 = vmul.f32 %v111, %v115
  %v125 = vmul.f32 %v114, %v115
  %v126 = vsub.f32 %v68, %v116
  %v127 = vsub.f32 %v69, %v117
  %v128 = vsub.f32 %v70, %v118
  %v129 = vsub.f32 %v71, %v119
  %v130 = vsub.f32 %v72, %v120
  %v131 = vsub.f32 %v73, %v121
  %v132 = vsub.f32 %v74, %v122
  %v133 = vsub.f32 %v75, %v123
  %v134 = vsub.f32 %v76, %v124
  %v135 = vsub.f32 %v77, %v125
  %v136 = vmul.f32 %v126, %v126
  %v137 = vmul.f32 %v127, %v127
  %v138 = vmul.f32 %v128, %v128
  %v139 = vmul.f32 %v129, %v129
  %v140 = vmul.f32 %v130, %v130
  %v141 = vmul.f32 %v131, %v131
  %v142 = vmul.f32 %v132, %v132
  %v143 = vmul.f32 %v133, %v133
  %v144 = vmul.f32 %v134, %v134
  %v145 = vmul.f32 %v135, %v135
  %v146 = vsel %vm84, %v136, 0.0
  %147 = vadd.xlane.f32.xlu0 %v146
  %v148 = vpop.xlane.xlu0 %147
  %v149 = vsel %vm84, %v137, 0.0
  %150 = vadd.xlane.f32.xlu0 %v149
  %v151 = vpop.xlane.xlu0 %150
  %v152 = vsel %vm84, %v138, 0.0
  %153 = vadd.xlane.f32.xlu0 %v152
  %v154 = vpop.xlane.xlu0 %153
  %v155 = vsel %vm84, %v139, 0.0
  %156 = vadd.xlane.f32.xlu0 %v155
  %v157 = vpop.xlane.xlu0 %156
  %v158 = vsel %vm84, %v140, 0.0
  %159 = vadd.xlane.f32.xlu0 %v158
  %v160 = vpop.xlane.xlu0 %159
  %v161 = vsel %vm84, %v141, 0.0
  %162 = vadd.xlane.f32.xlu0 %v161
  %v163 = vpop.xlane.xlu0 %162
  %v164 = vsel %vm84, %v142, 0.0
  %165 = vadd.xlane.f32.xlu0 %v164
  %v166 = vpop.xlane.xlu0 %165
  %v167 = vsel %vm84, %v143, 0.0
  %168 = vadd.xlane.f32.xlu0 %v167
  %v169 = vpop.xlane.xlu0 %168
  %v170 = vsel %vm84, %v144, 0.0
  %171 = vadd.xlane.f32.xlu0 %v170
  %v172 = vpop.xlane.xlu0 %171
  %v173 = vsel %vm84, %v145, 0.0
  %174 = vadd.xlane.f32.xlu0 %v173
  %v175 = vpop.xlane.xlu0 %174
  %v176 = vmul.f32 %v148, %v115
  %v177 = vmul.f32 %v151, %v115
  %v178 = vmul.f32 %v154, %v115
  %v179 = vmul.f32 %v157, %v115
  %v180 = vmul.f32 %v160, %v115
  %v181 = vmul.f32 %v163, %v115
  %v182 = vmul.f32 %v166, %v115
  %v183 = vmul.f32 %v169, %v115
  %v184 = vmul.f32 %v172, %v115
  %v185 = vmul.f32 %v175, %v115
  %v186 = vadd.f32 %v176, 1e-05
  %v187 = vadd.f32 %v177, 1e-05
  %v188 = vadd.f32 %v178, 1e-05
  %v189 = vadd.f32 %v179, 1e-05
  %v190 = vadd.f32 %v180, 1e-05
  %v191 = vadd.f32 %v181, 1e-05
  %v192 = vadd.f32 %v182, 1e-05
  %v193 = vadd.f32 %v183, 1e-05
  %v194 = vadd.f32 %v184, 1e-05
  %v195 = vadd.f32 %v185, 1e-05
  %v196 = vrsqrt.pop %v186
  %v197 = vrsqrt.pop %v187
  %v198 = vrsqrt.pop %v188
  %v199 = vrsqrt.pop %v189
  %v200 = vrsqrt.pop %v190
  %v201 = vrsqrt.pop %v191
  %v202 = vrsqrt.pop %v192
  %v203 = vrsqrt.pop %v193
  %v204 = vrsqrt.pop %v194
  %v205 = vrsqrt.pop %v195
  %v206 = vmul.f32 %v126, %v196
  %v207 = vmul.f32 %v127, %v197
  %v208 = vmul.f32 %v128, %v198
  %v209 = vmul.f32 %v129, %v199
  %v210 = vmul.f32 %v130, %v200
  %v211 = vmul.f32 %v131, %v201
  %v212 = vmul.f32 %v132, %v202
  %v213 = vmul.f32 %v133, %v203
  %v214 = vmul.f32 %v134, %v204
  %v215 = vmul.f32 %v135, %v205
  %v217 = vlaneseq
  %v218 = vshrl.u32 %v217, 7
  %v219 = vsub.s32 0, %v218
  %v220 = vrot.slane %v82, %v219
  %v222 = vmul.f32 %v206, %v220
  %v223 = vmul.f32 %v207, %v220
  %v224 = vmul.f32 %v208, %v220
  %v225 = vmul.f32 %v209, %v220
  %v226 = vmul.f32 %v210, %v220
  %v227 = vmul.f32 %v211, %v220
  %v228 = vmul.f32 %v212, %v220
  %v229 = vmul.f32 %v213, %v220
  %v230 = vmul.f32 %v214, %v220
  %v231 = vmul.f32 %v215, %v220
  %v233 = vlaneseq
  %v234 = vshrl.u32 %v233, 7
  %v235 = vsub.s32 0, %v234
  %v236 = vrot.slane %v83, %v235
  %v238 = vadd.f32 %v222, %v236
  %v239 = vadd.f32 %v223, %v236
  %v240 = vadd.f32 %v224, %v236
  %v241 = vadd.f32 %v225, %v236
  %v242 = vadd.f32 %v226, %v236
  %v243 = vadd.f32 %v227, %v236
  %v244 = vadd.f32 %v228, %v236
  %v245 = vadd.f32 %v229, %v236
  %v246 = vadd.f32 %v230, %v236
  %v247 = vadd.f32 %v231, %v236
  %v248 = vld [vmem:[%s3] sm:$0xff]
  %v249 = vld [vmem:[%s3 + $0x8] sm:$0xff]
  %v250 = vld [vmem:[%s3 + $0x10] sm:$0xff]
  %v251 = vld [vmem:[%s3 + $0x18] sm:$0xff]
  %v252 = vld [vmem:[%s3 + $0x20] sm:$0xff]
  %v253 = vld [vmem:[%s3 + $0x28] sm:$0xff]
  %v254 = vld [vmem:[%s3 + $0x30] sm:$0xff]
  %v255 = vld [vmem:[%s3 + $0x38] sm:$0xff]
  %v256 = vld [vmem:[%s4] sm:$0x1]
  %v258 = vlaneseq
  %v259 = vshrl.u32 %v258, 7
  %v260 = vsub.s32 0, %v259
  %v261 = vrot.slane %v256, %v260
  %v264 = vsel %vm84, %v238, 0
  %v267 = vsel %vm84, %v239, 0
  %v270 = vsel %vm84, %v240, 0
  %v273 = vsel %vm84, %v241, 0
  %v276 = vsel %vm84, %v242, 0
  %v279 = vsel %vm84, %v243, 0
  %v282 = vsel %vm84, %v244, 0
  %v285 = vsel %vm84, %v245, 0
  %v288 = vsel %vm84, %v246, 0
  %v291 = vsel %vm84, %v247, 0
  %293 = vmatprep.subr.mxu0 0.0
  %294 = vmatpush1.msra.mxu0 %v248
  %295 = vmatprep.subr.mxu0 0.0
  %296 = vmatpush1.msra.mxu0 %v249
  %297 = vmatprep.subr.mxu0 0.0
  %298 = vmatpush1.msra.mxu0 %v250
  %299 = vmatprep.subr.mxu0 0.0
  %300 = vmatpush1.msra.mxu0 %v251
  %301 = vmatprep.subr.mxu0 0.0
  %302 = vmatpush1.msra.mxu0 %v252
  %303 = vmatprep.subr.mxu0 0.0
  %304 = vmatpush1.msra.mxu0 %v253
  %305 = vmatprep.subr.mxu0 0.0
  %306 = vmatpush1.msra.mxu0 %v254
  %307 = vmatprep.subr.mxu0 0.0
  %308 = vmatpush1.msra.mxu0 %v255
  %309 = vmatprep.subr.mxu0 0.0
  %310 = vmatpush1.msra.mxu0 0.0
  %311 = vmatprep.subr.mxu0 0.0
  %312 = vmatpush1.msra.mxu0 0.0
  %313 = vmatprep.subr.mxu0 0.0
  %314 = vmatpush1.msra.mxu0 0.0
  %315 = vmatprep.subr.mxu0 0.0
  %316 = vmatpush1.msra.mxu0 0.0
  %317 = vmatprep.subr.mxu0 0.0
  %318 = vmatpush1.msra.mxu0 0.0
  %319 = vmatprep.subr.mxu0 0.0
  %320 = vmatpush1.msra.mxu0 0.0
  %321 = vmatprep.subr.mxu0 0.0
  %322 = vmatpush1.msra.mxu0 0.0
  %323 = vmatprep.subr.mxu0 0.0
  %324 = vmatpush1.msra.mxu0 0.0
  %325 = vmatprep.subr.mxu0 0.0
  %326 = vmatpush1.msra.mxu0 0.0
  %327 = vmatprep.subr.mxu0 0.0
  %328 = vmatpush1.msra.mxu0 0.0
  %329 = vmatprep.subr.mxu0 0.0
  %330 = vmatpush1.msra.mxu0 0.0
  %331 = vmatprep.subr.mxu0 0.0
  %332 = vmatpush1.msra.mxu0 0.0
  %333 = vmatprep.subr.mxu0 0.0
  %334 = vmatpush1.msra.mxu0 0.0
  %335 = vmatprep.subr.mxu0 0.0
  %336 = vmatpush1.msra.mxu0 0.0
  %337 = vmatprep.subr.mxu0 0.0
  %338 = vmatpush1.msra.mxu0 0.0
  %339 = vmatprep.subr.mxu0 0.0
  %340 = vmatpush1.msra.mxu0 0.0
  %341 = vmatprep.subr.mxu0 0.0
  %342 = vmatpush1.msra.mxu0 0.0
  %343 = vmatprep.subr.mxu0 0.0
  %344 = vmatpush1.msra.mxu0 0.0
  %345 = vmatprep.subr.mxu0 0.0
  %346 = vmatpush1.msra.mxu0 0.0
  %347 = vmatprep.subr.mxu0 0.0
  %348 = vmatpush1.msra.mxu0 0.0
  %349 = vmatprep.subr.mxu0 0.0
  %350 = vmatpush1.msra.mxu0 0.0
  %351 = vmatprep.subr.mxu0 0.0
  %352 = vmatpush1.msra.mxu0 0.0
  %353 = vmatprep.subr.mxu0 0.0
  %354 = vmatpush1.msra.mxu0 0.0
  %355 = vmatprep.subr.mxu0 0.0
  %356 = vmatpush1.msra.mxu0 0.0
  %357 = vmatprep.mubr.f32.mxu0 0.0
  %358 = vmatmul.mubr.f32.gmra.mrb[0].mxu0 %v264
  %v359 = vpop.f32.mrb[0].mxu0
  %v360 = vadd.f32 %v261, %v359
  %v361 = vpop.f32.mrb[0].mxu0
  %362 = vmatprep.mubr.f32.mxu0 0.0
  %363 = vmatmul.mubr.f32.gmra.mrb[0].mxu0 %v267
  %v364 = vpop.f32.mrb[0].mxu0
  %v365 = vadd.f32 %v261, %v364
  %v366 = vpop.f32.mrb[0].mxu0
  %367 = vmatprep.mubr.f32.mxu0 0.0
  %368 = vmatmul.mubr.f32.gmra.mrb[0].mxu0 %v270
  %v369 = vpop.f32.mrb[0].mxu0
  %v370 = vadd.f32 %v261, %v369
  %v371 = vpop.f32.mrb[0].mxu0
  %372 = vmatprep.mubr.f32.mxu0 0.0
  %373 = vmatmul.mubr.f32.gmra.mrb[0].mxu0 %v273
  %v374 = vpop.f32.mrb[0].mxu0
  %v375 = vadd.f32 %v261, %v374
  %v376 = vpop.f32.mrb[0].mxu0
  %377 = vmatprep.mubr.f32.mxu0 0.0
  %378 = vmatmul.mubr.f32.gmra.mrb[0].mxu0 %v276
  %v379 = vpop.f32.mrb[0].mxu0
  %v380 = vadd.f32 %v261, %v379
  %v381 = vpop.f32.mrb[0].mxu0
  %382 = vmatprep.mubr.f32.mxu0 0.0
  %383 = vmatmul.mubr.f32.gmra.mrb[0].mxu0 %v279
  %v384 = vpop.f32.mrb[0].mxu0
  %v385 = vadd.f32 %v261, %v384
  %v386 = vpop.f32.mrb[0].mxu0
  %387 = vmatprep.mubr.f32.mxu0 0.0
  %388 = vmatmul.mubr.f32.gmra.mrb[0].mxu0 %v282
  %v389 = vpop.f32.mrb[0].mxu0
  %v390 = vadd.f32 %v261, %v389
  %v391 = vpop.f32.mrb[0].mxu0
  %392 = vmatprep.mubr.f32.mxu0 0.0
  %393 = vmatmul.mubr.f32.gmra.mrb[0].mxu0 %v285
  %v394 = vpop.f32.mrb[0].mxu0
  %v395 = vadd.f32 %v261, %v394
  %v396 = vpop.f32.mrb[0].mxu0
  %397 = vmatprep.mubr.f32.mxu0 0.0
  %398 = vmatmul.mubr.f32.gmra.mrb[0].mxu0 %v288
  %v399 = vpop.f32.mrb[0].mxu0
  %v400 = vadd.f32 %v261, %v399
  %v401 = vpop.f32.mrb[0].mxu0
  %402 = vmatprep.mubr.f32.mxu0 0.0
  %403 = vmatmul.mubr.f32.gmra.mrb[0].mxu0 %v291
  %v404 = vpop.f32.mrb[0].mxu0
  %v405 = vadd.f32 %v261, %v404
  %v406 = vpop.f32.mrb[0].mxu0
  %407 = vdwg.mxu0
  %v408 = vld [vmem:[%s5] sm:$0xff]
  %v409 = vld [vmem:[%s5 + $0x8] sm:$0xff]
  %v410 = vld [vmem:[%s5 + $0x10] sm:$0xff]
  %v411 = vld [vmem:[%s5 + $0x18] sm:$0xff]
  %v412 = vld [vmem:[%s5 + $0x20] sm:$0xff]
  %v413 = vld [vmem:[%s5 + $0x28] sm:$0xff]
  %v414 = vld [vmem:[%s5 + $0x30] sm:$0xff]
  %v415 = vld [vmem:[%s5 + $0x38] sm:$0xff]
  %v416 = vld [vmem:[%s6] sm:$0x1]
  %v418 = vlaneseq
  %v419 = vshrl.u32 %v418, 7
  %v420 = vsub.s32 0, %v419
  %v421 = vrot.slane %v416, %v420
  %423 = vmatprep.subr.mxu0 0.0
  %424 = vmatpush1.msra.mxu0 %v408
  %425 = vmatprep.subr.mxu0 0.0
  %426 = vmatpush1.msra.mxu0 %v409
  %427 = vmatprep.subr.mxu0 0.0
  %428 = vmatpush1.msra.mxu0 %v410
  %429 = vmatprep.subr.mxu0 0.0
  %430 = vmatpush1.msra.mxu0 %v411
  %431 = vmatprep.subr.mxu0 0.0
  %432 = vmatpush1.msra.mxu0 %v412
  %433 = vmatprep.subr.mxu0 0.0
  %434 = vmatpush1.msra.mxu0 %v413
  %435 = vmatprep.subr.mxu0 0.0
  %436 = vmatpush1.msra.mxu0 %v414
  %437 = vmatprep.subr.mxu0 0.0
  %438 = vmatpush1.msra.mxu0 %v415
  %439 = vmatprep.subr.mxu0 0.0
  %440 = vmatpush1.msra.mxu0 0.0
  %441 = vmatprep.subr.mxu0 0.0
  %442 = vmatpush1.msra.mxu0 0.0
  %443 = vmatprep.subr.mxu0 0.0
  %444 = vmatpush1.msra.mxu0 0.0
  %445 = vmatprep.subr.mxu0 0.0
  %446 = vmatpush1.msra.mxu0 0.0
  %447 = vmatprep.subr.mxu0 0.0
  %448 = vmatpush1.msra.mxu0 0.0
  %449 = vmatprep.subr.mxu0 0.0
  %450 = vmatpush1.msra.mxu0 0.0
  %451 = vmatprep.subr.mxu0 0.0
  %452 = vmatpush1.msra.mxu0 0.0
  %453 = vmatprep.subr.mxu0 0.0
  %454 = vmatpush1.msra.mxu0 0.0
  %455 = vmatprep.subr.mxu0 0.0
  %456 = vmatpush1.msra.mxu0 0.0
  %457 = vmatprep.subr.mxu0 0.0
  %458 = vmatpush1.msra.mxu0 0.0
  %459 = vmatprep.subr.mxu0 0.0
  %460 = vmatpush1.msra.mxu0 0.0
  %461 = vmatprep.subr.mxu0 0.0
  %462 = vmatpush1.msra.mxu0 0.0
  %463 = vmatprep.subr.mxu0 0.0
  %464 = vmatpush1.msra.mxu0 0.0
  %465 = vmatprep.subr.mxu0 0.0
  %466 = vmatpush1.msra.mxu0 0.0
  %467 = vmatprep.subr.mxu0 0.0
  %468 = vmatpush1.msra.mxu0 0.0
  %469 = vmatprep.subr.mxu0 0.0
  %470 = vmatpush1.msra.mxu0 0.0
  %471 = vmatprep.subr.mxu0 0.0
  %472 = vmatpush1.msra.mxu0 0.0
  %473 = vmatprep.subr.mxu0 0.0
  %474 = vmatpush1.msra.mxu0 0.0
  %475 = vmatprep.subr.mxu0 0.0
  %476 = vmatpush1.msra.mxu0 0.0
  %477 = vmatprep.subr.mxu0 0.0
  %478 = vmatpush1.msra.mxu0 0.0
  %479 = vmatprep.subr.mxu0 0.0
  %480 = vmatpush1.msra.mxu0 0.0
  %481 = vmatprep.subr.mxu0 0.0
  %482 = vmatpush1.msra.mxu0 0.0
  %483 = vmatprep.subr.mxu0 0.0
  %484 = vmatpush1.msra.mxu0 0.0
  %485 = vmatprep.subr.mxu0 0.0
  %486 = vmatpush1.msra.mxu0 0.0
  %487 = vmatprep.mubr.f32.mxu0 0.0
  %488 = vmatmul.mubr.f32.gmra.mrb[0].mxu0 %v264
  %v489 = vpop.f32.mrb[0].mxu0
  %v490 = vadd.f32 %v421, %v489
  %v491 = vpop.f32.mrb[0].mxu0
  %492 = vmatprep.mubr.f32.mxu0 0.0
  %493 = vmatmul.mubr.f32.gmra.mrb[0].mxu0 %v267
  %v494 = vpop.f32.mrb[0].mxu0
  %v495 = vadd.f32 %v421, %v494
  %v496 = vpop.f32.mrb[0].mxu0
  %497 = vmatprep.mubr.f32.mxu0 0.0
  %498 = vmatmul.mubr.f32.gmra.mrb[0].mxu0 %v270
  %v499 = vpop.f32.mrb[0].mxu0
  %v500 = vadd.f32 %v421, %v499
  %v501 = vpop.f32.mrb[0].mxu0
  %502 = vmatprep.mubr.f32.mxu0 0.0
  %503 = vmatmul.mubr.f32.gmra.mrb[0].mxu0 %v273
  %v504 = vpop.f32.mrb[0].mxu0
  %v505 = vadd.f32 %v421, %v504
  %v506 = vpop.f32.mrb[0].mxu0
  %507 = vmatprep.mubr.f32.mxu0 0.0
  %508 = vmatmul.mubr.f32.gmra.mrb[0].mxu0 %v276
  %v509 = vpop.f32.mrb[0].mxu0
  %v510 = vadd.f32 %v421, %v509
  %v511 = vpop.f32.mrb[0].mxu0
  %512 = vmatprep.mubr.f32.mxu0 0.0
  %513 = vmatmul.mubr.f32.gmra.mrb[0].mxu0 %v279
  %v514 = vpop.f32.mrb[0].mxu0
  %v515 = vadd.f32 %v421, %v514
  %v516 = vpop.f32.mrb[0].mxu0
  %517 = vmatprep.mubr.f32.mxu0 0.0
  %518 = vmatmul.mubr.f32.gmra.mrb[0].mxu0 %v282
  %v519 = vpop.f32.mrb[0].mxu0
  %v520 = vadd.f32 %v421, %v519
  %v521 = vpop.f32.mrb[0].mxu0
  %522 = vmatprep.mubr.f32.mxu0 0.0
  %523 = vmatmul.mubr.f32.gmra.mrb[0].mxu0 %v285
  %v524 = vpop.f32.mrb[0].mxu0
  %v525 = vadd.f32 %v421, %v524
  %v526 = vpop.f32.mrb[0].mxu0
  %527 = vmatprep.mubr.f32.mxu0 0.0
  %528 = vmatmul.mubr.f32.gmra.mrb[0].mxu0 %v288
  %v529 = vpop.f32.mrb[0].mxu0
  %v530 = vadd.f32 %v421, %v529
  %v531 = vpop.f32.mrb[0].mxu0
  %532 = vmatprep.mubr.f32.mxu0 0.0
  %533 = vmatmul.mubr.f32.gmra.mrb[0].mxu0 %v291
  %v534 = vpop.f32.mrb[0].mxu0
  %v535 = vadd.f32 %v421, %v534
  %v536 = vpop.f32.mrb[0].mxu0
  %537 = vdwg.mxu0
  %v538 = vld [vmem:[%s7] sm:$0xff]
  %v539 = vld [vmem:[%s7 + $0x8] sm:$0xff]
  %v540 = vld [vmem:[%s7 + $0x10] sm:$0xff]
  %v541 = vld [vmem:[%s7 + $0x18] sm:$0xff]
  %v542 = vld [vmem:[%s7 + $0x20] sm:$0xff]
  %v543 = vld [vmem:[%s7 + $0x28] sm:$0xff]
  %v544 = vld [vmem:[%s7 + $0x30] sm:$0xff]
  %v545 = vld [vmem:[%s7 + $0x38] sm:$0xff]
  %v546 = vld [vmem:[%s8] sm:$0x1]
  %v548 = vlaneseq
  %v549 = vshrl.u32 %v548, 7
  %v550 = vsub.s32 0, %v549
  %v551 = vrot.slane %v546, %v550
  %553 = vmatprep.subr.mxu0 0.0
  %554 = vmatpush1.msra.mxu0 %v538
  %555 = vmatprep.subr.mxu0 0.0
  %556 = vmatpush1.msra.mxu0 %v539
  %557 = vmatprep.subr.mxu0 0.0
  %558 = vmatpush1.msra.mxu0 %v540
  %559 = vmatprep.subr.mxu0 0.0
  %560 = vmatpush1.msra.mxu0 %v541
  %561 = vmatprep.subr.mxu0 0.0
  %562 = vmatpush1.msra.mxu0 %v542
  %563 = vmatprep.subr.mxu0 0.0
  %564 = vmatpush1.msra.mxu0 %v543
  %565 = vmatprep.subr.mxu0 0.0
  %566 = vmatpush1.msra.mxu0 %v544
  %567 = vmatprep.subr.mxu0 0.0
  %568 = vmatpush1.msra.mxu0 %v545
  %569 = vmatprep.subr.mxu0 0.0
  %570 = vmatpush1.msra.mxu0 0.0
  %571 = vmatprep.subr.mxu0 0.0
  %572 = vmatpush1.msra.mxu0 0.0
  %573 = vmatprep.subr.mxu0 0.0
  %574 = vmatpush1.msra.mxu0 0.0
  %575 = vmatprep.subr.mxu0 0.0
  %576 = vmatpush1.msra.mxu0 0.0
  %577 = vmatprep.subr.mxu0 0.0
  %578 = vmatpush1.msra.mxu0 0.0
  %579 = vmatprep.subr.mxu0 0.0
  %580 = vmatpush1.msra.mxu0 0.0
  %581 = vmatprep.subr.mxu0 0.0
  %582 = vmatpush1.msra.mxu0 0.0
  %583 = vmatprep.subr.mxu0 0.0
  %584 = vmatpush1.msra.mxu0 0.0
  %585 = vmatprep.subr.mxu0 0.0
  %586 = vmatpush1.msra.mxu0 0.0
  %587 = vmatprep.subr.mxu0 0.0
  %588 = vmatpush1.msra.mxu0 0.0
  %589 = vmatprep.subr.mxu0 0.0
  %590 = vmatpush1.msra.mxu0 0.0
  %591 = vmatprep.subr.mxu0 0.0
  %592 = vmatpush1.msra.mxu0 0.0
  %593 = vmatprep.subr.mxu0 0.0
  %594 = vmatpush1.msra.mxu0 0.0
  %595 = vmatprep.subr.mxu0 0.0
  %596 = vmatpush1.msra.mxu0 0.0
  %597 = vmatprep.subr.mxu0 0.0
  %598 = vmatpush1.msra.mxu0 0.0
  %599 = vmatprep.subr.mxu0 0.0
  %600 = vmatpush1.msra.mxu0 0.0
  %601 = vmatprep.subr.mxu0 0.0
  %602 = vmatpush1.msra.mxu0 0.0
  %603 = vmatprep.subr.mxu0 0.0
  %604 = vmatpush1.msra.mxu0 0.0
  %605 = vmatprep.subr.mxu0 0.0
  %606 = vmatpush1.msra.mxu0 0.0
  %607 = vmatprep.subr.mxu0 0.0
  %608 = vmatpush1.msra.mxu0 0.0
  %609 = vmatprep.subr.mxu0 0.0
  %610 = vmatpush1.msra.mxu0 0.0
  %611 = vmatprep.subr.mxu0 0.0
  %612 = vmatpush1.msra.mxu0 0.0
  %613 = vmatprep.subr.mxu0 0.0
  %614 = vmatpush1.msra.mxu0 0.0
  %615 = vmatprep.subr.mxu0 0.0
  %616 = vmatpush1.msra.mxu0 0.0
  %617 = vmatprep.mubr.f32.mxu0 0.0
  %618 = vmatmul.mubr.f32.gmra.mrb[0].mxu0 %v264
  %v619 = vpop.f32.mrb[0].mxu0
  %v620 = vadd.f32 %v551, %v619
  %v621 = vpop.f32.mrb[0].mxu0
  %622 = vmatprep.mubr.f32.mxu0 0.0
  %623 = vmatmul.mubr.f32.gmra.mrb[0].mxu0 %v267
  %v624 = vpop.f32.mrb[0].mxu0
  %v625 = vadd.f32 %v551, %v624
  %v626 = vpop.f32.mrb[0].mxu0
  %627 = vmatprep.mubr.f32.mxu0 0.0
  %628 = vmatmul.mubr.f32.gmra.mrb[0].mxu0 %v270
  %v629 = vpop.f32.mrb[0].mxu0
  %v630 = vadd.f32 %v551, %v629
  %v631 = vpop.f32.mrb[0].mxu0
  %632 = vmatprep.mubr.f32.mxu0 0.0
  %633 = vmatmul.mubr.f32.gmra.mrb[0].mxu0 %v273
  %v634 = vpop.f32.mrb[0].mxu0
  %v635 = vadd.f32 %v551, %v634
  %v636 = vpop.f32.mrb[0].mxu0
  %637 = vmatprep.mubr.f32.mxu0 0.0
  %638 = vmatmul.mubr.f32.gmra.mrb[0].mxu0 %v276
  %v639 = vpop.f32.mrb[0].mxu0
  %v640 = vadd.f32 %v551, %v639
  %v641 = vpop.f32.mrb[0].mxu0
  %642 = vmatprep.mubr.f32.mxu0 0.0
  %643 = vmatmul.mubr.f32.gmra.mrb[0].mxu0 %v279
  %v644 = vpop.f32.mrb[0].mxu0
  %v645 = vadd.f32 %v551, %v644
  %v646 = vpop.f32.mrb[0].mxu0
  %647 = vmatprep.mubr.f32.mxu0 0.0
  %648 = vmatmul.mubr.f32.gmra.mrb[0].mxu0 %v282
  %v649 = vpop.f32.mrb[0].mxu0
  %v650 = vadd.f32 %v551, %v649
  %v651 = vpop.f32.mrb[0].mxu0
  %652 = vmatprep.mubr.f32.mxu0 0.0
  %653 = vmatmul.mubr.f32.gmra.mrb[0].mxu0 %v285
  %v654 = vpop.f32.mrb[0].mxu0
  %v655 = vadd.f32 %v551, %v654
  %v656 = vpop.f32.mrb[0].mxu0
  %657 = vmatprep.mubr.f32.mxu0 0.0
  %658 = vmatmul.mubr.f32.gmra.mrb[0].mxu0 %v288
  %v659 = vpop.f32.mrb[0].mxu0
  %v660 = vadd.f32 %v551, %v659
  %v661 = vpop.f32.mrb[0].mxu0
  %662 = vmatprep.mubr.f32.mxu0 0.0
  %663 = vmatmul.mubr.f32.gmra.mrb[0].mxu0 %v291
  %v664 = vpop.f32.mrb[0].mxu0
  %v665 = vadd.f32 %v551, %v664
  %v666 = vpop.f32.mrb[0].mxu0
  %667 = vdwg.mxu0
  %vm668 = vcmask 130048
  %v670 = vsel %vm668, %v360, 0
  %v673 = vsel %vm668, %v365, 0
  %v676 = vsel %vm668, %v370, 0
  %v679 = vsel %vm668, %v375, 0
  %v682 = vsel %vm668, %v380, 0
  %v685 = vsel %vm668, %v385, 0
  %v688 = vsel %vm668, %v390, 0
  %v691 = vsel %vm668, %v395, 0
  %v694 = vsel %vm668, %v400, 0
  %v697 = vsel %vm668, %v405, 0
  %v700 = vsel %vm668, %v490, 0
  %v703 = vsel %vm668, %v495, 0
  %v706 = vsel %vm668, %v500, 0
  %v709 = vsel %vm668, %v505, 0
  %v712 = vsel %vm668, %v510, 0
  %v715 = vsel %vm668, %v515, 0
  %v718 = vsel %vm668, %v520, 0
  %v721 = vsel %vm668, %v525, 0
  %v724 = vsel %vm668, %v530, 0
  %v727 = vsel %vm668, %v535, 0
  %729 = vmatprep.subr.mxu0 0.0
  %730 = vmatpush1.xpose.msra.mxu0 %v700
  %731 = vmatprep.subr.mxu0 0.0
  %732 = vmatpush1.xpose.msra.mxu0 %v703
  %733 = vmatprep.subr.mxu0 0.0
  %734 = vmatpush1.xpose.msra.mxu0 %v706
  %735 = vmatprep.subr.mxu0 0.0
  %736 = vmatpush1.xpose.msra.mxu0 %v709
  %737 = vmatprep.subr.mxu0 0.0
  %738 = vmatpush1.xpose.msra.mxu0 %v712
  %739 = vmatprep.subr.mxu0 0.0
  %740 = vmatpush1.xpose.msra.mxu0 %v715
  %741 = vmatprep.subr.mxu0 0.0
  %742 = vmatpush1.xpose.msra.mxu0 %v718
  %743 = vmatprep.subr.mxu0 0.0
  %744 = vmatpush1.xpose.msra.mxu0 %v721
  %745 = vmatprep.subr.mxu0 0.0
  %746 = vmatpush1.xpose.msra.mxu0 %v724
  %747 = vmatprep.subr.mxu0 0.0
  %748 = vmatpush1.xpose.msra.mxu0 %v727
  %749 = vmatprep.subr.mxu0 0.0
  %750 = vmatpush1.xpose.msra.mxu0 0.0
  %751 = vmatprep.subr.mxu0 0.0
  %752 = vmatpush1.xpose.msra.mxu0 0.0
  %753 = vmatprep.subr.mxu0 0.0
  %754 = vmatpush1.xpose.msra.mxu0 0.0
  %755 = vmatprep.subr.mxu0 0.0
  %756 = vmatpush1.xpose.msra.mxu0 0.0
  %757 = vmatprep.subr.mxu0 0.0
  %758 = vmatpush1.xpose.msra.mxu0 0.0
  %759 = vmatprep.subr.mxu0 0.0
  %760 = vmatpush1.xpose.msra.mxu0 0.0
  %761 = vmatprep.subr.mxu0 0.0
  %762 = vmatpush1.xpose.msra.mxu0 0.0
  %763 = vmatprep.subr.mxu0 0.0
  %764 = vmatpush1.xpose.msra.mxu0 0.0
  %765 = vmatprep.subr.mxu0 0.0
  %766 = vmatpush1.xpose.msra.mxu0 0.0
  %767 = vmatprep.subr.mxu0 0.0
  %768 = vmatpush1.xpose.msra.mxu0 0.0
  %769 = vmatprep.subr.mxu0 0.0
  %770 = vmatpush1.xpose.msra.mxu0 0.0
  %771 = vmatprep.subr.mxu0 0.0
  %772 = vmatpush1.xpose.msra.mxu0 0.0
  %773 = vmatprep.subr.mxu0 0.0
  %774 = vmatpush1.xpose.msra.mxu0 0.0
  %775 = vmatprep.subr.mxu0 0.0
  %776 = vmatpush1.xpose.msra.mxu0 0.0
  %777 = vmatprep.subr.mxu0 0.0
  %778 = vmatpush1.xpose.msra.mxu0 0.0
  %779 = vmatprep.subr.mxu0 0.0
  %780 = vmatpush1.xpose.msra.mxu0 0.0
  %781 = vmatprep.subr.mxu0 0.0
  %782 = vmatpush1.xpose.msra.mxu0 0.0
  %783 = vmatprep.subr.mxu0 0.0
  %784 = vmatpush1.xpose.msra.mxu0 0.0
  %785 = vmatprep.subr.mxu0 0.0
  %786 = vmatpush1.xpose.msra.mxu0 0.0
  %787 = vmatprep.subr.mxu0 0.0
  %788 = vmatpush1.xpose.msra.mxu0 0.0
  %789 = vmatprep.subr.mxu0 0.0
  %790 = vmatpush1.xpose.msra.mxu0 0.0
  %791 = vmatprep.subr.mxu0 0.0
  %792 = vmatpush1.xpose.msra.mxu0 0.0
  %793 = vmatprep.mubr.f32.mxu0 0.0
  %794 = vmatmul.mubr.f32.gmra.mrb[0].mxu0 %v670
  %v795 = vpop.f32.mrb[0].mxu0
  %v796 = vadd.f32 %v81, %v795
  %v797 = vpop.f32.mrb[0].mxu0
  %798 = vmatprep.mubr.f32.mxu0 0.0
  %799 = vmatmul.mubr.f32.gmra.mrb[0].mxu0 %v673
  %v800 = vpop.f32.mrb[0].mxu0
  %v801 = vadd.f32 %v81, %v800
  %v802 = vpop.f32.mrb[0].mxu0
  %803 = vmatprep.mubr.f32.mxu0 0.0
  %804 = vmatmul.mubr.f32.gmra.mrb[0].mxu0 %v676
  %v805 = vpop.f32.mrb[0].mxu0
  %v806 = vadd.f32 %v81, %v805
  %v807 = vpop.f32.mrb[0].mxu0
  %808 = vmatprep.mubr.f32.mxu0 0.0
  %809 = vmatmul.mubr.f32.gmra.mrb[0].mxu0 %v679
  %v810 = vpop.f32.mrb[0].mxu0
  %v811 = vadd.f32 %v81, %v810
  %v812 = vpop.f32.mrb[0].mxu0
  %813 = vmatprep.mubr.f32.mxu0 0.0
  %814 = vmatmul.mubr.f32.gmra.mrb[0].mxu0 %v682
  %v815 = vpop.f32.mrb[0].mxu0
  %v816 = vadd.f32 %v81, %v815
  %v817 = vpop.f32.mrb[0].mxu0
  %818 = vmatprep.mubr.f32.mxu0 0.0
  %819 = vmatmul.mubr.f32.gmra.mrb[0].mxu0 %v685
  %v820 = vpop.f32.mrb[0].mxu0
  %v821 = vadd.f32 %v81, %v820
  %v822 = vpop.f32.mrb[0].mxu0
  %823 = vmatprep.mubr.f32.mxu0 0.0
  %824 = vmatmul.mubr.f32.gmra.mrb[0].mxu0 %v688
  %v825 = vpop.f32.mrb[0].mxu0
  %v826 = vadd.f32 %v81, %v825
  %v827 = vpop.f32.mrb[0].mxu0
  %828 = vmatprep.mubr.f32.mxu0 0.0
  %829 = vmatmul.mubr.f32.gmra.mrb[0].mxu0 %v691
  %v830 = vpop.f32.mrb[0].mxu0
  %v831 = vadd.f32 %v81, %v830
  %v832 = vpop.f32.mrb[0].mxu0
  %833 = vmatprep.mubr.f32.mxu0 0.0
  %834 = vmatmul.mubr.f32.gmra.mrb[0].mxu0 %v694
  %v835 = vpop.f32.mrb[0].mxu0
  %v836 = vadd.f32 %v81, %v835
  %v837 = vpop.f32.mrb[0].mxu0
  %838 = vmatprep.mubr.f32.mxu0 0.0
  %839 = vmatmul.mubr.f32.gmra.mrb[0].mxu0 %v697
  %v840 = vpop.f32.mrb[0].mxu0
  %v841 = vadd.f32 %v81, %v840
  %v842 = vpop.f32.mrb[0].mxu0
  %843 = vdwg.mxu0
  %vm844 = vcmask 654336
  %v845 = vsel %vm844, %v796, -inf
  %846 = vmax.xlane.f32.xlu0 %v845
  %v847 = vpop.xlane.xlu0 %846
  %v848 = vsel %vm844, %v801, -inf
  %849 = vmax.xlane.f32.xlu0 %v848
  %v850 = vpop.xlane.xlu0 %849
  %v851 = vsel %vm844, %v806, -inf
  %852 = vmax.xlane.f32.xlu0 %v851
  %v853 = vpop.xlane.xlu0 %852
  %v854 = vsel %vm844, %v811, -inf
  %855 = vmax.xlane.f32.xlu0 %v854
  %v856 = vpop.xlane.xlu0 %855
  %v857 = vsel %vm844, %v816, -inf
  %858 = vmax.xlane.f32.xlu0 %v857
  %v859 = vpop.xlane.xlu0 %858
  %v860 = vsel %vm844, %v821, -inf
  %861 = vmax.xlane.f32.xlu0 %v860
  %v862 = vpop.xlane.xlu0 %861
  %v863 = vsel %vm844, %v826, -inf
  %864 = vmax.xlane.f32.xlu0 %v863
  %v865 = vpop.xlane.xlu0 %864
  %v866 = vsel %vm844, %v831, -inf
  %867 = vmax.xlane.f32.xlu0 %v866
  %v868 = vpop.xlane.xlu0 %867
  %v869 = vsel %vm844, %v836, -inf
  %870 = vmax.xlane.f32.xlu0 %v869
  %v871 = vpop.xlane.xlu0 %870
  %v872 = vsel %vm844, %v841, -inf
  %873 = vmax.xlane.f32.xlu0 %v872
  %v874 = vpop.xlane.xlu0 %873
  %v875 = vsub.f32 %v796, %v847
  %v876 = vsub.f32 %v801, %v850
  %v877 = vsub.f32 %v806, %v853
  %v878 = vsub.f32 %v811, %v856
  %v879 = vsub.f32 %v816, %v859
  %v880 = vsub.f32 %v821, %v862
  %v881 = vsub.f32 %v826, %v865
  %v882 = vsub.f32 %v831, %v868
  %v883 = vsub.f32 %v836, %v871
  %v884 = vsub.f32 %v841, %v874
  %v885 = vmul.f32 %v875, 1.442695
  %v886 = vpow.pop %v885
  %v887 = vmul.f32 %v876, 1.442695
  %v888 = vpow.pop %v887
  %v889 = vmul.f32 %v877, 1.442695
  %v890 = vpow.pop %v889
  %v891 = vmul.f32 %v878, 1.442695
  %v892 = vpow.pop %v891
  %v893 = vmul.f32 %v879, 1.442695
  %v894 = vpow.pop %v893
  %v895 = vmul.f32 %v880, 1.442695
  %v896 = vpow.pop %v895
  %v897 = vmul.f32 %v881, 1.442695
  %v898 = vpow.pop %v897
  %v899 = vmul.f32 %v882, 1.442695
  %v900 = vpow.pop %v899
  %v901 = vmul.f32 %v883, 1.442695
  %v902 = vpow.pop %v901
  %v903 = vmul.f32 %v884, 1.442695
  %v904 = vpow.pop %v903
  %v905 = vsel %vm844, %v886, 0.0
  %906 = vadd.xlane.f32.xlu0 %v905
  %v907 = vpop.xlane.xlu0 %906
  %v908 = vsel %vm844, %v888, 0.0
  %909 = vadd.xlane.f32.xlu0 %v908
  %v910 = vpop.xlane.xlu0 %909
  %v911 = vsel %vm844, %v890, 0.0
  %912 = vadd.xlane.f32.xlu0 %v911
  %v913 = vpop.xlane.xlu0 %912
  %v914 = vsel %vm844, %v892, 0.0
  %915 = vadd.xlane.f32.xlu0 %v914
  %v916 = vpop.xlane.xlu0 %915
  %v917 = vsel %vm844, %v894, 0.0
  %918 = vadd.xlane.f32.xlu0 %v917
  %v919 = vpop.xlane.xlu0 %918
  %v920 = vsel %vm844, %v896, 0.0
  %921 = vadd.xlane.f32.xlu0 %v920
  %v922 = vpop.xlane.xlu0 %921
  %v923 = vsel %vm844, %v898, 0.0
  %924 = vadd.xlane.f32.xlu0 %v923
  %v925 = vpop.xlane.xlu0 %924
  %v926 = vsel %vm844, %v900, 0.0
  %927 = vadd.xlane.f32.xlu0 %v926
  %v928 = vpop.xlane.xlu0 %927
  %v929 = vsel %vm844, %v902, 0.0
  %930 = vadd.xlane.f32.xlu0 %v929
  %v931 = vpop.xlane.xlu0 %930
  %v932 = vsel %vm844, %v904, 0.0
  %933 = vadd.xlane.f32.xlu0 %v932
  %v934 = vpop.xlane.xlu0 %933
  %v935 = vrcp.pop %v907
  %v936 = vrcp.pop %v910
  %v937 = vrcp.pop %v913
  %v938 = vrcp.pop %v916
  %v939 = vrcp.pop %v919
  %v940 = vrcp.pop %v922
  %v941 = vrcp.pop %v925
  %v942 = vrcp.pop %v928
  %v943 = vrcp.pop %v931
  %v944 = vrcp.pop %v934
  %v945 = vmul.f32 %v886, %v935
  %v946 = vmul.f32 %v888, %v936
  %v947 = vmul.f32 %v890, %v937
  %v948 = vmul.f32 %v892, %v938
  %v949 = vmul.f32 %v894, %v939
  %v950 = vmul.f32 %v896, %v940
  %v951 = vmul.f32 %v898, %v941
  %v952 = vmul.f32 %v900, %v942
  %v953 = vmul.f32 %v902, %v943
  %v954 = vmul.f32 %v904, %v944
  %v956 = vsel %vm844, %v945, 0
  %v959 = vsel %vm844, %v946, 0
  %v962 = vsel %vm844, %v947, 0
  %v965 = vsel %vm844, %v948, 0
  %v968 = vsel %vm844, %v949, 0
  %v971 = vsel %vm844, %v950, 0
  %v974 = vsel %vm844, %v951, 0
  %v977 = vsel %vm844, %v952, 0
  %v980 = vsel %vm844, %v953, 0
  %v983 = vsel %vm844, %v954, 0
  %985 = vmatprep.subr.mxu0 0.0
  %986 = vmatpush1.msra.mxu0 %v620
  %987 = vmatprep.subr.mxu0 0.0
  %988 = vmatpush1.msra.mxu0 %v625
  %989 = vmatprep.subr.mxu0 0.0
  %990 = vmatpush1.msra.mxu0 %v630
  %991 = vmatprep.subr.mxu0 0.0
  %992 = vmatpush1.msra.mxu0 %v635
  %993 = vmatprep.subr.mxu0 0.0
  %994 = vmatpush1.msra.mxu0 %v640
  %995 = vmatprep.subr.mxu0 0.0
  %996 = vmatpush1.msra.mxu0 %v645
  %997 = vmatprep.subr.mxu0 0.0
  %998 = vmatpush1.msra.mxu0 %v650
  %999 = vmatprep.subr.mxu0 0.0
  %1000 = vmatpush1.msra.mxu0 %v655
  %1001 = vmatprep.subr.mxu0 0.0
  %1002 = vmatpush1.msra.mxu0 %v660
  %1003 = vmatprep.subr.mxu0 0.0
  %1004 = vmatpush1.msra.mxu0 %v665
  %1005 = vmatprep.subr.mxu0 0.0
  %1006 = vmatpush1.msra.mxu0 0.0
  %1007 = vmatprep.subr.mxu0 0.0
  %1008 = vmatpush1.msra.mxu0 0.0
  %1009 = vmatprep.subr.mxu0 0.0
  %1010 = vmatpush1.msra.mxu0 0.0
  %1011 = vmatprep.subr.mxu0 0.0
  %1012 = vmatpush1.msra.mxu0 0.0
  %1013 = vmatprep.subr.mxu0 0.0
  %1014 = vmatpush1.msra.mxu0 0.0
  %1015 = vmatprep.subr.mxu0 0.0
  %1016 = vmatpush1.msra.mxu0 0.0
  %1017 = vmatprep.subr.mxu0 0.0
  %1018 = vmatpush1.msra.mxu0 0.0
  %1019 = vmatprep.subr.mxu0 0.0
  %1020 = vmatpush1.msra.mxu0 0.0
  %1021 = vmatprep.subr.mxu0 0.0
  %1022 = vmatpush1.msra.mxu0 0.0
  %1023 = vmatprep.subr.mxu0 0.0
  %1024 = vmatpush1.msra.mxu0 0.0
  %1025 = vmatprep.subr.mxu0 0.0
  %1026 = vmatpush1.msra.mxu0 0.0
  %1027 = vmatprep.subr.mxu0 0.0
  %1028 = vmatpush1.msra.mxu0 0.0
  %1029 = vmatprep.subr.mxu0 0.0
  %1030 = vmatpush1.msra.mxu0 0.0
  %1031 = vmatprep.subr.mxu0 0.0
  %1032 = vmatpush1.msra.mxu0 0.0
  %1033 = vmatprep.subr.mxu0 0.0
  %1034 = vmatpush1.msra.mxu0 0.0
  %1035 = vmatprep.subr.mxu0 0.0
  %1036 = vmatpush1.msra.mxu0 0.0
  %1037 = vmatprep.subr.mxu0 0.0
  %1038 = vmatpush1.msra.mxu0 0.0
  %1039 = vmatprep.subr.mxu0 0.0
  %1040 = vmatpush1.msra.mxu0 0.0
  %1041 = vmatprep.subr.mxu0 0.0
  %1042 = vmatpush1.msra.mxu0 0.0
  %1043 = vmatprep.subr.mxu0 0.0
  %1044 = vmatpush1.msra.mxu0 0.0
  %1045 = vmatprep.subr.mxu0 0.0
  %1046 = vmatpush1.msra.mxu0 0.0
  %1047 = vmatprep.subr.mxu0 0.0
  %1048 = vmatpush1.msra.mxu0 0.0
  %1049 = vmatprep.mubr.f32.mxu0 0.0
  %1050 = vmatmul.mubr.f32.gmra.mrb[0].mxu0 %v956
  %v1051 = vpop.f32.mrb[0].mxu0
  %v1052 = vadd.f32 0.0, %v1051
  %v1053 = vpop.f32.mrb[0].mxu0
  %1054 = vmatprep.mubr.f32.mxu0 0.0
  %1055 = vmatmul.mubr.f32.gmra.mrb[0].mxu0 %v959
  %v1056 = vpop.f32.mrb[0].mxu0
  %v1057 = vadd.f32 0.0, %v1056
  %v1058 = vpop.f32.mrb[0].mxu0
  %1059 = vmatprep.mubr.f32.mxu0 0.0
  %1060 = vmatmul.mubr.f32.gmra.mrb[0].mxu0 %v962
  %v1061 = vpop.f32.mrb[0].mxu0
  %v1062 = vadd.f32 0.0, %v1061
  %v1063 = vpop.f32.mrb[0].mxu0
  %1064 = vmatprep.mubr.f32.mxu0 0.0
  %1065 = vmatmul.mubr.f32.gmra.mrb[0].mxu0 %v965
  %v1066 = vpop.f32.mrb[0].mxu0
  %v1067 = vadd.f32 0.0, %v1066
  %v1068 = vpop.f32.mrb[0].mxu0
  %1069 = vmatprep.mubr.f32.mxu0 0.0
  %1070 = vmatmul.mubr.f32.gmra.mrb[0].mxu0 %v968
  %v1071 = vpop.f32.mrb[0].mxu0
  %v1072 = vadd.f32 0.0, %v1071
  %v1073 = vpop.f32.mrb[0].mxu0
  %1074 = vmatprep.mubr.f32.mxu0 0.0
  %1075 = vmatmul.mubr.f32.gmra.mrb[0].mxu0 %v971
  %v1076 = vpop.f32.mrb[0].mxu0
  %v1077 = vadd.f32 0.0, %v1076
  %v1078 = vpop.f32.mrb[0].mxu0
  %1079 = vmatprep.mubr.f32.mxu0 0.0
  %1080 = vmatmul.mubr.f32.gmra.mrb[0].mxu0 %v974
  %v1081 = vpop.f32.mrb[0].mxu0
  %v1082 = vadd.f32 0.0, %v1081
  %v1083 = vpop.f32.mrb[0].mxu0
  %1084 = vmatprep.mubr.f32.mxu0 0.0
  %1085 = vmatmul.mubr.f32.gmra.mrb[0].mxu0 %v977
  %v1086 = vpop.f32.mrb[0].mxu0
  %v1087 = vadd.f32 0.0, %v1086
  %v1088 = vpop.f32.mrb[0].mxu0
  %1089 = vmatprep.mubr.f32.mxu0 0.0
  %1090 = vmatmul.mubr.f32.gmra.mrb[0].mxu0 %v980
  %v1091 = vpop.f32.mrb[0].mxu0
  %v1092 = vadd.f32 0.0, %v1091
  %v1093 = vpop.f32.mrb[0].mxu0
  %1094 = vmatprep.mubr.f32.mxu0 0.0
  %1095 = vmatmul.mubr.f32.gmra.mrb[0].mxu0 %v983
  %v1096 = vpop.f32.mrb[0].mxu0
  %v1097 = vadd.f32 0.0, %v1096
  %v1098 = vpop.f32.mrb[0].mxu0
  %1099 = vdwg.mxu0
  %v1100 = vld [vmem:[%s9] sm:$0xff]
  %v1101 = vld [vmem:[%s9 + $0x8] sm:$0xff]
  %s1102 = scalar_lea.vmem %s3, 64
  %v1103 = vld [vmem:[%s1102] sm:$0xff]
  %v1104 = vld [vmem:[%s1102 + $0x8] sm:$0xff]
  %v1105 = vld [vmem:[%s1102 + $0x10] sm:$0xff]
  %v1106 = vld [vmem:[%s1102 + $0x18] sm:$0xff]
  %v1107 = vld [vmem:[%s1102 + $0x20] sm:$0xff]
  %v1108 = vld [vmem:[%s1102 + $0x28] sm:$0xff]
  %v1109 = vld [vmem:[%s1102 + $0x30] sm:$0xff]
  %v1110 = vld [vmem:[%s1102 + $0x38] sm:$0xff]
  %s1111 = scalar_lea.vmem %s4, 1
  %v1112 = vld [vmem:[%s1111] sm:$0x1]
  %v1114 = vlaneseq
  %v1115 = vshrl.u32 %v1114, 7
  %v1116 = vsub.s32 0, %v1115
  %v1117 = vrot.slane %v1112, %v1116
  %1119 = vmatprep.subr.mxu0 0.0
  %1120 = vmatpush1.msra.mxu0 %v1103
  %1121 = vmatprep.subr.mxu0 0.0
  %1122 = vmatpush1.msra.mxu0 %v1104
  %1123 = vmatprep.subr.mxu0 0.0
  %1124 = vmatpush1.msra.mxu0 %v1105
  %1125 = vmatprep.subr.mxu0 0.0
  %1126 = vmatpush1.msra.mxu0 %v1106
  %1127 = vmatprep.subr.mxu0 0.0
  %1128 = vmatpush1.msra.mxu0 %v1107
  %1129 = vmatprep.subr.mxu0 0.0
  %1130 = vmatpush1.msra.mxu0 %v1108
  %1131 = vmatprep.subr.mxu0 0.0
  %1132 = vmatpush1.msra.mxu0 %v1109
  %1133 = vmatprep.subr.mxu0 0.0
  %1134 = vmatpush1.msra.mxu0 %v1110
  %1135 = vmatprep.subr.mxu0 0.0
  %1136 = vmatpush1.msra.mxu0 0.0
  %1137 = vmatprep.subr.mxu0 0.0
  %1138 = vmatpush1.msra.mxu0 0.0
  %1139 = vmatprep.subr.mxu0 0.0
  %1140 = vmatpush1.msra.mxu0 0.0
  %1141 = vmatprep.subr.mxu0 0.0
  %1142 = vmatpush1.msra.mxu0 0.0
  %1143 = vmatprep.subr.mxu0 0.0
  %1144 = vmatpush1.msra.mxu0 0.0
  %1145 = vmatprep.subr.mxu0 0.0
  %1146 = vmatpush1.msra.mxu0 0.0
  %1147 = vmatprep.subr.mxu0 0.0
  %1148 = vmatpush1.msra.mxu0 0.0
  %1149 = vmatprep.subr.mxu0 0.0
  %1150 = vmatpush1.msra.mxu0 0.0
  %1151 = vmatprep.subr.mxu0 0.0
  %1152 = vmatpush1.msra.mxu0 0.0
  %1153 = vmatprep.subr.mxu0 0.0
  %1154 = vmatpush1.msra.mxu0 0.0
  %1155 = vmatprep.subr.mxu0 0.0
  %1156 = vmatpush1.msra.mxu0 0.0
  %1157 = vmatprep.subr.mxu0 0.0
  %1158 = vmatpush1.msra.mxu0 0.0
  %1159 = vmatprep.subr.mxu0 0.0
  %1160 = vmatpush1.msra.mxu0 0.0
  %1161 = vmatprep.subr.mxu0 0.0
  %1162 = vmatpush1.msra.mxu0 0.0
  %1163 = vmatprep.subr.mxu0 0.0
  %1164 = vmatpush1.msra.mxu0 0.0
  %1165 = vmatprep.subr.mxu0 0.0
  %1166 = vmatpush1.msra.mxu0 0.0
  %1167 = vmatprep.subr.mxu0 0.0
  %1168 = vmatpush1.msra.mxu0 0.0
  %1169 = vmatprep.subr.mxu0 0.0
  %1170 = vmatpush1.msra.mxu0 0.0
  %1171 = vmatprep.subr.mxu0 0.0
  %1172 = vmatpush1.msra.mxu0 0.0
  %1173 = vmatprep.subr.mxu0 0.0
  %1174 = vmatpush1.msra.mxu0 0.0
  %1175 = vmatprep.subr.mxu0 0.0
  %1176 = vmatpush1.msra.mxu0 0.0
  %1177 = vmatprep.subr.mxu0 0.0
  %1178 = vmatpush1.msra.mxu0 0.0
  %1179 = vmatprep.subr.mxu0 0.0
  %1180 = vmatpush1.msra.mxu0 0.0
  %1181 = vmatprep.subr.mxu0 0.0
  %1182 = vmatpush1.msra.mxu0 0.0
  %1183 = vmatprep.mubr.f32.mxu0 0.0
  %1184 = vmatmul.mubr.f32.gmra.mrb[0].mxu0 %v264
  %v1185 = vpop.f32.mrb[0].mxu0
  %v1186 = vadd.f32 %v1117, %v1185
  %v1187 = vpop.f32.mrb[0].mxu0
  %1188 = vmatprep.mubr.f32.mxu0 0.0
  %1189 = vmatmul.mubr.f32.gmra.mrb[0].mxu0 %v267
  %v1190 = vpop.f32.mrb[0].mxu0
  %v1191 = vadd.f32 %v1117, %v1190
  %v1192 = vpop.f32.mrb[0].mxu0
  %1193 = vmatprep.mubr.f32.mxu0 0.0
  %1194 = vmatmul.mubr.f32.gmra.mrb[0].mxu0 %v270
  %v1195 = vpop.f32.mrb[0].mxu0
  %v1196 = vadd.f32 %v1117, %v1195
  %v1197 = vpop.f32.mrb[0].mxu0
  %1198 = vmatprep.mubr.f32.mxu0 0.0
  %1199 = vmatmul.mubr.f32.gmra.mrb[0].mxu0 %v273
  %v1200 = vpop.f32.mrb[0].mxu0
  %v1201 = vadd.f32 %v1117, %v1200
  %v1202 = vpop.f32.mrb[0].mxu0
  %1203 = vmatprep.mubr.f32.mxu0 0.0
  %1204 = vmatmul.mubr.f32.gmra.mrb[0].mxu0 %v276
  %v1205 = vpop.f32.mrb[0].mxu0
  %v1206 = vadd.f32 %v1117, %v1205
  %v1207 = vpop.f32.mrb[0].mxu0
  %1208 = vmatprep.mubr.f32.mxu0 0.0
  %1209 = vmatmul.mubr.f32.gmra.mrb[0].mxu0 %v279
  %v1210 = vpop.f32.mrb[0].mxu0
  %v1211 = vadd.f32 %v1117, %v1210
  %v1212 = vpop.f32.mrb[0].mxu0
  %1213 = vmatprep.mubr.f32.mxu0 0.0
  %1214 = vmatmul.mubr.f32.gmra.mrb[0].mxu0 %v282
  %v1215 = vpop.f32.mrb[0].mxu0
  %v1216 = vadd.f32 %v1117, %v1215
  %v1217 = vpop.f32.mrb[0].mxu0
  %1218 = vmatprep.mubr.f32.mxu0 0.0
  %1219 = vmatmul.mubr.f32.gmra.mrb[0].mxu0 %v285
  %v1220 = vpop.f32.mrb[0].mxu0
  %v1221 = vadd.f32 %v1117, %v1220
  %v1222 = vpop.f32.mrb[0].mxu0
  %1223 = vmatprep.mubr.f32.mxu0 0.0
  %1224 = vmatmul.mubr.f32.gmra.mrb[0].mxu0 %v288
  %v1225 = vpop.f32.mrb[0].mxu0
  %v1226 = vadd.f32 %v1117, %v1225
  %v1227 = vpop.f32.mrb[0].mxu0
  %1228 = vmatprep.mubr.f32.mxu0 0.0
  %1229 = vmatmul.mubr.f32.gmra.mrb[0].mxu0 %v291
  %v1230 = vpop.f32.mrb[0].mxu0
  %v1231 = vadd.f32 %v1117, %v1230
  %v1232 = vpop.f32.mrb[0].mxu0
  %1233 = vdwg.mxu0
  %s1234 = scalar_lea.vmem %s5, 64
  %v1235 = vld [vmem:[%s1234] sm:$0xff]
  %v1236 = vld [vmem:[%s1234 + $0x8] sm:$0xff]
  %v1237 = vld [vmem:[%s1234 + $0x10] sm:$0xff]
  %v1238 = vld [vmem:[%s1234 + $0x18] sm:$0xff]
  %v1239 = vld [vmem:[%s1234 + $0x20] sm:$0xff]
  %v1240 = vld [vmem:[%s1234 + $0x28] sm:$0xff]
  %v1241 = vld [vmem:[%s1234 + $0x30] sm:$0xff]
  %v1242 = vld [vmem:[%s1234 + $0x38] sm:$0xff]
  %s1243 = scalar_lea.vmem %s6, 1
  %v1244 = vld [vmem:[%s1243] sm:$0x1]
  %v1246 = vlaneseq
  %v1247 = vshrl.u32 %v1246, 7
  %v1248 = vsub.s32 0, %v1247
  %v1249 = vrot.slane %v1244, %v1248
  %1251 = vmatprep.subr.mxu0 0.0
  %1252 = vmatpush1.msra.mxu0 %v1235
  %1253 = vmatprep.subr.mxu0 0.0
  %1254 = vmatpush1.msra.mxu0 %v1236
  %1255 = vmatprep.subr.mxu0 0.0
  %1256 = vmatpush1.msra.mxu0 %v1237
  %1257 = vmatprep.subr.mxu0 0.0
  %1258 = vmatpush1.msra.mxu0 %v1238
  %1259 = vmatprep.subr.mxu0 0.0
  %1260 = vmatpush1.msra.mxu0 %v1239
  %1261 = vmatprep.subr.mxu0 0.0
  %1262 = vmatpush1.msra.mxu0 %v1240
  %1263 = vmatprep.subr.mxu0 0.0
  %1264 = vmatpush1.msra.mxu0 %v1241
  %1265 = vmatprep.subr.mxu0 0.0
  %1266 = vmatpush1.msra.mxu0 %v1242
  %1267 = vmatprep.subr.mxu0 0.0
  %1268 = vmatpush1.msra.mxu0 0.0
  %1269 = vmatprep.subr.mxu0 0.0
  %1270 = vmatpush1.msra.mxu0 0.0
  %1271 = vmatprep.subr.mxu0 0.0
  %1272 = vmatpush1.msra.mxu0 0.0
  %1273 = vmatprep.subr.mxu0 0.0
  %1274 = vmatpush1.msra.mxu0 0.0
  %1275 = vmatprep.subr.mxu0 0.0
  %1276 = vmatpush1.msra.mxu0 0.0
  %1277 = vmatprep.subr.mxu0 0.0
  %1278 = vmatpush1.msra.mxu0 0.0
  %1279 = vmatprep.subr.mxu0 0.0
  %1280 = vmatpush1.msra.mxu0 0.0
  %1281 = vmatprep.subr.mxu0 0.0
  %1282 = vmatpush1.msra.mxu0 0.0
  %1283 = vmatprep.subr.mxu0 0.0
  %1284 = vmatpush1.msra.mxu0 0.0
  %1285 = vmatprep.subr.mxu0 0.0
  %1286 = vmatpush1.msra.mxu0 0.0
  %1287 = vmatprep.subr.mxu0 0.0
  %1288 = vmatpush1.msra.mxu0 0.0
  %1289 = vmatprep.subr.mxu0 0.0
  %1290 = vmatpush1.msra.mxu0 0.0
  %1291 = vmatprep.subr.mxu0 0.0
  %1292 = vmatpush1.msra.mxu0 0.0
  %1293 = vmatprep.subr.mxu0 0.0
  %1294 = vmatpush1.msra.mxu0 0.0
  %1295 = vmatprep.subr.mxu0 0.0
  %1296 = vmatpush1.msra.mxu0 0.0
  %1297 = vmatprep.subr.mxu0 0.0
  %1298 = vmatpush1.msra.mxu0 0.0
  %1299 = vmatprep.subr.mxu0 0.0
  %1300 = vmatpush1.msra.mxu0 0.0
  %1301 = vmatprep.subr.mxu0 0.0
  %1302 = vmatpush1.msra.mxu0 0.0
  %1303 = vmatprep.subr.mxu0 0.0
  %1304 = vmatpush1.msra.mxu0 0.0
  %1305 = vmatprep.subr.mxu0 0.0
  %1306 = vmatpush1.msra.mxu0 0.0
  %1307 = vmatprep.subr.mxu0 0.0
  %1308 = vmatpush1.msra.mxu0 0.0
  %1309 = vmatprep.subr.mxu0 0.0
  %1310 = vmatpush1.msra.mxu0 0.0
  %1311 = vmatprep.subr.mxu0 0.0
  %1312 = vmatpush1.msra.mxu0 0.0
  %1313 = vmatprep.subr.mxu0 0.0
  %1314 = vmatpush1.msra.mxu0 0.0
  %1315 = vmatprep.mubr.f32.mxu0 0.0
  %1316 = vmatmul.mubr.f32.gmra.mrb[0].mxu0 %v264
  %v1317 = vpop.f32.mrb[0].mxu0
  %v1318 = vadd.f32 %v1249, %v1317
  %v1319 = vpop.f32.mrb[0].mxu0
  %1320 = vmatprep.mubr.f32.mxu0 0.0
  %1321 = vmatmul.mubr.f32.gmra.mrb[0].mxu0 %v267
  %v1322 = vpop.f32.mrb[0].mxu0
  %v1323 = vadd.f32 %v1249, %v1322
  %v1324 = vpop.f32.mrb[0].mxu0
  %1325 = vmatprep.mubr.f32.mxu0 0.0
  %1326 = vmatmul.mubr.f32.gmra.mrb[0].mxu0 %v270
  %v1327 = vpop.f32.mrb[0].mxu0
  %v1328 = vadd.f32 %v1249, %v1327
  %v1329 = vpop.f32.mrb[0].mxu0
  %1330 = vmatprep.mubr.f32.mxu0 0.0
  %1331 = vmatmul.mubr.f32.gmra.mrb[0].mxu0 %v273
  %v1332 = vpop.f32.mrb[0].mxu0
  %v1333 = vadd.f32 %v1249, %v1332
  %v1334 = vpop.f32.mrb[0].mxu0
  %1335 = vmatprep.mubr.f32.mxu0 0.0
  %1336 = vmatmul.mubr.f32.gmra.mrb[0].mxu0 %v276
  %v1337 = vpop.f32.mrb[0].mxu0
  %v1338 = vadd.f32 %v1249, %v1337
  %v1339 = vpop.f32.mrb[0].mxu0
  %1340 = vmatprep.mubr.f32.mxu0 0.0
  %1341 = vmatmul.mubr.f32.gmra.mrb[0].mxu0 %v279
  %v1342 = vpop.f32.mrb[0].mxu0
  %v1343 = vadd.f32 %v1249, %v1342
  %v1344 = vpop.f32.mrb[0].mxu0
  %1345 = vmatprep.mubr.f32.mxu0 0.0
  %1346 = vmatmul.mubr.f32.gmra.mrb[0].mxu0 %v282
  %v1347 = vpop.f32.mrb[0].mxu0
  %v1348 = vadd.f32 %v1249, %v1347
  %v1349 = vpop.f32.mrb[0].mxu0
  %1350 = vmatprep.mubr.f32.mxu0 0.0
  %1351 = vmatmul.mubr.f32.gmra.mrb[0].mxu0 %v285
  %v1352 = vpop.f32.mrb[0].mxu0
  %v1353 = vadd.f32 %v1249, %v1352
  %v1354 = vpop.f32.mrb[0].mxu0
  %1355 = vmatprep.mubr.f32.mxu0 0.0
  %1356 = vmatmul.mubr.f32.gmra.mrb[0].mxu0 %v288
  %v1357 = vpop.f32.mrb[0].mxu0
  %v1358 = vadd.f32 %v1249, %v1357
  %v1359 = vpop.f32.mrb[0].mxu0
  %1360 = vmatprep.mubr.f32.mxu0 0.0
  %1361 = vmatmul.mubr.f32.gmra.mrb[0].mxu0 %v291
  %v1362 = vpop.f32.mrb[0].mxu0
  %v1363 = vadd.f32 %v1249, %v1362
  %v1364 = vpop.f32.mrb[0].mxu0
  %1365 = vdwg.mxu0
  %s1366 = scalar_lea.vmem %s7, 64
  %v1367 = vld [vmem:[%s1366] sm:$0xff]
  %v1368 = vld [vmem:[%s1366 + $0x8] sm:$0xff]
  %v1369 = vld [vmem:[%s1366 + $0x10] sm:$0xff]
  %v1370 = vld [vmem:[%s1366 + $0x18] sm:$0xff]
  %v1371 = vld [vmem:[%s1366 + $0x20] sm:$0xff]
  %v1372 = vld [vmem:[%s1366 + $0x28] sm:$0xff]
  %v1373 = vld [vmem:[%s1366 + $0x30] sm:$0xff]
  %v1374 = vld [vmem:[%s1366 + $0x38] sm:$0xff]
  %s1375 = scalar_lea.vmem %s8, 1
  %v1376 = vld [vmem:[%s1375] sm:$0x1]
  %v1378 = vlaneseq
  %v1379 = vshrl.u32 %v1378, 7
  %v1380 = vsub.s32 0, %v1379
  %v1381 = vrot.slane %v1376, %v1380
  %1383 = vmatprep.subr.mxu0 0.0
  %1384 = vmatpush1.msra.mxu0 %v1367
  %1385 = vmatprep.subr.mxu0 0.0
  %1386 = vmatpush1.msra.mxu0 %v1368
  %1387 = vmatprep.subr.mxu0 0.0
  %1388 = vmatpush1.msra.mxu0 %v1369
  %1389 = vmatprep.subr.mxu0 0.0
  %1390 = vmatpush1.msra.mxu0 %v1370
  %1391 = vmatprep.subr.mxu0 0.0
  %1392 = vmatpush1.msra.mxu0 %v1371
  %1393 = vmatprep.subr.mxu0 0.0
  %1394 = vmatpush1.msra.mxu0 %v1372
  %1395 = vmatprep.subr.mxu0 0.0
  %1396 = vmatpush1.msra.mxu0 %v1373
  %1397 = vmatprep.subr.mxu0 0.0
  %1398 = vmatpush1.msra.mxu0 %v1374
  %1399 = vmatprep.subr.mxu0 0.0
  %1400 = vmatpush1.msra.mxu0 0.0
  %1401 = vmatprep.subr.mxu0 0.0
  %1402 = vmatpush1.msra.mxu0 0.0
  %1403 = vmatprep.subr.mxu0 0.0
  %1404 = vmatpush1.msra.mxu0 0.0
  %1405 = vmatprep.subr.mxu0 0.0
  %1406 = vmatpush1.msra.mxu0 0.0
  %1407 = vmatprep.subr.mxu0 0.0
  %1408 = vmatpush1.msra.mxu0 0.0
  %1409 = vmatprep.subr.mxu0 0.0
  %1410 = vmatpush1.msra.mxu0 0.0
  %1411 = vmatprep.subr.mxu0 0.0
  %1412 = vmatpush1.msra.mxu0 0.0
  %1413 = vmatprep.subr.mxu0 0.0
  %1414 = vmatpush1.msra.mxu0 0.0
  %1415 = vmatprep.subr.mxu0 0.0
  %1416 = vmatpush1.msra.mxu0 0.0
  %1417 = vmatprep.subr.mxu0 0.0
  %1418 = vmatpush1.msra.mxu0 0.0
  %1419 = vmatprep.subr.mxu0 0.0
  %1420 = vmatpush1.msra.mxu0 0.0
  %1421 = vmatprep.subr.mxu0 0.0
  %1422 = vmatpush1.msra.mxu0 0.0
  %1423 = vmatprep.subr.mxu0 0.0
  %1424 = vmatpush1.msra.mxu0 0.0
  %1425 = vmatprep.subr.mxu0 0.0
  %1426 = vmatpush1.msra.mxu0 0.0
  %1427 = vmatprep.subr.mxu0 0.0
  %1428 = vmatpush1.msra.mxu0 0.0
  %1429 = vmatprep.subr.mxu0 0.0
  %1430 = vmatpush1.msra.mxu0 0.0
  %1431 = vmatprep.subr.mxu0 0.0
  %1432 = vmatpush1.msra.mxu0 0.0
  %1433 = vmatprep.subr.mxu0 0.0
  %1434 = vmatpush1.msra.mxu0 0.0
  %1435 = vmatprep.subr.mxu0 0.0
  %1436 = vmatpush1.msra.mxu0 0.0
  %1437 = vmatprep.subr.mxu0 0.0
  %1438 = vmatpush1.msra.mxu0 0.0
  %1439 = vmatprep.subr.mxu0 0.0
  %1440 = vmatpush1.msra.mxu0 0.0
  %1441 = vmatprep.subr.mxu0 0.0
  %1442 = vmatpush1.msra.mxu0 0.0
  %1443 = vmatprep.subr.mxu0 0.0
  %1444 = vmatpush1.msra.mxu0 0.0
  %1445 = vmatprep.subr.mxu0 0.0
  %1446 = vmatpush1.msra.mxu0 0.0
  %1447 = vmatprep.mubr.f32.mxu0 0.0
  %1448 = vmatmul.mubr.f32.gmra.mrb[0].mxu0 %v264
  %v1449 = vpop.f32.mrb[0].mxu0
  %v1450 = vadd.f32 %v1381, %v1449
  %v1451 = vpop.f32.mrb[0].mxu0
  %1452 = vmatprep.mubr.f32.mxu0 0.0
  %1453 = vmatmul.mubr.f32.gmra.mrb[0].mxu0 %v267
  %v1454 = vpop.f32.mrb[0].mxu0
  %v1455 = vadd.f32 %v1381, %v1454
  %v1456 = vpop.f32.mrb[0].mxu0
  %1457 = vmatprep.mubr.f32.mxu0 0.0
  %1458 = vmatmul.mubr.f32.gmra.mrb[0].mxu0 %v270
  %v1459 = vpop.f32.mrb[0].mxu0
  %v1460 = vadd.f32 %v1381, %v1459
  %v1461 = vpop.f32.mrb[0].mxu0
  %1462 = vmatprep.mubr.f32.mxu0 0.0
  %1463 = vmatmul.mubr.f32.gmra.mrb[0].mxu0 %v273
  %v1464 = vpop.f32.mrb[0].mxu0
  %v1465 = vadd.f32 %v1381, %v1464
  %v1466 = vpop.f32.mrb[0].mxu0
  %1467 = vmatprep.mubr.f32.mxu0 0.0
  %1468 = vmatmul.mubr.f32.gmra.mrb[0].mxu0 %v276
  %v1469 = vpop.f32.mrb[0].mxu0
  %v1470 = vadd.f32 %v1381, %v1469
  %v1471 = vpop.f32.mrb[0].mxu0
  %1472 = vmatprep.mubr.f32.mxu0 0.0
  %1473 = vmatmul.mubr.f32.gmra.mrb[0].mxu0 %v279
  %v1474 = vpop.f32.mrb[0].mxu0
  %v1475 = vadd.f32 %v1381, %v1474
  %v1476 = vpop.f32.mrb[0].mxu0
  %1477 = vmatprep.mubr.f32.mxu0 0.0
  %1478 = vmatmul.mubr.f32.gmra.mrb[0].mxu0 %v282
  %v1479 = vpop.f32.mrb[0].mxu0
  %v1480 = vadd.f32 %v1381, %v1479
  %v1481 = vpop.f32.mrb[0].mxu0
  %1482 = vmatprep.mubr.f32.mxu0 0.0
  %1483 = vmatmul.mubr.f32.gmra.mrb[0].mxu0 %v285
  %v1484 = vpop.f32.mrb[0].mxu0
  %v1485 = vadd.f32 %v1381, %v1484
  %v1486 = vpop.f32.mrb[0].mxu0
  %1487 = vmatprep.mubr.f32.mxu0 0.0
  %1488 = vmatmul.mubr.f32.gmra.mrb[0].mxu0 %v288
  %v1489 = vpop.f32.mrb[0].mxu0
  %v1490 = vadd.f32 %v1381, %v1489
  %v1491 = vpop.f32.mrb[0].mxu0
  %1492 = vmatprep.mubr.f32.mxu0 0.0
  %1493 = vmatmul.mubr.f32.gmra.mrb[0].mxu0 %v291
  %v1494 = vpop.f32.mrb[0].mxu0
  %v1495 = vadd.f32 %v1381, %v1494
  %v1496 = vpop.f32.mrb[0].mxu0
  %1497 = vdwg.mxu0
  %v1499 = vsel %vm668, %v1186, 0
  %v1502 = vsel %vm668, %v1191, 0
  %v1505 = vsel %vm668, %v1196, 0
  %v1508 = vsel %vm668, %v1201, 0
  %v1511 = vsel %vm668, %v1206, 0
  %v1514 = vsel %vm668, %v1211, 0
  %v1517 = vsel %vm668, %v1216, 0
  %v1520 = vsel %vm668, %v1221, 0
  %v1523 = vsel %vm668, %v1226, 0
  %v1526 = vsel %vm668, %v1231, 0
  %v1529 = vsel %vm668, %v1318, 0
  %v1532 = vsel %vm668, %v1323, 0
  %v1535 = vsel %vm668, %v1328, 0
  %v1538 = vsel %vm668, %v1333, 0
  %v1541 = vsel %vm668, %v1338, 0
  %v1544 = vsel %vm668, %v1343, 0
  %v1547 = vsel %vm668, %v1348, 0
  %v1550 = vsel %vm668, %v1353, 0
  %v1553 = vsel %vm668, %v1358, 0
  %v1556 = vsel %vm668, %v1363, 0
  %1558 = vmatprep.subr.mxu0 0.0
  %1559 = vmatpush1.xpose.msra.mxu0 %v1529
  %1560 = vmatprep.subr.mxu0 0.0
  %1561 = vmatpush1.xpose.msra.mxu0 %v1532
  %1562 = vmatprep.subr.mxu0 0.0
  %1563 = vmatpush1.xpose.msra.mxu0 %v1535
  %1564 = vmatprep.subr.mxu0 0.0
  %1565 = vmatpush1.xpose.msra.mxu0 %v1538
  %1566 = vmatprep.subr.mxu0 0.0
  %1567 = vmatpush1.xpose.msra.mxu0 %v1541
  %1568 = vmatprep.subr.mxu0 0.0
  %1569 = vmatpush1.xpose.msra.mxu0 %v1544
  %1570 = vmatprep.subr.mxu0 0.0
  %1571 = vmatpush1.xpose.msra.mxu0 %v1547
  %1572 = vmatprep.subr.mxu0 0.0
  %1573 = vmatpush1.xpose.msra.mxu0 %v1550
  %1574 = vmatprep.subr.mxu0 0.0
  %1575 = vmatpush1.xpose.msra.mxu0 %v1553
  %1576 = vmatprep.subr.mxu0 0.0
  %1577 = vmatpush1.xpose.msra.mxu0 %v1556
  %1578 = vmatprep.subr.mxu0 0.0
  %1579 = vmatpush1.xpose.msra.mxu0 0.0
  %1580 = vmatprep.subr.mxu0 0.0
  %1581 = vmatpush1.xpose.msra.mxu0 0.0
  %1582 = vmatprep.subr.mxu0 0.0
  %1583 = vmatpush1.xpose.msra.mxu0 0.0
  %1584 = vmatprep.subr.mxu0 0.0
  %1585 = vmatpush1.xpose.msra.mxu0 0.0
  %1586 = vmatprep.subr.mxu0 0.0
  %1587 = vmatpush1.xpose.msra.mxu0 0.0
  %1588 = vmatprep.subr.mxu0 0.0
  %1589 = vmatpush1.xpose.msra.mxu0 0.0
  %1590 = vmatprep.subr.mxu0 0.0
  %1591 = vmatpush1.xpose.msra.mxu0 0.0
  %1592 = vmatprep.subr.mxu0 0.0
  %1593 = vmatpush1.xpose.msra.mxu0 0.0
  %1594 = vmatprep.subr.mxu0 0.0
  %1595 = vmatpush1.xpose.msra.mxu0 0.0
  %1596 = vmatprep.subr.mxu0 0.0
  %1597 = vmatpush1.xpose.msra.mxu0 0.0
  %1598 = vmatprep.subr.mxu0 0.0
  %1599 = vmatpush1.xpose.msra.mxu0 0.0
  %1600 = vmatprep.subr.mxu0 0.0
  %1601 = vmatpush1.xpose.msra.mxu0 0.0
  %1602 = vmatprep.subr.mxu0 0.0
  %1603 = vmatpush1.xpose.msra.mxu0 0.0
  %1604 = vmatprep.subr.mxu0 0.0
  %1605 = vmatpush1.xpose.msra.mxu0 0.0
  %1606 = vmatprep.subr.mxu0 0.0
  %1607 = vmatpush1.xpose.msra.mxu0 0.0
  %1608 = vmatprep.subr.mxu0 0.0
  %1609 = vmatpush1.xpose.msra.mxu0 0.0
  %1610 = vmatprep.subr.mxu0 0.0
  %1611 = vmatpush1.xpose.msra.mxu0 0.0
  %1612 = vmatprep.subr.mxu0 0.0
  %1613 = vmatpush1.xpose.msra.mxu0 0.0
  %1614 = vmatprep.subr.mxu0 0.0
  %1615 = vmatpush1.xpose.msra.mxu0 0.0
  %1616 = vmatprep.subr.mxu0 0.0
  %1617 = vmatpush1.xpose.msra.mxu0 0.0
  %1618 = vmatprep.subr.mxu0 0.0
  %1619 = vmatpush1.xpose.msra.mxu0 0.0
  %1620 = vmatprep.subr.mxu0 0.0
  %1621 = vmatpush1.xpose.msra.mxu0 0.0
  %1622 = vmatprep.mubr.f32.mxu0 0.0
  %1623 = vmatmul.mubr.f32.gmra.mrb[0].mxu0 %v1499
  %v1624 = vpop.f32.mrb[0].mxu0
  %v1625 = vadd.f32 %v81, %v1624
  %v1626 = vpop.f32.mrb[0].mxu0
  %1627 = vmatprep.mubr.f32.mxu0 0.0
  %1628 = vmatmul.mubr.f32.gmra.mrb[0].mxu0 %v1502
  %v1629 = vpop.f32.mrb[0].mxu0
  %v1630 = vadd.f32 %v81, %v1629
  %v1631 = vpop.f32.mrb[0].mxu0
  %1632 = vmatprep.mubr.f32.mxu0 0.0
  %1633 = vmatmul.mubr.f32.gmra.mrb[0].mxu0 %v1505
  %v1634 = vpop.f32.mrb[0].mxu0
  %v1635 = vadd.f32 %v81, %v1634
  %v1636 = vpop.f32.mrb[0].mxu0
  %1637 = vmatprep.mubr.f32.mxu0 0.0
  %1638 = vmatmul.mubr.f32.gmra.mrb[0].mxu0 %v1508
  %v1639 = vpop.f32.mrb[0].mxu0
  %v1640 = vadd.f32 %v81, %v1639
  %v1641 = vpop.f32.mrb[0].mxu0
  %1642 = vmatprep.mubr.f32.mxu0 0.0
  %1643 = vmatmul.mubr.f32.gmra.mrb[0].mxu0 %v1511
  %v1644 = vpop.f32.mrb[0].mxu0
  %v1645 = vadd.f32 %v81, %v1644
  %v1646 = vpop.f32.mrb[0].mxu0
  %1647 = vmatprep.mubr.f32.mxu0 0.0
  %1648 = vmatmul.mubr.f32.gmra.mrb[0].mxu0 %v1514
  %v1649 = vpop.f32.mrb[0].mxu0
  %v1650 = vadd.f32 %v81, %v1649
  %v1651 = vpop.f32.mrb[0].mxu0
  %1652 = vmatprep.mubr.f32.mxu0 0.0
  %1653 = vmatmul.mubr.f32.gmra.mrb[0].mxu0 %v1517
  %v1654 = vpop.f32.mrb[0].mxu0
  %v1655 = vadd.f32 %v81, %v1654
  %v1656 = vpop.f32.mrb[0].mxu0
  %1657 = vmatprep.mubr.f32.mxu0 0.0
  %1658 = vmatmul.mubr.f32.gmra.mrb[0].mxu0 %v1520
  %v1659 = vpop.f32.mrb[0].mxu0
  %v1660 = vadd.f32 %v81, %v1659
  %v1661 = vpop.f32.mrb[0].mxu0
  %1662 = vmatprep.mubr.f32.mxu0 0.0
  %1663 = vmatmul.mubr.f32.gmra.mrb[0].mxu0 %v1523
  %v1664 = vpop.f32.mrb[0].mxu0
  %v1665 = vadd.f32 %v81, %v1664
  %v1666 = vpop.f32.mrb[0].mxu0
  %1667 = vmatprep.mubr.f32.mxu0 0.0
  %1668 = vmatmul.mubr.f32.gmra.mrb[0].mxu0 %v1526
  %v1669 = vpop.f32.mrb[0].mxu0
  %v1670 = vadd.f32 %v81, %v1669
  %v1671 = vpop.f32.mrb[0].mxu0
  %1672 = vdwg.mxu0
  %v1673 = vsel %vm844, %v1625, -inf
  %1674 = vmax.xlane.f32.xlu0 %v1673
  %v1675 = vpop.xlane.xlu0 %1674
  %v1676 = vsel %vm844, %v1630, -inf
  %1677 = vmax.xlane.f32.xlu0 %v1676
  %v1678 = vpop.xlane.xlu0 %1677
  %v1679 = vsel %vm844, %v1635, -inf
  %1680 = vmax.xlane.f32.xlu0 %v1679
  %v1681 = vpop.xlane.xlu0 %1680
  %v1682 = vsel %vm844, %v1640, -inf
  %1683 = vmax.xlane.f32.xlu0 %v1682
  %v1684 = vpop.xlane.xlu0 %1683
  %v1685 = vsel %vm844, %v1645, -inf
  %1686 = vmax.xlane.f32.xlu0 %v1685
  %v1687 = vpop.xlane.xlu0 %1686
  %v1688 = vsel %vm844, %v1650, -inf
  %1689 = vmax.xlane.f32.xlu0 %v1688
  %v1690 = vpop.xlane.xlu0 %1689
  %v1691 = vsel %vm844, %v1655, -inf
  %1692 = vmax.xlane.f32.xlu0 %v1691
  %v1693 = vpop.xlane.xlu0 %1692
  %v1694 = vsel %vm844, %v1660, -inf
  %1695 = vmax.xlane.f32.xlu0 %v1694
  %v1696 = vpop.xlane.xlu0 %1695
  %v1697 = vsel %vm844, %v1665, -inf
  %1698 = vmax.xlane.f32.xlu0 %v1697
  %v1699 = vpop.xlane.xlu0 %1698
  %v1700 = vsel %vm844, %v1670, -inf
  %1701 = vmax.xlane.f32.xlu0 %v1700
  %v1702 = vpop.xlane.xlu0 %1701
  %v1703 = vsub.f32 %v1625, %v1675
  %v1704 = vsub.f32 %v1630, %v1678
  %v1705 = vsub.f32 %v1635, %v1681
  %v1706 = vsub.f32 %v1640, %v1684
  %v1707 = vsub.f32 %v1645, %v1687
  %v1708 = vsub.f32 %v1650, %v1690
  %v1709 = vsub.f32 %v1655, %v1693
  %v1710 = vsub.f32 %v1660, %v1696
  %v1711 = vsub.f32 %v1665, %v1699
  %v1712 = vsub.f32 %v1670, %v1702
  %v1713 = vmul.f32 %v1703, 1.442695
  %v1714 = vpow.pop %v1713
  %v1715 = vmul.f32 %v1704, 1.442695
  %v1716 = vpow.pop %v1715
  %v1717 = vmul.f32 %v1705, 1.442695
  %v1718 = vpow.pop %v1717
  %v1719 = vmul.f32 %v1706, 1.442695
  %v1720 = vpow.pop %v1719
  %v1721 = vmul.f32 %v1707, 1.442695
  %v1722 = vpow.pop %v1721
  %v1723 = vmul.f32 %v1708, 1.442695
  %v1724 = vpow.pop %v1723
  %v1725 = vmul.f32 %v1709, 1.442695
  %v1726 = vpow.pop %v1725
  %v1727 = vmul.f32 %v1710, 1.442695
  %v1728 = vpow.pop %v1727
  %v1729 = vmul.f32 %v1711, 1.442695
  %v1730 = vpow.pop %v1729
  %v1731 = vmul.f32 %v1712, 1.442695
  %v1732 = vpow.pop %v1731
  %v1733 = vsel %vm844, %v1714, 0.0
  %1734 = vadd.xlane.f32.xlu0 %v1733
  %v1735 = vpop.xlane.xlu0 %1734
  %v1736 = vsel %vm844, %v1716, 0.0
  %1737 = vadd.xlane.f32.xlu0 %v1736
  %v1738 = vpop.xlane.xlu0 %1737
  %v1739 = vsel %vm844, %v1718, 0.0
  %1740 = vadd.xlane.f32.xlu0 %v1739
  %v1741 = vpop.xlane.xlu0 %1740
  %v1742 = vsel %vm844, %v1720, 0.0
  %1743 = vadd.xlane.f32.xlu0 %v1742
  %v1744 = vpop.xlane.xlu0 %1743
  %v1745 = vsel %vm844, %v1722, 0.0
  %1746 = vadd.xlane.f32.xlu0 %v1745
  %v1747 = vpop.xlane.xlu0 %1746
  %v1748 = vsel %vm844, %v1724, 0.0
  %1749 = vadd.xlane.f32.xlu0 %v1748
  %v1750 = vpop.xlane.xlu0 %1749
  %v1751 = vsel %vm844, %v1726, 0.0
  %1752 = vadd.xlane.f32.xlu0 %v1751
  %v1753 = vpop.xlane.xlu0 %1752
  %v1754 = vsel %vm844, %v1728, 0.0
  %1755 = vadd.xlane.f32.xlu0 %v1754
  %v1756 = vpop.xlane.xlu0 %1755
  %v1757 = vsel %vm844, %v1730, 0.0
  %1758 = vadd.xlane.f32.xlu0 %v1757
  %v1759 = vpop.xlane.xlu0 %1758
  %v1760 = vsel %vm844, %v1732, 0.0
  %1761 = vadd.xlane.f32.xlu0 %v1760
  %v1762 = vpop.xlane.xlu0 %1761
  %v1763 = vrcp.pop %v1735
  %v1764 = vrcp.pop %v1738
  %v1765 = vrcp.pop %v1741
  %v1766 = vrcp.pop %v1744
  %v1767 = vrcp.pop %v1747
  %v1768 = vrcp.pop %v1750
  %v1769 = vrcp.pop %v1753
  %v1770 = vrcp.pop %v1756
  %v1771 = vrcp.pop %v1759
  %v1772 = vrcp.pop %v1762
  %v1773 = vmul.f32 %v1714, %v1763
  %v1774 = vmul.f32 %v1716, %v1764
  %v1775 = vmul.f32 %v1718, %v1765
  %v1776 = vmul.f32 %v1720, %v1766
  %v1777 = vmul.f32 %v1722, %v1767
  %v1778 = vmul.f32 %v1724, %v1768
  %v1779 = vmul.f32 %v1726, %v1769
  %v1780 = vmul.f32 %v1728, %v1770
  %v1781 = vmul.f32 %v1730, %v1771
  %v1782 = vmul.f32 %v1732, %v1772
  %v1784 = vsel %vm844, %v1773, 0
  %v1787 = vsel %vm844, %v1774, 0
  %v1790 = vsel %vm844, %v1775, 0
  %v1793 = vsel %vm844, %v1776, 0
  %v1796 = vsel %vm844, %v1777, 0
  %v1799 = vsel %vm844, %v1778, 0
  %v1802 = vsel %vm844, %v1779, 0
  %v1805 = vsel %vm844, %v1780, 0
  %v1808 = vsel %vm844, %v1781, 0
  %v1811 = vsel %vm844, %v1782, 0
  %1813 = vmatprep.subr.mxu0 0.0
  %1814 = vmatpush1.msra.mxu0 %v1450
  %1815 = vmatprep.subr.mxu0 0.0
  %1816 = vmatpush1.msra.mxu0 %v1455
  %1817 = vmatprep.subr.mxu0 0.0
  %1818 = vmatpush1.msra.mxu0 %v1460
  %1819 = vmatprep.subr.mxu0 0.0
  %1820 = vmatpush1.msra.mxu0 %v1465
  %1821 = vmatprep.subr.mxu0 0.0
  %1822 = vmatpush1.msra.mxu0 %v1470
  %1823 = vmatprep.subr.mxu0 0.0
  %1824 = vmatpush1.msra.mxu0 %v1475
  %1825 = vmatprep.subr.mxu0 0.0
  %1826 = vmatpush1.msra.mxu0 %v1480
  %1827 = vmatprep.subr.mxu0 0.0
  %1828 = vmatpush1.msra.mxu0 %v1485
  %1829 = vmatprep.subr.mxu0 0.0
  %1830 = vmatpush1.msra.mxu0 %v1490
  %1831 = vmatprep.subr.mxu0 0.0
  %1832 = vmatpush1.msra.mxu0 %v1495
  %1833 = vmatprep.subr.mxu0 0.0
  %1834 = vmatpush1.msra.mxu0 0.0
  %1835 = vmatprep.subr.mxu0 0.0
  %1836 = vmatpush1.msra.mxu0 0.0
  %1837 = vmatprep.subr.mxu0 0.0
  %1838 = vmatpush1.msra.mxu0 0.0
  %1839 = vmatprep.subr.mxu0 0.0
  %1840 = vmatpush1.msra.mxu0 0.0
  %1841 = vmatprep.subr.mxu0 0.0
  %1842 = vmatpush1.msra.mxu0 0.0
  %1843 = vmatprep.subr.mxu0 0.0
  %1844 = vmatpush1.msra.mxu0 0.0
  %1845 = vmatprep.subr.mxu0 0.0
  %1846 = vmatpush1.msra.mxu0 0.0
  %1847 = vmatprep.subr.mxu0 0.0
  %1848 = vmatpush1.msra.mxu0 0.0
  %1849 = vmatprep.subr.mxu0 0.0
  %1850 = vmatpush1.msra.mxu0 0.0
  %1851 = vmatprep.subr.mxu0 0.0
  %1852 = vmatpush1.msra.mxu0 0.0
  %1853 = vmatprep.subr.mxu0 0.0
  %1854 = vmatpush1.msra.mxu0 0.0
  %1855 = vmatprep.subr.mxu0 0.0
  %1856 = vmatpush1.msra.mxu0 0.0
  %1857 = vmatprep.subr.mxu0 0.0
  %1858 = vmatpush1.msra.mxu0 0.0
  %1859 = vmatprep.subr.mxu0 0.0
  %1860 = vmatpush1.msra.mxu0 0.0
  %1861 = vmatprep.subr.mxu0 0.0
  %1862 = vmatpush1.msra.mxu0 0.0
  %1863 = vmatprep.subr.mxu0 0.0
  %1864 = vmatpush1.msra.mxu0 0.0
  %1865 = vmatprep.subr.mxu0 0.0
  %1866 = vmatpush1.msra.mxu0 0.0
  %1867 = vmatprep.subr.mxu0 0.0
  %1868 = vmatpush1.msra.mxu0 0.0
  %1869 = vmatprep.subr.mxu0 0.0
  %1870 = vmatpush1.msra.mxu0 0.0
  %1871 = vmatprep.subr.mxu0 0.0
  %1872 = vmatpush1.msra.mxu0 0.0
  %1873 = vmatprep.subr.mxu0 0.0
  %1874 = vmatpush1.msra.mxu0 0.0
  %1875 = vmatprep.subr.mxu0 0.0
  %1876 = vmatpush1.msra.mxu0 0.0
  %1877 = vmatprep.mubr.f32.mxu0 0.0
  %1878 = vmatmul.mubr.f32.gmra.mrb[0].mxu0 %v1784
  %v1879 = vpop.f32.mrb[0].mxu0
  %v1880 = vadd.f32 0.0, %v1879
  %v1881 = vpop.f32.mrb[0].mxu0
  %1882 = vmatprep.mubr.f32.mxu0 0.0
  %1883 = vmatmul.mubr.f32.gmra.mrb[0].mxu0 %v1787
  %v1884 = vpop.f32.mrb[0].mxu0
  %v1885 = vadd.f32 0.0, %v1884
  %v1886 = vpop.f32.mrb[0].mxu0
  %1887 = vmatprep.mubr.f32.mxu0 0.0
  %1888 = vmatmul.mubr.f32.gmra.mrb[0].mxu0 %v1790
  %v1889 = vpop.f32.mrb[0].mxu0
  %v1890 = vadd.f32 0.0, %v1889
  %v1891 = vpop.f32.mrb[0].mxu0
  %1892 = vmatprep.mubr.f32.mxu0 0.0
  %1893 = vmatmul.mubr.f32.gmra.mrb[0].mxu0 %v1793
  %v1894 = vpop.f32.mrb[0].mxu0
  %v1895 = vadd.f32 0.0, %v1894
  %v1896 = vpop.f32.mrb[0].mxu0
  %1897 = vmatprep.mubr.f32.mxu0 0.0
  %1898 = vmatmul.mubr.f32.gmra.mrb[0].mxu0 %v1796
  %v1899 = vpop.f32.mrb[0].mxu0
  %v1900 = vadd.f32 0.0, %v1899
  %v1901 = vpop.f32.mrb[0].mxu0
  %1902 = vmatprep.mubr.f32.mxu0 0.0
  %1903 = vmatmul.mubr.f32.gmra.mrb[0].mxu0 %v1799
  %v1904 = vpop.f32.mrb[0].mxu0
  %v1905 = vadd.f32 0.0, %v1904
  %v1906 = vpop.f32.mrb[0].mxu0
  %1907 = vmatprep.mubr.f32.mxu0 0.0
  %1908 = vmatmul.mubr.f32.gmra.mrb[0].mxu0 %v1802
  %v1909 = vpop.f32.mrb[0].mxu0
  %v1910 = vadd.f32 0.0, %v1909
  %v1911 = vpop.f32.mrb[0].mxu0
  %1912 = vmatprep.mubr.f32.mxu0 0.0
  %1913 = vmatmul.mubr.f32.gmra.mrb[0].mxu0 %v1805
  %v1914 = vpop.f32.mrb[0].mxu0
  %v1915 = vadd.f32 0.0, %v1914
  %v1916 = vpop.f32.mrb[0].mxu0
  %1917 = vmatprep.mubr.f32.mxu0 0.0
  %1918 = vmatmul.mubr.f32.gmra.mrb[0].mxu0 %v1808
  %v1919 = vpop.f32.mrb[0].mxu0
  %v1920 = vadd.f32 0.0, %v1919
  %v1921 = vpop.f32.mrb[0].mxu0
  %1922 = vmatprep.mubr.f32.mxu0 0.0
  %1923 = vmatmul.mubr.f32.gmra.mrb[0].mxu0 %v1811
  %v1924 = vpop.f32.mrb[0].mxu0
  %v1925 = vadd.f32 0.0, %v1924
  %v1926 = vpop.f32.mrb[0].mxu0
  %1927 = vdwg.mxu0
  %s1928 = scalar_lea.vmem %s9, 16
  %v1929 = vld [vmem:[%s1928] sm:$0xff]
  %v1930 = vld [vmem:[%s1928 + $0x8] sm:$0xff]
  %v1932 = vsel %vm668, %v1880, 0
  %v1935 = vsel %vm668, %v1885, 0
  %v1938 = vsel %vm668, %v1890, 0
  %v1941 = vsel %vm668, %v1895, 0
  %v1944 = vsel %vm668, %v1900, 0
  %v1947 = vsel %vm668, %v1905, 0
  %v1950 = vsel %vm668, %v1910, 0
  %v1953 = vsel %vm668, %v1915, 0
  %v1956 = vsel %vm668, %v1920, 0
  %v1959 = vsel %vm668, %v1925, 0
  %1961 = vmatprep.subr.mxu0 0.0
  %1962 = vmatpush1.msra.mxu0 %v1929
  %1963 = vmatprep.subr.mxu0 0.0
  %1964 = vmatpush1.msra.mxu0 %v1930
  %1965 = vmatprep.subr.mxu0 0.0
  %1966 = vmatpush1.msra.mxu0 0.0
  %1967 = vmatprep.subr.mxu0 0.0
  %1968 = vmatpush1.msra.mxu0 0.0
  %1969 = vmatprep.subr.mxu0 0.0
  %1970 = vmatpush1.msra.mxu0 0.0
  %1971 = vmatprep.subr.mxu0 0.0
  %1972 = vmatpush1.msra.mxu0 0.0
  %1973 = vmatprep.subr.mxu0 0.0
  %1974 = vmatpush1.msra.mxu0 0.0
  %1975 = vmatprep.subr.mxu0 0.0
  %1976 = vmatpush1.msra.mxu0 0.0
  %1977 = vmatprep.subr.mxu0 0.0
  %1978 = vmatpush1.msra.mxu0 0.0
  %1979 = vmatprep.subr.mxu0 0.0
  %1980 = vmatpush1.msra.mxu0 0.0
  %1981 = vmatprep.subr.mxu0 0.0
  %1982 = vmatpush1.msra.mxu0 0.0
  %1983 = vmatprep.subr.mxu0 0.0
  %1984 = vmatpush1.msra.mxu0 0.0
  %1985 = vmatprep.subr.mxu0 0.0
  %1986 = vmatpush1.msra.mxu0 0.0
  %1987 = vmatprep.subr.mxu0 0.0
  %1988 = vmatpush1.msra.mxu0 0.0
  %1989 = vmatprep.subr.mxu0 0.0
  %1990 = vmatpush1.msra.mxu0 0.0
  %1991 = vmatprep.subr.mxu0 0.0
  %1992 = vmatpush1.msra.mxu0 0.0
  %1993 = vmatprep.subr.mxu0 0.0
  %1994 = vmatpush1.msra.mxu0 0.0
  %1995 = vmatprep.subr.mxu0 0.0
  %1996 = vmatpush1.msra.mxu0 0.0
  %1997 = vmatprep.subr.mxu0 0.0
  %1998 = vmatpush1.msra.mxu0 0.0
  %1999 = vmatprep.subr.mxu0 0.0
  %2000 = vmatpush1.msra.mxu0 0.0
  %2001 = vmatprep.subr.mxu0 0.0
  %2002 = vmatpush1.msra.mxu0 0.0
  %2003 = vmatprep.subr.mxu0 0.0
  %2004 = vmatpush1.msra.mxu0 0.0
  %2005 = vmatprep.subr.mxu0 0.0
  %2006 = vmatpush1.msra.mxu0 0.0
  %2007 = vmatprep.subr.mxu0 0.0
  %2008 = vmatpush1.msra.mxu0 0.0
  %2009 = vmatprep.subr.mxu0 0.0
  %2010 = vmatpush1.msra.mxu0 0.0
  %2011 = vmatprep.subr.mxu0 0.0
  %2012 = vmatpush1.msra.mxu0 0.0
  %2013 = vmatprep.subr.mxu0 0.0
  %2014 = vmatpush1.msra.mxu0 0.0
  %2015 = vmatprep.subr.mxu0 0.0
  %2016 = vmatpush1.msra.mxu0 0.0
  %2017 = vmatprep.subr.mxu0 0.0
  %2018 = vmatpush1.msra.mxu0 0.0
  %2019 = vmatprep.subr.mxu0 0.0
  %2020 = vmatpush1.msra.mxu0 0.0
  %2021 = vmatprep.subr.mxu0 0.0
  %2022 = vmatpush1.msra.mxu0 0.0
  %2023 = vmatprep.subr.mxu0 0.0
  %2024 = vmatpush1.msra.mxu0 0.0
  %2025 = vmatprep.mubr.f32.mxu0 0.0
  %2026 = vmatmul.mubr.f32.gmra.mrb[0].mxu0 %v1932
  %v2027 = vpop.f32.mrb[0].mxu0
  %v2028 = vadd.f32 0.0, %v2027
  %v2029 = vpop.f32.mrb[0].mxu0
  %2030 = vmatprep.mubr.f32.mxu0 0.0
  %2031 = vmatmul.mubr.f32.gmra.mrb[0].mxu0 %v1935
  %v2032 = vpop.f32.mrb[0].mxu0
  %v2033 = vadd.f32 0.0, %v2032
  %v2034 = vpop.f32.mrb[0].mxu0
  %2035 = vmatprep.mubr.f32.mxu0 0.0
  %2036 = vmatmul.mubr.f32.gmra.mrb[0].mxu0 %v1938
  %v2037 = vpop.f32.mrb[0].mxu0
  %v2038 = vadd.f32 0.0, %v2037
  %v2039 = vpop.f32.mrb[0].mxu0
  %2040 = vmatprep.mubr.f32.mxu0 0.0
  %2041 = vmatmul.mubr.f32.gmra.mrb[0].mxu0 %v1941
  %v2042 = vpop.f32.mrb[0].mxu0
  %v2043 = vadd.f32 0.0, %v2042
  %v2044 = vpop.f32.mrb[0].mxu0
  %2045 = vmatprep.mubr.f32.mxu0 0.0
  %2046 = vmatmul.mubr.f32.gmra.mrb[0].mxu0 %v1944
  %v2047 = vpop.f32.mrb[0].mxu0
  %v2048 = vadd.f32 0.0, %v2047
  %v2049 = vpop.f32.mrb[0].mxu0
  %2050 = vmatprep.mubr.f32.mxu0 0.0
  %2051 = vmatmul.mubr.f32.gmra.mrb[0].mxu0 %v1947
  %v2052 = vpop.f32.mrb[0].mxu0
  %v2053 = vadd.f32 0.0, %v2052
  %v2054 = vpop.f32.mrb[0].mxu0
  %2055 = vmatprep.mubr.f32.mxu0 0.0
  %2056 = vmatmul.mubr.f32.gmra.mrb[0].mxu0 %v1950
  %v2057 = vpop.f32.mrb[0].mxu0
  %v2058 = vadd.f32 0.0, %v2057
  %v2059 = vpop.f32.mrb[0].mxu0
  %2060 = vmatprep.mubr.f32.mxu0 0.0
  %2061 = vmatmul.mubr.f32.gmra.mrb[0].mxu0 %v1953
  %v2062 = vpop.f32.mrb[0].mxu0
  %v2063 = vadd.f32 0.0, %v2062
  %v2064 = vpop.f32.mrb[0].mxu0
  %2065 = vmatprep.mubr.f32.mxu0 0.0
  %2066 = vmatmul.mubr.f32.gmra.mrb[0].mxu0 %v1956
  %v2067 = vpop.f32.mrb[0].mxu0
  %v2068 = vadd.f32 0.0, %v2067
  %v2069 = vpop.f32.mrb[0].mxu0
  %2070 = vmatprep.mubr.f32.mxu0 0.0
  %2071 = vmatmul.mubr.f32.gmra.mrb[0].mxu0 %v1959
  %v2072 = vpop.f32.mrb[0].mxu0
  %v2073 = vadd.f32 0.0, %v2072
  %v2074 = vpop.f32.mrb[0].mxu0
  %2075 = vdwg.mxu0
  %v2077 = vsel %vm668, %v1052, 0
  %v2080 = vsel %vm668, %v1057, 0
  %v2083 = vsel %vm668, %v1062, 0
  %v2086 = vsel %vm668, %v1067, 0
  %v2089 = vsel %vm668, %v1072, 0
  %v2092 = vsel %vm668, %v1077, 0
  %v2095 = vsel %vm668, %v1082, 0
  %v2098 = vsel %vm668, %v1087, 0
  %v2101 = vsel %vm668, %v1092, 0
  %v2104 = vsel %vm668, %v1097, 0
  %2106 = vmatprep.subr.mxu0 0.0
  %2107 = vmatpush1.msra.mxu0 %v1100
  %2108 = vmatprep.subr.mxu0 0.0
  %2109 = vmatpush1.msra.mxu0 %v1101
  %2110 = vmatprep.subr.mxu0 0.0
  %2111 = vmatpush1.msra.mxu0 0.0
  %2112 = vmatprep.subr.mxu0 0.0
  %2113 = vmatpush1.msra.mxu0 0.0
  %2114 = vmatprep.subr.mxu0 0.0
  %2115 = vmatpush1.msra.mxu0 0.0
  %2116 = vmatprep.subr.mxu0 0.0
  %2117 = vmatpush1.msra.mxu0 0.0
  %2118 = vmatprep.subr.mxu0 0.0
  %2119 = vmatpush1.msra.mxu0 0.0
  %2120 = vmatprep.subr.mxu0 0.0
  %2121 = vmatpush1.msra.mxu0 0.0
  %2122 = vmatprep.subr.mxu0 0.0
  %2123 = vmatpush1.msra.mxu0 0.0
  %2124 = vmatprep.subr.mxu0 0.0
  %2125 = vmatpush1.msra.mxu0 0.0
  %2126 = vmatprep.subr.mxu0 0.0
  %2127 = vmatpush1.msra.mxu0 0.0
  %2128 = vmatprep.subr.mxu0 0.0
  %2129 = vmatpush1.msra.mxu0 0.0
  %2130 = vmatprep.subr.mxu0 0.0
  %2131 = vmatpush1.msra.mxu0 0.0
  %2132 = vmatprep.subr.mxu0 0.0
  %2133 = vmatpush1.msra.mxu0 0.0
  %2134 = vmatprep.subr.mxu0 0.0
  %2135 = vmatpush1.msra.mxu0 0.0
  %2136 = vmatprep.subr.mxu0 0.0
  %2137 = vmatpush1.msra.mxu0 0.0
  %2138 = vmatprep.subr.mxu0 0.0
  %2139 = vmatpush1.msra.mxu0 0.0
  %2140 = vmatprep.subr.mxu0 0.0
  %2141 = vmatpush1.msra.mxu0 0.0
  %2142 = vmatprep.subr.mxu0 0.0
  %2143 = vmatpush1.msra.mxu0 0.0
  %2144 = vmatprep.subr.mxu0 0.0
  %2145 = vmatpush1.msra.mxu0 0.0
  %2146 = vmatprep.subr.mxu0 0.0
  %2147 = vmatpush1.msra.mxu0 0.0
  %2148 = vmatprep.subr.mxu0 0.0
  %2149 = vmatpush1.msra.mxu0 0.0
  %2150 = vmatprep.subr.mxu0 0.0
  %2151 = vmatpush1.msra.mxu0 0.0
  %2152 = vmatprep.subr.mxu0 0.0
  %2153 = vmatpush1.msra.mxu0 0.0
  %2154 = vmatprep.subr.mxu0 0.0
  %2155 = vmatpush1.msra.mxu0 0.0
  %2156 = vmatprep.subr.mxu0 0.0
  %2157 = vmatpush1.msra.mxu0 0.0
  %2158 = vmatprep.subr.mxu0 0.0
  %2159 = vmatpush1.msra.mxu0 0.0
  %2160 = vmatprep.subr.mxu0 0.0
  %2161 = vmatpush1.msra.mxu0 0.0
  %2162 = vmatprep.subr.mxu0 0.0
  %2163 = vmatpush1.msra.mxu0 0.0
  %2164 = vmatprep.subr.mxu0 0.0
  %2165 = vmatpush1.msra.mxu0 0.0
  %2166 = vmatprep.subr.mxu0 0.0
  %2167 = vmatpush1.msra.mxu0 0.0
  %2168 = vmatprep.subr.mxu0 0.0
  %2169 = vmatpush1.msra.mxu0 0.0
  %2170 = vmatprep.mubr.f32.mxu0 0.0
  %2171 = vmatmul.mubr.f32.gmra.mrb[0].mxu0 %v2077
  %v2172 = vpop.f32.mrb[0].mxu0
  %v2173 = vadd.f32 %v2028, %v2172
  %v2174 = vpop.f32.mrb[0].mxu0
  %2175 = vmatprep.mubr.f32.mxu0 0.0
  %2176 = vmatmul.mubr.f32.gmra.mrb[0].mxu0 %v2080
  %v2177 = vpop.f32.mrb[0].mxu0
  %v2178 = vadd.f32 %v2033, %v2177
  %v2179 = vpop.f32.mrb[0].mxu0
  %2180 = vmatprep.mubr.f32.mxu0 0.0
  %2181 = vmatmul.mubr.f32.gmra.mrb[0].mxu0 %v2083
  %v2182 = vpop.f32.mrb[0].mxu0
  %v2183 = vadd.f32 %v2038, %v2182
  %v2184 = vpop.f32.mrb[0].mxu0
  %2185 = vmatprep.mubr.f32.mxu0 0.0
  %2186 = vmatmul.mubr.f32.gmra.mrb[0].mxu0 %v2086
  %v2187 = vpop.f32.mrb[0].mxu0
  %v2188 = vadd.f32 %v2043, %v2187
  %v2189 = vpop.f32.mrb[0].mxu0
  %2190 = vmatprep.mubr.f32.mxu0 0.0
  %2191 = vmatmul.mubr.f32.gmra.mrb[0].mxu0 %v2089
  %v2192 = vpop.f32.mrb[0].mxu0
  %v2193 = vadd.f32 %v2048, %v2192
  %v2194 = vpop.f32.mrb[0].mxu0
  %2195 = vmatprep.mubr.f32.mxu0 0.0
  %2196 = vmatmul.mubr.f32.gmra.mrb[0].mxu0 %v2092
  %v2197 = vpop.f32.mrb[0].mxu0
  %v2198 = vadd.f32 %v2053, %v2197
  %v2199 = vpop.f32.mrb[0].mxu0
  %2200 = vmatprep.mubr.f32.mxu0 0.0
  %2201 = vmatmul.mubr.f32.gmra.mrb[0].mxu0 %v2095
  %v2202 = vpop.f32.mrb[0].mxu0
  %v2203 = vadd.f32 %v2058, %v2202
  %v2204 = vpop.f32.mrb[0].mxu0
  %2205 = vmatprep.mubr.f32.mxu0 0.0
  %2206 = vmatmul.mubr.f32.gmra.mrb[0].mxu0 %v2098
  %v2207 = vpop.f32.mrb[0].mxu0
  %v2208 = vadd.f32 %v2063, %v2207
  %v2209 = vpop.f32.mrb[0].mxu0
  %2210 = vmatprep.mubr.f32.mxu0 0.0
  %2211 = vmatmul.mubr.f32.gmra.mrb[0].mxu0 %v2101
  %v2212 = vpop.f32.mrb[0].mxu0
  %v2213 = vadd.f32 %v2068, %v2212
  %v2214 = vpop.f32.mrb[0].mxu0
  %2215 = vmatprep.mubr.f32.mxu0 0.0
  %2216 = vmatmul.mubr.f32.gmra.mrb[0].mxu0 %v2104
  %v2217 = vpop.f32.mrb[0].mxu0
  %v2218 = vadd.f32 %v2073, %v2217
  %v2219 = vpop.f32.mrb[0].mxu0
  %2220 = vdwg.mxu0
  %s2221 = scalar_lea.vmem %s3, 128
  %v2222 = vld [vmem:[%s2221] sm:$0xff]
  %v2223 = vld [vmem:[%s2221 + $0x8] sm:$0xff]
  %v2224 = vld [vmem:[%s2221 + $0x10] sm:$0xff]
  %v2225 = vld [vmem:[%s2221 + $0x18] sm:$0xff]
  %v2226 = vld [vmem:[%s2221 + $0x20] sm:$0xff]
  %v2227 = vld [vmem:[%s2221 + $0x28] sm:$0xff]
  %v2228 = vld [vmem:[%s2221 + $0x30] sm:$0xff]
  %v2229 = vld [vmem:[%s2221 + $0x38] sm:$0xff]
  %s2230 = scalar_lea.vmem %s4, 2
  %v2231 = vld [vmem:[%s2230] sm:$0x1]
  %v2233 = vlaneseq
  %v2234 = vshrl.u32 %v2233, 7
  %v2235 = vsub.s32 0, %v2234
  %v2236 = vrot.slane %v2231, %v2235
  %2238 = vmatprep.subr.mxu0 0.0
  %2239 = vmatpush1.msra.mxu0 %v2222
  %2240 = vmatprep.subr.mxu0 0.0
  %2241 = vmatpush1.msra.mxu0 %v2223
  %2242 = vmatprep.subr.mxu0 0.0
  %2243 = vmatpush1.msra.mxu0 %v2224
  %2244 = vmatprep.subr.mxu0 0.0
  %2245 = vmatpush1.msra.mxu0 %v2225
  %2246 = vmatprep.subr.mxu0 0.0
  %2247 = vmatpush1.msra.mxu0 %v2226
  %2248 = vmatprep.subr.mxu0 0.0
  %2249 = vmatpush1.msra.mxu0 %v2227
  %2250 = vmatprep.subr.mxu0 0.0
  %2251 = vmatpush1.msra.mxu0 %v2228
  %2252 = vmatprep.subr.mxu0 0.0
  %2253 = vmatpush1.msra.mxu0 %v2229
  %2254 = vmatprep.subr.mxu0 0.0
  %2255 = vmatpush1.msra.mxu0 0.0
  %2256 = vmatprep.subr.mxu0 0.0
  %2257 = vmatpush1.msra.mxu0 0.0
  %2258 = vmatprep.subr.mxu0 0.0
  %2259 = vmatpush1.msra.mxu0 0.0
  %2260 = vmatprep.subr.mxu0 0.0
  %2261 = vmatpush1.msra.mxu0 0.0
  %2262 = vmatprep.subr.mxu0 0.0
  %2263 = vmatpush1.msra.mxu0 0.0
  %2264 = vmatprep.subr.mxu0 0.0
  %2265 = vmatpush1.msra.mxu0 0.0
  %2266 = vmatprep.subr.mxu0 0.0
  %2267 = vmatpush1.msra.mxu0 0.0
  %2268 = vmatprep.subr.mxu0 0.0
  %2269 = vmatpush1.msra.mxu0 0.0
  %2270 = vmatprep.subr.mxu0 0.0
  %2271 = vmatpush1.msra.mxu0 0.0
  %2272 = vmatprep.subr.mxu0 0.0
  %2273 = vmatpush1.msra.mxu0 0.0
  %2274 = vmatprep.subr.mxu0 0.0
  %2275 = vmatpush1.msra.mxu0 0.0
  %2276 = vmatprep.subr.mxu0 0.0
  %2277 = vmatpush1.msra.mxu0 0.0
  %2278 = vmatprep.subr.mxu0 0.0
  %2279 = vmatpush1.msra.mxu0 0.0
  %2280 = vmatprep.subr.mxu0 0.0
  %2281 = vmatpush1.msra.mxu0 0.0
  %2282 = vmatprep.subr.mxu0 0.0
  %2283 = vmatpush1.msra.mxu0 0.0
  %2284 = vmatprep.subr.mxu0 0.0
  %2285 = vmatpush1.msra.mxu0 0.0
  %2286 = vmatprep.subr.mxu0 0.0
  %2287 = vmatpush1.msra.mxu0 0.0
  %2288 = vmatprep.subr.mxu0 0.0
  %2289 = vmatpush1.msra.mxu0 0.0
  %2290 = vmatprep.subr.mxu0 0.0
  %2291 = vmatpush1.msra.mxu0 0.0
  %2292 = vmatprep.subr.mxu0 0.0
  %2293 = vmatpush1.msra.mxu0 0.0
  %2294 = vmatprep.subr.mxu0 0.0
  %2295 = vmatpush1.msra.mxu0 0.0
  %2296 = vmatprep.subr.mxu0 0.0
  %2297 = vmatpush1.msra.mxu0 0.0
  %2298 = vmatprep.subr.mxu0 0.0
  %2299 = vmatpush1.msra.mxu0 0.0
  %2300 = vmatprep.subr.mxu0 0.0
  %2301 = vmatpush1.msra.mxu0 0.0
  %2302 = vmatprep.mubr.f32.mxu0 0.0
  %2303 = vmatmul.mubr.f32.gmra.mrb[0].mxu0 %v264
  %v2304 = vpop.f32.mrb[0].mxu0
  %v2305 = vadd.f32 %v2236, %v2304
  %v2306 = vpop.f32.mrb[0].mxu0
  %2307 = vmatprep.mubr.f32.mxu0 0.0
  %2308 = vmatmul.mubr.f32.gmra.mrb[0].mxu0 %v267
  %v2309 = vpop.f32.mrb[0].mxu0
  %v2310 = vadd.f32 %v2236, %v2309
  %v2311 = vpop.f32.mrb[0].mxu0
  %2312 = vmatprep.mubr.f32.mxu0 0.0
  %2313 = vmatmul.mubr.f32.gmra.mrb[0].mxu0 %v270
  %v2314 = vpop.f32.mrb[0].mxu0
  %v2315 = vadd.f32 %v2236, %v2314
  %v2316 = vpop.f32.mrb[0].mxu0
  %2317 = vmatprep.mubr.f32.mxu0 0.0
  %2318 = vmatmul.mubr.f32.gmra.mrb[0].mxu0 %v273
  %v2319 = vpop.f32.mrb[0].mxu0
  %v2320 = vadd.f32 %v2236, %v2319
  %v2321 = vpop.f32.mrb[0].mxu0
  %2322 = vmatprep.mubr.f32.mxu0 0.0
  %2323 = vmatmul.mubr.f32.gmra.mrb[0].mxu0 %v276
  %v2324 = vpop.f32.mrb[0].mxu0
  %v2325 = vadd.f32 %v2236, %v2324
  %v2326 = vpop.f32.mrb[0].mxu0
  %2327 = vmatprep.mubr.f32.mxu0 0.0
  %2328 = vmatmul.mubr.f32.gmra.mrb[0].mxu0 %v279
  %v2329 = vpop.f32.mrb[0].mxu0
  %v2330 = vadd.f32 %v2236, %v2329
  %v2331 = vpop.f32.mrb[0].mxu0
  %2332 = vmatprep.mubr.f32.mxu0 0.0
  %2333 = vmatmul.mubr.f32.gmra.mrb[0].mxu0 %v282
  %v2334 = vpop.f32.mrb[0].mxu0
  %v2335 = vadd.f32 %v2236, %v2334
  %v2336 = vpop.f32.mrb[0].mxu0
  %2337 = vmatprep.mubr.f32.mxu0 0.0
  %2338 = vmatmul.mubr.f32.gmra.mrb[0].mxu0 %v285
  %v2339 = vpop.f32.mrb[0].mxu0
  %v2340 = vadd.f32 %v2236, %v2339
  %v2341 = vpop.f32.mrb[0].mxu0
  %2342 = vmatprep.mubr.f32.mxu0 0.0
  %2343 = vmatmul.mubr.f32.gmra.mrb[0].mxu0 %v288
  %v2344 = vpop.f32.mrb[0].mxu0
  %v2345 = vadd.f32 %v2236, %v2344
  %v2346 = vpop.f32.mrb[0].mxu0
  %2347 = vmatprep.mubr.f32.mxu0 0.0
  %2348 = vmatmul.mubr.f32.gmra.mrb[0].mxu0 %v291
  %v2349 = vpop.f32.mrb[0].mxu0
  %v2350 = vadd.f32 %v2236, %v2349
  %v2351 = vpop.f32.mrb[0].mxu0
  %2352 = vdwg.mxu0
  %s2353 = scalar_lea.vmem %s5, 128
  %v2354 = vld [vmem:[%s2353] sm:$0xff]
  %v2355 = vld [vmem:[%s2353 + $0x8] sm:$0xff]
  %v2356 = vld [vmem:[%s2353 + $0x10] sm:$0xff]
  %v2357 = vld [vmem:[%s2353 + $0x18] sm:$0xff]
  %v2358 = vld [vmem:[%s2353 + $0x20] sm:$0xff]
  %v2359 = vld [vmem:[%s2353 + $0x28] sm:$0xff]
  %v2360 = vld [vmem:[%s2353 + $0x30] sm:$0xff]
  %v2361 = vld [vmem:[%s2353 + $0x38] sm:$0xff]
  %s2362 = scalar_lea.vmem %s6, 2
  %v2363 = vld [vmem:[%s2362] sm:$0x1]
  %v2365 = vlaneseq
  %v2366 = vshrl.u32 %v2365, 7
  %v2367 = vsub.s32 0, %v2366
  %v2368 = vrot.slane %v2363, %v2367
  %2370 = vmatprep.subr.mxu0 0.0
  %2371 = vmatpush1.msra.mxu0 %v2354
  %2372 = vmatprep.subr.mxu0 0.0
  %2373 = vmatpush1.msra.mxu0 %v2355
  %2374 = vmatprep.subr.mxu0 0.0
  %2375 = vmatpush1.msra.mxu0 %v2356
  %2376 = vmatprep.subr.mxu0 0.0
  %2377 = vmatpush1.msra.mxu0 %v2357
  %2378 = vmatprep.subr.mxu0 0.0
  %2379 = vmatpush1.msra.mxu0 %v2358
  %2380 = vmatprep.subr.mxu0 0.0
  %2381 = vmatpush1.msra.mxu0 %v2359
  %2382 = vmatprep.subr.mxu0 0.0
  %2383 = vmatpush1.msra.mxu0 %v2360
  %2384 = vmatprep.subr.mxu0 0.0
  %2385 = vmatpush1.msra.mxu0 %v2361
  %2386 = vmatprep.subr.mxu0 0.0
  %2387 = vmatpush1.msra.mxu0 0.0
  %2388 = vmatprep.subr.mxu0 0.0
  %2389 = vmatpush1.msra.mxu0 0.0
  %2390 = vmatprep.subr.mxu0 0.0
  %2391 = vmatpush1.msra.mxu0 0.0
  %2392 = vmatprep.subr.mxu0 0.0
  %2393 = vmatpush1.msra.mxu0 0.0
  %2394 = vmatprep.subr.mxu0 0.0
  %2395 = vmatpush1.msra.mxu0 0.0
  %2396 = vmatprep.subr.mxu0 0.0
  %2397 = vmatpush1.msra.mxu0 0.0
  %2398 = vmatprep.subr.mxu0 0.0
  %2399 = vmatpush1.msra.mxu0 0.0
  %2400 = vmatprep.subr.mxu0 0.0
  %2401 = vmatpush1.msra.mxu0 0.0
  %2402 = vmatprep.subr.mxu0 0.0
  %2403 = vmatpush1.msra.mxu0 0.0
  %2404 = vmatprep.subr.mxu0 0.0
  %2405 = vmatpush1.msra.mxu0 0.0
  %2406 = vmatprep.subr.mxu0 0.0
  %2407 = vmatpush1.msra.mxu0 0.0
  %2408 = vmatprep.subr.mxu0 0.0
  %2409 = vmatpush1.msra.mxu0 0.0
  %2410 = vmatprep.subr.mxu0 0.0
  %2411 = vmatpush1.msra.mxu0 0.0
  %2412 = vmatprep.subr.mxu0 0.0
  %2413 = vmatpush1.msra.mxu0 0.0
  %2414 = vmatprep.subr.mxu0 0.0
  %2415 = vmatpush1.msra.mxu0 0.0
  %2416 = vmatprep.subr.mxu0 0.0
  %2417 = vmatpush1.msra.mxu0 0.0
  %2418 = vmatprep.subr.mxu0 0.0
  %2419 = vmatpush1.msra.mxu0 0.0
  %2420 = vmatprep.subr.mxu0 0.0
  %2421 = vmatpush1.msra.mxu0 0.0
  %2422 = vmatprep.subr.mxu0 0.0
  %2423 = vmatpush1.msra.mxu0 0.0
  %2424 = vmatprep.subr.mxu0 0.0
  %2425 = vmatpush1.msra.mxu0 0.0
  %2426 = vmatprep.subr.mxu0 0.0
  %2427 = vmatpush1.msra.mxu0 0.0
  %2428 = vmatprep.subr.mxu0 0.0
  %2429 = vmatpush1.msra.mxu0 0.0
  %2430 = vmatprep.subr.mxu0 0.0
  %2431 = vmatpush1.msra.mxu0 0.0
  %2432 = vmatprep.subr.mxu0 0.0
  %2433 = vmatpush1.msra.mxu0 0.0
  %2434 = vmatprep.mubr.f32.mxu0 0.0
  %2435 = vmatmul.mubr.f32.gmra.mrb[0].mxu0 %v264
  %v2436 = vpop.f32.mrb[0].mxu0
  %v2437 = vadd.f32 %v2368, %v2436
  %v2438 = vpop.f32.mrb[0].mxu0
  %2439 = vmatprep.mubr.f32.mxu0 0.0
  %2440 = vmatmul.mubr.f32.gmra.mrb[0].mxu0 %v267
  %v2441 = vpop.f32.mrb[0].mxu0
  %v2442 = vadd.f32 %v2368, %v2441
  %v2443 = vpop.f32.mrb[0].mxu0
  %2444 = vmatprep.mubr.f32.mxu0 0.0
  %2445 = vmatmul.mubr.f32.gmra.mrb[0].mxu0 %v270
  %v2446 = vpop.f32.mrb[0].mxu0
  %v2447 = vadd.f32 %v2368, %v2446
  %v2448 = vpop.f32.mrb[0].mxu0
  %2449 = vmatprep.mubr.f32.mxu0 0.0
  %2450 = vmatmul.mubr.f32.gmra.mrb[0].mxu0 %v273
  %v2451 = vpop.f32.mrb[0].mxu0
  %v2452 = vadd.f32 %v2368, %v2451
  %v2453 = vpop.f32.mrb[0].mxu0
  %2454 = vmatprep.mubr.f32.mxu0 0.0
  %2455 = vmatmul.mubr.f32.gmra.mrb[0].mxu0 %v276
  %v2456 = vpop.f32.mrb[0].mxu0
  %v2457 = vadd.f32 %v2368, %v2456
  %v2458 = vpop.f32.mrb[0].mxu0
  %2459 = vmatprep.mubr.f32.mxu0 0.0
  %2460 = vmatmul.mubr.f32.gmra.mrb[0].mxu0 %v279
  %v2461 = vpop.f32.mrb[0].mxu0
  %v2462 = vadd.f32 %v2368, %v2461
  %v2463 = vpop.f32.mrb[0].mxu0
  %2464 = vmatprep.mubr.f32.mxu0 0.0
  %2465 = vmatmul.mubr.f32.gmra.mrb[0].mxu0 %v282
  %v2466 = vpop.f32.mrb[0].mxu0
  %v2467 = vadd.f32 %v2368, %v2466
  %v2468 = vpop.f32.mrb[0].mxu0
  %2469 = vmatprep.mubr.f32.mxu0 0.0
  %2470 = vmatmul.mubr.f32.gmra.mrb[0].mxu0 %v285
  %v2471 = vpop.f32.mrb[0].mxu0
  %v2472 = vadd.f32 %v2368, %v2471
  %v2473 = vpop.f32.mrb[0].mxu0
  %2474 = vmatprep.mubr.f32.mxu0 0.0
  %2475 = vmatmul.mubr.f32.gmra.mrb[0].mxu0 %v288
  %v2476 = vpop.f32.mrb[0].mxu0
  %v2477 = vadd.f32 %v2368, %v2476
  %v2478 = vpop.f32.mrb[0].mxu0
  %2479 = vmatprep.mubr.f32.mxu0 0.0
  %2480 = vmatmul.mubr.f32.gmra.mrb[0].mxu0 %v291
  %v2481 = vpop.f32.mrb[0].mxu0
  %v2482 = vadd.f32 %v2368, %v2481
  %v2483 = vpop.f32.mrb[0].mxu0
  %2484 = vdwg.mxu0
  %s2485 = scalar_lea.vmem %s7, 128
  %v2486 = vld [vmem:[%s2485] sm:$0xff]
  %v2487 = vld [vmem:[%s2485 + $0x8] sm:$0xff]
  %v2488 = vld [vmem:[%s2485 + $0x10] sm:$0xff]
  %v2489 = vld [vmem:[%s2485 + $0x18] sm:$0xff]
  %v2490 = vld [vmem:[%s2485 + $0x20] sm:$0xff]
  %v2491 = vld [vmem:[%s2485 + $0x28] sm:$0xff]
  %v2492 = vld [vmem:[%s2485 + $0x30] sm:$0xff]
  %v2493 = vld [vmem:[%s2485 + $0x38] sm:$0xff]
  %s2494 = scalar_lea.vmem %s8, 2
  %v2495 = vld [vmem:[%s2494] sm:$0x1]
  %v2497 = vlaneseq
  %v2498 = vshrl.u32 %v2497, 7
  %v2499 = vsub.s32 0, %v2498
  %v2500 = vrot.slane %v2495, %v2499
  %2502 = vmatprep.subr.mxu0 0.0
  %2503 = vmatpush1.msra.mxu0 %v2486
  %2504 = vmatprep.subr.mxu0 0.0
  %2505 = vmatpush1.msra.mxu0 %v2487
  %2506 = vmatprep.subr.mxu0 0.0
  %2507 = vmatpush1.msra.mxu0 %v2488
  %2508 = vmatprep.subr.mxu0 0.0
  %2509 = vmatpush1.msra.mxu0 %v2489
  %2510 = vmatprep.subr.mxu0 0.0
  %2511 = vmatpush1.msra.mxu0 %v2490
  %2512 = vmatprep.subr.mxu0 0.0
  %2513 = vmatpush1.msra.mxu0 %v2491
  %2514 = vmatprep.subr.mxu0 0.0
  %2515 = vmatpush1.msra.mxu0 %v2492
  %2516 = vmatprep.subr.mxu0 0.0
  %2517 = vmatpush1.msra.mxu0 %v2493
  %2518 = vmatprep.subr.mxu0 0.0
  %2519 = vmatpush1.msra.mxu0 0.0
  %2520 = vmatprep.subr.mxu0 0.0
  %2521 = vmatpush1.msra.mxu0 0.0
  %2522 = vmatprep.subr.mxu0 0.0
  %2523 = vmatpush1.msra.mxu0 0.0
  %2524 = vmatprep.subr.mxu0 0.0
  %2525 = vmatpush1.msra.mxu0 0.0
  %2526 = vmatprep.subr.mxu0 0.0
  %2527 = vmatpush1.msra.mxu0 0.0
  %2528 = vmatprep.subr.mxu0 0.0
  %2529 = vmatpush1.msra.mxu0 0.0
  %2530 = vmatprep.subr.mxu0 0.0
  %2531 = vmatpush1.msra.mxu0 0.0
  %2532 = vmatprep.subr.mxu0 0.0
  %2533 = vmatpush1.msra.mxu0 0.0
  %2534 = vmatprep.subr.mxu0 0.0
  %2535 = vmatpush1.msra.mxu0 0.0
  %2536 = vmatprep.subr.mxu0 0.0
  %2537 = vmatpush1.msra.mxu0 0.0
  %2538 = vmatprep.subr.mxu0 0.0
  %2539 = vmatpush1.msra.mxu0 0.0
  %2540 = vmatprep.subr.mxu0 0.0
  %2541 = vmatpush1.msra.mxu0 0.0
  %2542 = vmatprep.subr.mxu0 0.0
  %2543 = vmatpush1.msra.mxu0 0.0
  %2544 = vmatprep.subr.mxu0 0.0
  %2545 = vmatpush1.msra.mxu0 0.0
  %2546 = vmatprep.subr.mxu0 0.0
  %2547 = vmatpush1.msra.mxu0 0.0
  %2548 = vmatprep.subr.mxu0 0.0
  %2549 = vmatpush1.msra.mxu0 0.0
  %2550 = vmatprep.subr.mxu0 0.0
  %2551 = vmatpush1.msra.mxu0 0.0
  %2552 = vmatprep.subr.mxu0 0.0
  %2553 = vmatpush1.msra.mxu0 0.0
  %2554 = vmatprep.subr.mxu0 0.0
  %2555 = vmatpush1.msra.mxu0 0.0
  %2556 = vmatprep.subr.mxu0 0.0
  %2557 = vmatpush1.msra.mxu0 0.0
  %2558 = vmatprep.subr.mxu0 0.0
  %2559 = vmatpush1.msra.mxu0 0.0
  %2560 = vmatprep.subr.mxu0 0.0
  %2561 = vmatpush1.msra.mxu0 0.0
  %2562 = vmatprep.subr.mxu0 0.0
  %2563 = vmatpush1.msra.mxu0 0.0
  %2564 = vmatprep.subr.mxu0 0.0
  %2565 = vmatpush1.msra.mxu0 0.0
  %2566 = vmatprep.mubr.f32.mxu0 0.0
  %2567 = vmatmul.mubr.f32.gmra.mrb[0].mxu0 %v264
  %v2568 = vpop.f32.mrb[0].mxu0
  %v2569 = vadd.f32 %v2500, %v2568
  %v2570 = vpop.f32.mrb[0].mxu0
  %2571 = vmatprep.mubr.f32.mxu0 0.0
  %2572 = vmatmul.mubr.f32.gmra.mrb[0].mxu0 %v267
  %v2573 = vpop.f32.mrb[0].mxu0
  %v2574 = vadd.f32 %v2500, %v2573
  %v2575 = vpop.f32.mrb[0].mxu0
  %2576 = vmatprep.mubr.f32.mxu0 0.0
  %2577 = vmatmul.mubr.f32.gmra.mrb[0].mxu0 %v270
  %v2578 = vpop.f32.mrb[0].mxu0
  %v2579 = vadd.f32 %v2500, %v2578
  %v2580 = vpop.f32.mrb[0].mxu0
  %2581 = vmatprep.mubr.f32.mxu0 0.0
  %2582 = vmatmul.mubr.f32.gmra.mrb[0].mxu0 %v273
  %v2583 = vpop.f32.mrb[0].mxu0
  %v2584 = vadd.f32 %v2500, %v2583
  %v2585 = vpop.f32.mrb[0].mxu0
  %2586 = vmatprep.mubr.f32.mxu0 0.0
  %2587 = vmatmul.mubr.f32.gmra.mrb[0].mxu0 %v276
  %v2588 = vpop.f32.mrb[0].mxu0
  %v2589 = vadd.f32 %v2500, %v2588
  %v2590 = vpop.f32.mrb[0].mxu0
  %2591 = vmatprep.mubr.f32.mxu0 0.0
  %2592 = vmatmul.mubr.f32.gmra.mrb[0].mxu0 %v279
  %v2593 = vpop.f32.mrb[0].mxu0
  %v2594 = vadd.f32 %v2500, %v2593
  %v2595 = vpop.f32.mrb[0].mxu0
  %2596 = vmatprep.mubr.f32.mxu0 0.0
  %2597 = vmatmul.mubr.f32.gmra.mrb[0].mxu0 %v282
  %v2598 = vpop.f32.mrb[0].mxu0
  %v2599 = vadd.f32 %v2500, %v2598
  %v2600 = vpop.f32.mrb[0].mxu0
  %2601 = vmatprep.mubr.f32.mxu0 0.0
  %2602 = vmatmul.mubr.f32.gmra.mrb[0].mxu0 %v285
  %v2603 = vpop.f32.mrb[0].mxu0
  %v2604 = vadd.f32 %v2500, %v2603
  %v2605 = vpop.f32.mrb[0].mxu0
  %2606 = vmatprep.mubr.f32.mxu0 0.0
  %2607 = vmatmul.mubr.f32.gmra.mrb[0].mxu0 %v288
  %v2608 = vpop.f32.mrb[0].mxu0
  %v2609 = vadd.f32 %v2500, %v2608
  %v2610 = vpop.f32.mrb[0].mxu0
  %2611 = vmatprep.mubr.f32.mxu0 0.0
  %2612 = vmatmul.mubr.f32.gmra.mrb[0].mxu0 %v291
  %v2613 = vpop.f32.mrb[0].mxu0
  %v2614 = vadd.f32 %v2500, %v2613
  %v2615 = vpop.f32.mrb[0].mxu0
  %2616 = vdwg.mxu0
  %v2618 = vsel %vm668, %v2305, 0
  %v2621 = vsel %vm668, %v2310, 0
  %v2624 = vsel %vm668, %v2315, 0
  %v2627 = vsel %vm668, %v2320, 0
  %v2630 = vsel %vm668, %v2325, 0
  %v2633 = vsel %vm668, %v2330, 0
  %v2636 = vsel %vm668, %v2335, 0
  %v2639 = vsel %vm668, %v2340, 0
  %v2642 = vsel %vm668, %v2345, 0
  %v2645 = vsel %vm668, %v2350, 0
  %v2648 = vsel %vm668, %v2437, 0
  %v2651 = vsel %vm668, %v2442, 0
  %v2654 = vsel %vm668, %v2447, 0
  %v2657 = vsel %vm668, %v2452, 0
  %v2660 = vsel %vm668, %v2457, 0
  %v2663 = vsel %vm668, %v2462, 0
  %v2666 = vsel %vm668, %v2467, 0
  %v2669 = vsel %vm668, %v2472, 0
  %v2672 = vsel %vm668, %v2477, 0
  %v2675 = vsel %vm668, %v2482, 0
  %2677 = vmatprep.subr.mxu0 0.0
  %2678 = vmatpush1.xpose.msra.mxu0 %v2648
  %2679 = vmatprep.subr.mxu0 0.0
  %2680 = vmatpush1.xpose.msra.mxu0 %v2651
  %2681 = vmatprep.subr.mxu0 0.0
  %2682 = vmatpush1.xpose.msra.mxu0 %v2654
  %2683 = vmatprep.subr.mxu0 0.0
  %2684 = vmatpush1.xpose.msra.mxu0 %v2657
  %2685 = vmatprep.subr.mxu0 0.0
  %2686 = vmatpush1.xpose.msra.mxu0 %v2660
  %2687 = vmatprep.subr.mxu0 0.0
  %2688 = vmatpush1.xpose.msra.mxu0 %v2663
  %2689 = vmatprep.subr.mxu0 0.0
  %2690 = vmatpush1.xpose.msra.mxu0 %v2666
  %2691 = vmatprep.subr.mxu0 0.0
  %2692 = vmatpush1.xpose.msra.mxu0 %v2669
  %2693 = vmatprep.subr.mxu0 0.0
  %2694 = vmatpush1.xpose.msra.mxu0 %v2672
  %2695 = vmatprep.subr.mxu0 0.0
  %2696 = vmatpush1.xpose.msra.mxu0 %v2675
  %2697 = vmatprep.subr.mxu0 0.0
  %2698 = vmatpush1.xpose.msra.mxu0 0.0
  %2699 = vmatprep.subr.mxu0 0.0
  %2700 = vmatpush1.xpose.msra.mxu0 0.0
  %2701 = vmatprep.subr.mxu0 0.0
  %2702 = vmatpush1.xpose.msra.mxu0 0.0
  %2703 = vmatprep.subr.mxu0 0.0
  %2704 = vmatpush1.xpose.msra.mxu0 0.0
  %2705 = vmatprep.subr.mxu0 0.0
  %2706 = vmatpush1.xpose.msra.mxu0 0.0
  %2707 = vmatprep.subr.mxu0 0.0
  %2708 = vmatpush1.xpose.msra.mxu0 0.0
  %2709 = vmatprep.subr.mxu0 0.0
  %2710 = vmatpush1.xpose.msra.mxu0 0.0
  %2711 = vmatprep.subr.mxu0 0.0
  %2712 = vmatpush1.xpose.msra.mxu0 0.0
  %2713 = vmatprep.subr.mxu0 0.0
  %2714 = vmatpush1.xpose.msra.mxu0 0.0
  %2715 = vmatprep.subr.mxu0 0.0
  %2716 = vmatpush1.xpose.msra.mxu0 0.0
  %2717 = vmatprep.subr.mxu0 0.0
  %2718 = vmatpush1.xpose.msra.mxu0 0.0
  %2719 = vmatprep.subr.mxu0 0.0
  %2720 = vmatpush1.xpose.msra.mxu0 0.0
  %2721 = vmatprep.subr.mxu0 0.0
  %2722 = vmatpush1.xpose.msra.mxu0 0.0
  %2723 = vmatprep.subr.mxu0 0.0
  %2724 = vmatpush1.xpose.msra.mxu0 0.0
  %2725 = vmatprep.subr.mxu0 0.0
  %2726 = vmatpush1.xpose.msra.mxu0 0.0
  %2727 = vmatprep.subr.mxu0 0.0
  %2728 = vmatpush1.xpose.msra.mxu0 0.0
  %2729 = vmatprep.subr.mxu0 0.0
  %2730 = vmatpush1.xpose.msra.mxu0 0.0
  %2731 = vmatprep.subr.mxu0 0.0
  %2732 = vmatpush1.xpose.msra.mxu0 0.0
  %2733 = vmatprep.subr.mxu0 0.0
  %2734 = vmatpush1.xpose.msra.mxu0 0.0
  %2735 = vmatprep.subr.mxu0 0.0
  %2736 = vmatpush1.xpose.msra.mxu0 0.0
  %2737 = vmatprep.subr.mxu0 0.0
  %2738 = vmatpush1.xpose.msra.mxu0 0.0
  %2739 = vmatprep.subr.mxu0 0.0
  %2740 = vmatpush1.xpose.msra.mxu0 0.0
  %2741 = vmatprep.mubr.f32.mxu0 0.0
  %2742 = vmatmul.mubr.f32.gmra.mrb[0].mxu0 %v2618
  %v2743 = vpop.f32.mrb[0].mxu0
  %v2744 = vadd.f32 %v81, %v2743
  %v2745 = vpop.f32.mrb[0].mxu0
  %2746 = vmatprep.mubr.f32.mxu0 0.0
  %2747 = vmatmul.mubr.f32.gmra.mrb[0].mxu0 %v2621
  %v2748 = vpop.f32.mrb[0].mxu0
  %v2749 = vadd.f32 %v81, %v2748
  %v2750 = vpop.f32.mrb[0].mxu0
  %2751 = vmatprep.mubr.f32.mxu0 0.0
  %2752 = vmatmul.mubr.f32.gmra.mrb[0].mxu0 %v2624
  %v2753 = vpop.f32.mrb[0].mxu0
  %v2754 = vadd.f32 %v81, %v2753
  %v2755 = vpop.f32.mrb[0].mxu0
  %2756 = vmatprep.mubr.f32.mxu0 0.0
  %2757 = vmatmul.mubr.f32.gmra.mrb[0].mxu0 %v2627
  %v2758 = vpop.f32.mrb[0].mxu0
  %v2759 = vadd.f32 %v81, %v2758
  %v2760 = vpop.f32.mrb[0].mxu0
  %2761 = vmatprep.mubr.f32.mxu0 0.0
  %2762 = vmatmul.mubr.f32.gmra.mrb[0].mxu0 %v2630
  %v2763 = vpop.f32.mrb[0].mxu0
  %v2764 = vadd.f32 %v81, %v2763
  %v2765 = vpop.f32.mrb[0].mxu0
  %2766 = vmatprep.mubr.f32.mxu0 0.0
  %2767 = vmatmul.mubr.f32.gmra.mrb[0].mxu0 %v2633
  %v2768 = vpop.f32.mrb[0].mxu0
  %v2769 = vadd.f32 %v81, %v2768
  %v2770 = vpop.f32.mrb[0].mxu0
  %2771 = vmatprep.mubr.f32.mxu0 0.0
  %2772 = vmatmul.mubr.f32.gmra.mrb[0].mxu0 %v2636
  %v2773 = vpop.f32.mrb[0].mxu0
  %v2774 = vadd.f32 %v81, %v2773
  %v2775 = vpop.f32.mrb[0].mxu0
  %2776 = vmatprep.mubr.f32.mxu0 0.0
  %2777 = vmatmul.mubr.f32.gmra.mrb[0].mxu0 %v2639
  %v2778 = vpop.f32.mrb[0].mxu0
  %v2779 = vadd.f32 %v81, %v2778
  %v2780 = vpop.f32.mrb[0].mxu0
  %2781 = vmatprep.mubr.f32.mxu0 0.0
  %2782 = vmatmul.mubr.f32.gmra.mrb[0].mxu0 %v2642
  %v2783 = vpop.f32.mrb[0].mxu0
  %v2784 = vadd.f32 %v81, %v2783
  %v2785 = vpop.f32.mrb[0].mxu0
  %2786 = vmatprep.mubr.f32.mxu0 0.0
  %2787 = vmatmul.mubr.f32.gmra.mrb[0].mxu0 %v2645
  %v2788 = vpop.f32.mrb[0].mxu0
  %v2789 = vadd.f32 %v81, %v2788
  %v2790 = vpop.f32.mrb[0].mxu0
  %2791 = vdwg.mxu0
  %v2792 = vsel %vm844, %v2744, -inf
  %2793 = vmax.xlane.f32.xlu0 %v2792
  %v2794 = vpop.xlane.xlu0 %2793
  %v2795 = vsel %vm844, %v2749, -inf
  %2796 = vmax.xlane.f32.xlu0 %v2795
  %v2797 = vpop.xlane.xlu0 %2796
  %v2798 = vsel %vm844, %v2754, -inf
  %2799 = vmax.xlane.f32.xlu0 %v2798
  %v2800 = vpop.xlane.xlu0 %2799
  %v2801 = vsel %vm844, %v2759, -inf
  %2802 = vmax.xlane.f32.xlu0 %v2801
  %v2803 = vpop.xlane.xlu0 %2802
  %v2804 = vsel %vm844, %v2764, -inf
  %2805 = vmax.xlane.f32.xlu0 %v2804
  %v2806 = vpop.xlane.xlu0 %2805
  %v2807 = vsel %vm844, %v2769, -inf
  %2808 = vmax.xlane.f32.xlu0 %v2807
  %v2809 = vpop.xlane.xlu0 %2808
  %v2810 = vsel %vm844, %v2774, -inf
  %2811 = vmax.xlane.f32.xlu0 %v2810
  %v2812 = vpop.xlane.xlu0 %2811
  %v2813 = vsel %vm844, %v2779, -inf
  %2814 = vmax.xlane.f32.xlu0 %v2813
  %v2815 = vpop.xlane.xlu0 %2814
  %v2816 = vsel %vm844, %v2784, -inf
  %2817 = vmax.xlane.f32.xlu0 %v2816
  %v2818 = vpop.xlane.xlu0 %2817
  %v2819 = vsel %vm844, %v2789, -inf
  %2820 = vmax.xlane.f32.xlu0 %v2819
  %v2821 = vpop.xlane.xlu0 %2820
  %v2822 = vsub.f32 %v2744, %v2794
  %v2823 = vsub.f32 %v2749, %v2797
  %v2824 = vsub.f32 %v2754, %v2800
  %v2825 = vsub.f32 %v2759, %v2803
  %v2826 = vsub.f32 %v2764, %v2806
  %v2827 = vsub.f32 %v2769, %v2809
  %v2828 = vsub.f32 %v2774, %v2812
  %v2829 = vsub.f32 %v2779, %v2815
  %v2830 = vsub.f32 %v2784, %v2818
  %v2831 = vsub.f32 %v2789, %v2821
  %v2832 = vmul.f32 %v2822, 1.442695
  %v2833 = vpow.pop %v2832
  %v2834 = vmul.f32 %v2823, 1.442695
  %v2835 = vpow.pop %v2834
  %v2836 = vmul.f32 %v2824, 1.442695
  %v2837 = vpow.pop %v2836
  %v2838 = vmul.f32 %v2825, 1.442695
  %v2839 = vpow.pop %v2838
  %v2840 = vmul.f32 %v2826, 1.442695
  %v2841 = vpow.pop %v2840
  %v2842 = vmul.f32 %v2827, 1.442695
  %v2843 = vpow.pop %v2842
  %v2844 = vmul.f32 %v2828, 1.442695
  %v2845 = vpow.pop %v2844
  %v2846 = vmul.f32 %v2829, 1.442695
  %v2847 = vpow.pop %v2846
  %v2848 = vmul.f32 %v2830, 1.442695
  %v2849 = vpow.pop %v2848
  %v2850 = vmul.f32 %v2831, 1.442695
  %v2851 = vpow.pop %v2850
  %v2852 = vsel %vm844, %v2833, 0.0
  %2853 = vadd.xlane.f32.xlu0 %v2852
  %v2854 = vpop.xlane.xlu0 %2853
  %v2855 = vsel %vm844, %v2835, 0.0
  %2856 = vadd.xlane.f32.xlu0 %v2855
  %v2857 = vpop.xlane.xlu0 %2856
  %v2858 = vsel %vm844, %v2837, 0.0
  %2859 = vadd.xlane.f32.xlu0 %v2858
  %v2860 = vpop.xlane.xlu0 %2859
  %v2861 = vsel %vm844, %v2839, 0.0
  %2862 = vadd.xlane.f32.xlu0 %v2861
  %v2863 = vpop.xlane.xlu0 %2862
  %v2864 = vsel %vm844, %v2841, 0.0
  %2865 = vadd.xlane.f32.xlu0 %v2864
  %v2866 = vpop.xlane.xlu0 %2865
  %v2867 = vsel %vm844, %v2843, 0.0
  %2868 = vadd.xlane.f32.xlu0 %v2867
  %v2869 = vpop.xlane.xlu0 %2868
  %v2870 = vsel %vm844, %v2845, 0.0
  %2871 = vadd.xlane.f32.xlu0 %v2870
  %v2872 = vpop.xlane.xlu0 %2871
  %v2873 = vsel %vm844, %v2847, 0.0
  %2874 = vadd.xlane.f32.xlu0 %v2873
  %v2875 = vpop.xlane.xlu0 %2874
  %v2876 = vsel %vm844, %v2849, 0.0
  %2877 = vadd.xlane.f32.xlu0 %v2876
  %v2878 = vpop.xlane.xlu0 %2877
  %v2879 = vsel %vm844, %v2851, 0.0
  %2880 = vadd.xlane.f32.xlu0 %v2879
  %v2881 = vpop.xlane.xlu0 %2880
  %v2882 = vrcp.pop %v2854
  %v2883 = vrcp.pop %v2857
  %v2884 = vrcp.pop %v2860
  %v2885 = vrcp.pop %v2863
  %v2886 = vrcp.pop %v2866
  %v2887 = vrcp.pop %v2869
  %v2888 = vrcp.pop %v2872
  %v2889 = vrcp.pop %v2875
  %v2890 = vrcp.pop %v2878
  %v2891 = vrcp.pop %v2881
  %v2892 = vmul.f32 %v2833, %v2882
  %v2893 = vmul.f32 %v2835, %v2883
  %v2894 = vmul.f32 %v2837, %v2884
  %v2895 = vmul.f32 %v2839, %v2885
  %v2896 = vmul.f32 %v2841, %v2886
  %v2897 = vmul.f32 %v2843, %v2887
  %v2898 = vmul.f32 %v2845, %v2888
  %v2899 = vmul.f32 %v2847, %v2889
  %v2900 = vmul.f32 %v2849, %v2890
  %v2901 = vmul.f32 %v2851, %v2891
  %v2903 = vsel %vm844, %v2892, 0
  %v2906 = vsel %vm844, %v2893, 0
  %v2909 = vsel %vm844, %v2894, 0
  %v2912 = vsel %vm844, %v2895, 0
  %v2915 = vsel %vm844, %v2896, 0
  %v2918 = vsel %vm844, %v2897, 0
  %v2921 = vsel %vm844, %v2898, 0
  %v2924 = vsel %vm844, %v2899, 0
  %v2927 = vsel %vm844, %v2900, 0
  %v2930 = vsel %vm844, %v2901, 0
  %2932 = vmatprep.subr.mxu0 0.0
  %2933 = vmatpush1.msra.mxu0 %v2569
  %2934 = vmatprep.subr.mxu0 0.0
  %2935 = vmatpush1.msra.mxu0 %v2574
  %2936 = vmatprep.subr.mxu0 0.0
  %2937 = vmatpush1.msra.mxu0 %v2579
  %2938 = vmatprep.subr.mxu0 0.0
  %2939 = vmatpush1.msra.mxu0 %v2584
  %2940 = vmatprep.subr.mxu0 0.0
  %2941 = vmatpush1.msra.mxu0 %v2589
  %2942 = vmatprep.subr.mxu0 0.0
  %2943 = vmatpush1.msra.mxu0 %v2594
  %2944 = vmatprep.subr.mxu0 0.0
  %2945 = vmatpush1.msra.mxu0 %v2599
  %2946 = vmatprep.subr.mxu0 0.0
  %2947 = vmatpush1.msra.mxu0 %v2604
  %2948 = vmatprep.subr.mxu0 0.0
  %2949 = vmatpush1.msra.mxu0 %v2609
  %2950 = vmatprep.subr.mxu0 0.0
  %2951 = vmatpush1.msra.mxu0 %v2614
  %2952 = vmatprep.subr.mxu0 0.0
  %2953 = vmatpush1.msra.mxu0 0.0
  %2954 = vmatprep.subr.mxu0 0.0
  %2955 = vmatpush1.msra.mxu0 0.0
  %2956 = vmatprep.subr.mxu0 0.0
  %2957 = vmatpush1.msra.mxu0 0.0
  %2958 = vmatprep.subr.mxu0 0.0
  %2959 = vmatpush1.msra.mxu0 0.0
  %2960 = vmatprep.subr.mxu0 0.0
  %2961 = vmatpush1.msra.mxu0 0.0
  %2962 = vmatprep.subr.mxu0 0.0
  %2963 = vmatpush1.msra.mxu0 0.0
  %2964 = vmatprep.subr.mxu0 0.0
  %2965 = vmatpush1.msra.mxu0 0.0
  %2966 = vmatprep.subr.mxu0 0.0
  %2967 = vmatpush1.msra.mxu0 0.0
  %2968 = vmatprep.subr.mxu0 0.0
  %2969 = vmatpush1.msra.mxu0 0.0
  %2970 = vmatprep.subr.mxu0 0.0
  %2971 = vmatpush1.msra.mxu0 0.0
  %2972 = vmatprep.subr.mxu0 0.0
  %2973 = vmatpush1.msra.mxu0 0.0
  %2974 = vmatprep.subr.mxu0 0.0
  %2975 = vmatpush1.msra.mxu0 0.0
  %2976 = vmatprep.subr.mxu0 0.0
  %2977 = vmatpush1.msra.mxu0 0.0
  %2978 = vmatprep.subr.mxu0 0.0
  %2979 = vmatpush1.msra.mxu0 0.0
  %2980 = vmatprep.subr.mxu0 0.0
  %2981 = vmatpush1.msra.mxu0 0.0
  %2982 = vmatprep.subr.mxu0 0.0
  %2983 = vmatpush1.msra.mxu0 0.0
  %2984 = vmatprep.subr.mxu0 0.0
  %2985 = vmatpush1.msra.mxu0 0.0
  %2986 = vmatprep.subr.mxu0 0.0
  %2987 = vmatpush1.msra.mxu0 0.0
  %2988 = vmatprep.subr.mxu0 0.0
  %2989 = vmatpush1.msra.mxu0 0.0
  %2990 = vmatprep.subr.mxu0 0.0
  %2991 = vmatpush1.msra.mxu0 0.0
  %2992 = vmatprep.subr.mxu0 0.0
  %2993 = vmatpush1.msra.mxu0 0.0
  %2994 = vmatprep.subr.mxu0 0.0
  %2995 = vmatpush1.msra.mxu0 0.0
  %2996 = vmatprep.mubr.f32.mxu0 0.0
  %2997 = vmatmul.mubr.f32.gmra.mrb[0].mxu0 %v2903
  %v2998 = vpop.f32.mrb[0].mxu0
  %v2999 = vadd.f32 0.0, %v2998
  %v3000 = vpop.f32.mrb[0].mxu0
  %3001 = vmatprep.mubr.f32.mxu0 0.0
  %3002 = vmatmul.mubr.f32.gmra.mrb[0].mxu0 %v2906
  %v3003 = vpop.f32.mrb[0].mxu0
  %v3004 = vadd.f32 0.0, %v3003
  %v3005 = vpop.f32.mrb[0].mxu0
  %3006 = vmatprep.mubr.f32.mxu0 0.0
  %3007 = vmatmul.mubr.f32.gmra.mrb[0].mxu0 %v2909
  %v3008 = vpop.f32.mrb[0].mxu0
  %v3009 = vadd.f32 0.0, %v3008
  %v3010 = vpop.f32.mrb[0].mxu0
  %3011 = vmatprep.mubr.f32.mxu0 0.0
  %3012 = vmatmul.mubr.f32.gmra.mrb[0].mxu0 %v2912
  %v3013 = vpop.f32.mrb[0].mxu0
  %v3014 = vadd.f32 0.0, %v3013
  %v3015 = vpop.f32.mrb[0].mxu0
  %3016 = vmatprep.mubr.f32.mxu0 0.0
  %3017 = vmatmul.mubr.f32.gmra.mrb[0].mxu0 %v2915
  %v3018 = vpop.f32.mrb[0].mxu0
  %v3019 = vadd.f32 0.0, %v3018
  %v3020 = vpop.f32.mrb[0].mxu0
  %3021 = vmatprep.mubr.f32.mxu0 0.0
  %3022 = vmatmul.mubr.f32.gmra.mrb[0].mxu0 %v2918
  %v3023 = vpop.f32.mrb[0].mxu0
  %v3024 = vadd.f32 0.0, %v3023
  %v3025 = vpop.f32.mrb[0].mxu0
  %3026 = vmatprep.mubr.f32.mxu0 0.0
  %3027 = vmatmul.mubr.f32.gmra.mrb[0].mxu0 %v2921
  %v3028 = vpop.f32.mrb[0].mxu0
  %v3029 = vadd.f32 0.0, %v3028
  %v3030 = vpop.f32.mrb[0].mxu0
  %3031 = vmatprep.mubr.f32.mxu0 0.0
  %3032 = vmatmul.mubr.f32.gmra.mrb[0].mxu0 %v2924
  %v3033 = vpop.f32.mrb[0].mxu0
  %v3034 = vadd.f32 0.0, %v3033
  %v3035 = vpop.f32.mrb[0].mxu0
  %3036 = vmatprep.mubr.f32.mxu0 0.0
  %3037 = vmatmul.mubr.f32.gmra.mrb[0].mxu0 %v2927
  %v3038 = vpop.f32.mrb[0].mxu0
  %v3039 = vadd.f32 0.0, %v3038
  %v3040 = vpop.f32.mrb[0].mxu0
  %3041 = vmatprep.mubr.f32.mxu0 0.0
  %3042 = vmatmul.mubr.f32.gmra.mrb[0].mxu0 %v2930
  %v3043 = vpop.f32.mrb[0].mxu0
  %v3044 = vadd.f32 0.0, %v3043
  %v3045 = vpop.f32.mrb[0].mxu0
  %3046 = vdwg.mxu0
  %s3047 = scalar_lea.vmem %s9, 32
  %v3048 = vld [vmem:[%s3047] sm:$0xff]
  %v3049 = vld [vmem:[%s3047 + $0x8] sm:$0xff]
  %v3051 = vsel %vm668, %v2999, 0
  %v3054 = vsel %vm668, %v3004, 0
  %v3057 = vsel %vm668, %v3009, 0
  %v3060 = vsel %vm668, %v3014, 0
  %v3063 = vsel %vm668, %v3019, 0
  %v3066 = vsel %vm668, %v3024, 0
  %v3069 = vsel %vm668, %v3029, 0
  %v3072 = vsel %vm668, %v3034, 0
  %v3075 = vsel %vm668, %v3039, 0
  %v3078 = vsel %vm668, %v3044, 0
  %3080 = vmatprep.subr.mxu0 0.0
  %3081 = vmatpush1.msra.mxu0 %v3048
  %3082 = vmatprep.subr.mxu0 0.0
  %3083 = vmatpush1.msra.mxu0 %v3049
  %3084 = vmatprep.subr.mxu0 0.0
  %3085 = vmatpush1.msra.mxu0 0.0
  %3086 = vmatprep.subr.mxu0 0.0
  %3087 = vmatpush1.msra.mxu0 0.0
  %3088 = vmatprep.subr.mxu0 0.0
  %3089 = vmatpush1.msra.mxu0 0.0
  %3090 = vmatprep.subr.mxu0 0.0
  %3091 = vmatpush1.msra.mxu0 0.0
  %3092 = vmatprep.subr.mxu0 0.0
  %3093 = vmatpush1.msra.mxu0 0.0
  %3094 = vmatprep.subr.mxu0 0.0
  %3095 = vmatpush1.msra.mxu0 0.0
  %3096 = vmatprep.subr.mxu0 0.0
  %3097 = vmatpush1.msra.mxu0 0.0
  %3098 = vmatprep.subr.mxu0 0.0
  %3099 = vmatpush1.msra.mxu0 0.0
  %3100 = vmatprep.subr.mxu0 0.0
  %3101 = vmatpush1.msra.mxu0 0.0
  %3102 = vmatprep.subr.mxu0 0.0
  %3103 = vmatpush1.msra.mxu0 0.0
  %3104 = vmatprep.subr.mxu0 0.0
  %3105 = vmatpush1.msra.mxu0 0.0
  %3106 = vmatprep.subr.mxu0 0.0
  %3107 = vmatpush1.msra.mxu0 0.0
  %3108 = vmatprep.subr.mxu0 0.0
  %3109 = vmatpush1.msra.mxu0 0.0
  %3110 = vmatprep.subr.mxu0 0.0
  %3111 = vmatpush1.msra.mxu0 0.0
  %3112 = vmatprep.subr.mxu0 0.0
  %3113 = vmatpush1.msra.mxu0 0.0
  %3114 = vmatprep.subr.mxu0 0.0
  %3115 = vmatpush1.msra.mxu0 0.0
  %3116 = vmatprep.subr.mxu0 0.0
  %3117 = vmatpush1.msra.mxu0 0.0
  %3118 = vmatprep.subr.mxu0 0.0
  %3119 = vmatpush1.msra.mxu0 0.0
  %3120 = vmatprep.subr.mxu0 0.0
  %3121 = vmatpush1.msra.mxu0 0.0
  %3122 = vmatprep.subr.mxu0 0.0
  %3123 = vmatpush1.msra.mxu0 0.0
  %3124 = vmatprep.subr.mxu0 0.0
  %3125 = vmatpush1.msra.mxu0 0.0
  %3126 = vmatprep.subr.mxu0 0.0
  %3127 = vmatpush1.msra.mxu0 0.0
  %3128 = vmatprep.subr.mxu0 0.0
  %3129 = vmatpush1.msra.mxu0 0.0
  %3130 = vmatprep.subr.mxu0 0.0
  %3131 = vmatpush1.msra.mxu0 0.0
  %3132 = vmatprep.subr.mxu0 0.0
  %3133 = vmatpush1.msra.mxu0 0.0
  %3134 = vmatprep.subr.mxu0 0.0
  %3135 = vmatpush1.msra.mxu0 0.0
  %3136 = vmatprep.subr.mxu0 0.0
  %3137 = vmatpush1.msra.mxu0 0.0
  %3138 = vmatprep.subr.mxu0 0.0
  %3139 = vmatpush1.msra.mxu0 0.0
  %3140 = vmatprep.subr.mxu0 0.0
  %3141 = vmatpush1.msra.mxu0 0.0
  %3142 = vmatprep.subr.mxu0 0.0
  %3143 = vmatpush1.msra.mxu0 0.0
  %3144 = vmatprep.mubr.f32.mxu0 0.0
  %3145 = vmatmul.mubr.f32.gmra.mrb[0].mxu0 %v3051
  %v3146 = vpop.f32.mrb[0].mxu0
  %v3147 = vadd.f32 0.0, %v3146
  %v3148 = vpop.f32.mrb[0].mxu0
  %3149 = vmatprep.mubr.f32.mxu0 0.0
  %3150 = vmatmul.mubr.f32.gmra.mrb[0].mxu0 %v3054
  %v3151 = vpop.f32.mrb[0].mxu0
  %v3152 = vadd.f32 0.0, %v3151
  %v3153 = vpop.f32.mrb[0].mxu0
  %3154 = vmatprep.mubr.f32.mxu0 0.0
  %3155 = vmatmul.mubr.f32.gmra.mrb[0].mxu0 %v3057
  %v3156 = vpop.f32.mrb[0].mxu0
  %v3157 = vadd.f32 0.0, %v3156
  %v3158 = vpop.f32.mrb[0].mxu0
  %3159 = vmatprep.mubr.f32.mxu0 0.0
  %3160 = vmatmul.mubr.f32.gmra.mrb[0].mxu0 %v3060
  %v3161 = vpop.f32.mrb[0].mxu0
  %v3162 = vadd.f32 0.0, %v3161
  %v3163 = vpop.f32.mrb[0].mxu0
  %3164 = vmatprep.mubr.f32.mxu0 0.0
  %3165 = vmatmul.mubr.f32.gmra.mrb[0].mxu0 %v3063
  %v3166 = vpop.f32.mrb[0].mxu0
  %v3167 = vadd.f32 0.0, %v3166
  %v3168 = vpop.f32.mrb[0].mxu0
  %3169 = vmatprep.mubr.f32.mxu0 0.0
  %3170 = vmatmul.mubr.f32.gmra.mrb[0].mxu0 %v3066
  %v3171 = vpop.f32.mrb[0].mxu0
  %v3172 = vadd.f32 0.0, %v3171
  %v3173 = vpop.f32.mrb[0].mxu0
  %3174 = vmatprep.mubr.f32.mxu0 0.0
  %3175 = vmatmul.mubr.f32.gmra.mrb[0].mxu0 %v3069
  %v3176 = vpop.f32.mrb[0].mxu0
  %v3177 = vadd.f32 0.0, %v3176
  %v3178 = vpop.f32.mrb[0].mxu0
  %3179 = vmatprep.mubr.f32.mxu0 0.0
  %3180 = vmatmul.mubr.f32.gmra.mrb[0].mxu0 %v3072
  %v3181 = vpop.f32.mrb[0].mxu0
  %v3182 = vadd.f32 0.0, %v3181
  %v3183 = vpop.f32.mrb[0].mxu0
  %3184 = vmatprep.mubr.f32.mxu0 0.0
  %3185 = vmatmul.mubr.f32.gmra.mrb[0].mxu0 %v3075
  %v3186 = vpop.f32.mrb[0].mxu0
  %v3187 = vadd.f32 0.0, %v3186
  %v3188 = vpop.f32.mrb[0].mxu0
  %3189 = vmatprep.mubr.f32.mxu0 0.0
  %3190 = vmatmul.mubr.f32.gmra.mrb[0].mxu0 %v3078
  %v3191 = vpop.f32.mrb[0].mxu0
  %v3192 = vadd.f32 0.0, %v3191
  %v3193 = vpop.f32.mrb[0].mxu0
  %3194 = vdwg.mxu0
  %v3195 = vadd.f32 %v2173, %v3147
  %v3196 = vadd.f32 %v2178, %v3152
  %v3197 = vadd.f32 %v2183, %v3157
  %v3198 = vadd.f32 %v2188, %v3162
  %v3199 = vadd.f32 %v2193, %v3167
  %v3200 = vadd.f32 %v2198, %v3172
  %v3201 = vadd.f32 %v2203, %v3177
  %v3202 = vadd.f32 %v2208, %v3182
  %v3203 = vadd.f32 %v2213, %v3187
  %v3204 = vadd.f32 %v2218, %v3192
  %s3205 = scalar_lea.vmem %s3, 192
  %v3206 = vld [vmem:[%s3205] sm:$0xff]
  %v3207 = vld [vmem:[%s3205 + $0x8] sm:$0xff]
  %v3208 = vld [vmem:[%s3205 + $0x10] sm:$0xff]
  %v3209 = vld [vmem:[%s3205 + $0x18] sm:$0xff]
  %v3210 = vld [vmem:[%s3205 + $0x20] sm:$0xff]
  %v3211 = vld [vmem:[%s3205 + $0x28] sm:$0xff]
  %v3212 = vld [vmem:[%s3205 + $0x30] sm:$0xff]
  %v3213 = vld [vmem:[%s3205 + $0x38] sm:$0xff]
  %s3214 = scalar_lea.vmem %s4, 3
  %v3215 = vld [vmem:[%s3214] sm:$0x1]
  %v3217 = vlaneseq
  %v3218 = vshrl.u32 %v3217, 7
  %v3219 = vsub.s32 0, %v3218
  %v3220 = vrot.slane %v3215, %v3219
  %3222 = vmatprep.subr.mxu0 0.0
  %3223 = vmatpush1.msra.mxu0 %v3206
  %3224 = vmatprep.subr.mxu0 0.0
  %3225 = vmatpush1.msra.mxu0 %v3207
  %3226 = vmatprep.subr.mxu0 0.0
  %3227 = vmatpush1.msra.mxu0 %v3208
  %3228 = vmatprep.subr.mxu0 0.0
  %3229 = vmatpush1.msra.mxu0 %v3209
  %3230 = vmatprep.subr.mxu0 0.0
  %3231 = vmatpush1.msra.mxu0 %v3210
  %3232 = vmatprep.subr.mxu0 0.0
  %3233 = vmatpush1.msra.mxu0 %v3211
  %3234 = vmatprep.subr.mxu0 0.0
  %3235 = vmatpush1.msra.mxu0 %v3212
  %3236 = vmatprep.subr.mxu0 0.0
  %3237 = vmatpush1.msra.mxu0 %v3213
  %3238 = vmatprep.subr.mxu0 0.0
  %3239 = vmatpush1.msra.mxu0 0.0
  %3240 = vmatprep.subr.mxu0 0.0
  %3241 = vmatpush1.msra.mxu0 0.0
  %3242 = vmatprep.subr.mxu0 0.0
  %3243 = vmatpush1.msra.mxu0 0.0
  %3244 = vmatprep.subr.mxu0 0.0
  %3245 = vmatpush1.msra.mxu0 0.0
  %3246 = vmatprep.subr.mxu0 0.0
  %3247 = vmatpush1.msra.mxu0 0.0
  %3248 = vmatprep.subr.mxu0 0.0
  %3249 = vmatpush1.msra.mxu0 0.0
  %3250 = vmatprep.subr.mxu0 0.0
  %3251 = vmatpush1.msra.mxu0 0.0
  %3252 = vmatprep.subr.mxu0 0.0
  %3253 = vmatpush1.msra.mxu0 0.0
  %3254 = vmatprep.subr.mxu0 0.0
  %3255 = vmatpush1.msra.mxu0 0.0
  %3256 = vmatprep.subr.mxu0 0.0
  %3257 = vmatpush1.msra.mxu0 0.0
  %3258 = vmatprep.subr.mxu0 0.0
  %3259 = vmatpush1.msra.mxu0 0.0
  %3260 = vmatprep.subr.mxu0 0.0
  %3261 = vmatpush1.msra.mxu0 0.0
  %3262 = vmatprep.subr.mxu0 0.0
  %3263 = vmatpush1.msra.mxu0 0.0
  %3264 = vmatprep.subr.mxu0 0.0
  %3265 = vmatpush1.msra.mxu0 0.0
  %3266 = vmatprep.subr.mxu0 0.0
  %3267 = vmatpush1.msra.mxu0 0.0
  %3268 = vmatprep.subr.mxu0 0.0
  %3269 = vmatpush1.msra.mxu0 0.0
  %3270 = vmatprep.subr.mxu0 0.0
  %3271 = vmatpush1.msra.mxu0 0.0
  %3272 = vmatprep.subr.mxu0 0.0
  %3273 = vmatpush1.msra.mxu0 0.0
  %3274 = vmatprep.subr.mxu0 0.0
  %3275 = vmatpush1.msra.mxu0 0.0
  %3276 = vmatprep.subr.mxu0 0.0
  %3277 = vmatpush1.msra.mxu0 0.0
  %3278 = vmatprep.subr.mxu0 0.0
  %3279 = vmatpush1.msra.mxu0 0.0
  %3280 = vmatprep.subr.mxu0 0.0
  %3281 = vmatpush1.msra.mxu0 0.0
  %3282 = vmatprep.subr.mxu0 0.0
  %3283 = vmatpush1.msra.mxu0 0.0
  %3284 = vmatprep.subr.mxu0 0.0
  %3285 = vmatpush1.msra.mxu0 0.0
  %3286 = vmatprep.mubr.f32.mxu0 0.0
  %3287 = vmatmul.mubr.f32.gmra.mrb[0].mxu0 %v264
  %v3288 = vpop.f32.mrb[0].mxu0
  %v3289 = vadd.f32 %v3220, %v3288
  %v3290 = vpop.f32.mrb[0].mxu0
  %3291 = vmatprep.mubr.f32.mxu0 0.0
  %3292 = vmatmul.mubr.f32.gmra.mrb[0].mxu0 %v267
  %v3293 = vpop.f32.mrb[0].mxu0
  %v3294 = vadd.f32 %v3220, %v3293
  %v3295 = vpop.f32.mrb[0].mxu0
  %3296 = vmatprep.mubr.f32.mxu0 0.0
  %3297 = vmatmul.mubr.f32.gmra.mrb[0].mxu0 %v270
  %v3298 = vpop.f32.mrb[0].mxu0
  %v3299 = vadd.f32 %v3220, %v3298
  %v3300 = vpop.f32.mrb[0].mxu0
  %3301 = vmatprep.mubr.f32.mxu0 0.0
  %3302 = vmatmul.mubr.f32.gmra.mrb[0].mxu0 %v273
  %v3303 = vpop.f32.mrb[0].mxu0
  %v3304 = vadd.f32 %v3220, %v3303
  %v3305 = vpop.f32.mrb[0].mxu0
  %3306 = vmatprep.mubr.f32.mxu0 0.0
  %3307 = vmatmul.mubr.f32.gmra.mrb[0].mxu0 %v276
  %v3308 = vpop.f32.mrb[0].mxu0
  %v3309 = vadd.f32 %v3220, %v3308
  %v3310 = vpop.f32.mrb[0].mxu0
  %3311 = vmatprep.mubr.f32.mxu0 0.0
  %3312 = vmatmul.mubr.f32.gmra.mrb[0].mxu0 %v279
  %v3313 = vpop.f32.mrb[0].mxu0
  %v3314 = vadd.f32 %v3220, %v3313
  %v3315 = vpop.f32.mrb[0].mxu0
  %3316 = vmatprep.mubr.f32.mxu0 0.0
  %3317 = vmatmul.mubr.f32.gmra.mrb[0].mxu0 %v282
  %v3318 = vpop.f32.mrb[0].mxu0
  %v3319 = vadd.f32 %v3220, %v3318
  %v3320 = vpop.f32.mrb[0].mxu0
  %3321 = vmatprep.mubr.f32.mxu0 0.0
  %3322 = vmatmul.mubr.f32.gmra.mrb[0].mxu0 %v285
  %v3323 = vpop.f32.mrb[0].mxu0
  %v3324 = vadd.f32 %v3220, %v3323
  %v3325 = vpop.f32.mrb[0].mxu0
  %3326 = vmatprep.mubr.f32.mxu0 0.0
  %3327 = vmatmul.mubr.f32.gmra.mrb[0].mxu0 %v288
  %v3328 = vpop.f32.mrb[0].mxu0
  %v3329 = vadd.f32 %v3220, %v3328
  %v3330 = vpop.f32.mrb[0].mxu0
  %3331 = vmatprep.mubr.f32.mxu0 0.0
  %3332 = vmatmul.mubr.f32.gmra.mrb[0].mxu0 %v291
  %v3333 = vpop.f32.mrb[0].mxu0
  %v3334 = vadd.f32 %v3220, %v3333
  %v3335 = vpop.f32.mrb[0].mxu0
  %3336 = vdwg.mxu0
  %s3337 = scalar_lea.vmem %s5, 192
  %v3338 = vld [vmem:[%s3337] sm:$0xff]
  %v3339 = vld [vmem:[%s3337 + $0x8] sm:$0xff]
  %v3340 = vld [vmem:[%s3337 + $0x10] sm:$0xff]
  %v3341 = vld [vmem:[%s3337 + $0x18] sm:$0xff]
  %v3342 = vld [vmem:[%s3337 + $0x20] sm:$0xff]
  %v3343 = vld [vmem:[%s3337 + $0x28] sm:$0xff]
  %v3344 = vld [vmem:[%s3337 + $0x30] sm:$0xff]
  %v3345 = vld [vmem:[%s3337 + $0x38] sm:$0xff]
  %s3346 = scalar_lea.vmem %s6, 3
  %v3347 = vld [vmem:[%s3346] sm:$0x1]
  %v3349 = vlaneseq
  %v3350 = vshrl.u32 %v3349, 7
  %v3351 = vsub.s32 0, %v3350
  %v3352 = vrot.slane %v3347, %v3351
  %3354 = vmatprep.subr.mxu0 0.0
  %3355 = vmatpush1.msra.mxu0 %v3338
  %3356 = vmatprep.subr.mxu0 0.0
  %3357 = vmatpush1.msra.mxu0 %v3339
  %3358 = vmatprep.subr.mxu0 0.0
  %3359 = vmatpush1.msra.mxu0 %v3340
  %3360 = vmatprep.subr.mxu0 0.0
  %3361 = vmatpush1.msra.mxu0 %v3341
  %3362 = vmatprep.subr.mxu0 0.0
  %3363 = vmatpush1.msra.mxu0 %v3342
  %3364 = vmatprep.subr.mxu0 0.0
  %3365 = vmatpush1.msra.mxu0 %v3343
  %3366 = vmatprep.subr.mxu0 0.0
  %3367 = vmatpush1.msra.mxu0 %v3344
  %3368 = vmatprep.subr.mxu0 0.0
  %3369 = vmatpush1.msra.mxu0 %v3345
  %3370 = vmatprep.subr.mxu0 0.0
  %3371 = vmatpush1.msra.mxu0 0.0
  %3372 = vmatprep.subr.mxu0 0.0
  %3373 = vmatpush1.msra.mxu0 0.0
  %3374 = vmatprep.subr.mxu0 0.0
  %3375 = vmatpush1.msra.mxu0 0.0
  %3376 = vmatprep.subr.mxu0 0.0
  %3377 = vmatpush1.msra.mxu0 0.0
  %3378 = vmatprep.subr.mxu0 0.0
  %3379 = vmatpush1.msra.mxu0 0.0
  %3380 = vmatprep.subr.mxu0 0.0
  %3381 = vmatpush1.msra.mxu0 0.0
  %3382 = vmatprep.subr.mxu0 0.0
  %3383 = vmatpush1.msra.mxu0 0.0
  %3384 = vmatprep.subr.mxu0 0.0
  %3385 = vmatpush1.msra.mxu0 0.0
  %3386 = vmatprep.subr.mxu0 0.0
  %3387 = vmatpush1.msra.mxu0 0.0
  %3388 = vmatprep.subr.mxu0 0.0
  %3389 = vmatpush1.msra.mxu0 0.0
  %3390 = vmatprep.subr.mxu0 0.0
  %3391 = vmatpush1.msra.mxu0 0.0
  %3392 = vmatprep.subr.mxu0 0.0
  %3393 = vmatpush1.msra.mxu0 0.0
  %3394 = vmatprep.subr.mxu0 0.0
  %3395 = vmatpush1.msra.mxu0 0.0
  %3396 = vmatprep.subr.mxu0 0.0
  %3397 = vmatpush1.msra.mxu0 0.0
  %3398 = vmatprep.subr.mxu0 0.0
  %3399 = vmatpush1.msra.mxu0 0.0
  %3400 = vmatprep.subr.mxu0 0.0
  %3401 = vmatpush1.msra.mxu0 0.0
  %3402 = vmatprep.subr.mxu0 0.0
  %3403 = vmatpush1.msra.mxu0 0.0
  %3404 = vmatprep.subr.mxu0 0.0
  %3405 = vmatpush1.msra.mxu0 0.0
  %3406 = vmatprep.subr.mxu0 0.0
  %3407 = vmatpush1.msra.mxu0 0.0
  %3408 = vmatprep.subr.mxu0 0.0
  %3409 = vmatpush1.msra.mxu0 0.0
  %3410 = vmatprep.subr.mxu0 0.0
  %3411 = vmatpush1.msra.mxu0 0.0
  %3412 = vmatprep.subr.mxu0 0.0
  %3413 = vmatpush1.msra.mxu0 0.0
  %3414 = vmatprep.subr.mxu0 0.0
  %3415 = vmatpush1.msra.mxu0 0.0
  %3416 = vmatprep.subr.mxu0 0.0
  %3417 = vmatpush1.msra.mxu0 0.0
  %3418 = vmatprep.mubr.f32.mxu0 0.0
  %3419 = vmatmul.mubr.f32.gmra.mrb[0].mxu0 %v264
  %v3420 = vpop.f32.mrb[0].mxu0
  %v3421 = vadd.f32 %v3352, %v3420
  %v3422 = vpop.f32.mrb[0].mxu0
  %3423 = vmatprep.mubr.f32.mxu0 0.0
  %3424 = vmatmul.mubr.f32.gmra.mrb[0].mxu0 %v267
  %v3425 = vpop.f32.mrb[0].mxu0
  %v3426 = vadd.f32 %v3352, %v3425
  %v3427 = vpop.f32.mrb[0].mxu0
  %3428 = vmatprep.mubr.f32.mxu0 0.0
  %3429 = vmatmul.mubr.f32.gmra.mrb[0].mxu0 %v270
  %v3430 = vpop.f32.mrb[0].mxu0
  %v3431 = vadd.f32 %v3352, %v3430
  %v3432 = vpop.f32.mrb[0].mxu0
  %3433 = vmatprep.mubr.f32.mxu0 0.0
  %3434 = vmatmul.mubr.f32.gmra.mrb[0].mxu0 %v273
  %v3435 = vpop.f32.mrb[0].mxu0
  %v3436 = vadd.f32 %v3352, %v3435
  %v3437 = vpop.f32.mrb[0].mxu0
  %3438 = vmatprep.mubr.f32.mxu0 0.0
  %3439 = vmatmul.mubr.f32.gmra.mrb[0].mxu0 %v276
  %v3440 = vpop.f32.mrb[0].mxu0
  %v3441 = vadd.f32 %v3352, %v3440
  %v3442 = vpop.f32.mrb[0].mxu0
  %3443 = vmatprep.mubr.f32.mxu0 0.0
  %3444 = vmatmul.mubr.f32.gmra.mrb[0].mxu0 %v279
  %v3445 = vpop.f32.mrb[0].mxu0
  %v3446 = vadd.f32 %v3352, %v3445
  %v3447 = vpop.f32.mrb[0].mxu0
  %3448 = vmatprep.mubr.f32.mxu0 0.0
  %3449 = vmatmul.mubr.f32.gmra.mrb[0].mxu0 %v282
  %v3450 = vpop.f32.mrb[0].mxu0
  %v3451 = vadd.f32 %v3352, %v3450
  %v3452 = vpop.f32.mrb[0].mxu0
  %3453 = vmatprep.mubr.f32.mxu0 0.0
  %3454 = vmatmul.mubr.f32.gmra.mrb[0].mxu0 %v285
  %v3455 = vpop.f32.mrb[0].mxu0
  %v3456 = vadd.f32 %v3352, %v3455
  %v3457 = vpop.f32.mrb[0].mxu0
  %3458 = vmatprep.mubr.f32.mxu0 0.0
  %3459 = vmatmul.mubr.f32.gmra.mrb[0].mxu0 %v288
  %v3460 = vpop.f32.mrb[0].mxu0
  %v3461 = vadd.f32 %v3352, %v3460
  %v3462 = vpop.f32.mrb[0].mxu0
  %3463 = vmatprep.mubr.f32.mxu0 0.0
  %3464 = vmatmul.mubr.f32.gmra.mrb[0].mxu0 %v291
  %v3465 = vpop.f32.mrb[0].mxu0
  %v3466 = vadd.f32 %v3352, %v3465
  %v3467 = vpop.f32.mrb[0].mxu0
  %3468 = vdwg.mxu0
  %s3469 = scalar_lea.vmem %s7, 192
  %v3470 = vld [vmem:[%s3469] sm:$0xff]
  %v3471 = vld [vmem:[%s3469 + $0x8] sm:$0xff]
  %v3472 = vld [vmem:[%s3469 + $0x10] sm:$0xff]
  %v3473 = vld [vmem:[%s3469 + $0x18] sm:$0xff]
  %v3474 = vld [vmem:[%s3469 + $0x20] sm:$0xff]
  %v3475 = vld [vmem:[%s3469 + $0x28] sm:$0xff]
  %v3476 = vld [vmem:[%s3469 + $0x30] sm:$0xff]
  %v3477 = vld [vmem:[%s3469 + $0x38] sm:$0xff]
  %s3478 = scalar_lea.vmem %s8, 3
  %v3479 = vld [vmem:[%s3478] sm:$0x1]
  %v3481 = vlaneseq
  %v3482 = vshrl.u32 %v3481, 7
  %v3483 = vsub.s32 0, %v3482
  %v3484 = vrot.slane %v3479, %v3483
  %3486 = vmatprep.subr.mxu0 0.0
  %3487 = vmatpush1.msra.mxu0 %v3470
  %3488 = vmatprep.subr.mxu0 0.0
  %3489 = vmatpush1.msra.mxu0 %v3471
  %3490 = vmatprep.subr.mxu0 0.0
  %3491 = vmatpush1.msra.mxu0 %v3472
  %3492 = vmatprep.subr.mxu0 0.0
  %3493 = vmatpush1.msra.mxu0 %v3473
  %3494 = vmatprep.subr.mxu0 0.0
  %3495 = vmatpush1.msra.mxu0 %v3474
  %3496 = vmatprep.subr.mxu0 0.0
  %3497 = vmatpush1.msra.mxu0 %v3475
  %3498 = vmatprep.subr.mxu0 0.0
  %3499 = vmatpush1.msra.mxu0 %v3476
  %3500 = vmatprep.subr.mxu0 0.0
  %3501 = vmatpush1.msra.mxu0 %v3477
  %3502 = vmatprep.subr.mxu0 0.0
  %3503 = vmatpush1.msra.mxu0 0.0
  %3504 = vmatprep.subr.mxu0 0.0
  %3505 = vmatpush1.msra.mxu0 0.0
  %3506 = vmatprep.subr.mxu0 0.0
  %3507 = vmatpush1.msra.mxu0 0.0
  %3508 = vmatprep.subr.mxu0 0.0
  %3509 = vmatpush1.msra.mxu0 0.0
  %3510 = vmatprep.subr.mxu0 0.0
  %3511 = vmatpush1.msra.mxu0 0.0
  %3512 = vmatprep.subr.mxu0 0.0
  %3513 = vmatpush1.msra.mxu0 0.0
  %3514 = vmatprep.subr.mxu0 0.0
  %3515 = vmatpush1.msra.mxu0 0.0
  %3516 = vmatprep.subr.mxu0 0.0
  %3517 = vmatpush1.msra.mxu0 0.0
  %3518 = vmatprep.subr.mxu0 0.0
  %3519 = vmatpush1.msra.mxu0 0.0
  %3520 = vmatprep.subr.mxu0 0.0
  %3521 = vmatpush1.msra.mxu0 0.0
  %3522 = vmatprep.subr.mxu0 0.0
  %3523 = vmatpush1.msra.mxu0 0.0
  %3524 = vmatprep.subr.mxu0 0.0
  %3525 = vmatpush1.msra.mxu0 0.0
  %3526 = vmatprep.subr.mxu0 0.0
  %3527 = vmatpush1.msra.mxu0 0.0
  %3528 = vmatprep.subr.mxu0 0.0
  %3529 = vmatpush1.msra.mxu0 0.0
  %3530 = vmatprep.subr.mxu0 0.0
  %3531 = vmatpush1.msra.mxu0 0.0
  %3532 = vmatprep.subr.mxu0 0.0
  %3533 = vmatpush1.msra.mxu0 0.0
  %3534 = vmatprep.subr.mxu0 0.0
  %3535 = vmatpush1.msra.mxu0 0.0
  %3536 = vmatprep.subr.mxu0 0.0
  %3537 = vmatpush1.msra.mxu0 0.0
  %3538 = vmatprep.subr.mxu0 0.0
  %3539 = vmatpush1.msra.mxu0 0.0
  %3540 = vmatprep.subr.mxu0 0.0
  %3541 = vmatpush1.msra.mxu0 0.0
  %3542 = vmatprep.subr.mxu0 0.0
  %3543 = vmatpush1.msra.mxu0 0.0
  %3544 = vmatprep.subr.mxu0 0.0
  %3545 = vmatpush1.msra.mxu0 0.0
  %3546 = vmatprep.subr.mxu0 0.0
  %3547 = vmatpush1.msra.mxu0 0.0
  %3548 = vmatprep.subr.mxu0 0.0
  %3549 = vmatpush1.msra.mxu0 0.0
  %3550 = vmatprep.mubr.f32.mxu0 0.0
  %3551 = vmatmul.mubr.f32.gmra.mrb[0].mxu0 %v264
  %v3552 = vpop.f32.mrb[0].mxu0
  %v3553 = vadd.f32 %v3484, %v3552
  %v3554 = vpop.f32.mrb[0].mxu0
  %3555 = vmatprep.mubr.f32.mxu0 0.0
  %3556 = vmatmul.mubr.f32.gmra.mrb[0].mxu0 %v267
  %v3557 = vpop.f32.mrb[0].mxu0
  %v3558 = vadd.f32 %v3484, %v3557
  %v3559 = vpop.f32.mrb[0].mxu0
  %3560 = vmatprep.mubr.f32.mxu0 0.0
  %3561 = vmatmul.mubr.f32.gmra.mrb[0].mxu0 %v270
  %v3562 = vpop.f32.mrb[0].mxu0
  %v3563 = vadd.f32 %v3484, %v3562
  %v3564 = vpop.f32.mrb[0].mxu0
  %3565 = vmatprep.mubr.f32.mxu0 0.0
  %3566 = vmatmul.mubr.f32.gmra.mrb[0].mxu0 %v273
  %v3567 = vpop.f32.mrb[0].mxu0
  %v3568 = vadd.f32 %v3484, %v3567
  %v3569 = vpop.f32.mrb[0].mxu0
  %3570 = vmatprep.mubr.f32.mxu0 0.0
  %3571 = vmatmul.mubr.f32.gmra.mrb[0].mxu0 %v276
  %v3572 = vpop.f32.mrb[0].mxu0
  %v3573 = vadd.f32 %v3484, %v3572
  %v3574 = vpop.f32.mrb[0].mxu0
  %3575 = vmatprep.mubr.f32.mxu0 0.0
  %3576 = vmatmul.mubr.f32.gmra.mrb[0].mxu0 %v279
  %v3577 = vpop.f32.mrb[0].mxu0
  %v3578 = vadd.f32 %v3484, %v3577
  %v3579 = vpop.f32.mrb[0].mxu0
  %3580 = vmatprep.mubr.f32.mxu0 0.0
  %3581 = vmatmul.mubr.f32.gmra.mrb[0].mxu0 %v282
  %v3582 = vpop.f32.mrb[0].mxu0
  %v3583 = vadd.f32 %v3484, %v3582
  %v3584 = vpop.f32.mrb[0].mxu0
  %3585 = vmatprep.mubr.f32.mxu0 0.0
  %3586 = vmatmul.mubr.f32.gmra.mrb[0].mxu0 %v285
  %v3587 = vpop.f32.mrb[0].mxu0
  %v3588 = vadd.f32 %v3484, %v3587
  %v3589 = vpop.f32.mrb[0].mxu0
  %3590 = vmatprep.mubr.f32.mxu0 0.0
  %3591 = vmatmul.mubr.f32.gmra.mrb[0].mxu0 %v288
  %v3592 = vpop.f32.mrb[0].mxu0
  %v3593 = vadd.f32 %v3484, %v3592
  %v3594 = vpop.f32.mrb[0].mxu0
  %3595 = vmatprep.mubr.f32.mxu0 0.0
  %3596 = vmatmul.mubr.f32.gmra.mrb[0].mxu0 %v291
  %v3597 = vpop.f32.mrb[0].mxu0
  %v3598 = vadd.f32 %v3484, %v3597
  %v3599 = vpop.f32.mrb[0].mxu0
  %3600 = vdwg.mxu0
  %v3602 = vsel %vm668, %v3289, 0
  %v3605 = vsel %vm668, %v3294, 0
  %v3608 = vsel %vm668, %v3299, 0
  %v3611 = vsel %vm668, %v3304, 0
  %v3614 = vsel %vm668, %v3309, 0
  %v3617 = vsel %vm668, %v3314, 0
  %v3620 = vsel %vm668, %v3319, 0
  %v3623 = vsel %vm668, %v3324, 0
  %v3626 = vsel %vm668, %v3329, 0
  %v3629 = vsel %vm668, %v3334, 0
  %v3632 = vsel %vm668, %v3421, 0
  %v3635 = vsel %vm668, %v3426, 0
  %v3638 = vsel %vm668, %v3431, 0
  %v3641 = vsel %vm668, %v3436, 0
  %v3644 = vsel %vm668, %v3441, 0
  %v3647 = vsel %vm668, %v3446, 0
  %v3650 = vsel %vm668, %v3451, 0
  %v3653 = vsel %vm668, %v3456, 0
  %v3656 = vsel %vm668, %v3461, 0
  %v3659 = vsel %vm668, %v3466, 0
  %3661 = vmatprep.subr.mxu0 0.0
  %3662 = vmatpush1.xpose.msra.mxu0 %v3632
  %3663 = vmatprep.subr.mxu0 0.0
  %3664 = vmatpush1.xpose.msra.mxu0 %v3635
  %3665 = vmatprep.subr.mxu0 0.0
  %3666 = vmatpush1.xpose.msra.mxu0 %v3638
  %3667 = vmatprep.subr.mxu0 0.0
  %3668 = vmatpush1.xpose.msra.mxu0 %v3641
  %3669 = vmatprep.subr.mxu0 0.0
  %3670 = vmatpush1.xpose.msra.mxu0 %v3644
  %3671 = vmatprep.subr.mxu0 0.0
  %3672 = vmatpush1.xpose.msra.mxu0 %v3647
  %3673 = vmatprep.subr.mxu0 0.0
  %3674 = vmatpush1.xpose.msra.mxu0 %v3650
  %3675 = vmatprep.subr.mxu0 0.0
  %3676 = vmatpush1.xpose.msra.mxu0 %v3653
  %3677 = vmatprep.subr.mxu0 0.0
  %3678 = vmatpush1.xpose.msra.mxu0 %v3656
  %3679 = vmatprep.subr.mxu0 0.0
  %3680 = vmatpush1.xpose.msra.mxu0 %v3659
  %3681 = vmatprep.subr.mxu0 0.0
  %3682 = vmatpush1.xpose.msra.mxu0 0.0
  %3683 = vmatprep.subr.mxu0 0.0
  %3684 = vmatpush1.xpose.msra.mxu0 0.0
  %3685 = vmatprep.subr.mxu0 0.0
  %3686 = vmatpush1.xpose.msra.mxu0 0.0
  %3687 = vmatprep.subr.mxu0 0.0
  %3688 = vmatpush1.xpose.msra.mxu0 0.0
  %3689 = vmatprep.subr.mxu0 0.0
  %3690 = vmatpush1.xpose.msra.mxu0 0.0
  %3691 = vmatprep.subr.mxu0 0.0
  %3692 = vmatpush1.xpose.msra.mxu0 0.0
  %3693 = vmatprep.subr.mxu0 0.0
  %3694 = vmatpush1.xpose.msra.mxu0 0.0
  %3695 = vmatprep.subr.mxu0 0.0
  %3696 = vmatpush1.xpose.msra.mxu0 0.0
  %3697 = vmatprep.subr.mxu0 0.0
  %3698 = vmatpush1.xpose.msra.mxu0 0.0
  %3699 = vmatprep.subr.mxu0 0.0
  %3700 = vmatpush1.xpose.msra.mxu0 0.0
  %3701 = vmatprep.subr.mxu0 0.0
  %3702 = vmatpush1.xpose.msra.mxu0 0.0
  %3703 = vmatprep.subr.mxu0 0.0
  %3704 = vmatpush1.xpose.msra.mxu0 0.0
  %3705 = vmatprep.subr.mxu0 0.0
  %3706 = vmatpush1.xpose.msra.mxu0 0.0
  %3707 = vmatprep.subr.mxu0 0.0
  %3708 = vmatpush1.xpose.msra.mxu0 0.0
  %3709 = vmatprep.subr.mxu0 0.0
  %3710 = vmatpush1.xpose.msra.mxu0 0.0
  %3711 = vmatprep.subr.mxu0 0.0
  %3712 = vmatpush1.xpose.msra.mxu0 0.0
  %3713 = vmatprep.subr.mxu0 0.0
  %3714 = vmatpush1.xpose.msra.mxu0 0.0
  %3715 = vmatprep.subr.mxu0 0.0
  %3716 = vmatpush1.xpose.msra.mxu0 0.0
  %3717 = vmatprep.subr.mxu0 0.0
  %3718 = vmatpush1.xpose.msra.mxu0 0.0
  %3719 = vmatprep.subr.mxu0 0.0
  %3720 = vmatpush1.xpose.msra.mxu0 0.0
  %3721 = vmatprep.subr.mxu0 0.0
  %3722 = vmatpush1.xpose.msra.mxu0 0.0
  %3723 = vmatprep.subr.mxu0 0.0
  %3724 = vmatpush1.xpose.msra.mxu0 0.0
  %3725 = vmatprep.mubr.f32.mxu0 0.0
  %3726 = vmatmul.mubr.f32.gmra.mrb[0].mxu0 %v3602
  %v3727 = vpop.f32.mrb[0].mxu0
  %v3728 = vadd.f32 %v81, %v3727
  %v3729 = vpop.f32.mrb[0].mxu0
  %3730 = vmatprep.mubr.f32.mxu0 0.0
  %3731 = vmatmul.mubr.f32.gmra.mrb[0].mxu0 %v3605
  %v3732 = vpop.f32.mrb[0].mxu0
  %v3733 = vadd.f32 %v81, %v3732
  %v3734 = vpop.f32.mrb[0].mxu0
  %3735 = vmatprep.mubr.f32.mxu0 0.0
  %3736 = vmatmul.mubr.f32.gmra.mrb[0].mxu0 %v3608
  %v3737 = vpop.f32.mrb[0].mxu0
  %v3738 = vadd.f32 %v81, %v3737
  %v3739 = vpop.f32.mrb[0].mxu0
  %3740 = vmatprep.mubr.f32.mxu0 0.0
  %3741 = vmatmul.mubr.f32.gmra.mrb[0].mxu0 %v3611
  %v3742 = vpop.f32.mrb[0].mxu0
  %v3743 = vadd.f32 %v81, %v3742
  %v3744 = vpop.f32.mrb[0].mxu0
  %3745 = vmatprep.mubr.f32.mxu0 0.0
  %3746 = vmatmul.mubr.f32.gmra.mrb[0].mxu0 %v3614
  %v3747 = vpop.f32.mrb[0].mxu0
  %v3748 = vadd.f32 %v81, %v3747
  %v3749 = vpop.f32.mrb[0].mxu0
  %3750 = vmatprep.mubr.f32.mxu0 0.0
  %3751 = vmatmul.mubr.f32.gmra.mrb[0].mxu0 %v3617
  %v3752 = vpop.f32.mrb[0].mxu0
  %v3753 = vadd.f32 %v81, %v3752
  %v3754 = vpop.f32.mrb[0].mxu0
  %3755 = vmatprep.mubr.f32.mxu0 0.0
  %3756 = vmatmul.mubr.f32.gmra.mrb[0].mxu0 %v3620
  %v3757 = vpop.f32.mrb[0].mxu0
  %v3758 = vadd.f32 %v81, %v3757
  %v3759 = vpop.f32.mrb[0].mxu0
  %3760 = vmatprep.mubr.f32.mxu0 0.0
  %3761 = vmatmul.mubr.f32.gmra.mrb[0].mxu0 %v3623
  %v3762 = vpop.f32.mrb[0].mxu0
  %v3763 = vadd.f32 %v81, %v3762
  %v3764 = vpop.f32.mrb[0].mxu0
  %3765 = vmatprep.mubr.f32.mxu0 0.0
  %3766 = vmatmul.mubr.f32.gmra.mrb[0].mxu0 %v3626
  %v3767 = vpop.f32.mrb[0].mxu0
  %v3768 = vadd.f32 %v81, %v3767
  %v3769 = vpop.f32.mrb[0].mxu0
  %3770 = vmatprep.mubr.f32.mxu0 0.0
  %3771 = vmatmul.mubr.f32.gmra.mrb[0].mxu0 %v3629
  %v3772 = vpop.f32.mrb[0].mxu0
  %v3773 = vadd.f32 %v81, %v3772
  %v3774 = vpop.f32.mrb[0].mxu0
  %3775 = vdwg.mxu0
  %v3776 = vsel %vm844, %v3728, -inf
  %3777 = vmax.xlane.f32.xlu0 %v3776
  %v3778 = vpop.xlane.xlu0 %3777
  %v3779 = vsel %vm844, %v3733, -inf
  %3780 = vmax.xlane.f32.xlu0 %v3779
  %v3781 = vpop.xlane.xlu0 %3780
  %v3782 = vsel %vm844, %v3738, -inf
  %3783 = vmax.xlane.f32.xlu0 %v3782
  %v3784 = vpop.xlane.xlu0 %3783
  %v3785 = vsel %vm844, %v3743, -inf
  %3786 = vmax.xlane.f32.xlu0 %v3785
  %v3787 = vpop.xlane.xlu0 %3786
  %v3788 = vsel %vm844, %v3748, -inf
  %3789 = vmax.xlane.f32.xlu0 %v3788
  %v3790 = vpop.xlane.xlu0 %3789
  %v3791 = vsel %vm844, %v3753, -inf
  %3792 = vmax.xlane.f32.xlu0 %v3791
  %v3793 = vpop.xlane.xlu0 %3792
  %v3794 = vsel %vm844, %v3758, -inf
  %3795 = vmax.xlane.f32.xlu0 %v3794
  %v3796 = vpop.xlane.xlu0 %3795
  %v3797 = vsel %vm844, %v3763, -inf
  %3798 = vmax.xlane.f32.xlu0 %v3797
  %v3799 = vpop.xlane.xlu0 %3798
  %v3800 = vsel %vm844, %v3768, -inf
  %3801 = vmax.xlane.f32.xlu0 %v3800
  %v3802 = vpop.xlane.xlu0 %3801
  %v3803 = vsel %vm844, %v3773, -inf
  %3804 = vmax.xlane.f32.xlu0 %v3803
  %v3805 = vpop.xlane.xlu0 %3804
  %v3806 = vsub.f32 %v3728, %v3778
  %v3807 = vsub.f32 %v3733, %v3781
  %v3808 = vsub.f32 %v3738, %v3784
  %v3809 = vsub.f32 %v3743, %v3787
  %v3810 = vsub.f32 %v3748, %v3790
  %v3811 = vsub.f32 %v3753, %v3793
  %v3812 = vsub.f32 %v3758, %v3796
  %v3813 = vsub.f32 %v3763, %v3799
  %v3814 = vsub.f32 %v3768, %v3802
  %v3815 = vsub.f32 %v3773, %v3805
  %v3816 = vmul.f32 %v3806, 1.442695
  %v3817 = vpow.pop %v3816
  %v3818 = vmul.f32 %v3807, 1.442695
  %v3819 = vpow.pop %v3818
  %v3820 = vmul.f32 %v3808, 1.442695
  %v3821 = vpow.pop %v3820
  %v3822 = vmul.f32 %v3809, 1.442695
  %v3823 = vpow.pop %v3822
  %v3824 = vmul.f32 %v3810, 1.442695
  %v3825 = vpow.pop %v3824
  %v3826 = vmul.f32 %v3811, 1.442695
  %v3827 = vpow.pop %v3826
  %v3828 = vmul.f32 %v3812, 1.442695
  %v3829 = vpow.pop %v3828
  %v3830 = vmul.f32 %v3813, 1.442695
  %v3831 = vpow.pop %v3830
  %v3832 = vmul.f32 %v3814, 1.442695
  %v3833 = vpow.pop %v3832
  %v3834 = vmul.f32 %v3815, 1.442695
  %v3835 = vpow.pop %v3834
  %v3836 = vsel %vm844, %v3817, 0.0
  %3837 = vadd.xlane.f32.xlu0 %v3836
  %v3838 = vpop.xlane.xlu0 %3837
  %v3839 = vsel %vm844, %v3819, 0.0
  %3840 = vadd.xlane.f32.xlu0 %v3839
  %v3841 = vpop.xlane.xlu0 %3840
  %v3842 = vsel %vm844, %v3821, 0.0
  %3843 = vadd.xlane.f32.xlu0 %v3842
  %v3844 = vpop.xlane.xlu0 %3843
  %v3845 = vsel %vm844, %v3823, 0.0
  %3846 = vadd.xlane.f32.xlu0 %v3845
  %v3847 = vpop.xlane.xlu0 %3846
  %v3848 = vsel %vm844, %v3825, 0.0
  %3849 = vadd.xlane.f32.xlu0 %v3848
  %v3850 = vpop.xlane.xlu0 %3849
  %v3851 = vsel %vm844, %v3827, 0.0
  %3852 = vadd.xlane.f32.xlu0 %v3851
  %v3853 = vpop.xlane.xlu0 %3852
  %v3854 = vsel %vm844, %v3829, 0.0
  %3855 = vadd.xlane.f32.xlu0 %v3854
  %v3856 = vpop.xlane.xlu0 %3855
  %v3857 = vsel %vm844, %v3831, 0.0
  %3858 = vadd.xlane.f32.xlu0 %v3857
  %v3859 = vpop.xlane.xlu0 %3858
  %v3860 = vsel %vm844, %v3833, 0.0
  %3861 = vadd.xlane.f32.xlu0 %v3860
  %v3862 = vpop.xlane.xlu0 %3861
  %v3863 = vsel %vm844, %v3835, 0.0
  %3864 = vadd.xlane.f32.xlu0 %v3863
  %v3865 = vpop.xlane.xlu0 %3864
  %v3866 = vrcp.pop %v3838
  %v3867 = vrcp.pop %v3841
  %v3868 = vrcp.pop %v3844
  %v3869 = vrcp.pop %v3847
  %v3870 = vrcp.pop %v3850
  %v3871 = vrcp.pop %v3853
  %v3872 = vrcp.pop %v3856
  %v3873 = vrcp.pop %v3859
  %v3874 = vrcp.pop %v3862
  %v3875 = vrcp.pop %v3865
  %v3876 = vmul.f32 %v3817, %v3866
  %v3877 = vmul.f32 %v3819, %v3867
  %v3878 = vmul.f32 %v3821, %v3868
  %v3879 = vmul.f32 %v3823, %v3869
  %v3880 = vmul.f32 %v3825, %v3870
  %v3881 = vmul.f32 %v3827, %v3871
  %v3882 = vmul.f32 %v3829, %v3872
  %v3883 = vmul.f32 %v3831, %v3873
  %v3884 = vmul.f32 %v3833, %v3874
  %v3885 = vmul.f32 %v3835, %v3875
  %v3887 = vsel %vm844, %v3876, 0
  %v3890 = vsel %vm844, %v3877, 0
  %v3893 = vsel %vm844, %v3878, 0
  %v3896 = vsel %vm844, %v3879, 0
  %v3899 = vsel %vm844, %v3880, 0
  %v3902 = vsel %vm844, %v3881, 0
  %v3905 = vsel %vm844, %v3882, 0
  %v3908 = vsel %vm844, %v3883, 0
  %v3911 = vsel %vm844, %v3884, 0
  %v3914 = vsel %vm844, %v3885, 0
  %3916 = vmatprep.subr.mxu0 0.0
  %3917 = vmatpush1.msra.mxu0 %v3553
  %3918 = vmatprep.subr.mxu0 0.0
  %3919 = vmatpush1.msra.mxu0 %v3558
  %3920 = vmatprep.subr.mxu0 0.0
  %3921 = vmatpush1.msra.mxu0 %v3563
  %3922 = vmatprep.subr.mxu0 0.0
  %3923 = vmatpush1.msra.mxu0 %v3568
  %3924 = vmatprep.subr.mxu0 0.0
  %3925 = vmatpush1.msra.mxu0 %v3573
  %3926 = vmatprep.subr.mxu0 0.0
  %3927 = vmatpush1.msra.mxu0 %v3578
  %3928 = vmatprep.subr.mxu0 0.0
  %3929 = vmatpush1.msra.mxu0 %v3583
  %3930 = vmatprep.subr.mxu0 0.0
  %3931 = vmatpush1.msra.mxu0 %v3588
  %3932 = vmatprep.subr.mxu0 0.0
  %3933 = vmatpush1.msra.mxu0 %v3593
  %3934 = vmatprep.subr.mxu0 0.0
  %3935 = vmatpush1.msra.mxu0 %v3598
  %3936 = vmatprep.subr.mxu0 0.0
  %3937 = vmatpush1.msra.mxu0 0.0
  %3938 = vmatprep.subr.mxu0 0.0
  %3939 = vmatpush1.msra.mxu0 0.0
  %3940 = vmatprep.subr.mxu0 0.0
  %3941 = vmatpush1.msra.mxu0 0.0
  %3942 = vmatprep.subr.mxu0 0.0
  %3943 = vmatpush1.msra.mxu0 0.0
  %3944 = vmatprep.subr.mxu0 0.0
  %3945 = vmatpush1.msra.mxu0 0.0
  %3946 = vmatprep.subr.mxu0 0.0
  %3947 = vmatpush1.msra.mxu0 0.0
  %3948 = vmatprep.subr.mxu0 0.0
  %3949 = vmatpush1.msra.mxu0 0.0
  %3950 = vmatprep.subr.mxu0 0.0
  %3951 = vmatpush1.msra.mxu0 0.0
  %3952 = vmatprep.subr.mxu0 0.0
  %3953 = vmatpush1.msra.mxu0 0.0
  %3954 = vmatprep.subr.mxu0 0.0
  %3955 = vmatpush1.msra.mxu0 0.0
  %3956 = vmatprep.subr.mxu0 0.0
  %3957 = vmatpush1.msra.mxu0 0.0
  %3958 = vmatprep.subr.mxu0 0.0
  %3959 = vmatpush1.msra.mxu0 0.0
  %3960 = vmatprep.subr.mxu0 0.0
  %3961 = vmatpush1.msra.mxu0 0.0
  %3962 = vmatprep.subr.mxu0 0.0
  %3963 = vmatpush1.msra.mxu0 0.0
  %3964 = vmatprep.subr.mxu0 0.0
  %3965 = vmatpush1.msra.mxu0 0.0
  %3966 = vmatprep.subr.mxu0 0.0
  %3967 = vmatpush1.msra.mxu0 0.0
  %3968 = vmatprep.subr.mxu0 0.0
  %3969 = vmatpush1.msra.mxu0 0.0
  %3970 = vmatprep.subr.mxu0 0.0
  %3971 = vmatpush1.msra.mxu0 0.0
  %3972 = vmatprep.subr.mxu0 0.0
  %3973 = vmatpush1.msra.mxu0 0.0
  %3974 = vmatprep.subr.mxu0 0.0
  %3975 = vmatpush1.msra.mxu0 0.0
  %3976 = vmatprep.subr.mxu0 0.0
  %3977 = vmatpush1.msra.mxu0 0.0
  %3978 = vmatprep.subr.mxu0 0.0
  %3979 = vmatpush1.msra.mxu0 0.0
  %3980 = vmatprep.mubr.f32.mxu0 0.0
  %3981 = vmatmul.mubr.f32.gmra.mrb[0].mxu0 %v3887
  %v3982 = vpop.f32.mrb[0].mxu0
  %v3983 = vadd.f32 0.0, %v3982
  %v3984 = vpop.f32.mrb[0].mxu0
  %3985 = vmatprep.mubr.f32.mxu0 0.0
  %3986 = vmatmul.mubr.f32.gmra.mrb[0].mxu0 %v3890
  %v3987 = vpop.f32.mrb[0].mxu0
  %v3988 = vadd.f32 0.0, %v3987
  %v3989 = vpop.f32.mrb[0].mxu0
  %3990 = vmatprep.mubr.f32.mxu0 0.0
  %3991 = vmatmul.mubr.f32.gmra.mrb[0].mxu0 %v3893
  %v3992 = vpop.f32.mrb[0].mxu0
  %v3993 = vadd.f32 0.0, %v3992
  %v3994 = vpop.f32.mrb[0].mxu0
  %3995 = vmatprep.mubr.f32.mxu0 0.0
  %3996 = vmatmul.mubr.f32.gmra.mrb[0].mxu0 %v3896
  %v3997 = vpop.f32.mrb[0].mxu0
  %v3998 = vadd.f32 0.0, %v3997
  %v3999 = vpop.f32.mrb[0].mxu0
  %4000 = vmatprep.mubr.f32.mxu0 0.0
  %4001 = vmatmul.mubr.f32.gmra.mrb[0].mxu0 %v3899
  %v4002 = vpop.f32.mrb[0].mxu0
  %v4003 = vadd.f32 0.0, %v4002
  %v4004 = vpop.f32.mrb[0].mxu0
  %4005 = vmatprep.mubr.f32.mxu0 0.0
  %4006 = vmatmul.mubr.f32.gmra.mrb[0].mxu0 %v3902
  %v4007 = vpop.f32.mrb[0].mxu0
  %v4008 = vadd.f32 0.0, %v4007
  %v4009 = vpop.f32.mrb[0].mxu0
  %4010 = vmatprep.mubr.f32.mxu0 0.0
  %4011 = vmatmul.mubr.f32.gmra.mrb[0].mxu0 %v3905
  %v4012 = vpop.f32.mrb[0].mxu0
  %v4013 = vadd.f32 0.0, %v4012
  %v4014 = vpop.f32.mrb[0].mxu0
  %4015 = vmatprep.mubr.f32.mxu0 0.0
  %4016 = vmatmul.mubr.f32.gmra.mrb[0].mxu0 %v3908
  %v4017 = vpop.f32.mrb[0].mxu0
  %v4018 = vadd.f32 0.0, %v4017
  %v4019 = vpop.f32.mrb[0].mxu0
  %4020 = vmatprep.mubr.f32.mxu0 0.0
  %4021 = vmatmul.mubr.f32.gmra.mrb[0].mxu0 %v3911
  %v4022 = vpop.f32.mrb[0].mxu0
  %v4023 = vadd.f32 0.0, %v4022
  %v4024 = vpop.f32.mrb[0].mxu0
  %4025 = vmatprep.mubr.f32.mxu0 0.0
  %4026 = vmatmul.mubr.f32.gmra.mrb[0].mxu0 %v3914
  %v4027 = vpop.f32.mrb[0].mxu0
  %v4028 = vadd.f32 0.0, %v4027
  %v4029 = vpop.f32.mrb[0].mxu0
  %4030 = vdwg.mxu0
  %s4031 = scalar_lea.vmem %s9, 48
  %v4032 = vld [vmem:[%s4031] sm:$0xff]
  %v4033 = vld [vmem:[%s4031 + $0x8] sm:$0xff]
  %v4035 = vsel %vm668, %v3983, 0
  %v4038 = vsel %vm668, %v3988, 0
  %v4041 = vsel %vm668, %v3993, 0
  %v4044 = vsel %vm668, %v3998, 0
  %v4047 = vsel %vm668, %v4003, 0
  %v4050 = vsel %vm668, %v4008, 0
  %v4053 = vsel %vm668, %v4013, 0
  %v4056 = vsel %vm668, %v4018, 0
  %v4059 = vsel %vm668, %v4023, 0
  %v4062 = vsel %vm668, %v4028, 0
  %4064 = vmatprep.subr.mxu0 0.0
  %4065 = vmatpush1.msra.mxu0 %v4032
  %4066 = vmatprep.subr.mxu0 0.0
  %4067 = vmatpush1.msra.mxu0 %v4033
  %4068 = vmatprep.subr.mxu0 0.0
  %4069 = vmatpush1.msra.mxu0 0.0
  %4070 = vmatprep.subr.mxu0 0.0
  %4071 = vmatpush1.msra.mxu0 0.0
  %4072 = vmatprep.subr.mxu0 0.0
  %4073 = vmatpush1.msra.mxu0 0.0
  %4074 = vmatprep.subr.mxu0 0.0
  %4075 = vmatpush1.msra.mxu0 0.0
  %4076 = vmatprep.subr.mxu0 0.0
  %4077 = vmatpush1.msra.mxu0 0.0
  %4078 = vmatprep.subr.mxu0 0.0
  %4079 = vmatpush1.msra.mxu0 0.0
  %4080 = vmatprep.subr.mxu0 0.0
  %4081 = vmatpush1.msra.mxu0 0.0
  %4082 = vmatprep.subr.mxu0 0.0
  %4083 = vmatpush1.msra.mxu0 0.0
  %4084 = vmatprep.subr.mxu0 0.0
  %4085 = vmatpush1.msra.mxu0 0.0
  %4086 = vmatprep.subr.mxu0 0.0
  %4087 = vmatpush1.msra.mxu0 0.0
  %4088 = vmatprep.subr.mxu0 0.0
  %4089 = vmatpush1.msra.mxu0 0.0
  %4090 = vmatprep.subr.mxu0 0.0
  %4091 = vmatpush1.msra.mxu0 0.0
  %4092 = vmatprep.subr.mxu0 0.0
  %4093 = vmatpush1.msra.mxu0 0.0
  %4094 = vmatprep.subr.mxu0 0.0
  %4095 = vmatpush1.msra.mxu0 0.0
  %4096 = vmatprep.subr.mxu0 0.0
  %4097 = vmatpush1.msra.mxu0 0.0
  %4098 = vmatprep.subr.mxu0 0.0
  %4099 = vmatpush1.msra.mxu0 0.0
  %4100 = vmatprep.subr.mxu0 0.0
  %4101 = vmatpush1.msra.mxu0 0.0
  %4102 = vmatprep.subr.mxu0 0.0
  %4103 = vmatpush1.msra.mxu0 0.0
  %4104 = vmatprep.subr.mxu0 0.0
  %4105 = vmatpush1.msra.mxu0 0.0
  %4106 = vmatprep.subr.mxu0 0.0
  %4107 = vmatpush1.msra.mxu0 0.0
  %4108 = vmatprep.subr.mxu0 0.0
  %4109 = vmatpush1.msra.mxu0 0.0
  %4110 = vmatprep.subr.mxu0 0.0
  %4111 = vmatpush1.msra.mxu0 0.0
  %4112 = vmatprep.subr.mxu0 0.0
  %4113 = vmatpush1.msra.mxu0 0.0
  %4114 = vmatprep.subr.mxu0 0.0
  %4115 = vmatpush1.msra.mxu0 0.0
  %4116 = vmatprep.subr.mxu0 0.0
  %4117 = vmatpush1.msra.mxu0 0.0
  %4118 = vmatprep.subr.mxu0 0.0
  %4119 = vmatpush1.msra.mxu0 0.0
  %4120 = vmatprep.subr.mxu0 0.0
  %4121 = vmatpush1.msra.mxu0 0.0
  %4122 = vmatprep.subr.mxu0 0.0
  %4123 = vmatpush1.msra.mxu0 0.0
  %4124 = vmatprep.subr.mxu0 0.0
  %4125 = vmatpush1.msra.mxu0 0.0
  %4126 = vmatprep.subr.mxu0 0.0
  %4127 = vmatpush1.msra.mxu0 0.0
  %4128 = vmatprep.mubr.f32.mxu0 0.0
  %4129 = vmatmul.mubr.f32.gmra.mrb[0].mxu0 %v4035
  %v4130 = vpop.f32.mrb[0].mxu0
  %v4131 = vadd.f32 0.0, %v4130
  %v4132 = vpop.f32.mrb[0].mxu0
  %4133 = vmatprep.mubr.f32.mxu0 0.0
  %4134 = vmatmul.mubr.f32.gmra.mrb[0].mxu0 %v4038
  %v4135 = vpop.f32.mrb[0].mxu0
  %v4136 = vadd.f32 0.0, %v4135
  %v4137 = vpop.f32.mrb[0].mxu0
  %4138 = vmatprep.mubr.f32.mxu0 0.0
  %4139 = vmatmul.mubr.f32.gmra.mrb[0].mxu0 %v4041
  %v4140 = vpop.f32.mrb[0].mxu0
  %v4141 = vadd.f32 0.0, %v4140
  %v4142 = vpop.f32.mrb[0].mxu0
  %4143 = vmatprep.mubr.f32.mxu0 0.0
  %4144 = vmatmul.mubr.f32.gmra.mrb[0].mxu0 %v4044
  %v4145 = vpop.f32.mrb[0].mxu0
  %v4146 = vadd.f32 0.0, %v4145
  %v4147 = vpop.f32.mrb[0].mxu0
  %4148 = vmatprep.mubr.f32.mxu0 0.0
  %4149 = vmatmul.mubr.f32.gmra.mrb[0].mxu0 %v4047
  %v4150 = vpop.f32.mrb[0].mxu0
  %v4151 = vadd.f32 0.0, %v4150
  %v4152 = vpop.f32.mrb[0].mxu0
  %4153 = vmatprep.mubr.f32.mxu0 0.0
  %4154 = vmatmul.mubr.f32.gmra.mrb[0].mxu0 %v4050
  %v4155 = vpop.f32.mrb[0].mxu0
  %v4156 = vadd.f32 0.0, %v4155
  %v4157 = vpop.f32.mrb[0].mxu0
  %4158 = vmatprep.mubr.f32.mxu0 0.0
  %4159 = vmatmul.mubr.f32.gmra.mrb[0].mxu0 %v4053
  %v4160 = vpop.f32.mrb[0].mxu0
  %v4161 = vadd.f32 0.0, %v4160
  %v4162 = vpop.f32.mrb[0].mxu0
  %4163 = vmatprep.mubr.f32.mxu0 0.0
  %4164 = vmatmul.mubr.f32.gmra.mrb[0].mxu0 %v4056
  %v4165 = vpop.f32.mrb[0].mxu0
  %v4166 = vadd.f32 0.0, %v4165
  %v4167 = vpop.f32.mrb[0].mxu0
  %4168 = vmatprep.mubr.f32.mxu0 0.0
  %4169 = vmatmul.mubr.f32.gmra.mrb[0].mxu0 %v4059
  %v4170 = vpop.f32.mrb[0].mxu0
  %v4171 = vadd.f32 0.0, %v4170
  %v4172 = vpop.f32.mrb[0].mxu0
  %4173 = vmatprep.mubr.f32.mxu0 0.0
  %4174 = vmatmul.mubr.f32.gmra.mrb[0].mxu0 %v4062
  %v4175 = vpop.f32.mrb[0].mxu0
  %v4176 = vadd.f32 0.0, %v4175
  %v4177 = vpop.f32.mrb[0].mxu0
  %4178 = vdwg.mxu0
  %v4179 = vadd.f32 %v3195, %v4131
  %v4180 = vadd.f32 %v3196, %v4136
  %v4181 = vadd.f32 %v3197, %v4141
  %v4182 = vadd.f32 %v3198, %v4146
  %v4183 = vadd.f32 %v3199, %v4151
  %v4184 = vadd.f32 %v3200, %v4156
  %v4185 = vadd.f32 %v3201, %v4161
  %v4186 = vadd.f32 %v3202, %v4166
  %v4187 = vadd.f32 %v3203, %v4171
  %v4188 = vadd.f32 %v3204, %v4176
  %v4189 = vadd.f32 %v68, %v4179
  %v4190 = vadd.f32 %v69, %v4180
  %v4191 = vadd.f32 %v70, %v4181
  %v4192 = vadd.f32 %v71, %v4182
  %v4193 = vadd.f32 %v72, %v4183
  %v4194 = vadd.f32 %v73, %v4184
  %v4195 = vadd.f32 %v74, %v4185
  %v4196 = vadd.f32 %v75, %v4186
  %v4197 = vadd.f32 %v76, %v4187
  %v4198 = vadd.f32 %v77, %v4188
  %v4199 = vld [vmem:[%s10] sm:$0x1]
  %v4201 = vlaneseq
  %v4202 = vshrl.u32 %v4201, 7
  %v4203 = vsub.s32 0, %v4202
  %v4204 = vrot.slane %v4199, %v4203
  %v4206 = vadd.f32 %v4189, %v4204
  %v4207 = vadd.f32 %v4190, %v4204
  %v4208 = vadd.f32 %v4191, %v4204
  %v4209 = vadd.f32 %v4192, %v4204
  %v4210 = vadd.f32 %v4193, %v4204
  %v4211 = vadd.f32 %v4194, %v4204
  %v4212 = vadd.f32 %v4195, %v4204
  %v4213 = vadd.f32 %v4196, %v4204
  %v4214 = vadd.f32 %v4197, %v4204
  %v4215 = vadd.f32 %v4198, %v4204
  %v4216 = vld [vmem:[%s11] sm:$0x1]
  %v4217 = vld [vmem:[%s12] sm:$0x1]
  %v4218 = vsel %vm84, %v4206, 0.0
  %4219 = vadd.xlane.f32.xlu0 %v4218
  %v4220 = vpop.xlane.xlu0 %4219
  %v4221 = vsel %vm84, %v4207, 0.0
  %4222 = vadd.xlane.f32.xlu0 %v4221
  %v4223 = vpop.xlane.xlu0 %4222
  %v4224 = vsel %vm84, %v4208, 0.0
  %4225 = vadd.xlane.f32.xlu0 %v4224
  %v4226 = vpop.xlane.xlu0 %4225
  %v4227 = vsel %vm84, %v4209, 0.0
  %4228 = vadd.xlane.f32.xlu0 %v4227
  %v4229 = vpop.xlane.xlu0 %4228
  %v4230 = vsel %vm84, %v4210, 0.0
  %4231 = vadd.xlane.f32.xlu0 %v4230
  %v4232 = vpop.xlane.xlu0 %4231
  %v4233 = vsel %vm84, %v4211, 0.0
  %4234 = vadd.xlane.f32.xlu0 %v4233
  %v4235 = vpop.xlane.xlu0 %4234
  %v4236 = vsel %vm84, %v4212, 0.0
  %4237 = vadd.xlane.f32.xlu0 %v4236
  %v4238 = vpop.xlane.xlu0 %4237
  %v4239 = vsel %vm84, %v4213, 0.0
  %4240 = vadd.xlane.f32.xlu0 %v4239
  %v4241 = vpop.xlane.xlu0 %4240
  %v4242 = vsel %vm84, %v4214, 0.0
  %4243 = vadd.xlane.f32.xlu0 %v4242
  %v4244 = vpop.xlane.xlu0 %4243
  %v4245 = vsel %vm84, %v4215, 0.0
  %4246 = vadd.xlane.f32.xlu0 %v4245
  %v4247 = vpop.xlane.xlu0 %4246
  %v4248 = vmul.f32 %v4220, %v115
  %v4249 = vmul.f32 %v4223, %v115
  %v4250 = vmul.f32 %v4226, %v115
  %v4251 = vmul.f32 %v4229, %v115
  %v4252 = vmul.f32 %v4232, %v115
  %v4253 = vmul.f32 %v4235, %v115
  %v4254 = vmul.f32 %v4238, %v115
  %v4255 = vmul.f32 %v4241, %v115
  %v4256 = vmul.f32 %v4244, %v115
  %v4257 = vmul.f32 %v4247, %v115
  %v4258 = vsub.f32 %v4206, %v4248
  %v4259 = vsub.f32 %v4207, %v4249
  %v4260 = vsub.f32 %v4208, %v4250
  %v4261 = vsub.f32 %v4209, %v4251
  %v4262 = vsub.f32 %v4210, %v4252
  %v4263 = vsub.f32 %v4211, %v4253
  %v4264 = vsub.f32 %v4212, %v4254
  %v4265 = vsub.f32 %v4213, %v4255
  %v4266 = vsub.f32 %v4214, %v4256
  %v4267 = vsub.f32 %v4215, %v4257
  %v4268 = vmul.f32 %v4258, %v4258
  %v4269 = vmul.f32 %v4259, %v4259
  %v4270 = vmul.f32 %v4260, %v4260
  %v4271 = vmul.f32 %v4261, %v4261
  %v4272 = vmul.f32 %v4262, %v4262
  %v4273 = vmul.f32 %v4263, %v4263
  %v4274 = vmul.f32 %v4264, %v4264
  %v4275 = vmul.f32 %v4265, %v4265
  %v4276 = vmul.f32 %v4266, %v4266
  %v4277 = vmul.f32 %v4267, %v4267
  %v4278 = vsel %vm84, %v4268, 0.0
  %4279 = vadd.xlane.f32.xlu0 %v4278
  %v4280 = vpop.xlane.xlu0 %4279
  %v4281 = vsel %vm84, %v4269, 0.0
  %4282 = vadd.xlane.f32.xlu0 %v4281
  %v4283 = vpop.xlane.xlu0 %4282
  %v4284 = vsel %vm84, %v4270, 0.0
  %4285 = vadd.xlane.f32.xlu0 %v4284
  %v4286 = vpop.xlane.xlu0 %4285
  %v4287 = vsel %vm84, %v4271, 0.0
  %4288 = vadd.xlane.f32.xlu0 %v4287
  %v4289 = vpop.xlane.xlu0 %4288
  %v4290 = vsel %vm84, %v4272, 0.0
  %4291 = vadd.xlane.f32.xlu0 %v4290
  %v4292 = vpop.xlane.xlu0 %4291
  %v4293 = vsel %vm84, %v4273, 0.0
  %4294 = vadd.xlane.f32.xlu0 %v4293
  %v4295 = vpop.xlane.xlu0 %4294
  %v4296 = vsel %vm84, %v4274, 0.0
  %4297 = vadd.xlane.f32.xlu0 %v4296
  %v4298 = vpop.xlane.xlu0 %4297
  %v4299 = vsel %vm84, %v4275, 0.0
  %4300 = vadd.xlane.f32.xlu0 %v4299
  %v4301 = vpop.xlane.xlu0 %4300
  %v4302 = vsel %vm84, %v4276, 0.0
  %4303 = vadd.xlane.f32.xlu0 %v4302
  %v4304 = vpop.xlane.xlu0 %4303
  %v4305 = vsel %vm84, %v4277, 0.0
  %4306 = vadd.xlane.f32.xlu0 %v4305
  %v4307 = vpop.xlane.xlu0 %4306
  %v4308 = vmul.f32 %v4280, %v115
  %v4309 = vmul.f32 %v4283, %v115
  %v4310 = vmul.f32 %v4286, %v115
  %v4311 = vmul.f32 %v4289, %v115
  %v4312 = vmul.f32 %v4292, %v115
  %v4313 = vmul.f32 %v4295, %v115
  %v4314 = vmul.f32 %v4298, %v115
  %v4315 = vmul.f32 %v4301, %v115
  %v4316 = vmul.f32 %v4304, %v115
  %v4317 = vmul.f32 %v4307, %v115
  %v4318 = vadd.f32 %v4308, 1e-05
  %v4319 = vadd.f32 %v4309, 1e-05
  %v4320 = vadd.f32 %v4310, 1e-05
  %v4321 = vadd.f32 %v4311, 1e-05
  %v4322 = vadd.f32 %v4312, 1e-05
  %v4323 = vadd.f32 %v4313, 1e-05
  %v4324 = vadd.f32 %v4314, 1e-05
  %v4325 = vadd.f32 %v4315, 1e-05
  %v4326 = vadd.f32 %v4316, 1e-05
  %v4327 = vadd.f32 %v4317, 1e-05
  %v4328 = vrsqrt.pop %v4318
  %v4329 = vrsqrt.pop %v4319
  %v4330 = vrsqrt.pop %v4320
  %v4331 = vrsqrt.pop %v4321
  %v4332 = vrsqrt.pop %v4322
  %v4333 = vrsqrt.pop %v4323
  %v4334 = vrsqrt.pop %v4324
  %v4335 = vrsqrt.pop %v4325
  %v4336 = vrsqrt.pop %v4326
  %v4337 = vrsqrt.pop %v4327
  %v4338 = vmul.f32 %v4258, %v4328
  %v4339 = vmul.f32 %v4259, %v4329
  %v4340 = vmul.f32 %v4260, %v4330
  %v4341 = vmul.f32 %v4261, %v4331
  %v4342 = vmul.f32 %v4262, %v4332
  %v4343 = vmul.f32 %v4263, %v4333
  %v4344 = vmul.f32 %v4264, %v4334
  %v4345 = vmul.f32 %v4265, %v4335
  %v4346 = vmul.f32 %v4266, %v4336
  %v4347 = vmul.f32 %v4267, %v4337
  %v4349 = vlaneseq
  %v4350 = vshrl.u32 %v4349, 7
  %v4351 = vsub.s32 0, %v4350
  %v4352 = vrot.slane %v4216, %v4351
  %v4354 = vmul.f32 %v4338, %v4352
  %v4355 = vmul.f32 %v4339, %v4352
  %v4356 = vmul.f32 %v4340, %v4352
  %v4357 = vmul.f32 %v4341, %v4352
  %v4358 = vmul.f32 %v4342, %v4352
  %v4359 = vmul.f32 %v4343, %v4352
  %v4360 = vmul.f32 %v4344, %v4352
  %v4361 = vmul.f32 %v4345, %v4352
  %v4362 = vmul.f32 %v4346, %v4352
  %v4363 = vmul.f32 %v4347, %v4352
  %v4365 = vlaneseq
  %v4366 = vshrl.u32 %v4365, 7
  %v4367 = vsub.s32 0, %v4366
  %v4368 = vrot.slane %v4217, %v4367
  %v4370 = vadd.f32 %v4354, %v4368
  %v4371 = vadd.f32 %v4355, %v4368
  %v4372 = vadd.f32 %v4356, %v4368
  %v4373 = vadd.f32 %v4357, %v4368
  %v4374 = vadd.f32 %v4358, %v4368
  %v4375 = vadd.f32 %v4359, %v4368
  %v4376 = vadd.f32 %v4360, %v4368
  %v4377 = vadd.f32 %v4361, %v4368
  %v4378 = vadd.f32 %v4362, %v4368
  %v4379 = vadd.f32 %v4363, %v4368
  %v4380 = vld [vmem:[%s13] sm:$0xff]
  %v4381 = vld [vmem:[%s13 + $0x8] sm:$0xff]
  %v4382 = vld [vmem:[%s13 + $0x10] sm:$0xff]
  %v4383 = vld [vmem:[%s13 + $0x18] sm:$0xff]
  %v4384 = vld [vmem:[%s13 + $0x20] sm:$0xff]
  %v4385 = vld [vmem:[%s13 + $0x28] sm:$0xff]
  %v4386 = vld [vmem:[%s13 + $0x30] sm:$0xff]
  %v4387 = vld [vmem:[%s13 + $0x38] sm:$0xff]
  %v4388 = vld [vmem:[%s13 + $0x40] sm:$0xff]
  %v4389 = vld [vmem:[%s13 + $0x48] sm:$0xff]
  %v4390 = vld [vmem:[%s13 + $0x50] sm:$0xff]
  %v4391 = vld [vmem:[%s13 + $0x58] sm:$0xff]
  %v4392 = vld [vmem:[%s13 + $0x60] sm:$0xff]
  %v4393 = vld [vmem:[%s13 + $0x68] sm:$0xff]
  %v4394 = vld [vmem:[%s13 + $0x70] sm:$0xff]
  %v4395 = vld [vmem:[%s13 + $0x78] sm:$0xff]
  %v4396 = vld [vmem:[%s14] sm:$0x3]
  %v4398 = vlaneseq
  %v4399 = vshrl.u32 %v4398, 7
  %v4400 = vsub.s32 0, %v4399
  %v4401 = vrot.slane %v4396, %v4400
  %v4402 = vlaneseq
  %v4403 = vshrl.u32 %v4402, 7
  %v4404 = vsub.s32 1, %v4403
  %v4405 = vrot.slane %v4396, %v4404
  %v4409 = vsel %vm84, %v4370, 0
  %v4412 = vsel %vm84, %v4371, 0
  %v4415 = vsel %vm84, %v4372, 0
  %v4418 = vsel %vm84, %v4373, 0
  %v4421 = vsel %vm84, %v4374, 0
  %v4424 = vsel %vm84, %v4375, 0
  %v4427 = vsel %vm84, %v4376, 0
  %v4430 = vsel %vm84, %v4377, 0
  %v4433 = vsel %vm84, %v4378, 0
  %v4436 = vsel %vm84, %v4379, 0
  %4438 = vmatprep.subr.mxu0 %v4381
  %4439 = vmatpush1.msra.mxu0 %v4380
  %4440 = vmatprep.subr.mxu0 %v4383
  %4441 = vmatpush1.msra.mxu0 %v4382
  %4442 = vmatprep.subr.mxu0 %v4385
  %4443 = vmatpush1.msra.mxu0 %v4384
  %4444 = vmatprep.subr.mxu0 %v4387
  %4445 = vmatpush1.msra.mxu0 %v4386
  %4446 = vmatprep.subr.mxu0 %v4389
  %4447 = vmatpush1.msra.mxu0 %v4388
  %4448 = vmatprep.subr.mxu0 %v4391
  %4449 = vmatpush1.msra.mxu0 %v4390
  %4450 = vmatprep.subr.mxu0 %v4393
  %4451 = vmatpush1.msra.mxu0 %v4392
  %4452 = vmatprep.subr.mxu0 %v4395
  %4453 = vmatpush1.msra.mxu0 %v4394
  %4454 = vmatprep.subr.mxu0 0.0
  %4455 = vmatpush1.msra.mxu0 0.0
  %4456 = vmatprep.subr.mxu0 0.0
  %4457 = vmatpush1.msra.mxu0 0.0
  %4458 = vmatprep.subr.mxu0 0.0
  %4459 = vmatpush1.msra.mxu0 0.0
  %4460 = vmatprep.subr.mxu0 0.0
  %4461 = vmatpush1.msra.mxu0 0.0
  %4462 = vmatprep.subr.mxu0 0.0
  %4463 = vmatpush1.msra.mxu0 0.0
  %4464 = vmatprep.subr.mxu0 0.0
  %4465 = vmatpush1.msra.mxu0 0.0
  %4466 = vmatprep.subr.mxu0 0.0
  %4467 = vmatpush1.msra.mxu0 0.0
  %4468 = vmatprep.subr.mxu0 0.0
  %4469 = vmatpush1.msra.mxu0 0.0
  %4470 = vmatprep.subr.mxu0 0.0
  %4471 = vmatpush1.msra.mxu0 0.0
  %4472 = vmatprep.subr.mxu0 0.0
  %4473 = vmatpush1.msra.mxu0 0.0
  %4474 = vmatprep.subr.mxu0 0.0
  %4475 = vmatpush1.msra.mxu0 0.0
  %4476 = vmatprep.subr.mxu0 0.0
  %4477 = vmatpush1.msra.mxu0 0.0
  %4478 = vmatprep.subr.mxu0 0.0
  %4479 = vmatpush1.msra.mxu0 0.0
  %4480 = vmatprep.subr.mxu0 0.0
  %4481 = vmatpush1.msra.mxu0 0.0
  %4482 = vmatprep.subr.mxu0 0.0
  %4483 = vmatpush1.msra.mxu0 0.0
  %4484 = vmatprep.subr.mxu0 0.0
  %4485 = vmatpush1.msra.mxu0 0.0
  %4486 = vmatprep.subr.mxu0 0.0
  %4487 = vmatpush1.msra.mxu0 0.0
  %4488 = vmatprep.subr.mxu0 0.0
  %4489 = vmatpush1.msra.mxu0 0.0
  %4490 = vmatprep.subr.mxu0 0.0
  %4491 = vmatpush1.msra.mxu0 0.0
  %4492 = vmatprep.subr.mxu0 0.0
  %4493 = vmatpush1.msra.mxu0 0.0
  %4494 = vmatprep.subr.mxu0 0.0
  %4495 = vmatpush1.msra.mxu0 0.0
  %4496 = vmatprep.subr.mxu0 0.0
  %4497 = vmatpush1.msra.mxu0 0.0
  %4498 = vmatprep.subr.mxu0 0.0
  %4499 = vmatpush1.msra.mxu0 0.0
  %4500 = vmatprep.subr.mxu0 0.0
  %4501 = vmatpush1.msra.mxu0 0.0
  %4502 = vmatprep.mubr.f32.mxu0 0.0
  %4503 = vmatmul.mubr.f32.gmra.mrb[0].mxu0 %v4409
  %v4504 = vpop.f32.mrb[0].mxu0
  %v4505 = vadd.f32 %v4401, %v4504
  %v4506 = vpop.f32.mrb[0].mxu0
  %v4507 = vadd.f32 %v4405, %v4506
  %4508 = vmatprep.mubr.f32.mxu0 0.0
  %4509 = vmatmul.mubr.f32.gmra.mrb[0].mxu0 %v4412
  %v4510 = vpop.f32.mrb[0].mxu0
  %v4511 = vadd.f32 %v4401, %v4510
  %v4512 = vpop.f32.mrb[0].mxu0
  %v4513 = vadd.f32 %v4405, %v4512
  %4514 = vmatprep.mubr.f32.mxu0 0.0
  %4515 = vmatmul.mubr.f32.gmra.mrb[0].mxu0 %v4415
  %v4516 = vpop.f32.mrb[0].mxu0
  %v4517 = vadd.f32 %v4401, %v4516
  %v4518 = vpop.f32.mrb[0].mxu0
  %v4519 = vadd.f32 %v4405, %v4518
  %4520 = vmatprep.mubr.f32.mxu0 0.0
  %4521 = vmatmul.mubr.f32.gmra.mrb[0].mxu0 %v4418
  %v4522 = vpop.f32.mrb[0].mxu0
  %v4523 = vadd.f32 %v4401, %v4522
  %v4524 = vpop.f32.mrb[0].mxu0
  %v4525 = vadd.f32 %v4405, %v4524
  %4526 = vmatprep.mubr.f32.mxu0 0.0
  %4527 = vmatmul.mubr.f32.gmra.mrb[0].mxu0 %v4421
  %v4528 = vpop.f32.mrb[0].mxu0
  %v4529 = vadd.f32 %v4401, %v4528
  %v4530 = vpop.f32.mrb[0].mxu0
  %v4531 = vadd.f32 %v4405, %v4530
  %4532 = vmatprep.mubr.f32.mxu0 0.0
  %4533 = vmatmul.mubr.f32.gmra.mrb[0].mxu0 %v4424
  %v4534 = vpop.f32.mrb[0].mxu0
  %v4535 = vadd.f32 %v4401, %v4534
  %v4536 = vpop.f32.mrb[0].mxu0
  %v4537 = vadd.f32 %v4405, %v4536
  %4538 = vmatprep.mubr.f32.mxu0 0.0
  %4539 = vmatmul.mubr.f32.gmra.mrb[0].mxu0 %v4427
  %v4540 = vpop.f32.mrb[0].mxu0
  %v4541 = vadd.f32 %v4401, %v4540
  %v4542 = vpop.f32.mrb[0].mxu0
  %v4543 = vadd.f32 %v4405, %v4542
  %4544 = vmatprep.mubr.f32.mxu0 0.0
  %4545 = vmatmul.mubr.f32.gmra.mrb[0].mxu0 %v4430
  %v4546 = vpop.f32.mrb[0].mxu0
  %v4547 = vadd.f32 %v4401, %v4546
  %v4548 = vpop.f32.mrb[0].mxu0
  %v4549 = vadd.f32 %v4405, %v4548
  %4550 = vmatprep.mubr.f32.mxu0 0.0
  %4551 = vmatmul.mubr.f32.gmra.mrb[0].mxu0 %v4433
  %v4552 = vpop.f32.mrb[0].mxu0
  %v4553 = vadd.f32 %v4401, %v4552
  %v4554 = vpop.f32.mrb[0].mxu0
  %v4555 = vadd.f32 %v4405, %v4554
  %4556 = vmatprep.mubr.f32.mxu0 0.0
  %4557 = vmatmul.mubr.f32.gmra.mrb[0].mxu0 %v4436
  %v4558 = vpop.f32.mrb[0].mxu0
  %v4559 = vadd.f32 %v4401, %v4558
  %v4560 = vpop.f32.mrb[0].mxu0
  %v4561 = vadd.f32 %v4405, %v4560
  %4562 = vdwg.mxu0
  %v4563 = vmul.f32 %v4505, 0.5
  %v4564 = vmul.f32 %v4507, 0.5
  %v4565 = vmul.f32 %v4511, 0.5
  %v4566 = vmul.f32 %v4513, 0.5
  %v4567 = vmul.f32 %v4517, 0.5
  %v4568 = vmul.f32 %v4519, 0.5
  %v4569 = vmul.f32 %v4523, 0.5
  %v4570 = vmul.f32 %v4525, 0.5
  %v4571 = vmul.f32 %v4529, 0.5
  %v4572 = vmul.f32 %v4531, 0.5
  %v4573 = vmul.f32 %v4535, 0.5
  %v4574 = vmul.f32 %v4537, 0.5
  %v4575 = vmul.f32 %v4541, 0.5
  %v4576 = vmul.f32 %v4543, 0.5
  %v4577 = vmul.f32 %v4547, 0.5
  %v4578 = vmul.f32 %v4549, 0.5
  %v4579 = vmul.f32 %v4553, 0.5
  %v4580 = vmul.f32 %v4555, 0.5
  %v4581 = vmul.f32 %v4559, 0.5
  %v4582 = vmul.f32 %v4561, 0.5
  %v4583 = vmul.f32 %v4505, 0.70710677
  %v4584 = vmul.f32 %v4507, 0.70710677
  %v4585 = vmul.f32 %v4511, 0.70710677
  %v4586 = vmul.f32 %v4513, 0.70710677
  %v4587 = vmul.f32 %v4517, 0.70710677
  %v4588 = vmul.f32 %v4519, 0.70710677
  %v4589 = vmul.f32 %v4523, 0.70710677
  %v4590 = vmul.f32 %v4525, 0.70710677
  %v4591 = vmul.f32 %v4529, 0.70710677
  %v4592 = vmul.f32 %v4531, 0.70710677
  %v4593 = vmul.f32 %v4535, 0.70710677
  %v4594 = vmul.f32 %v4537, 0.70710677
  %v4595 = vmul.f32 %v4541, 0.70710677
  %v4596 = vmul.f32 %v4543, 0.70710677
  %v4597 = vmul.f32 %v4547, 0.70710677
  %v4598 = vmul.f32 %v4549, 0.70710677
  %v4599 = vmul.f32 %v4553, 0.70710677
  %v4600 = vmul.f32 %v4555, 0.70710677
  %v4601 = vmul.f32 %v4559, 0.70710677
  %v4602 = vmul.f32 %v4561, 0.70710677
  %v4603 = verf.f32.pop %v4583
  %v4604 = verf.f32.pop %v4584
  %v4605 = verf.f32.pop %v4585
  %v4606 = verf.f32.pop %v4586
  %v4607 = verf.f32.pop %v4587
  %v4608 = verf.f32.pop %v4588
  %v4609 = verf.f32.pop %v4589
  %v4610 = verf.f32.pop %v4590
  %v4611 = verf.f32.pop %v4591
  %v4612 = verf.f32.pop %v4592
  %v4613 = verf.f32.pop %v4593
  %v4614 = verf.f32.pop %v4594
  %v4615 = verf.f32.pop %v4595
  %v4616 = verf.f32.pop %v4596
  %v4617 = verf.f32.pop %v4597
  %v4618 = verf.f32.pop %v4598
  %v4619 = verf.f32.pop %v4599
  %v4620 = verf.f32.pop %v4600
  %v4621 = verf.f32.pop %v4601
  %v4622 = verf.f32.pop %v4602
  %v4623 = vadd.f32 %v4603, 1.0
  %v4624 = vadd.f32 %v4604, 1.0
  %v4625 = vadd.f32 %v4605, 1.0
  %v4626 = vadd.f32 %v4606, 1.0
  %v4627 = vadd.f32 %v4607, 1.0
  %v4628 = vadd.f32 %v4608, 1.0
  %v4629 = vadd.f32 %v4609, 1.0
  %v4630 = vadd.f32 %v4610, 1.0
  %v4631 = vadd.f32 %v4611, 1.0
  %v4632 = vadd.f32 %v4612, 1.0
  %v4633 = vadd.f32 %v4613, 1.0
  %v4634 = vadd.f32 %v4614, 1.0
  %v4635 = vadd.f32 %v4615, 1.0
  %v4636 = vadd.f32 %v4616, 1.0
  %v4637 = vadd.f32 %v4617, 1.0
  %v4638 = vadd.f32 %v4618, 1.0
  %v4639 = vadd.f32 %v4619, 1.0
  %v4640 = vadd.f32 %v4620, 1.0
  %v4641 = vadd.f32 %v4621, 1.0
  %v4642 = vadd.f32 %v4622, 1.0
  %v4643 = vmul.f32 %v4563, %v4623
  %v4644 = vmul.f32 %v4564, %v4624
  %v4645 = vmul.f32 %v4565, %v4625
  %v4646 = vmul.f32 %v4566, %v4626
  %v4647 = vmul.f32 %v4567, %v4627
  %v4648 = vmul.f32 %v4568, %v4628
  %v4649 = vmul.f32 %v4569, %v4629
  %v4650 = vmul.f32 %v4570, %v4630
  %v4651 = vmul.f32 %v4571, %v4631
  %v4652 = vmul.f32 %v4572, %v4632
  %v4653 = vmul.f32 %v4573, %v4633
  %v4654 = vmul.f32 %v4574, %v4634
  %v4655 = vmul.f32 %v4575, %v4635
  %v4656 = vmul.f32 %v4576, %v4636
  %v4657 = vmul.f32 %v4577, %v4637
  %v4658 = vmul.f32 %v4578, %v4638
  %v4659 = vmul.f32 %v4579, %v4639
  %v4660 = vmul.f32 %v4580, %v4640
  %v4661 = vmul.f32 %v4581, %v4641
  %v4662 = vmul.f32 %v4582, %v4642
  %v4663 = vld [vmem:[%s15] sm:$0xff]
  %v4664 = vld [vmem:[%s15 + $0x8] sm:$0xff]
  %v4665 = vld [vmem:[%s15 + $0x10] sm:$0xff]
  %v4666 = vld [vmem:[%s15 + $0x18] sm:$0xff]
  %v4667 = vld [vmem:[%s15 + $0x20] sm:$0xff]
  %v4668 = vld [vmem:[%s15 + $0x28] sm:$0xff]
  %v4669 = vld [vmem:[%s15 + $0x30] sm:$0xff]
  %v4670 = vld [vmem:[%s15 + $0x38] sm:$0xff]
  %v4671 = vld [vmem:[%s15 + $0x40] sm:$0xff]
  %v4672 = vld [vmem:[%s15 + $0x48] sm:$0xff]
  %v4673 = vld [vmem:[%s15 + $0x50] sm:$0xff]
  %v4674 = vld [vmem:[%s15 + $0x58] sm:$0xff]
  %v4675 = vld [vmem:[%s15 + $0x60] sm:$0xff]
  %v4676 = vld [vmem:[%s15 + $0x68] sm:$0xff]
  %v4677 = vld [vmem:[%s15 + $0x70] sm:$0xff]
  %v4678 = vld [vmem:[%s15 + $0x78] sm:$0xff]
  %v4679 = vld [vmem:[%s15 + $0x80] sm:$0xff]
  %v4680 = vld [vmem:[%s15 + $0x88] sm:$0xff]
  %v4681 = vld [vmem:[%s15 + $0x90] sm:$0xff]
  %v4682 = vld [vmem:[%s15 + $0x98] sm:$0xff]
  %v4683 = vld [vmem:[%s15 + $0xa0] sm:$0xff]
  %v4684 = vld [vmem:[%s15 + $0xa8] sm:$0xff]
  %v4685 = vld [vmem:[%s15 + $0xb0] sm:$0xff]
  %v4686 = vld [vmem:[%s15 + $0xb8] sm:$0xff]
  %v4687 = vld [vmem:[%s15 + $0xc0] sm:$0xff]
  %v4688 = vld [vmem:[%s15 + $0xc8] sm:$0xff]
  %v4689 = vld [vmem:[%s15 + $0xd0] sm:$0xff]
  %v4690 = vld [vmem:[%s15 + $0xd8] sm:$0xff]
  %v4691 = vld [vmem:[%s15 + $0xe0] sm:$0xff]
  %v4692 = vld [vmem:[%s15 + $0xe8] sm:$0xff]
  %v4693 = vld [vmem:[%s15 + $0xf0] sm:$0xff]
  %v4694 = vld [vmem:[%s15 + $0xf8] sm:$0xff]
  %v4695 = vld [vmem:[%s16] sm:$0x1]
  %v4697 = vlaneseq
  %v4698 = vshrl.u32 %v4697, 7
  %v4699 = vsub.s32 0, %v4698
  %v4700 = vrot.slane %v4695, %v4699
  %4702 = vmatprep.subr.mxu0 0.0
  %4703 = vmatpush1.msra.mxu0 %v4663
  %4704 = vmatprep.subr.mxu0 0.0
  %4705 = vmatpush1.msra.mxu0 %v4664
  %4706 = vmatprep.subr.mxu0 0.0
  %4707 = vmatpush1.msra.mxu0 %v4665
  %4708 = vmatprep.subr.mxu0 0.0
  %4709 = vmatpush1.msra.mxu0 %v4666
  %4710 = vmatprep.subr.mxu0 0.0
  %4711 = vmatpush1.msra.mxu0 %v4667
  %4712 = vmatprep.subr.mxu0 0.0
  %4713 = vmatpush1.msra.mxu0 %v4668
  %4714 = vmatprep.subr.mxu0 0.0
  %4715 = vmatpush1.msra.mxu0 %v4669
  %4716 = vmatprep.subr.mxu0 0.0
  %4717 = vmatpush1.msra.mxu0 %v4670
  %4718 = vmatprep.subr.mxu0 0.0
  %4719 = vmatpush1.msra.mxu0 %v4671
  %4720 = vmatprep.subr.mxu0 0.0
  %4721 = vmatpush1.msra.mxu0 %v4672
  %4722 = vmatprep.subr.mxu0 0.0
  %4723 = vmatpush1.msra.mxu0 %v4673
  %4724 = vmatprep.subr.mxu0 0.0
  %4725 = vmatpush1.msra.mxu0 %v4674
  %4726 = vmatprep.subr.mxu0 0.0
  %4727 = vmatpush1.msra.mxu0 %v4675
  %4728 = vmatprep.subr.mxu0 0.0
  %4729 = vmatpush1.msra.mxu0 %v4676
  %4730 = vmatprep.subr.mxu0 0.0
  %4731 = vmatpush1.msra.mxu0 %v4677
  %4732 = vmatprep.subr.mxu0 0.0
  %4733 = vmatpush1.msra.mxu0 %v4678
  %4734 = vmatprep.subr.mxu0 0.0
  %4735 = vmatpush1.msra.mxu0 %v4679
  %4736 = vmatprep.subr.mxu0 0.0
  %4737 = vmatpush1.msra.mxu0 %v4680
  %4738 = vmatprep.subr.mxu0 0.0
  %4739 = vmatpush1.msra.mxu0 %v4681
  %4740 = vmatprep.subr.mxu0 0.0
  %4741 = vmatpush1.msra.mxu0 %v4682
  %4742 = vmatprep.subr.mxu0 0.0
  %4743 = vmatpush1.msra.mxu0 %v4683
  %4744 = vmatprep.subr.mxu0 0.0
  %4745 = vmatpush1.msra.mxu0 %v4684
  %4746 = vmatprep.subr.mxu0 0.0
  %4747 = vmatpush1.msra.mxu0 %v4685
  %4748 = vmatprep.subr.mxu0 0.0
  %4749 = vmatpush1.msra.mxu0 %v4686
  %4750 = vmatprep.subr.mxu0 0.0
  %4751 = vmatpush1.msra.mxu0 %v4687
  %4752 = vmatprep.subr.mxu0 0.0
  %4753 = vmatpush1.msra.mxu0 %v4688
  %4754 = vmatprep.subr.mxu0 0.0
  %4755 = vmatpush1.msra.mxu0 %v4689
  %4756 = vmatprep.subr.mxu0 0.0
  %4757 = vmatpush1.msra.mxu0 %v4690
  %4758 = vmatprep.subr.mxu0 0.0
  %4759 = vmatpush1.msra.mxu0 %v4691
  %4760 = vmatprep.subr.mxu0 0.0
  %4761 = vmatpush1.msra.mxu0 %v4692
  %4762 = vmatprep.subr.mxu0 0.0
  %4763 = vmatpush1.msra.mxu0 %v4693
  %4764 = vmatprep.subr.mxu0 0.0
  %4765 = vmatpush1.msra.mxu0 %v4694
  %4766 = vmatprep.mubr.f32.mxu0 %v4644
  %4767 = vmatmul.mubr.f32.gmra.mrb[0].mxu0 %v4643
  %v4768 = vpop.f32.mrb[0].mxu0
  %v4769 = vadd.f32 %v4700, %v4768
  %v4770 = vpop.f32.mrb[0].mxu0
  %4771 = vmatprep.mubr.f32.mxu0 %v4646
  %4772 = vmatmul.mubr.f32.gmra.mrb[0].mxu0 %v4645
  %v4773 = vpop.f32.mrb[0].mxu0
  %v4774 = vadd.f32 %v4700, %v4773
  %v4775 = vpop.f32.mrb[0].mxu0
  %4776 = vmatprep.mubr.f32.mxu0 %v4648
  %4777 = vmatmul.mubr.f32.gmra.mrb[0].mxu0 %v4647
  %v4778 = vpop.f32.mrb[0].mxu0
  %v4779 = vadd.f32 %v4700, %v4778
  %v4780 = vpop.f32.mrb[0].mxu0
  %4781 = vmatprep.mubr.f32.mxu0 %v4650
  %4782 = vmatmul.mubr.f32.gmra.mrb[0].mxu0 %v4649
  %v4783 = vpop.f32.mrb[0].mxu0
  %v4784 = vadd.f32 %v4700, %v4783
  %v4785 = vpop.f32.mrb[0].mxu0
  %4786 = vmatprep.mubr.f32.mxu0 %v4652
  %4787 = vmatmul.mubr.f32.gmra.mrb[0].mxu0 %v4651
  %v4788 = vpop.f32.mrb[0].mxu0
  %v4789 = vadd.f32 %v4700, %v4788
  %v4790 = vpop.f32.mrb[0].mxu0
  %4791 = vmatprep.mubr.f32.mxu0 %v4654
  %4792 = vmatmul.mubr.f32.gmra.mrb[0].mxu0 %v4653
  %v4793 = vpop.f32.mrb[0].mxu0
  %v4794 = vadd.f32 %v4700, %v4793
  %v4795 = vpop.f32.mrb[0].mxu0
  %4796 = vmatprep.mubr.f32.mxu0 %v4656
  %4797 = vmatmul.mubr.f32.gmra.mrb[0].mxu0 %v4655
  %v4798 = vpop.f32.mrb[0].mxu0
  %v4799 = vadd.f32 %v4700, %v4798
  %v4800 = vpop.f32.mrb[0].mxu0
  %4801 = vmatprep.mubr.f32.mxu0 %v4658
  %4802 = vmatmul.mubr.f32.gmra.mrb[0].mxu0 %v4657
  %v4803 = vpop.f32.mrb[0].mxu0
  %v4804 = vadd.f32 %v4700, %v4803
  %v4805 = vpop.f32.mrb[0].mxu0
  %4806 = vmatprep.mubr.f32.mxu0 %v4660
  %4807 = vmatmul.mubr.f32.gmra.mrb[0].mxu0 %v4659
  %v4808 = vpop.f32.mrb[0].mxu0
  %v4809 = vadd.f32 %v4700, %v4808
  %v4810 = vpop.f32.mrb[0].mxu0
  %4811 = vmatprep.mubr.f32.mxu0 %v4662
  %4812 = vmatmul.mubr.f32.gmra.mrb[0].mxu0 %v4661
  %v4813 = vpop.f32.mrb[0].mxu0
  %v4814 = vadd.f32 %v4700, %v4813
  %v4815 = vpop.f32.mrb[0].mxu0
  %4816 = vdwg.mxu0
  %v4817 = vadd.f32 %v4206, %v4769
  %v4818 = vadd.f32 %v4207, %v4774
  %v4819 = vadd.f32 %v4208, %v4779
  %v4820 = vadd.f32 %v4209, %v4784
  %v4821 = vadd.f32 %v4210, %v4789
  %v4822 = vadd.f32 %v4211, %v4794
  %v4823 = vadd.f32 %v4212, %v4799
  %v4824 = vadd.f32 %v4213, %v4804
  %v4825 = vadd.f32 %v4214, %v4809
  %v4826 = vadd.f32 %v4215, %v4814
  %s4827 = scalar_lea.vmem %s1, 1
  %v4828 = vld [vmem:[%s4827] sm:$0x1]
  %s4829 = scalar_lea.vmem %s2, 1
  %v4830 = vld [vmem:[%s4829] sm:$0x1]
  %v4831 = vsel %vm84, %v4817, 0.0
  %4832 = vadd.xlane.f32.xlu0 %v4831
  %v4833 = vpop.xlane.xlu0 %4832
  %v4834 = vsel %vm84, %v4818, 0.0
  %4835 = vadd.xlane.f32.xlu0 %v4834
  %v4836 = vpop.xlane.xlu0 %4835
  %v4837 = vsel %vm84, %v4819, 0.0
  %4838 = vadd.xlane.f32.xlu0 %v4837
  %v4839 = vpop.xlane.xlu0 %4838
  %v4840 = vsel %vm84, %v4820, 0.0
  %4841 = vadd.xlane.f32.xlu0 %v4840
  %v4842 = vpop.xlane.xlu0 %4841
  %v4843 = vsel %vm84, %v4821, 0.0
  %4844 = vadd.xlane.f32.xlu0 %v4843
  %v4845 = vpop.xlane.xlu0 %4844
  %v4846 = vsel %vm84, %v4822, 0.0
  %4847 = vadd.xlane.f32.xlu0 %v4846
  %v4848 = vpop.xlane.xlu0 %4847
  %v4849 = vsel %vm84, %v4823, 0.0
  %4850 = vadd.xlane.f32.xlu0 %v4849
  %v4851 = vpop.xlane.xlu0 %4850
  %v4852 = vsel %vm84, %v4824, 0.0
  %4853 = vadd.xlane.f32.xlu0 %v4852
  %v4854 = vpop.xlane.xlu0 %4853
  %v4855 = vsel %vm84, %v4825, 0.0
  %4856 = vadd.xlane.f32.xlu0 %v4855
  %v4857 = vpop.xlane.xlu0 %4856
  %v4858 = vsel %vm84, %v4826, 0.0
  %4859 = vadd.xlane.f32.xlu0 %v4858
  %v4860 = vpop.xlane.xlu0 %4859
  %v4861 = vmul.f32 %v4833, %v115
  %v4862 = vmul.f32 %v4836, %v115
  %v4863 = vmul.f32 %v4839, %v115
  %v4864 = vmul.f32 %v4842, %v115
  %v4865 = vmul.f32 %v4845, %v115
  %v4866 = vmul.f32 %v4848, %v115
  %v4867 = vmul.f32 %v4851, %v115
  %v4868 = vmul.f32 %v4854, %v115
  %v4869 = vmul.f32 %v4857, %v115
  %v4870 = vmul.f32 %v4860, %v115
  %v4871 = vsub.f32 %v4817, %v4861
  %v4872 = vsub.f32 %v4818, %v4862
  %v4873 = vsub.f32 %v4819, %v4863
  %v4874 = vsub.f32 %v4820, %v4864
  %v4875 = vsub.f32 %v4821, %v4865
  %v4876 = vsub.f32 %v4822, %v4866
  %v4877 = vsub.f32 %v4823, %v4867
  %v4878 = vsub.f32 %v4824, %v4868
  %v4879 = vsub.f32 %v4825, %v4869
  %v4880 = vsub.f32 %v4826, %v4870
  %v4881 = vmul.f32 %v4871, %v4871
  %v4882 = vmul.f32 %v4872, %v4872
  %v4883 = vmul.f32 %v4873, %v4873
  %v4884 = vmul.f32 %v4874, %v4874
  %v4885 = vmul.f32 %v4875, %v4875
  %v4886 = vmul.f32 %v4876, %v4876
  %v4887 = vmul.f32 %v4877, %v4877
  %v4888 = vmul.f32 %v4878, %v4878
  %v4889 = vmul.f32 %v4879, %v4879
  %v4890 = vmul.f32 %v4880, %v4880
  %v4891 = vsel %vm84, %v4881, 0.0
  %4892 = vadd.xlane.f32.xlu0 %v4891
  %v4893 = vpop.xlane.xlu0 %4892
  %v4894 = vsel %vm84, %v4882, 0.0
  %4895 = vadd.xlane.f32.xlu0 %v4894
  %v4896 = vpop.xlane.xlu0 %4895
  %v4897 = vsel %vm84, %v4883, 0.0
  %4898 = vadd.xlane.f32.xlu0 %v4897
  %v4899 = vpop.xlane.xlu0 %4898
  %v4900 = vsel %vm84, %v4884, 0.0
  %4901 = vadd.xlane.f32.xlu0 %v4900
  %v4902 = vpop.xlane.xlu0 %4901
  %v4903 = vsel %vm84, %v4885, 0.0
  %4904 = vadd.xlane.f32.xlu0 %v4903
  %v4905 = vpop.xlane.xlu0 %4904
  %v4906 = vsel %vm84, %v4886, 0.0
  %4907 = vadd.xlane.f32.xlu0 %v4906
  %v4908 = vpop.xlane.xlu0 %4907
  %v4909 = vsel %vm84, %v4887, 0.0
  %4910 = vadd.xlane.f32.xlu0 %v4909
  %v4911 = vpop.xlane.xlu0 %4910
  %v4912 = vsel %vm84, %v4888, 0.0
  %4913 = vadd.xlane.f32.xlu0 %v4912
  %v4914 = vpop.xlane.xlu0 %4913
  %v4915 = vsel %vm84, %v4889, 0.0
  %4916 = vadd.xlane.f32.xlu0 %v4915
  %v4917 = vpop.xlane.xlu0 %4916
  %v4918 = vsel %vm84, %v4890, 0.0
  %4919 = vadd.xlane.f32.xlu0 %v4918
  %v4920 = vpop.xlane.xlu0 %4919
  %v4921 = vmul.f32 %v4893, %v115
  %v4922 = vmul.f32 %v4896, %v115
  %v4923 = vmul.f32 %v4899, %v115
  %v4924 = vmul.f32 %v4902, %v115
  %v4925 = vmul.f32 %v4905, %v115
  %v4926 = vmul.f32 %v4908, %v115
  %v4927 = vmul.f32 %v4911, %v115
  %v4928 = vmul.f32 %v4914, %v115
  %v4929 = vmul.f32 %v4917, %v115
  %v4930 = vmul.f32 %v4920, %v115
  %v4931 = vadd.f32 %v4921, 1e-05
  %v4932 = vadd.f32 %v4922, 1e-05
  %v4933 = vadd.f32 %v4923, 1e-05
  %v4934 = vadd.f32 %v4924, 1e-05
  %v4935 = vadd.f32 %v4925, 1e-05
  %v4936 = vadd.f32 %v4926, 1e-05
  %v4937 = vadd.f32 %v4927, 1e-05
  %v4938 = vadd.f32 %v4928, 1e-05
  %v4939 = vadd.f32 %v4929, 1e-05
  %v4940 = vadd.f32 %v4930, 1e-05
  %v4941 = vrsqrt.pop %v4931
  %v4942 = vrsqrt.pop %v4932
  %v4943 = vrsqrt.pop %v4933
  %v4944 = vrsqrt.pop %v4934
  %v4945 = vrsqrt.pop %v4935
  %v4946 = vrsqrt.pop %v4936
  %v4947 = vrsqrt.pop %v4937
  %v4948 = vrsqrt.pop %v4938
  %v4949 = vrsqrt.pop %v4939
  %v4950 = vrsqrt.pop %v4940
  %v4951 = vmul.f32 %v4871, %v4941
  %v4952 = vmul.f32 %v4872, %v4942
  %v4953 = vmul.f32 %v4873, %v4943
  %v4954 = vmul.f32 %v4874, %v4944
  %v4955 = vmul.f32 %v4875, %v4945
  %v4956 = vmul.f32 %v4876, %v4946
  %v4957 = vmul.f32 %v4877, %v4947
  %v4958 = vmul.f32 %v4878, %v4948
  %v4959 = vmul.f32 %v4879, %v4949
  %v4960 = vmul.f32 %v4880, %v4950
  %v4962 = vlaneseq
  %v4963 = vshrl.u32 %v4962, 7
  %v4964 = vsub.s32 0, %v4963
  %v4965 = vrot.slane %v4828, %v4964
  %v4967 = vmul.f32 %v4951, %v4965
  %v4968 = vmul.f32 %v4952, %v4965
  %v4969 = vmul.f32 %v4953, %v4965
  %v4970 = vmul.f32 %v4954, %v4965
  %v4971 = vmul.f32 %v4955, %v4965
  %v4972 = vmul.f32 %v4956, %v4965
  %v4973 = vmul.f32 %v4957, %v4965
  %v4974 = vmul.f32 %v4958, %v4965
  %v4975 = vmul.f32 %v4959, %v4965
  %v4976 = vmul.f32 %v4960, %v4965
  %v4978 = vlaneseq
  %v4979 = vshrl.u32 %v4978, 7
  %v4980 = vsub.s32 0, %v4979
  %v4981 = vrot.slane %v4830, %v4980
  %v4983 = vadd.f32 %v4967, %v4981
  %v4984 = vadd.f32 %v4968, %v4981
  %v4985 = vadd.f32 %v4969, %v4981
  %v4986 = vadd.f32 %v4970, %v4981
  %v4987 = vadd.f32 %v4971, %v4981
  %v4988 = vadd.f32 %v4972, %v4981
  %v4989 = vadd.f32 %v4973, %v4981
  %v4990 = vadd.f32 %v4974, %v4981
  %v4991 = vadd.f32 %v4975, %v4981
  %v4992 = vadd.f32 %v4976, %v4981
  %s4993 = scalar_lea.vmem %s3, 256
  %v4994 = vld [vmem:[%s4993] sm:$0xff]
  %v4995 = vld [vmem:[%s4993 + $0x8] sm:$0xff]
  %v4996 = vld [vmem:[%s4993 + $0x10] sm:$0xff]
  %v4997 = vld [vmem:[%s4993 + $0x18] sm:$0xff]
  %v4998 = vld [vmem:[%s4993 + $0x20] sm:$0xff]
  %v4999 = vld [vmem:[%s4993 + $0x28] sm:$0xff]
  %v5000 = vld [vmem:[%s4993 + $0x30] sm:$0xff]
  %v5001 = vld [vmem:[%s4993 + $0x38] sm:$0xff]
  %s5002 = scalar_lea.vmem %s4, 4
  %v5003 = vld [vmem:[%s5002] sm:$0x1]
  %v5005 = vlaneseq
  %v5006 = vshrl.u32 %v5005, 7
  %v5007 = vsub.s32 0, %v5006
  %v5008 = vrot.slane %v5003, %v5007
  %v5011 = vsel %vm84, %v4983, 0
  %v5014 = vsel %vm84, %v4984, 0
  %v5017 = vsel %vm84, %v4985, 0
  %v5020 = vsel %vm84, %v4986, 0
  %v5023 = vsel %vm84, %v4987, 0
  %v5026 = vsel %vm84, %v4988, 0
  %v5029 = vsel %vm84, %v4989, 0
  %v5032 = vsel %vm84, %v4990, 0
  %v5035 = vsel %vm84, %v4991, 0
  %v5038 = vsel %vm84, %v4992, 0
  %5040 = vmatprep.subr.mxu0 0.0
  %5041 = vmatpush1.msra.mxu0 %v4994
  %5042 = vmatprep.subr.mxu0 0.0
  %5043 = vmatpush1.msra.mxu0 %v4995
  %5044 = vmatprep.subr.mxu0 0.0
  %5045 = vmatpush1.msra.mxu0 %v4996
  %5046 = vmatprep.subr.mxu0 0.0
  %5047 = vmatpush1.msra.mxu0 %v4997
  %5048 = vmatprep.subr.mxu0 0.0
  %5049 = vmatpush1.msra.mxu0 %v4998
  %5050 = vmatprep.subr.mxu0 0.0
  %5051 = vmatpush1.msra.mxu0 %v4999
  %5052 = vmatprep.subr.mxu0 0.0
  %5053 = vmatpush1.msra.mxu0 %v5000
  %5054 = vmatprep.subr.mxu0 0.0
  %5055 = vmatpush1.msra.mxu0 %v5001
  %5056 = vmatprep.subr.mxu0 0.0
  %5057 = vmatpush1.msra.mxu0 0.0
  %5058 = vmatprep.subr.mxu0 0.0
  %5059 = vmatpush1.msra.mxu0 0.0
  %5060 = vmatprep.subr.mxu0 0.0
  %5061 = vmatpush1.msra.mxu0 0.0
  %5062 = vmatprep.subr.mxu0 0.0
  %5063 = vmatpush1.msra.mxu0 0.0
  %5064 = vmatprep.subr.mxu0 0.0
  %5065 = vmatpush1.msra.mxu0 0.0
  %5066 = vmatprep.subr.mxu0 0.0
  %5067 = vmatpush1.msra.mxu0 0.0
  %5068 = vmatprep.subr.mxu0 0.0
  %5069 = vmatpush1.msra.mxu0 0.0
  %5070 = vmatprep.subr.mxu0 0.0
  %5071 = vmatpush1.msra.mxu0 0.0
  %5072 = vmatprep.subr.mxu0 0.0
  %5073 = vmatpush1.msra.mxu0 0.0
  %5074 = vmatprep.subr.mxu0 0.0
  %5075 = vmatpush1.msra.mxu0 0.0
  %5076 = vmatprep.subr.mxu0 0.0
  %5077 = vmatpush1.msra.mxu0 0.0
  %5078 = vmatprep.subr.mxu0 0.0
  %5079 = vmatpush1.msra.mxu0 0.0
  %5080 = vmatprep.subr.mxu0 0.0
  %5081 = vmatpush1.msra.mxu0 0.0
  %5082 = vmatprep.subr.mxu0 0.0
  %5083 = vmatpush1.msra.mxu0 0.0
  %5084 = vmatprep.subr.mxu0 0.0
  %5085 = vmatpush1.msra.mxu0 0.0
  %5086 = vmatprep.subr.mxu0 0.0
  %5087 = vmatpush1.msra.mxu0 0.0
  %5088 = vmatprep.subr.mxu0 0.0
  %5089 = vmatpush1.msra.mxu0 0.0
  %5090 = vmatprep.subr.mxu0 0.0
  %5091 = vmatpush1.msra.mxu0 0.0
  %5092 = vmatprep.subr.mxu0 0.0
  %5093 = vmatpush1.msra.mxu0 0.0
  %5094 = vmatprep.subr.mxu0 0.0
  %5095 = vmatpush1.msra.mxu0 0.0
  %5096 = vmatprep.subr.mxu0 0.0
  %5097 = vmatpush1.msra.mxu0 0.0
  %5098 = vmatprep.subr.mxu0 0.0
  %5099 = vmatpush1.msra.mxu0 0.0
  %5100 = vmatprep.subr.mxu0 0.0
  %5101 = vmatpush1.msra.mxu0 0.0
  %5102 = vmatprep.subr.mxu0 0.0
  %5103 = vmatpush1.msra.mxu0 0.0
  %5104 = vmatprep.mubr.f32.mxu0 0.0
  %5105 = vmatmul.mubr.f32.gmra.mrb[0].mxu0 %v5011
  %v5106 = vpop.f32.mrb[0].mxu0
  %v5107 = vadd.f32 %v5008, %v5106
  %v5108 = vpop.f32.mrb[0].mxu0
  %5109 = vmatprep.mubr.f32.mxu0 0.0
  %5110 = vmatmul.mubr.f32.gmra.mrb[0].mxu0 %v5014
  %v5111 = vpop.f32.mrb[0].mxu0
  %v5112 = vadd.f32 %v5008, %v5111
  %v5113 = vpop.f32.mrb[0].mxu0
  %5114 = vmatprep.mubr.f32.mxu0 0.0
  %5115 = vmatmul.mubr.f32.gmra.mrb[0].mxu0 %v5017
  %v5116 = vpop.f32.mrb[0].mxu0
  %v5117 = vadd.f32 %v5008, %v5116
  %v5118 = vpop.f32.mrb[0].mxu0
  %5119 = vmatprep.mubr.f32.mxu0 0.0
  %5120 = vmatmul.mubr.f32.gmra.mrb[0].mxu0 %v5020
  %v5121 = vpop.f32.mrb[0].mxu0
  %v5122 = vadd.f32 %v5008, %v5121
  %v5123 = vpop.f32.mrb[0].mxu0
  %5124 = vmatprep.mubr.f32.mxu0 0.0
  %5125 = vmatmul.mubr.f32.gmra.mrb[0].mxu0 %v5023
  %v5126 = vpop.f32.mrb[0].mxu0
  %v5127 = vadd.f32 %v5008, %v5126
  %v5128 = vpop.f32.mrb[0].mxu0
  %5129 = vmatprep.mubr.f32.mxu0 0.0
  %5130 = vmatmul.mubr.f32.gmra.mrb[0].mxu0 %v5026
  %v5131 = vpop.f32.mrb[0].mxu0
  %v5132 = vadd.f32 %v5008, %v5131
  %v5133 = vpop.f32.mrb[0].mxu0
  %5134 = vmatprep.mubr.f32.mxu0 0.0
  %5135 = vmatmul.mubr.f32.gmra.mrb[0].mxu0 %v5029
  %v5136 = vpop.f32.mrb[0].mxu0
  %v5137 = vadd.f32 %v5008, %v5136
  %v5138 = vpop.f32.mrb[0].mxu0
  %5139 = vmatprep.mubr.f32.mxu0 0.0
  %5140 = vmatmul.mubr.f32.gmra.mrb[0].mxu0 %v5032
  %v5141 = vpop.f32.mrb[0].mxu0
  %v5142 = vadd.f32 %v5008, %v5141
  %v5143 = vpop.f32.mrb[0].mxu0
  %5144 = vmatprep.mubr.f32.mxu0 0.0
  %5145 = vmatmul.mubr.f32.gmra.mrb[0].mxu0 %v5035
  %v5146 = vpop.f32.mrb[0].mxu0
  %v5147 = vadd.f32 %v5008, %v5146
  %v5148 = vpop.f32.mrb[0].mxu0
  %5149 = vmatprep.mubr.f32.mxu0 0.0
  %5150 = vmatmul.mubr.f32.gmra.mrb[0].mxu0 %v5038
  %v5151 = vpop.f32.mrb[0].mxu0
  %v5152 = vadd.f32 %v5008, %v5151
  %v5153 = vpop.f32.mrb[0].mxu0
  %5154 = vdwg.mxu0
  %s5155 = scalar_lea.vmem %s5, 256
  %v5156 = vld [vmem:[%s5155] sm:$0xff]
  %v5157 = vld [vmem:[%s5155 + $0x8] sm:$0xff]
  %v5158 = vld [vmem:[%s5155 + $0x10] sm:$0xff]
  %v5159 = vld [vmem:[%s5155 + $0x18] sm:$0xff]
  %v5160 = vld [vmem:[%s5155 + $0x20] sm:$0xff]
  %v5161 = vld [vmem:[%s5155 + $0x28] sm:$0xff]
  %v5162 = vld [vmem:[%s5155 + $0x30] sm:$0xff]
  %v5163 = vld [vmem:[%s5155 + $0x38] sm:$0xff]
  %s5164 = scalar_lea.vmem %s6, 4
  %v5165 = vld [vmem:[%s5164] sm:$0x1]
  %v5167 = vlaneseq
  %v5168 = vshrl.u32 %v5167, 7
  %v5169 = vsub.s32 0, %v5168
  %v5170 = vrot.slane %v5165, %v5169
  %5172 = vmatprep.subr.mxu0 0.0
  %5173 = vmatpush1.msra.mxu0 %v5156
  %5174 = vmatprep.subr.mxu0 0.0
  %5175 = vmatpush1.msra.mxu0 %v5157
  %5176 = vmatprep.subr.mxu0 0.0
  %5177 = vmatpush1.msra.mxu0 %v5158
  %5178 = vmatprep.subr.mxu0 0.0
  %5179 = vmatpush1.msra.mxu0 %v5159
  %5180 = vmatprep.subr.mxu0 0.0
  %5181 = vmatpush1.msra.mxu0 %v5160
  %5182 = vmatprep.subr.mxu0 0.0
  %5183 = vmatpush1.msra.mxu0 %v5161
  %5184 = vmatprep.subr.mxu0 0.0
  %5185 = vmatpush1.msra.mxu0 %v5162
  %5186 = vmatprep.subr.mxu0 0.0
  %5187 = vmatpush1.msra.mxu0 %v5163
  %5188 = vmatprep.subr.mxu0 0.0
  %5189 = vmatpush1.msra.mxu0 0.0
  %5190 = vmatprep.subr.mxu0 0.0
  %5191 = vmatpush1.msra.mxu0 0.0
  %5192 = vmatprep.subr.mxu0 0.0
  %5193 = vmatpush1.msra.mxu0 0.0
  %5194 = vmatprep.subr.mxu0 0.0
  %5195 = vmatpush1.msra.mxu0 0.0
  %5196 = vmatprep.subr.mxu0 0.0
  %5197 = vmatpush1.msra.mxu0 0.0
  %5198 = vmatprep.subr.mxu0 0.0
  %5199 = vmatpush1.msra.mxu0 0.0
  %5200 = vmatprep.subr.mxu0 0.0
  %5201 = vmatpush1.msra.mxu0 0.0
  %5202 = vmatprep.subr.mxu0 0.0
  %5203 = vmatpush1.msra.mxu0 0.0
  %5204 = vmatprep.subr.mxu0 0.0
  %5205 = vmatpush1.msra.mxu0 0.0
  %5206 = vmatprep.subr.mxu0 0.0
  %5207 = vmatpush1.msra.mxu0 0.0
  %5208 = vmatprep.subr.mxu0 0.0
  %5209 = vmatpush1.msra.mxu0 0.0
  %5210 = vmatprep.subr.mxu0 0.0
  %5211 = vmatpush1.msra.mxu0 0.0
  %5212 = vmatprep.subr.mxu0 0.0
  %5213 = vmatpush1.msra.mxu0 0.0
  %5214 = vmatprep.subr.mxu0 0.0
  %5215 = vmatpush1.msra.mxu0 0.0
  %5216 = vmatprep.subr.mxu0 0.0
  %5217 = vmatpush1.msra.mxu0 0.0
  %5218 = vmatprep.subr.mxu0 0.0
  %5219 = vmatpush1.msra.mxu0 0.0
  %5220 = vmatprep.subr.mxu0 0.0
  %5221 = vmatpush1.msra.mxu0 0.0
  %5222 = vmatprep.subr.mxu0 0.0
  %5223 = vmatpush1.msra.mxu0 0.0
  %5224 = vmatprep.subr.mxu0 0.0
  %5225 = vmatpush1.msra.mxu0 0.0
  %5226 = vmatprep.subr.mxu0 0.0
  %5227 = vmatpush1.msra.mxu0 0.0
  %5228 = vmatprep.subr.mxu0 0.0
  %5229 = vmatpush1.msra.mxu0 0.0
  %5230 = vmatprep.subr.mxu0 0.0
  %5231 = vmatpush1.msra.mxu0 0.0
  %5232 = vmatprep.subr.mxu0 0.0
  %5233 = vmatpush1.msra.mxu0 0.0
  %5234 = vmatprep.subr.mxu0 0.0
  %5235 = vmatpush1.msra.mxu0 0.0
  %5236 = vmatprep.mubr.f32.mxu0 0.0
  %5237 = vmatmul.mubr.f32.gmra.mrb[0].mxu0 %v5011
  %v5238 = vpop.f32.mrb[0].mxu0
  %v5239 = vadd.f32 %v5170, %v5238
  %v5240 = vpop.f32.mrb[0].mxu0
  %5241 = vmatprep.mubr.f32.mxu0 0.0
  %5242 = vmatmul.mubr.f32.gmra.mrb[0].mxu0 %v5014
  %v5243 = vpop.f32.mrb[0].mxu0
  %v5244 = vadd.f32 %v5170, %v5243
  %v5245 = vpop.f32.mrb[0].mxu0
  %5246 = vmatprep.mubr.f32.mxu0 0.0
  %5247 = vmatmul.mubr.f32.gmra.mrb[0].mxu0 %v5017
  %v5248 = vpop.f32.mrb[0].mxu0
  %v5249 = vadd.f32 %v5170, %v5248
  %v5250 = vpop.f32.mrb[0].mxu0
  %5251 = vmatprep.mubr.f32.mxu0 0.0
  %5252 = vmatmul.mubr.f32.gmra.mrb[0].mxu0 %v5020
  %v5253 = vpop.f32.mrb[0].mxu0
  %v5254 = vadd.f32 %v5170, %v5253
  %v5255 = vpop.f32.mrb[0].mxu0
  %5256 = vmatprep.mubr.f32.mxu0 0.0
  %5257 = vmatmul.mubr.f32.gmra.mrb[0].mxu0 %v5023
  %v5258 = vpop.f32.mrb[0].mxu0
  %v5259 = vadd.f32 %v5170, %v5258
  %v5260 = vpop.f32.mrb[0].mxu0
  %5261 = vmatprep.mubr.f32.mxu0 0.0
  %5262 = vmatmul.mubr.f32.gmra.mrb[0].mxu0 %v5026
  %v5263 = vpop.f32.mrb[0].mxu0
  %v5264 = vadd.f32 %v5170, %v5263
  %v5265 = vpop.f32.mrb[0].mxu0
  %5266 = vmatprep.mubr.f32.mxu0 0.0
  %5267 = vmatmul.mubr.f32.gmra.mrb[0].mxu0 %v5029
  %v5268 = vpop.f32.mrb[0].mxu0
  %v5269 = vadd.f32 %v5170, %v5268
  %v5270 = vpop.f32.mrb[0].mxu0
  %5271 = vmatprep.mubr.f32.mxu0 0.0
  %5272 = vmatmul.mubr.f32.gmra.mrb[0].mxu0 %v5032
  %v5273 = vpop.f32.mrb[0].mxu0
  %v5274 = vadd.f32 %v5170, %v5273
  %v5275 = vpop.f32.mrb[0].mxu0
  %5276 = vmatprep.mubr.f32.mxu0 0.0
  %5277 = vmatmul.mubr.f32.gmra.mrb[0].mxu0 %v5035
  %v5278 = vpop.f32.mrb[0].mxu0
  %v5279 = vadd.f32 %v5170, %v5278
  %v5280 = vpop.f32.mrb[0].mxu0
  %5281 = vmatprep.mubr.f32.mxu0 0.0
  %5282 = vmatmul.mubr.f32.gmra.mrb[0].mxu0 %v5038
  %v5283 = vpop.f32.mrb[0].mxu0
  %v5284 = vadd.f32 %v5170, %v5283
  %v5285 = vpop.f32.mrb[0].mxu0
  %5286 = vdwg.mxu0
  %s5287 = scalar_lea.vmem %s7, 256
  %v5288 = vld [vmem:[%s5287] sm:$0xff]
  %v5289 = vld [vmem:[%s5287 + $0x8] sm:$0xff]
  %v5290 = vld [vmem:[%s5287 + $0x10] sm:$0xff]
  %v5291 = vld [vmem:[%s5287 + $0x18] sm:$0xff]
  %v5292 = vld [vmem:[%s5287 + $0x20] sm:$0xff]
  %v5293 = vld [vmem:[%s5287 + $0x28] sm:$0xff]
  %v5294 = vld [vmem:[%s5287 + $0x30] sm:$0xff]
  %v5295 = vld [vmem:[%s5287 + $0x38] sm:$0xff]
  %s5296 = scalar_lea.vmem %s8, 4
  %v5297 = vld [vmem:[%s5296] sm:$0x1]
  %v5299 = vlaneseq
  %v5300 = vshrl.u32 %v5299, 7
  %v5301 = vsub.s32 0, %v5300
  %v5302 = vrot.slane %v5297, %v5301
  %5304 = vmatprep.subr.mxu0 0.0
  %5305 = vmatpush1.msra.mxu0 %v5288
  %5306 = vmatprep.subr.mxu0 0.0
  %5307 = vmatpush1.msra.mxu0 %v5289
  %5308 = vmatprep.subr.mxu0 0.0
  %5309 = vmatpush1.msra.mxu0 %v5290
  %5310 = vmatprep.subr.mxu0 0.0
  %5311 = vmatpush1.msra.mxu0 %v5291
  %5312 = vmatprep.subr.mxu0 0.0
  %5313 = vmatpush1.msra.mxu0 %v5292
  %5314 = vmatprep.subr.mxu0 0.0
  %5315 = vmatpush1.msra.mxu0 %v5293
  %5316 = vmatprep.subr.mxu0 0.0
  %5317 = vmatpush1.msra.mxu0 %v5294
  %5318 = vmatprep.subr.mxu0 0.0
  %5319 = vmatpush1.msra.mxu0 %v5295
  %5320 = vmatprep.subr.mxu0 0.0
  %5321 = vmatpush1.msra.mxu0 0.0
  %5322 = vmatprep.subr.mxu0 0.0
  %5323 = vmatpush1.msra.mxu0 0.0
  %5324 = vmatprep.subr.mxu0 0.0
  %5325 = vmatpush1.msra.mxu0 0.0
  %5326 = vmatprep.subr.mxu0 0.0
  %5327 = vmatpush1.msra.mxu0 0.0
  %5328 = vmatprep.subr.mxu0 0.0
  %5329 = vmatpush1.msra.mxu0 0.0
  %5330 = vmatprep.subr.mxu0 0.0
  %5331 = vmatpush1.msra.mxu0 0.0
  %5332 = vmatprep.subr.mxu0 0.0
  %5333 = vmatpush1.msra.mxu0 0.0
  %5334 = vmatprep.subr.mxu0 0.0
  %5335 = vmatpush1.msra.mxu0 0.0
  %5336 = vmatprep.subr.mxu0 0.0
  %5337 = vmatpush1.msra.mxu0 0.0
  %5338 = vmatprep.subr.mxu0 0.0
  %5339 = vmatpush1.msra.mxu0 0.0
  %5340 = vmatprep.subr.mxu0 0.0
  %5341 = vmatpush1.msra.mxu0 0.0
  %5342 = vmatprep.subr.mxu0 0.0
  %5343 = vmatpush1.msra.mxu0 0.0
  %5344 = vmatprep.subr.mxu0 0.0
  %5345 = vmatpush1.msra.mxu0 0.0
  %5346 = vmatprep.subr.mxu0 0.0
  %5347 = vmatpush1.msra.mxu0 0.0
  %5348 = vmatprep.subr.mxu0 0.0
  %5349 = vmatpush1.msra.mxu0 0.0
  %5350 = vmatprep.subr.mxu0 0.0
  %5351 = vmatpush1.msra.mxu0 0.0
  %5352 = vmatprep.subr.mxu0 0.0
  %5353 = vmatpush1.msra.mxu0 0.0
  %5354 = vmatprep.subr.mxu0 0.0
  %5355 = vmatpush1.msra.mxu0 0.0
  %5356 = vmatprep.subr.mxu0 0.0
  %5357 = vmatpush1.msra.mxu0 0.0
  %5358 = vmatprep.subr.mxu0 0.0
  %5359 = vmatpush1.msra.mxu0 0.0
  %5360 = vmatprep.subr.mxu0 0.0
  %5361 = vmatpush1.msra.mxu0 0.0
  %5362 = vmatprep.subr.mxu0 0.0
  %5363 = vmatpush1.msra.mxu0 0.0
  %5364 = vmatprep.subr.mxu0 0.0
  %5365 = vmatpush1.msra.mxu0 0.0
  %5366 = vmatprep.subr.mxu0 0.0
  %5367 = vmatpush1.msra.mxu0 0.0
  %5368 = vmatprep.mubr.f32.mxu0 0.0
  %5369 = vmatmul.mubr.f32.gmra.mrb[0].mxu0 %v5011
  %v5370 = vpop.f32.mrb[0].mxu0
  %v5371 = vadd.f32 %v5302, %v5370
  %v5372 = vpop.f32.mrb[0].mxu0
  %5373 = vmatprep.mubr.f32.mxu0 0.0
  %5374 = vmatmul.mubr.f32.gmra.mrb[0].mxu0 %v5014
  %v5375 = vpop.f32.mrb[0].mxu0
  %v5376 = vadd.f32 %v5302, %v5375
  %v5377 = vpop.f32.mrb[0].mxu0
  %5378 = vmatprep.mubr.f32.mxu0 0.0
  %5379 = vmatmul.mubr.f32.gmra.mrb[0].mxu0 %v5017
  %v5380 = vpop.f32.mrb[0].mxu0
  %v5381 = vadd.f32 %v5302, %v5380
  %v5382 = vpop.f32.mrb[0].mxu0
  %5383 = vmatprep.mubr.f32.mxu0 0.0
  %5384 = vmatmul.mubr.f32.gmra.mrb[0].mxu0 %v5020
  %v5385 = vpop.f32.mrb[0].mxu0
  %v5386 = vadd.f32 %v5302, %v5385
  %v5387 = vpop.f32.mrb[0].mxu0
  %5388 = vmatprep.mubr.f32.mxu0 0.0
  %5389 = vmatmul.mubr.f32.gmra.mrb[0].mxu0 %v5023
  %v5390 = vpop.f32.mrb[0].mxu0
  %v5391 = vadd.f32 %v5302, %v5390
  %v5392 = vpop.f32.mrb[0].mxu0
  %5393 = vmatprep.mubr.f32.mxu0 0.0
  %5394 = vmatmul.mubr.f32.gmra.mrb[0].mxu0 %v5026
  %v5395 = vpop.f32.mrb[0].mxu0
  %v5396 = vadd.f32 %v5302, %v5395
  %v5397 = vpop.f32.mrb[0].mxu0
  %5398 = vmatprep.mubr.f32.mxu0 0.0
  %5399 = vmatmul.mubr.f32.gmra.mrb[0].mxu0 %v5029
  %v5400 = vpop.f32.mrb[0].mxu0
  %v5401 = vadd.f32 %v5302, %v5400
  %v5402 = vpop.f32.mrb[0].mxu0
  %5403 = vmatprep.mubr.f32.mxu0 0.0
  %5404 = vmatmul.mubr.f32.gmra.mrb[0].mxu0 %v5032
  %v5405 = vpop.f32.mrb[0].mxu0
  %v5406 = vadd.f32 %v5302, %v5405
  %v5407 = vpop.f32.mrb[0].mxu0
  %5408 = vmatprep.mubr.f32.mxu0 0.0
  %5409 = vmatmul.mubr.f32.gmra.mrb[0].mxu0 %v5035
  %v5410 = vpop.f32.mrb[0].mxu0
  %v5411 = vadd.f32 %v5302, %v5410
  %v5412 = vpop.f32.mrb[0].mxu0
  %5413 = vmatprep.mubr.f32.mxu0 0.0
  %5414 = vmatmul.mubr.f32.gmra.mrb[0].mxu0 %v5038
  %v5415 = vpop.f32.mrb[0].mxu0
  %v5416 = vadd.f32 %v5302, %v5415
  %v5417 = vpop.f32.mrb[0].mxu0
  %5418 = vdwg.mxu0
  %v5420 = vsel %vm668, %v5107, 0
  %v5423 = vsel %vm668, %v5112, 0
  %v5426 = vsel %vm668, %v5117, 0
  %v5429 = vsel %vm668, %v5122, 0
  %v5432 = vsel %vm668, %v5127, 0
  %v5435 = vsel %vm668, %v5132, 0
  %v5438 = vsel %vm668, %v5137, 0
  %v5441 = vsel %vm668, %v5142, 0
  %v5444 = vsel %vm668, %v5147, 0
  %v5447 = vsel %vm668, %v5152, 0
  %v5450 = vsel %vm668, %v5239, 0
  %v5453 = vsel %vm668, %v5244, 0
  %v5456 = vsel %vm668, %v5249, 0
  %v5459 = vsel %vm668, %v5254, 0
  %v5462 = vsel %vm668, %v5259, 0
  %v5465 = vsel %vm668, %v5264, 0
  %v5468 = vsel %vm668, %v5269, 0
  %v5471 = vsel %vm668, %v5274, 0
  %v5474 = vsel %vm668, %v5279, 0
  %v5477 = vsel %vm668, %v5284, 0
  %5479 = vmatprep.subr.mxu0 0.0
  %5480 = vmatpush1.xpose.msra.mxu0 %v5450
  %5481 = vmatprep.subr.mxu0 0.0
  %5482 = vmatpush1.xpose.msra.mxu0 %v5453
  %5483 = vmatprep.subr.mxu0 0.0
  %5484 = vmatpush1.xpose.msra.mxu0 %v5456
  %5485 = vmatprep.subr.mxu0 0.0
  %5486 = vmatpush1.xpose.msra.mxu0 %v5459
  %5487 = vmatprep.subr.mxu0 0.0
  %5488 = vmatpush1.xpose.msra.mxu0 %v5462
  %5489 = vmatprep.subr.mxu0 0.0
  %5490 = vmatpush1.xpose.msra.mxu0 %v5465
  %5491 = vmatprep.subr.mxu0 0.0
  %5492 = vmatpush1.xpose.msra.mxu0 %v5468
  %5493 = vmatprep.subr.mxu0 0.0
  %5494 = vmatpush1.xpose.msra.mxu0 %v5471
  %5495 = vmatprep.subr.mxu0 0.0
  %5496 = vmatpush1.xpose.msra.mxu0 %v5474
  %5497 = vmatprep.subr.mxu0 0.0
  %5498 = vmatpush1.xpose.msra.mxu0 %v5477
  %5499 = vmatprep.subr.mxu0 0.0
  %5500 = vmatpush1.xpose.msra.mxu0 0.0
  %5501 = vmatprep.subr.mxu0 0.0
  %5502 = vmatpush1.xpose.msra.mxu0 0.0
  %5503 = vmatprep.subr.mxu0 0.0
  %5504 = vmatpush1.xpose.msra.mxu0 0.0
  %5505 = vmatprep.subr.mxu0 0.0
  %5506 = vmatpush1.xpose.msra.mxu0 0.0
  %5507 = vmatprep.subr.mxu0 0.0
  %5508 = vmatpush1.xpose.msra.mxu0 0.0
  %5509 = vmatprep.subr.mxu0 0.0
  %5510 = vmatpush1.xpose.msra.mxu0 0.0
  %5511 = vmatprep.subr.mxu0 0.0
  %5512 = vmatpush1.xpose.msra.mxu0 0.0
  %5513 = vmatprep.subr.mxu0 0.0
  %5514 = vmatpush1.xpose.msra.mxu0 0.0
  %5515 = vmatprep.subr.mxu0 0.0
  %5516 = vmatpush1.xpose.msra.mxu0 0.0
  %5517 = vmatprep.subr.mxu0 0.0
  %5518 = vmatpush1.xpose.msra.mxu0 0.0
  %5519 = vmatprep.subr.mxu0 0.0
  %5520 = vmatpush1.xpose.msra.mxu0 0.0
  %5521 = vmatprep.subr.mxu0 0.0
  %5522 = vmatpush1.xpose.msra.mxu0 0.0
  %5523 = vmatprep.subr.mxu0 0.0
  %5524 = vmatpush1.xpose.msra.mxu0 0.0
  %5525 = vmatprep.subr.mxu0 0.0
  %5526 = vmatpush1.xpose.msra.mxu0 0.0
  %5527 = vmatprep.subr.mxu0 0.0
  %5528 = vmatpush1.xpose.msra.mxu0 0.0
  %5529 = vmatprep.subr.mxu0 0.0
  %5530 = vmatpush1.xpose.msra.mxu0 0.0
  %5531 = vmatprep.subr.mxu0 0.0
  %5532 = vmatpush1.xpose.msra.mxu0 0.0
  %5533 = vmatprep.subr.mxu0 0.0
  %5534 = vmatpush1.xpose.msra.mxu0 0.0
  %5535 = vmatprep.subr.mxu0 0.0
  %5536 = vmatpush1.xpose.msra.mxu0 0.0
  %5537 = vmatprep.subr.mxu0 0.0
  %5538 = vmatpush1.xpose.msra.mxu0 0.0
  %5539 = vmatprep.subr.mxu0 0.0
  %5540 = vmatpush1.xpose.msra.mxu0 0.0
  %5541 = vmatprep.subr.mxu0 0.0
  %5542 = vmatpush1.xpose.msra.mxu0 0.0
  %5543 = vmatprep.mubr.f32.mxu0 0.0
  %5544 = vmatmul.mubr.f32.gmra.mrb[0].mxu0 %v5420
  %v5545 = vpop.f32.mrb[0].mxu0
  %v5546 = vadd.f32 %v81, %v5545
  %v5547 = vpop.f32.mrb[0].mxu0
  %5548 = vmatprep.mubr.f32.mxu0 0.0
  %5549 = vmatmul.mubr.f32.gmra.mrb[0].mxu0 %v5423
  %v5550 = vpop.f32.mrb[0].mxu0
  %v5551 = vadd.f32 %v81, %v5550
  %v5552 = vpop.f32.mrb[0].mxu0
  %5553 = vmatprep.mubr.f32.mxu0 0.0
  %5554 = vmatmul.mubr.f32.gmra.mrb[0].mxu0 %v5426
  %v5555 = vpop.f32.mrb[0].mxu0
  %v5556 = vadd.f32 %v81, %v5555
  %v5557 = vpop.f32.mrb[0].mxu0
  %5558 = vmatprep.mubr.f32.mxu0 0.0
  %5559 = vmatmul.mubr.f32.gmra.mrb[0].mxu0 %v5429
  %v5560 = vpop.f32.mrb[0].mxu0
  %v5561 = vadd.f32 %v81, %v5560
  %v5562 = vpop.f32.mrb[0].mxu0
  %5563 = vmatprep.mubr.f32.mxu0 0.0
  %5564 = vmatmul.mubr.f32.gmra.mrb[0].mxu0 %v5432
  %v5565 = vpop.f32.mrb[0].mxu0
  %v5566 = vadd.f32 %v81, %v5565
  %v5567 = vpop.f32.mrb[0].mxu0
  %5568 = vmatprep.mubr.f32.mxu0 0.0
  %5569 = vmatmul.mubr.f32.gmra.mrb[0].mxu0 %v5435
  %v5570 = vpop.f32.mrb[0].mxu0
  %v5571 = vadd.f32 %v81, %v5570
  %v5572 = vpop.f32.mrb[0].mxu0
  %5573 = vmatprep.mubr.f32.mxu0 0.0
  %5574 = vmatmul.mubr.f32.gmra.mrb[0].mxu0 %v5438
  %v5575 = vpop.f32.mrb[0].mxu0
  %v5576 = vadd.f32 %v81, %v5575
  %v5577 = vpop.f32.mrb[0].mxu0
  %5578 = vmatprep.mubr.f32.mxu0 0.0
  %5579 = vmatmul.mubr.f32.gmra.mrb[0].mxu0 %v5441
  %v5580 = vpop.f32.mrb[0].mxu0
  %v5581 = vadd.f32 %v81, %v5580
  %v5582 = vpop.f32.mrb[0].mxu0
  %5583 = vmatprep.mubr.f32.mxu0 0.0
  %5584 = vmatmul.mubr.f32.gmra.mrb[0].mxu0 %v5444
  %v5585 = vpop.f32.mrb[0].mxu0
  %v5586 = vadd.f32 %v81, %v5585
  %v5587 = vpop.f32.mrb[0].mxu0
  %5588 = vmatprep.mubr.f32.mxu0 0.0
  %5589 = vmatmul.mubr.f32.gmra.mrb[0].mxu0 %v5447
  %v5590 = vpop.f32.mrb[0].mxu0
  %v5591 = vadd.f32 %v81, %v5590
  %v5592 = vpop.f32.mrb[0].mxu0
  %5593 = vdwg.mxu0
  %v5594 = vsel %vm844, %v5546, -inf
  %5595 = vmax.xlane.f32.xlu0 %v5594
  %v5596 = vpop.xlane.xlu0 %5595
  %v5597 = vsel %vm844, %v5551, -inf
  %5598 = vmax.xlane.f32.xlu0 %v5597
  %v5599 = vpop.xlane.xlu0 %5598
  %v5600 = vsel %vm844, %v5556, -inf
  %5601 = vmax.xlane.f32.xlu0 %v5600
  %v5602 = vpop.xlane.xlu0 %5601
  %v5603 = vsel %vm844, %v5561, -inf
  %5604 = vmax.xlane.f32.xlu0 %v5603
  %v5605 = vpop.xlane.xlu0 %5604
  %v5606 = vsel %vm844, %v5566, -inf
  %5607 = vmax.xlane.f32.xlu0 %v5606
  %v5608 = vpop.xlane.xlu0 %5607
  %v5609 = vsel %vm844, %v5571, -inf
  %5610 = vmax.xlane.f32.xlu0 %v5609
  %v5611 = vpop.xlane.xlu0 %5610
  %v5612 = vsel %vm844, %v5576, -inf
  %5613 = vmax.xlane.f32.xlu0 %v5612
  %v5614 = vpop.xlane.xlu0 %5613
  %v5615 = vsel %vm844, %v5581, -inf
  %5616 = vmax.xlane.f32.xlu0 %v5615
  %v5617 = vpop.xlane.xlu0 %5616
  %v5618 = vsel %vm844, %v5586, -inf
  %5619 = vmax.xlane.f32.xlu0 %v5618
  %v5620 = vpop.xlane.xlu0 %5619
  %v5621 = vsel %vm844, %v5591, -inf
  %5622 = vmax.xlane.f32.xlu0 %v5621
  %v5623 = vpop.xlane.xlu0 %5622
  %v5624 = vsub.f32 %v5546, %v5596
  %v5625 = vsub.f32 %v5551, %v5599
  %v5626 = vsub.f32 %v5556, %v5602
  %v5627 = vsub.f32 %v5561, %v5605
  %v5628 = vsub.f32 %v5566, %v5608
  %v5629 = vsub.f32 %v5571, %v5611
  %v5630 = vsub.f32 %v5576, %v5614
  %v5631 = vsub.f32 %v5581, %v5617
  %v5632 = vsub.f32 %v5586, %v5620
  %v5633 = vsub.f32 %v5591, %v5623
  %v5634 = vmul.f32 %v5624, 1.442695
  %v5635 = vpow.pop %v5634
  %v5636 = vmul.f32 %v5625, 1.442695
  %v5637 = vpow.pop %v5636
  %v5638 = vmul.f32 %v5626, 1.442695
  %v5639 = vpow.pop %v5638
  %v5640 = vmul.f32 %v5627, 1.442695
  %v5641 = vpow.pop %v5640
  %v5642 = vmul.f32 %v5628, 1.442695
  %v5643 = vpow.pop %v5642
  %v5644 = vmul.f32 %v5629, 1.442695
  %v5645 = vpow.pop %v5644
  %v5646 = vmul.f32 %v5630, 1.442695
  %v5647 = vpow.pop %v5646
  %v5648 = vmul.f32 %v5631, 1.442695
  %v5649 = vpow.pop %v5648
  %v5650 = vmul.f32 %v5632, 1.442695
  %v5651 = vpow.pop %v5650
  %v5652 = vmul.f32 %v5633, 1.442695
  %v5653 = vpow.pop %v5652
  %v5654 = vsel %vm844, %v5635, 0.0
  %5655 = vadd.xlane.f32.xlu0 %v5654
  %v5656 = vpop.xlane.xlu0 %5655
  %v5657 = vsel %vm844, %v5637, 0.0
  %5658 = vadd.xlane.f32.xlu0 %v5657
  %v5659 = vpop.xlane.xlu0 %5658
  %v5660 = vsel %vm844, %v5639, 0.0
  %5661 = vadd.xlane.f32.xlu0 %v5660
  %v5662 = vpop.xlane.xlu0 %5661
  %v5663 = vsel %vm844, %v5641, 0.0
  %5664 = vadd.xlane.f32.xlu0 %v5663
  %v5665 = vpop.xlane.xlu0 %5664
  %v5666 = vsel %vm844, %v5643, 0.0
  %5667 = vadd.xlane.f32.xlu0 %v5666
  %v5668 = vpop.xlane.xlu0 %5667
  %v5669 = vsel %vm844, %v5645, 0.0
  %5670 = vadd.xlane.f32.xlu0 %v5669
  %v5671 = vpop.xlane.xlu0 %5670
  %v5672 = vsel %vm844, %v5647, 0.0
  %5673 = vadd.xlane.f32.xlu0 %v5672
  %v5674 = vpop.xlane.xlu0 %5673
  %v5675 = vsel %vm844, %v5649, 0.0
  %5676 = vadd.xlane.f32.xlu0 %v5675
  %v5677 = vpop.xlane.xlu0 %5676
  %v5678 = vsel %vm844, %v5651, 0.0
  %5679 = vadd.xlane.f32.xlu0 %v5678
  %v5680 = vpop.xlane.xlu0 %5679
  %v5681 = vsel %vm844, %v5653, 0.0
  %5682 = vadd.xlane.f32.xlu0 %v5681
  %v5683 = vpop.xlane.xlu0 %5682
  %v5684 = vrcp.pop %v5656
  %v5685 = vrcp.pop %v5659
  %v5686 = vrcp.pop %v5662
  %v5687 = vrcp.pop %v5665
  %v5688 = vrcp.pop %v5668
  %v5689 = vrcp.pop %v5671
  %v5690 = vrcp.pop %v5674
  %v5691 = vrcp.pop %v5677
  %v5692 = vrcp.pop %v5680
  %v5693 = vrcp.pop %v5683
  %v5694 = vmul.f32 %v5635, %v5684
  %v5695 = vmul.f32 %v5637, %v5685
  %v5696 = vmul.f32 %v5639, %v5686
  %v5697 = vmul.f32 %v5641, %v5687
  %v5698 = vmul.f32 %v5643, %v5688
  %v5699 = vmul.f32 %v5645, %v5689
  %v5700 = vmul.f32 %v5647, %v5690
  %v5701 = vmul.f32 %v5649, %v5691
  %v5702 = vmul.f32 %v5651, %v5692
  %v5703 = vmul.f32 %v5653, %v5693
  %v5705 = vsel %vm844, %v5694, 0
  %v5708 = vsel %vm844, %v5695, 0
  %v5711 = vsel %vm844, %v5696, 0
  %v5714 = vsel %vm844, %v5697, 0
  %v5717 = vsel %vm844, %v5698, 0
  %v5720 = vsel %vm844, %v5699, 0
  %v5723 = vsel %vm844, %v5700, 0
  %v5726 = vsel %vm844, %v5701, 0
  %v5729 = vsel %vm844, %v5702, 0
  %v5732 = vsel %vm844, %v5703, 0
  %5734 = vmatprep.subr.mxu0 0.0
  %5735 = vmatpush1.msra.mxu0 %v5371
  %5736 = vmatprep.subr.mxu0 0.0
  %5737 = vmatpush1.msra.mxu0 %v5376
  %5738 = vmatprep.subr.mxu0 0.0
  %5739 = vmatpush1.msra.mxu0 %v5381
  %5740 = vmatprep.subr.mxu0 0.0
  %5741 = vmatpush1.msra.mxu0 %v5386
  %5742 = vmatprep.subr.mxu0 0.0
  %5743 = vmatpush1.msra.mxu0 %v5391
  %5744 = vmatprep.subr.mxu0 0.0
  %5745 = vmatpush1.msra.mxu0 %v5396
  %5746 = vmatprep.subr.mxu0 0.0
  %5747 = vmatpush1.msra.mxu0 %v5401
  %5748 = vmatprep.subr.mxu0 0.0
  %5749 = vmatpush1.msra.mxu0 %v5406
  %5750 = vmatprep.subr.mxu0 0.0
  %5751 = vmatpush1.msra.mxu0 %v5411
  %5752 = vmatprep.subr.mxu0 0.0
  %5753 = vmatpush1.msra.mxu0 %v5416
  %5754 = vmatprep.subr.mxu0 0.0
  %5755 = vmatpush1.msra.mxu0 0.0
  %5756 = vmatprep.subr.mxu0 0.0
  %5757 = vmatpush1.msra.mxu0 0.0
  %5758 = vmatprep.subr.mxu0 0.0
  %5759 = vmatpush1.msra.mxu0 0.0
  %5760 = vmatprep.subr.mxu0 0.0
  %5761 = vmatpush1.msra.mxu0 0.0
  %5762 = vmatprep.subr.mxu0 0.0
  %5763 = vmatpush1.msra.mxu0 0.0
  %5764 = vmatprep.subr.mxu0 0.0
  %5765 = vmatpush1.msra.mxu0 0.0
  %5766 = vmatprep.subr.mxu0 0.0
  %5767 = vmatpush1.msra.mxu0 0.0
  %5768 = vmatprep.subr.mxu0 0.0
  %5769 = vmatpush1.msra.mxu0 0.0
  %5770 = vmatprep.subr.mxu0 0.0
  %5771 = vmatpush1.msra.mxu0 0.0
  %5772 = vmatprep.subr.mxu0 0.0
  %5773 = vmatpush1.msra.mxu0 0.0
  %5774 = vmatprep.subr.mxu0 0.0
  %5775 = vmatpush1.msra.mxu0 0.0
  %5776 = vmatprep.subr.mxu0 0.0
  %5777 = vmatpush1.msra.mxu0 0.0
  %5778 = vmatprep.subr.mxu0 0.0
  %5779 = vmatpush1.msra.mxu0 0.0
  %5780 = vmatprep.subr.mxu0 0.0
  %5781 = vmatpush1.msra.mxu0 0.0
  %5782 = vmatprep.subr.mxu0 0.0
  %5783 = vmatpush1.msra.mxu0 0.0
  %5784 = vmatprep.subr.mxu0 0.0
  %5785 = vmatpush1.msra.mxu0 0.0
  %5786 = vmatprep.subr.mxu0 0.0
  %5787 = vmatpush1.msra.mxu0 0.0
  %5788 = vmatprep.subr.mxu0 0.0
  %5789 = vmatpush1.msra.mxu0 0.0
  %5790 = vmatprep.subr.mxu0 0.0
  %5791 = vmatpush1.msra.mxu0 0.0
  %5792 = vmatprep.subr.mxu0 0.0
  %5793 = vmatpush1.msra.mxu0 0.0
  %5794 = vmatprep.subr.mxu0 0.0
  %5795 = vmatpush1.msra.mxu0 0.0
  %5796 = vmatprep.subr.mxu0 0.0
  %5797 = vmatpush1.msra.mxu0 0.0
  %5798 = vmatprep.mubr.f32.mxu0 0.0
  %5799 = vmatmul.mubr.f32.gmra.mrb[0].mxu0 %v5705
  %v5800 = vpop.f32.mrb[0].mxu0
  %v5801 = vadd.f32 0.0, %v5800
  %v5802 = vpop.f32.mrb[0].mxu0
  %5803 = vmatprep.mubr.f32.mxu0 0.0
  %5804 = vmatmul.mubr.f32.gmra.mrb[0].mxu0 %v5708
  %v5805 = vpop.f32.mrb[0].mxu0
  %v5806 = vadd.f32 0.0, %v5805
  %v5807 = vpop.f32.mrb[0].mxu0
  %5808 = vmatprep.mubr.f32.mxu0 0.0
  %5809 = vmatmul.mubr.f32.gmra.mrb[0].mxu0 %v5711
  %v5810 = vpop.f32.mrb[0].mxu0
  %v5811 = vadd.f32 0.0, %v5810
  %v5812 = vpop.f32.mrb[0].mxu0
  %5813 = vmatprep.mubr.f32.mxu0 0.0
  %5814 = vmatmul.mubr.f32.gmra.mrb[0].mxu0 %v5714
  %v5815 = vpop.f32.mrb[0].mxu0
  %v5816 = vadd.f32 0.0, %v5815
  %v5817 = vpop.f32.mrb[0].mxu0
  %5818 = vmatprep.mubr.f32.mxu0 0.0
  %5819 = vmatmul.mubr.f32.gmra.mrb[0].mxu0 %v5717
  %v5820 = vpop.f32.mrb[0].mxu0
  %v5821 = vadd.f32 0.0, %v5820
  %v5822 = vpop.f32.mrb[0].mxu0
  %5823 = vmatprep.mubr.f32.mxu0 0.0
  %5824 = vmatmul.mubr.f32.gmra.mrb[0].mxu0 %v5720
  %v5825 = vpop.f32.mrb[0].mxu0
  %v5826 = vadd.f32 0.0, %v5825
  %v5827 = vpop.f32.mrb[0].mxu0
  %5828 = vmatprep.mubr.f32.mxu0 0.0
  %5829 = vmatmul.mubr.f32.gmra.mrb[0].mxu0 %v5723
  %v5830 = vpop.f32.mrb[0].mxu0
  %v5831 = vadd.f32 0.0, %v5830
  %v5832 = vpop.f32.mrb[0].mxu0
  %5833 = vmatprep.mubr.f32.mxu0 0.0
  %5834 = vmatmul.mubr.f32.gmra.mrb[0].mxu0 %v5726
  %v5835 = vpop.f32.mrb[0].mxu0
  %v5836 = vadd.f32 0.0, %v5835
  %v5837 = vpop.f32.mrb[0].mxu0
  %5838 = vmatprep.mubr.f32.mxu0 0.0
  %5839 = vmatmul.mubr.f32.gmra.mrb[0].mxu0 %v5729
  %v5840 = vpop.f32.mrb[0].mxu0
  %v5841 = vadd.f32 0.0, %v5840
  %v5842 = vpop.f32.mrb[0].mxu0
  %5843 = vmatprep.mubr.f32.mxu0 0.0
  %5844 = vmatmul.mubr.f32.gmra.mrb[0].mxu0 %v5732
  %v5845 = vpop.f32.mrb[0].mxu0
  %v5846 = vadd.f32 0.0, %v5845
  %v5847 = vpop.f32.mrb[0].mxu0
  %5848 = vdwg.mxu0
  %s5849 = scalar_lea.vmem %s9, 64
  %v5850 = vld [vmem:[%s5849] sm:$0xff]
  %v5851 = vld [vmem:[%s5849 + $0x8] sm:$0xff]
  %s5852 = scalar_lea.vmem %s3, 320
  %v5853 = vld [vmem:[%s5852] sm:$0xff]
  %v5854 = vld [vmem:[%s5852 + $0x8] sm:$0xff]
  %v5855 = vld [vmem:[%s5852 + $0x10] sm:$0xff]
  %v5856 = vld [vmem:[%s5852 + $0x18] sm:$0xff]
  %v5857 = vld [vmem:[%s5852 + $0x20] sm:$0xff]
  %v5858 = vld [vmem:[%s5852 + $0x28] sm:$0xff]
  %v5859 = vld [vmem:[%s5852 + $0x30] sm:$0xff]
  %v5860 = vld [vmem:[%s5852 + $0x38] sm:$0xff]
  %s5861 = scalar_lea.vmem %s4, 5
  %v5862 = vld [vmem:[%s5861] sm:$0x1]
  %v5864 = vlaneseq
  %v5865 = vshrl.u32 %v5864, 7
  %v5866 = vsub.s32 0, %v5865
  %v5867 = vrot.slane %v5862, %v5866
  %5869 = vmatprep.subr.mxu0 0.0
  %5870 = vmatpush1.msra.mxu0 %v5853
  %5871 = vmatprep.subr.mxu0 0.0
  %5872 = vmatpush1.msra.mxu0 %v5854
  %5873 = vmatprep.subr.mxu0 0.0
  %5874 = vmatpush1.msra.mxu0 %v5855
  %5875 = vmatprep.subr.mxu0 0.0
  %5876 = vmatpush1.msra.mxu0 %v5856
  %5877 = vmatprep.subr.mxu0 0.0
  %5878 = vmatpush1.msra.mxu0 %v5857
  %5879 = vmatprep.subr.mxu0 0.0
  %5880 = vmatpush1.msra.mxu0 %v5858
  %5881 = vmatprep.subr.mxu0 0.0
  %5882 = vmatpush1.msra.mxu0 %v5859
  %5883 = vmatprep.subr.mxu0 0.0
  %5884 = vmatpush1.msra.mxu0 %v5860
  %5885 = vmatprep.subr.mxu0 0.0
  %5886 = vmatpush1.msra.mxu0 0.0
  %5887 = vmatprep.subr.mxu0 0.0
  %5888 = vmatpush1.msra.mxu0 0.0
  %5889 = vmatprep.subr.mxu0 0.0
  %5890 = vmatpush1.msra.mxu0 0.0
  %5891 = vmatprep.subr.mxu0 0.0
  %5892 = vmatpush1.msra.mxu0 0.0
  %5893 = vmatprep.subr.mxu0 0.0
  %5894 = vmatpush1.msra.mxu0 0.0
  %5895 = vmatprep.subr.mxu0 0.0
  %5896 = vmatpush1.msra.mxu0 0.0
  %5897 = vmatprep.subr.mxu0 0.0
  %5898 = vmatpush1.msra.mxu0 0.0
  %5899 = vmatprep.subr.mxu0 0.0
  %5900 = vmatpush1.msra.mxu0 0.0
  %5901 = vmatprep.subr.mxu0 0.0
  %5902 = vmatpush1.msra.mxu0 0.0
  %5903 = vmatprep.subr.mxu0 0.0
  %5904 = vmatpush1.msra.mxu0 0.0
  %5905 = vmatprep.subr.mxu0 0.0
  %5906 = vmatpush1.msra.mxu0 0.0
  %5907 = vmatprep.subr.mxu0 0.0
  %5908 = vmatpush1.msra.mxu0 0.0
  %5909 = vmatprep.subr.mxu0 0.0
  %5910 = vmatpush1.msra.mxu0 0.0
  %5911 = vmatprep.subr.mxu0 0.0
  %5912 = vmatpush1.msra.mxu0 0.0
  %5913 = vmatprep.subr.mxu0 0.0
  %5914 = vmatpush1.msra.mxu0 0.0
  %5915 = vmatprep.subr.mxu0 0.0
  %5916 = vmatpush1.msra.mxu0 0.0
  %5917 = vmatprep.subr.mxu0 0.0
  %5918 = vmatpush1.msra.mxu0 0.0
  %5919 = vmatprep.subr.mxu0 0.0
  %5920 = vmatpush1.msra.mxu0 0.0
  %5921 = vmatprep.subr.mxu0 0.0
  %5922 = vmatpush1.msra.mxu0 0.0
  %5923 = vmatprep.subr.mxu0 0.0
  %5924 = vmatpush1.msra.mxu0 0.0
  %5925 = vmatprep.subr.mxu0 0.0
  %5926 = vmatpush1.msra.mxu0 0.0
  %5927 = vmatprep.subr.mxu0 0.0
  %5928 = vmatpush1.msra.mxu0 0.0
  %5929 = vmatprep.subr.mxu0 0.0
  %5930 = vmatpush1.msra.mxu0 0.0
  %5931 = vmatprep.subr.mxu0 0.0
  %5932 = vmatpush1.msra.mxu0 0.0
  %5933 = vmatprep.mubr.f32.mxu0 0.0
  %5934 = vmatmul.mubr.f32.gmra.mrb[0].mxu0 %v5011
  %v5935 = vpop.f32.mrb[0].mxu0
  %v5936 = vadd.f32 %v5867, %v5935
  %v5937 = vpop.f32.mrb[0].mxu0
  %5938 = vmatprep.mubr.f32.mxu0 0.0
  %5939 = vmatmul.mubr.f32.gmra.mrb[0].mxu0 %v5014
  %v5940 = vpop.f32.mrb[0].mxu0
  %v5941 = vadd.f32 %v5867, %v5940
  %v5942 = vpop.f32.mrb[0].mxu0
  %5943 = vmatprep.mubr.f32.mxu0 0.0
  %5944 = vmatmul.mubr.f32.gmra.mrb[0].mxu0 %v5017
  %v5945 = vpop.f32.mrb[0].mxu0
  %v5946 = vadd.f32 %v5867, %v5945
  %v5947 = vpop.f32.mrb[0].mxu0
  %5948 = vmatprep.mubr.f32.mxu0 0.0
  %5949 = vmatmul.mubr.f32.gmra.mrb[0].mxu0 %v5020
  %v5950 = vpop.f32.mrb[0].mxu0
  %v5951 = vadd.f32 %v5867, %v5950
  %v5952 = vpop.f32.mrb[0].mxu0
  %5953 = vmatprep.mubr.f32.mxu0 0.0
  %5954 = vmatmul.mubr.f32.gmra.mrb[0].mxu0 %v5023
  %v5955 = vpop.f32.mrb[0].mxu0
  %v5956 = vadd.f32 %v5867, %v5955
  %v5957 = vpop.f32.mrb[0].mxu0
  %5958 = vmatprep.mubr.f32.mxu0 0.0
  %5959 = vmatmul.mubr.f32.gmra.mrb[0].mxu0 %v5026
  %v5960 = vpop.f32.mrb[0].mxu0
  %v5961 = vadd.f32 %v5867, %v5960
  %v5962 = vpop.f32.mrb[0].mxu0
  %5963 = vmatprep.mubr.f32.mxu0 0.0
  %5964 = vmatmul.mubr.f32.gmra.mrb[0].mxu0 %v5029
  %v5965 = vpop.f32.mrb[0].mxu0
  %v5966 = vadd.f32 %v5867, %v5965
  %v5967 = vpop.f32.mrb[0].mxu0
  %5968 = vmatprep.mubr.f32.mxu0 0.0
  %5969 = vmatmul.mubr.f32.gmra.mrb[0].mxu0 %v5032
  %v5970 = vpop.f32.mrb[0].mxu0
  %v5971 = vadd.f32 %v5867, %v5970
  %v5972 = vpop.f32.mrb[0].mxu0
  %5973 = vmatprep.mubr.f32.mxu0 0.0
  %5974 = vmatmul.mubr.f32.gmra.mrb[0].mxu0 %v5035
  %v5975 = vpop.f32.mrb[0].mxu0
  %v5976 = vadd.f32 %v5867, %v5975
  %v5977 = vpop.f32.mrb[0].mxu0
  %5978 = vmatprep.mubr.f32.mxu0 0.0
  %5979 = vmatmul.mubr.f32.gmra.mrb[0].mxu0 %v5038
  %v5980 = vpop.f32.mrb[0].mxu0
  %v5981 = vadd.f32 %v5867, %v5980
  %v5982 = vpop.f32.mrb[0].mxu0
  %5983 = vdwg.mxu0
  %s5984 = scalar_lea.vmem %s5, 320
  %v5985 = vld [vmem:[%s5984] sm:$0xff]
  %v5986 = vld [vmem:[%s5984 + $0x8] sm:$0xff]
  %v5987 = vld [vmem:[%s5984 + $0x10] sm:$0xff]
  %v5988 = vld [vmem:[%s5984 + $0x18] sm:$0xff]
  %v5989 = vld [vmem:[%s5984 + $0x20] sm:$0xff]
  %v5990 = vld [vmem:[%s5984 + $0x28] sm:$0xff]
  %v5991 = vld [vmem:[%s5984 + $0x30] sm:$0xff]
  %v5992 = vld [vmem:[%s5984 + $0x38] sm:$0xff]
  %s5993 = scalar_lea.vmem %s6, 5
  %v5994 = vld [vmem:[%s5993] sm:$0x1]
  %v5996 = vlaneseq
  %v5997 = vshrl.u32 %v5996, 7
  %v5998 = vsub.s32 0, %v5997
  %v5999 = vrot.slane %v5994, %v5998
  %6001 = vmatprep.subr.mxu0 0.0
  %6002 = vmatpush1.msra.mxu0 %v5985
  %6003 = vmatprep.subr.mxu0 0.0
  %6004 = vmatpush1.msra.mxu0 %v5986
  %6005 = vmatprep.subr.mxu0 0.0
  %6006 = vmatpush1.msra.mxu0 %v5987
  %6007 = vmatprep.subr.mxu0 0.0
  %6008 = vmatpush1.msra.mxu0 %v5988
  %6009 = vmatprep.subr.mxu0 0.0
  %6010 = vmatpush1.msra.mxu0 %v5989
  %6011 = vmatprep.subr.mxu0 0.0
  %6012 = vmatpush1.msra.mxu0 %v5990
  %6013 = vmatprep.subr.mxu0 0.0
  %6014 = vmatpush1.msra.mxu0 %v5991
  %6015 = vmatprep.subr.mxu0 0.0
  %6016 = vmatpush1.msra.mxu0 %v5992
  %6017 = vmatprep.subr.mxu0 0.0
  %6018 = vmatpush1.msra.mxu0 0.0
  %6019 = vmatprep.subr.mxu0 0.0
  %6020 = vmatpush1.msra.mxu0 0.0
  %6021 = vmatprep.subr.mxu0 0.0
  %6022 = vmatpush1.msra.mxu0 0.0
  %6023 = vmatprep.subr.mxu0 0.0
  %6024 = vmatpush1.msra.mxu0 0.0
  %6025 = vmatprep.subr.mxu0 0.0
  %6026 = vmatpush1.msra.mxu0 0.0
  %6027 = vmatprep.subr.mxu0 0.0
  %6028 = vmatpush1.msra.mxu0 0.0
  %6029 = vmatprep.subr.mxu0 0.0
  %6030 = vmatpush1.msra.mxu0 0.0
  %6031 = vmatprep.subr.mxu0 0.0
  %6032 = vmatpush1.msra.mxu0 0.0
  %6033 = vmatprep.subr.mxu0 0.0
  %6034 = vmatpush1.msra.mxu0 0.0
  %6035 = vmatprep.subr.mxu0 0.0
  %6036 = vmatpush1.msra.mxu0 0.0
  %6037 = vmatprep.subr.mxu0 0.0
  %6038 = vmatpush1.msra.mxu0 0.0
  %6039 = vmatprep.subr.mxu0 0.0
  %6040 = vmatpush1.msra.mxu0 0.0
  %6041 = vmatprep.subr.mxu0 0.0
  %6042 = vmatpush1.msra.mxu0 0.0
  %6043 = vmatprep.subr.mxu0 0.0
  %6044 = vmatpush1.msra.mxu0 0.0
  %6045 = vmatprep.subr.mxu0 0.0
  %6046 = vmatpush1.msra.mxu0 0.0
  %6047 = vmatprep.subr.mxu0 0.0
  %6048 = vmatpush1.msra.mxu0 0.0
  %6049 = vmatprep.subr.mxu0 0.0
  %6050 = vmatpush1.msra.mxu0 0.0
  %6051 = vmatprep.subr.mxu0 0.0
  %6052 = vmatpush1.msra.mxu0 0.0
  %6053 = vmatprep.subr.mxu0 0.0
  %6054 = vmatpush1.msra.mxu0 0.0
  %6055 = vmatprep.subr.mxu0 0.0
  %6056 = vmatpush1.msra.mxu0 0.0
  %6057 = vmatprep.subr.mxu0 0.0
  %6058 = vmatpush1.msra.mxu0 0.0
  %6059 = vmatprep.subr.mxu0 0.0
  %6060 = vmatpush1.msra.mxu0 0.0
  %6061 = vmatprep.subr.mxu0 0.0
  %6062 = vmatpush1.msra.mxu0 0.0
  %6063 = vmatprep.subr.mxu0 0.0
  %6064 = vmatpush1.msra.mxu0 0.0
  %6065 = vmatprep.mubr.f32.mxu0 0.0
  %6066 = vmatmul.mubr.f32.gmra.mrb[0].mxu0 %v5011
  %v6067 = vpop.f32.mrb[0].mxu0
  %v6068 = vadd.f32 %v5999, %v6067
  %v6069 = vpop.f32.mrb[0].mxu0
  %6070 = vmatprep.mubr.f32.mxu0 0.0
  %6071 = vmatmul.mubr.f32.gmra.mrb[0].mxu0 %v5014
  %v6072 = vpop.f32.mrb[0].mxu0
  %v6073 = vadd.f32 %v5999, %v6072
  %v6074 = vpop.f32.mrb[0].mxu0
  %6075 = vmatprep.mubr.f32.mxu0 0.0
  %6076 = vmatmul.mubr.f32.gmra.mrb[0].mxu0 %v5017
  %v6077 = vpop.f32.mrb[0].mxu0
  %v6078 = vadd.f32 %v5999, %v6077
  %v6079 = vpop.f32.mrb[0].mxu0
  %6080 = vmatprep.mubr.f32.mxu0 0.0
  %6081 = vmatmul.mubr.f32.gmra.mrb[0].mxu0 %v5020
  %v6082 = vpop.f32.mrb[0].mxu0
  %v6083 = vadd.f32 %v5999, %v6082
  %v6084 = vpop.f32.mrb[0].mxu0
  %6085 = vmatprep.mubr.f32.mxu0 0.0
  %6086 = vmatmul.mubr.f32.gmra.mrb[0].mxu0 %v5023
  %v6087 = vpop.f32.mrb[0].mxu0
  %v6088 = vadd.f32 %v5999, %v6087
  %v6089 = vpop.f32.mrb[0].mxu0
  %6090 = vmatprep.mubr.f32.mxu0 0.0
  %6091 = vmatmul.mubr.f32.gmra.mrb[0].mxu0 %v5026
  %v6092 = vpop.f32.mrb[0].mxu0
  %v6093 = vadd.f32 %v5999, %v6092
  %v6094 = vpop.f32.mrb[0].mxu0
  %6095 = vmatprep.mubr.f32.mxu0 0.0
  %6096 = vmatmul.mubr.f32.gmra.mrb[0].mxu0 %v5029
  %v6097 = vpop.f32.mrb[0].mxu0
  %v6098 = vadd.f32 %v5999, %v6097
  %v6099 = vpop.f32.mrb[0].mxu0
  %6100 = vmatprep.mubr.f32.mxu0 0.0
  %6101 = vmatmul.mubr.f32.gmra.mrb[0].mxu0 %v5032
  %v6102 = vpop.f32.mrb[0].mxu0
  %v6103 = vadd.f32 %v5999, %v6102
  %v6104 = vpop.f32.mrb[0].mxu0
  %6105 = vmatprep.mubr.f32.mxu0 0.0
  %6106 = vmatmul.mubr.f32.gmra.mrb[0].mxu0 %v5035
  %v6107 = vpop.f32.mrb[0].mxu0
  %v6108 = vadd.f32 %v5999, %v6107
  %v6109 = vpop.f32.mrb[0].mxu0
  %6110 = vmatprep.mubr.f32.mxu0 0.0
  %6111 = vmatmul.mubr.f32.gmra.mrb[0].mxu0 %v5038
  %v6112 = vpop.f32.mrb[0].mxu0
  %v6113 = vadd.f32 %v5999, %v6112
  %v6114 = vpop.f32.mrb[0].mxu0
  %6115 = vdwg.mxu0
  %s6116 = scalar_lea.vmem %s7, 320
  %v6117 = vld [vmem:[%s6116] sm:$0xff]
  %v6118 = vld [vmem:[%s6116 + $0x8] sm:$0xff]
  %v6119 = vld [vmem:[%s6116 + $0x10] sm:$0xff]
  %v6120 = vld [vmem:[%s6116 + $0x18] sm:$0xff]
  %v6121 = vld [vmem:[%s6116 + $0x20] sm:$0xff]
  %v6122 = vld [vmem:[%s6116 + $0x28] sm:$0xff]
  %v6123 = vld [vmem:[%s6116 + $0x30] sm:$0xff]
  %v6124 = vld [vmem:[%s6116 + $0x38] sm:$0xff]
  %s6125 = scalar_lea.vmem %s8, 5
  %v6126 = vld [vmem:[%s6125] sm:$0x1]
  %v6128 = vlaneseq
  %v6129 = vshrl.u32 %v6128, 7
  %v6130 = vsub.s32 0, %v6129
  %v6131 = vrot.slane %v6126, %v6130
  %6133 = vmatprep.subr.mxu0 0.0
  %6134 = vmatpush1.msra.mxu0 %v6117
  %6135 = vmatprep.subr.mxu0 0.0
  %6136 = vmatpush1.msra.mxu0 %v6118
  %6137 = vmatprep.subr.mxu0 0.0
  %6138 = vmatpush1.msra.mxu0 %v6119
  %6139 = vmatprep.subr.mxu0 0.0
  %6140 = vmatpush1.msra.mxu0 %v6120
  %6141 = vmatprep.subr.mxu0 0.0
  %6142 = vmatpush1.msra.mxu0 %v6121
  %6143 = vmatprep.subr.mxu0 0.0
  %6144 = vmatpush1.msra.mxu0 %v6122
  %6145 = vmatprep.subr.mxu0 0.0
  %6146 = vmatpush1.msra.mxu0 %v6123
  %6147 = vmatprep.subr.mxu0 0.0
  %6148 = vmatpush1.msra.mxu0 %v6124
  %6149 = vmatprep.subr.mxu0 0.0
  %6150 = vmatpush1.msra.mxu0 0.0
  %6151 = vmatprep.subr.mxu0 0.0
  %6152 = vmatpush1.msra.mxu0 0.0
  %6153 = vmatprep.subr.mxu0 0.0
  %6154 = vmatpush1.msra.mxu0 0.0
  %6155 = vmatprep.subr.mxu0 0.0
  %6156 = vmatpush1.msra.mxu0 0.0
  %6157 = vmatprep.subr.mxu0 0.0
  %6158 = vmatpush1.msra.mxu0 0.0
  %6159 = vmatprep.subr.mxu0 0.0
  %6160 = vmatpush1.msra.mxu0 0.0
  %6161 = vmatprep.subr.mxu0 0.0
  %6162 = vmatpush1.msra.mxu0 0.0
  %6163 = vmatprep.subr.mxu0 0.0
  %6164 = vmatpush1.msra.mxu0 0.0
  %6165 = vmatprep.subr.mxu0 0.0
  %6166 = vmatpush1.msra.mxu0 0.0
  %6167 = vmatprep.subr.mxu0 0.0
  %6168 = vmatpush1.msra.mxu0 0.0
  %6169 = vmatprep.subr.mxu0 0.0
  %6170 = vmatpush1.msra.mxu0 0.0
  %6171 = vmatprep.subr.mxu0 0.0
  %6172 = vmatpush1.msra.mxu0 0.0
  %6173 = vmatprep.subr.mxu0 0.0
  %6174 = vmatpush1.msra.mxu0 0.0
  %6175 = vmatprep.subr.mxu0 0.0
  %6176 = vmatpush1.msra.mxu0 0.0
  %6177 = vmatprep.subr.mxu0 0.0
  %6178 = vmatpush1.msra.mxu0 0.0
  %6179 = vmatprep.subr.mxu0 0.0
  %6180 = vmatpush1.msra.mxu0 0.0
  %6181 = vmatprep.subr.mxu0 0.0
  %6182 = vmatpush1.msra.mxu0 0.0
  %6183 = vmatprep.subr.mxu0 0.0
  %6184 = vmatpush1.msra.mxu0 0.0
  %6185 = vmatprep.subr.mxu0 0.0
  %6186 = vmatpush1.msra.mxu0 0.0
  %6187 = vmatprep.subr.mxu0 0.0
  %6188 = vmatpush1.msra.mxu0 0.0
  %6189 = vmatprep.subr.mxu0 0.0
  %6190 = vmatpush1.msra.mxu0 0.0
  %6191 = vmatprep.subr.mxu0 0.0
  %6192 = vmatpush1.msra.mxu0 0.0
  %6193 = vmatprep.subr.mxu0 0.0
  %6194 = vmatpush1.msra.mxu0 0.0
  %6195 = vmatprep.subr.mxu0 0.0
  %6196 = vmatpush1.msra.mxu0 0.0
  %6197 = vmatprep.mubr.f32.mxu0 0.0
  %6198 = vmatmul.mubr.f32.gmra.mrb[0].mxu0 %v5011
  %v6199 = vpop.f32.mrb[0].mxu0
  %v6200 = vadd.f32 %v6131, %v6199
  %v6201 = vpop.f32.mrb[0].mxu0
  %6202 = vmatprep.mubr.f32.mxu0 0.0
  %6203 = vmatmul.mubr.f32.gmra.mrb[0].mxu0 %v5014
  %v6204 = vpop.f32.mrb[0].mxu0
  %v6205 = vadd.f32 %v6131, %v6204
  %v6206 = vpop.f32.mrb[0].mxu0
  %6207 = vmatprep.mubr.f32.mxu0 0.0
  %6208 = vmatmul.mubr.f32.gmra.mrb[0].mxu0 %v5017
  %v6209 = vpop.f32.mrb[0].mxu0
  %v6210 = vadd.f32 %v6131, %v6209
  %v6211 = vpop.f32.mrb[0].mxu0
  %6212 = vmatprep.mubr.f32.mxu0 0.0
  %6213 = vmatmul.mubr.f32.gmra.mrb[0].mxu0 %v5020
  %v6214 = vpop.f32.mrb[0].mxu0
  %v6215 = vadd.f32 %v6131, %v6214
  %v6216 = vpop.f32.mrb[0].mxu0
  %6217 = vmatprep.mubr.f32.mxu0 0.0
  %6218 = vmatmul.mubr.f32.gmra.mrb[0].mxu0 %v5023
  %v6219 = vpop.f32.mrb[0].mxu0
  %v6220 = vadd.f32 %v6131, %v6219
  %v6221 = vpop.f32.mrb[0].mxu0
  %6222 = vmatprep.mubr.f32.mxu0 0.0
  %6223 = vmatmul.mubr.f32.gmra.mrb[0].mxu0 %v5026
  %v6224 = vpop.f32.mrb[0].mxu0
  %v6225 = vadd.f32 %v6131, %v6224
  %v6226 = vpop.f32.mrb[0].mxu0
  %6227 = vmatprep.mubr.f32.mxu0 0.0
  %6228 = vmatmul.mubr.f32.gmra.mrb[0].mxu0 %v5029
  %v6229 = vpop.f32.mrb[0].mxu0
  %v6230 = vadd.f32 %v6131, %v6229
  %v6231 = vpop.f32.mrb[0].mxu0
  %6232 = vmatprep.mubr.f32.mxu0 0.0
  %6233 = vmatmul.mubr.f32.gmra.mrb[0].mxu0 %v5032
  %v6234 = vpop.f32.mrb[0].mxu0
  %v6235 = vadd.f32 %v6131, %v6234
  %v6236 = vpop.f32.mrb[0].mxu0
  %6237 = vmatprep.mubr.f32.mxu0 0.0
  %6238 = vmatmul.mubr.f32.gmra.mrb[0].mxu0 %v5035
  %v6239 = vpop.f32.mrb[0].mxu0
  %v6240 = vadd.f32 %v6131, %v6239
  %v6241 = vpop.f32.mrb[0].mxu0
  %6242 = vmatprep.mubr.f32.mxu0 0.0
  %6243 = vmatmul.mubr.f32.gmra.mrb[0].mxu0 %v5038
  %v6244 = vpop.f32.mrb[0].mxu0
  %v6245 = vadd.f32 %v6131, %v6244
  %v6246 = vpop.f32.mrb[0].mxu0
  %6247 = vdwg.mxu0
  %v6249 = vsel %vm668, %v5936, 0
  %v6252 = vsel %vm668, %v5941, 0
  %v6255 = vsel %vm668, %v5946, 0
  %v6258 = vsel %vm668, %v5951, 0
  %v6261 = vsel %vm668, %v5956, 0
  %v6264 = vsel %vm668, %v5961, 0
  %v6267 = vsel %vm668, %v5966, 0
  %v6270 = vsel %vm668, %v5971, 0
  %v6273 = vsel %vm668, %v5976, 0
  %v6276 = vsel %vm668, %v5981, 0
  %v6279 = vsel %vm668, %v6068, 0
  %v6282 = vsel %vm668, %v6073, 0
  %v6285 = vsel %vm668, %v6078, 0
  %v6288 = vsel %vm668, %v6083, 0
  %v6291 = vsel %vm668, %v6088, 0
  %v6294 = vsel %vm668, %v6093, 0
  %v6297 = vsel %vm668, %v6098, 0
  %v6300 = vsel %vm668, %v6103, 0
  %v6303 = vsel %vm668, %v6108, 0
  %v6306 = vsel %vm668, %v6113, 0
  %6308 = vmatprep.subr.mxu0 0.0
  %6309 = vmatpush1.xpose.msra.mxu0 %v6279
  %6310 = vmatprep.subr.mxu0 0.0
  %6311 = vmatpush1.xpose.msra.mxu0 %v6282
  %6312 = vmatprep.subr.mxu0 0.0
  %6313 = vmatpush1.xpose.msra.mxu0 %v6285
  %6314 = vmatprep.subr.mxu0 0.0
  %6315 = vmatpush1.xpose.msra.mxu0 %v6288
  %6316 = vmatprep.subr.mxu0 0.0
  %6317 = vmatpush1.xpose.msra.mxu0 %v6291
  %6318 = vmatprep.subr.mxu0 0.0
  %6319 = vmatpush1.xpose.msra.mxu0 %v6294
  %6320 = vmatprep.subr.mxu0 0.0
  %6321 = vmatpush1.xpose.msra.mxu0 %v6297
  %6322 = vmatprep.subr.mxu0 0.0
  %6323 = vmatpush1.xpose.msra.mxu0 %v6300
  %6324 = vmatprep.subr.mxu0 0.0
  %6325 = vmatpush1.xpose.msra.mxu0 %v6303
  %6326 = vmatprep.subr.mxu0 0.0
  %6327 = vmatpush1.xpose.msra.mxu0 %v6306
  %6328 = vmatprep.subr.mxu0 0.0
  %6329 = vmatpush1.xpose.msra.mxu0 0.0
  %6330 = vmatprep.subr.mxu0 0.0
  %6331 = vmatpush1.xpose.msra.mxu0 0.0
  %6332 = vmatprep.subr.mxu0 0.0
  %6333 = vmatpush1.xpose.msra.mxu0 0.0
  %6334 = vmatprep.subr.mxu0 0.0
  %6335 = vmatpush1.xpose.msra.mxu0 0.0
  %6336 = vmatprep.subr.mxu0 0.0
  %6337 = vmatpush1.xpose.msra.mxu0 0.0
  %6338 = vmatprep.subr.mxu0 0.0
  %6339 = vmatpush1.xpose.msra.mxu0 0.0
  %6340 = vmatprep.subr.mxu0 0.0
  %6341 = vmatpush1.xpose.msra.mxu0 0.0
  %6342 = vmatprep.subr.mxu0 0.0
  %6343 = vmatpush1.xpose.msra.mxu0 0.0
  %6344 = vmatprep.subr.mxu0 0.0
  %6345 = vmatpush1.xpose.msra.mxu0 0.0
  %6346 = vmatprep.subr.mxu0 0.0
  %6347 = vmatpush1.xpose.msra.mxu0 0.0
  %6348 = vmatprep.subr.mxu0 0.0
  %6349 = vmatpush1.xpose.msra.mxu0 0.0
  %6350 = vmatprep.subr.mxu0 0.0
  %6351 = vmatpush1.xpose.msra.mxu0 0.0
  %6352 = vmatprep.subr.mxu0 0.0
  %6353 = vmatpush1.xpose.msra.mxu0 0.0
  %6354 = vmatprep.subr.mxu0 0.0
  %6355 = vmatpush1.xpose.msra.mxu0 0.0
  %6356 = vmatprep.subr.mxu0 0.0
  %6357 = vmatpush1.xpose.msra.mxu0 0.0
  %6358 = vmatprep.subr.mxu0 0.0
  %6359 = vmatpush1.xpose.msra.mxu0 0.0
  %6360 = vmatprep.subr.mxu0 0.0
  %6361 = vmatpush1.xpose.msra.mxu0 0.0
  %6362 = vmatprep.subr.mxu0 0.0
  %6363 = vmatpush1.xpose.msra.mxu0 0.0
  %6364 = vmatprep.subr.mxu0 0.0
  %6365 = vmatpush1.xpose.msra.mxu0 0.0
  %6366 = vmatprep.subr.mxu0 0.0
  %6367 = vmatpush1.xpose.msra.mxu0 0.0
  %6368 = vmatprep.subr.mxu0 0.0
  %6369 = vmatpush1.xpose.msra.mxu0 0.0
  %6370 = vmatprep.subr.mxu0 0.0
  %6371 = vmatpush1.xpose.msra.mxu0 0.0
  %6372 = vmatprep.mubr.f32.mxu0 0.0
  %6373 = vmatmul.mubr.f32.gmra.mrb[0].mxu0 %v6249
  %v6374 = vpop.f32.mrb[0].mxu0
  %v6375 = vadd.f32 %v81, %v6374
  %v6376 = vpop.f32.mrb[0].mxu0
  %6377 = vmatprep.mubr.f32.mxu0 0.0
  %6378 = vmatmul.mubr.f32.gmra.mrb[0].mxu0 %v6252
  %v6379 = vpop.f32.mrb[0].mxu0
  %v6380 = vadd.f32 %v81, %v6379
  %v6381 = vpop.f32.mrb[0].mxu0
  %6382 = vmatprep.mubr.f32.mxu0 0.0
  %6383 = vmatmul.mubr.f32.gmra.mrb[0].mxu0 %v6255
  %v6384 = vpop.f32.mrb[0].mxu0
  %v6385 = vadd.f32 %v81, %v6384
  %v6386 = vpop.f32.mrb[0].mxu0
  %6387 = vmatprep.mubr.f32.mxu0 0.0
  %6388 = vmatmul.mubr.f32.gmra.mrb[0].mxu0 %v6258
  %v6389 = vpop.f32.mrb[0].mxu0
  %v6390 = vadd.f32 %v81, %v6389
  %v6391 = vpop.f32.mrb[0].mxu0
  %6392 = vmatprep.mubr.f32.mxu0 0.0
  %6393 = vmatmul.mubr.f32.gmra.mrb[0].mxu0 %v6261
  %v6394 = vpop.f32.mrb[0].mxu0
  %v6395 = vadd.f32 %v81, %v6394
  %v6396 = vpop.f32.mrb[0].mxu0
  %6397 = vmatprep.mubr.f32.mxu0 0.0
  %6398 = vmatmul.mubr.f32.gmra.mrb[0].mxu0 %v6264
  %v6399 = vpop.f32.mrb[0].mxu0
  %v6400 = vadd.f32 %v81, %v6399
  %v6401 = vpop.f32.mrb[0].mxu0
  %6402 = vmatprep.mubr.f32.mxu0 0.0
  %6403 = vmatmul.mubr.f32.gmra.mrb[0].mxu0 %v6267
  %v6404 = vpop.f32.mrb[0].mxu0
  %v6405 = vadd.f32 %v81, %v6404
  %v6406 = vpop.f32.mrb[0].mxu0
  %6407 = vmatprep.mubr.f32.mxu0 0.0
  %6408 = vmatmul.mubr.f32.gmra.mrb[0].mxu0 %v6270
  %v6409 = vpop.f32.mrb[0].mxu0
  %v6410 = vadd.f32 %v81, %v6409
  %v6411 = vpop.f32.mrb[0].mxu0
  %6412 = vmatprep.mubr.f32.mxu0 0.0
  %6413 = vmatmul.mubr.f32.gmra.mrb[0].mxu0 %v6273
  %v6414 = vpop.f32.mrb[0].mxu0
  %v6415 = vadd.f32 %v81, %v6414
  %v6416 = vpop.f32.mrb[0].mxu0
  %6417 = vmatprep.mubr.f32.mxu0 0.0
  %6418 = vmatmul.mubr.f32.gmra.mrb[0].mxu0 %v6276
  %v6419 = vpop.f32.mrb[0].mxu0
  %v6420 = vadd.f32 %v81, %v6419
  %v6421 = vpop.f32.mrb[0].mxu0
  %6422 = vdwg.mxu0
  %v6423 = vsel %vm844, %v6375, -inf
  %6424 = vmax.xlane.f32.xlu0 %v6423
  %v6425 = vpop.xlane.xlu0 %6424
  %v6426 = vsel %vm844, %v6380, -inf
  %6427 = vmax.xlane.f32.xlu0 %v6426
  %v6428 = vpop.xlane.xlu0 %6427
  %v6429 = vsel %vm844, %v6385, -inf
  %6430 = vmax.xlane.f32.xlu0 %v6429
  %v6431 = vpop.xlane.xlu0 %6430
  %v6432 = vsel %vm844, %v6390, -inf
  %6433 = vmax.xlane.f32.xlu0 %v6432
  %v6434 = vpop.xlane.xlu0 %6433
  %v6435 = vsel %vm844, %v6395, -inf
  %6436 = vmax.xlane.f32.xlu0 %v6435
  %v6437 = vpop.xlane.xlu0 %6436
  %v6438 = vsel %vm844, %v6400, -inf
  %6439 = vmax.xlane.f32.xlu0 %v6438
  %v6440 = vpop.xlane.xlu0 %6439
  %v6441 = vsel %vm844, %v6405, -inf
  %6442 = vmax.xlane.f32.xlu0 %v6441
  %v6443 = vpop.xlane.xlu0 %6442
  %v6444 = vsel %vm844, %v6410, -inf
  %6445 = vmax.xlane.f32.xlu0 %v6444
  %v6446 = vpop.xlane.xlu0 %6445
  %v6447 = vsel %vm844, %v6415, -inf
  %6448 = vmax.xlane.f32.xlu0 %v6447
  %v6449 = vpop.xlane.xlu0 %6448
  %v6450 = vsel %vm844, %v6420, -inf
  %6451 = vmax.xlane.f32.xlu0 %v6450
  %v6452 = vpop.xlane.xlu0 %6451
  %v6453 = vsub.f32 %v6375, %v6425
  %v6454 = vsub.f32 %v6380, %v6428
  %v6455 = vsub.f32 %v6385, %v6431
  %v6456 = vsub.f32 %v6390, %v6434
  %v6457 = vsub.f32 %v6395, %v6437
  %v6458 = vsub.f32 %v6400, %v6440
  %v6459 = vsub.f32 %v6405, %v6443
  %v6460 = vsub.f32 %v6410, %v6446
  %v6461 = vsub.f32 %v6415, %v6449
  %v6462 = vsub.f32 %v6420, %v6452
  %v6463 = vmul.f32 %v6453, 1.442695
  %v6464 = vpow.pop %v6463
  %v6465 = vmul.f32 %v6454, 1.442695
  %v6466 = vpow.pop %v6465
  %v6467 = vmul.f32 %v6455, 1.442695
  %v6468 = vpow.pop %v6467
  %v6469 = vmul.f32 %v6456, 1.442695
  %v6470 = vpow.pop %v6469
  %v6471 = vmul.f32 %v6457, 1.442695
  %v6472 = vpow.pop %v6471
  %v6473 = vmul.f32 %v6458, 1.442695
  %v6474 = vpow.pop %v6473
  %v6475 = vmul.f32 %v6459, 1.442695
  %v6476 = vpow.pop %v6475
  %v6477 = vmul.f32 %v6460, 1.442695
  %v6478 = vpow.pop %v6477
  %v6479 = vmul.f32 %v6461, 1.442695
  %v6480 = vpow.pop %v6479
  %v6481 = vmul.f32 %v6462, 1.442695
  %v6482 = vpow.pop %v6481
  %v6483 = vsel %vm844, %v6464, 0.0
  %6484 = vadd.xlane.f32.xlu0 %v6483
  %v6485 = vpop.xlane.xlu0 %6484
  %v6486 = vsel %vm844, %v6466, 0.0
  %6487 = vadd.xlane.f32.xlu0 %v6486
  %v6488 = vpop.xlane.xlu0 %6487
  %v6489 = vsel %vm844, %v6468, 0.0
  %6490 = vadd.xlane.f32.xlu0 %v6489
  %v6491 = vpop.xlane.xlu0 %6490
  %v6492 = vsel %vm844, %v6470, 0.0
  %6493 = vadd.xlane.f32.xlu0 %v6492
  %v6494 = vpop.xlane.xlu0 %6493
  %v6495 = vsel %vm844, %v6472, 0.0
  %6496 = vadd.xlane.f32.xlu0 %v6495
  %v6497 = vpop.xlane.xlu0 %6496
  %v6498 = vsel %vm844, %v6474, 0.0
  %6499 = vadd.xlane.f32.xlu0 %v6498
  %v6500 = vpop.xlane.xlu0 %6499
  %v6501 = vsel %vm844, %v6476, 0.0
  %6502 = vadd.xlane.f32.xlu0 %v6501
  %v6503 = vpop.xlane.xlu0 %6502
  %v6504 = vsel %vm844, %v6478, 0.0
  %6505 = vadd.xlane.f32.xlu0 %v6504
  %v6506 = vpop.xlane.xlu0 %6505
  %v6507 = vsel %vm844, %v6480, 0.0
  %6508 = vadd.xlane.f32.xlu0 %v6507
  %v6509 = vpop.xlane.xlu0 %6508
  %v6510 = vsel %vm844, %v6482, 0.0
  %6511 = vadd.xlane.f32.xlu0 %v6510
  %v6512 = vpop.xlane.xlu0 %6511
  %v6513 = vrcp.pop %v6485
  %v6514 = vrcp.pop %v6488
  %v6515 = vrcp.pop %v6491
  %v6516 = vrcp.pop %v6494
  %v6517 = vrcp.pop %v6497
  %v6518 = vrcp.pop %v6500
  %v6519 = vrcp.pop %v6503
  %v6520 = vrcp.pop %v6506
  %v6521 = vrcp.pop %v6509
  %v6522 = vrcp.pop %v6512
  %v6523 = vmul.f32 %v6464, %v6513
  %v6524 = vmul.f32 %v6466, %v6514
  %v6525 = vmul.f32 %v6468, %v6515
  %v6526 = vmul.f32 %v6470, %v6516
  %v6527 = vmul.f32 %v6472, %v6517
  %v6528 = vmul.f32 %v6474, %v6518
  %v6529 = vmul.f32 %v6476, %v6519
  %v6530 = vmul.f32 %v6478, %v6520
  %v6531 = vmul.f32 %v6480, %v6521
  %v6532 = vmul.f32 %v6482, %v6522
  %v6534 = vsel %vm844, %v6523, 0
  %v6537 = vsel %vm844, %v6524, 0
  %v6540 = vsel %vm844, %v6525, 0
  %v6543 = vsel %vm844, %v6526, 0
  %v6546 = vsel %vm844, %v6527, 0
  %v6549 = vsel %vm844, %v6528, 0
  %v6552 = vsel %vm844, %v6529, 0
  %v6555 = vsel %vm844, %v6530, 0
  %v6558 = vsel %vm844, %v6531, 0
  %v6561 = vsel %vm844, %v6532, 0
  %6563 = vmatprep.subr.mxu0 0.0
  %6564 = vmatpush1.msra.mxu0 %v6200
  %6565 = vmatprep.subr.mxu0 0.0
  %6566 = vmatpush1.msra.mxu0 %v6205
  %6567 = vmatprep.subr.mxu0 0.0
  %6568 = vmatpush1.msra.mxu0 %v6210
  %6569 = vmatprep.subr.mxu0 0.0
  %6570 = vmatpush1.msra.mxu0 %v6215
  %6571 = vmatprep.subr.mxu0 0.0
  %6572 = vmatpush1.msra.mxu0 %v6220
  %6573 = vmatprep.subr.mxu0 0.0
  %6574 = vmatpush1.msra.mxu0 %v6225
  %6575 = vmatprep.subr.mxu0 0.0
  %6576 = vmatpush1.msra.mxu0 %v6230
  %6577 = vmatprep.subr.mxu0 0.0
  %6578 = vmatpush1.msra.mxu0 %v6235
  %6579 = vmatprep.subr.mxu0 0.0
  %6580 = vmatpush1.msra.mxu0 %v6240
  %6581 = vmatprep.subr.mxu0 0.0
  %6582 = vmatpush1.msra.mxu0 %v6245
  %6583 = vmatprep.subr.mxu0 0.0
  %6584 = vmatpush1.msra.mxu0 0.0
  %6585 = vmatprep.subr.mxu0 0.0
  %6586 = vmatpush1.msra.mxu0 0.0
  %6587 = vmatprep.subr.mxu0 0.0
  %6588 = vmatpush1.msra.mxu0 0.0
  %6589 = vmatprep.subr.mxu0 0.0
  %6590 = vmatpush1.msra.mxu0 0.0
  %6591 = vmatprep.subr.mxu0 0.0
  %6592 = vmatpush1.msra.mxu0 0.0
  %6593 = vmatprep.subr.mxu0 0.0
  %6594 = vmatpush1.msra.mxu0 0.0
  %6595 = vmatprep.subr.mxu0 0.0
  %6596 = vmatpush1.msra.mxu0 0.0
  %6597 = vmatprep.subr.mxu0 0.0
  %6598 = vmatpush1.msra.mxu0 0.0
  %6599 = vmatprep.subr.mxu0 0.0
  %6600 = vmatpush1.msra.mxu0 0.0
  %6601 = vmatprep.subr.mxu0 0.0
  %6602 = vmatpush1.msra.mxu0 0.0
  %6603 = vmatprep.subr.mxu0 0.0
  %6604 = vmatpush1.msra.mxu0 0.0
  %6605 = vmatprep.subr.mxu0 0.0
  %6606 = vmatpush1.msra.mxu0 0.0
  %6607 = vmatprep.subr.mxu0 0.0
  %6608 = vmatpush1.msra.mxu0 0.0
  %6609 = vmatprep.subr.mxu0 0.0
  %6610 = vmatpush1.msra.mxu0 0.0
  %6611 = vmatprep.subr.mxu0 0.0
  %6612 = vmatpush1.msra.mxu0 0.0
  %6613 = vmatprep.subr.mxu0 0.0
  %6614 = vmatpush1.msra.mxu0 0.0
  %6615 = vmatprep.subr.mxu0 0.0
  %6616 = vmatpush1.msra.mxu0 0.0
  %6617 = vmatprep.subr.mxu0 0.0
  %6618 = vmatpush1.msra.mxu0 0.0
  %6619 = vmatprep.subr.mxu0 0.0
  %6620 = vmatpush1.msra.mxu0 0.0
  %6621 = vmatprep.subr.mxu0 0.0
  %6622 = vmatpush1.msra.mxu0 0.0
  %6623 = vmatprep.subr.mxu0 0.0
  %6624 = vmatpush1.msra.mxu0 0.0
  %6625 = vmatprep.subr.mxu0 0.0
  %6626 = vmatpush1.msra.mxu0 0.0
  %6627 = vmatprep.mubr.f32.mxu0 0.0
  %6628 = vmatmul.mubr.f32.gmra.mrb[0].mxu0 %v6534
  %v6629 = vpop.f32.mrb[0].mxu0
  %v6630 = vadd.f32 0.0, %v6629
  %v6631 = vpop.f32.mrb[0].mxu0
  %6632 = vmatprep.mubr.f32.mxu0 0.0
  %6633 = vmatmul.mubr.f32.gmra.mrb[0].mxu0 %v6537
  %v6634 = vpop.f32.mrb[0].mxu0
  %v6635 = vadd.f32 0.0, %v6634
  %v6636 = vpop.f32.mrb[0].mxu0
  %6637 = vmatprep.mubr.f32.mxu0 0.0
  %6638 = vmatmul.mubr.f32.gmra.mrb[0].mxu0 %v6540
  %v6639 = vpop.f32.mrb[0].mxu0
  %v6640 = vadd.f32 0.0, %v6639
  %v6641 = vpop.f32.mrb[0].mxu0
  %6642 = vmatprep.mubr.f32.mxu0 0.0
  %6643 = vmatmul.mubr.f32.gmra.mrb[0].mxu0 %v6543
  %v6644 = vpop.f32.mrb[0].mxu0
  %v6645 = vadd.f32 0.0, %v6644
  %v6646 = vpop.f32.mrb[0].mxu0
  %6647 = vmatprep.mubr.f32.mxu0 0.0
  %6648 = vmatmul.mubr.f32.gmra.mrb[0].mxu0 %v6546
  %v6649 = vpop.f32.mrb[0].mxu0
  %v6650 = vadd.f32 0.0, %v6649
  %v6651 = vpop.f32.mrb[0].mxu0
  %6652 = vmatprep.mubr.f32.mxu0 0.0
  %6653 = vmatmul.mubr.f32.gmra.mrb[0].mxu0 %v6549
  %v6654 = vpop.f32.mrb[0].mxu0
  %v6655 = vadd.f32 0.0, %v6654
  %v6656 = vpop.f32.mrb[0].mxu0
  %6657 = vmatprep.mubr.f32.mxu0 0.0
  %6658 = vmatmul.mubr.f32.gmra.mrb[0].mxu0 %v6552
  %v6659 = vpop.f32.mrb[0].mxu0
  %v6660 = vadd.f32 0.0, %v6659
  %v6661 = vpop.f32.mrb[0].mxu0
  %6662 = vmatprep.mubr.f32.mxu0 0.0
  %6663 = vmatmul.mubr.f32.gmra.mrb[0].mxu0 %v6555
  %v6664 = vpop.f32.mrb[0].mxu0
  %v6665 = vadd.f32 0.0, %v6664
  %v6666 = vpop.f32.mrb[0].mxu0
  %6667 = vmatprep.mubr.f32.mxu0 0.0
  %6668 = vmatmul.mubr.f32.gmra.mrb[0].mxu0 %v6558
  %v6669 = vpop.f32.mrb[0].mxu0
  %v6670 = vadd.f32 0.0, %v6669
  %v6671 = vpop.f32.mrb[0].mxu0
  %6672 = vmatprep.mubr.f32.mxu0 0.0
  %6673 = vmatmul.mubr.f32.gmra.mrb[0].mxu0 %v6561
  %v6674 = vpop.f32.mrb[0].mxu0
  %v6675 = vadd.f32 0.0, %v6674
  %v6676 = vpop.f32.mrb[0].mxu0
  %6677 = vdwg.mxu0
  %s6678 = scalar_lea.vmem %s9, 80
  %v6679 = vld [vmem:[%s6678] sm:$0xff]
  %v6680 = vld [vmem:[%s6678 + $0x8] sm:$0xff]
  %v6682 = vsel %vm668, %v6630, 0
  %v6685 = vsel %vm668, %v6635, 0
  %v6688 = vsel %vm668, %v6640, 0
  %v6691 = vsel %vm668, %v6645, 0
  %v6694 = vsel %vm668, %v6650, 0
  %v6697 = vsel %vm668, %v6655, 0
  %v6700 = vsel %vm668, %v6660, 0
  %v6703 = vsel %vm668, %v6665, 0
  %v6706 = vsel %vm668, %v6670, 0
  %v6709 = vsel %vm668, %v6675, 0
  %6711 = vmatprep.subr.mxu0 0.0
  %6712 = vmatpush1.msra.mxu0 %v6679
  %6713 = vmatprep.subr.mxu0 0.0
  %6714 = vmatpush1.msra.mxu0 %v6680
  %6715 = vmatprep.subr.mxu0 0.0
  %6716 = vmatpush1.msra.mxu0 0.0
  %6717 = vmatprep.subr.mxu0 0.0
  %6718 = vmatpush1.msra.mxu0 0.0
  %6719 = vmatprep.subr.mxu0 0.0
  %6720 = vmatpush1.msra.mxu0 0.0
  %6721 = vmatprep.subr.mxu0 0.0
  %6722 = vmatpush1.msra.mxu0 0.0
  %6723 = vmatprep.subr.mxu0 0.0
  %6724 = vmatpush1.msra.mxu0 0.0
  %6725 = vmatprep.subr.mxu0 0.0
  %6726 = vmatpush1.msra.mxu0 0.0
  %6727 = vmatprep.subr.mxu0 0.0
  %6728 = vmatpush1.msra.mxu0 0.0
  %6729 = vmatprep.subr.mxu0 0.0
  %6730 = vmatpush1.msra.mxu0 0.0
  %6731 = vmatprep.subr.mxu0 0.0
  %6732 = vmatpush1.msra.mxu0 0.0
  %6733 = vmatprep.subr.mxu0 0.0
  %6734 = vmatpush1.msra.mxu0 0.0
  %6735 = vmatprep.subr.mxu0 0.0
  %6736 = vmatpush1.msra.mxu0 0.0
  %6737 = vmatprep.subr.mxu0 0.0
  %6738 = vmatpush1.msra.mxu0 0.0
  %6739 = vmatprep.subr.mxu0 0.0
  %6740 = vmatpush1.msra.mxu0 0.0
  %6741 = vmatprep.subr.mxu0 0.0
  %6742 = vmatpush1.msra.mxu0 0.0
  %6743 = vmatprep.subr.mxu0 0.0
  %6744 = vmatpush1.msra.mxu0 0.0
  %6745 = vmatprep.subr.mxu0 0.0
  %6746 = vmatpush1.msra.mxu0 0.0
  %6747 = vmatprep.subr.mxu0 0.0
  %6748 = vmatpush1.msra.mxu0 0.0
  %6749 = vmatprep.subr.mxu0 0.0
  %6750 = vmatpush1.msra.mxu0 0.0
  %6751 = vmatprep.subr.mxu0 0.0
  %6752 = vmatpush1.msra.mxu0 0.0
  %6753 = vmatprep.subr.mxu0 0.0
  %6754 = vmatpush1.msra.mxu0 0.0
  %6755 = vmatprep.subr.mxu0 0.0
  %6756 = vmatpush1.msra.mxu0 0.0
  %6757 = vmatprep.subr.mxu0 0.0
  %6758 = vmatpush1.msra.mxu0 0.0
  %6759 = vmatprep.subr.mxu0 0.0
  %6760 = vmatpush1.msra.mxu0 0.0
  %6761 = vmatprep.subr.mxu0 0.0
  %6762 = vmatpush1.msra.mxu0 0.0
  %6763 = vmatprep.subr.mxu0 0.0
  %6764 = vmatpush1.msra.mxu0 0.0
  %6765 = vmatprep.subr.mxu0 0.0
  %6766 = vmatpush1.msra.mxu0 0.0
  %6767 = vmatprep.subr.mxu0 0.0
  %6768 = vmatpush1.msra.mxu0 0.0
  %6769 = vmatprep.subr.mxu0 0.0
  %6770 = vmatpush1.msra.mxu0 0.0
  %6771 = vmatprep.subr.mxu0 0.0
  %6772 = vmatpush1.msra.mxu0 0.0
  %6773 = vmatprep.subr.mxu0 0.0
  %6774 = vmatpush1.msra.mxu0 0.0
  %6775 = vmatprep.mubr.f32.mxu0 0.0
  %6776 = vmatmul.mubr.f32.gmra.mrb[0].mxu0 %v6682
  %v6777 = vpop.f32.mrb[0].mxu0
  %v6778 = vadd.f32 0.0, %v6777
  %v6779 = vpop.f32.mrb[0].mxu0
  %6780 = vmatprep.mubr.f32.mxu0 0.0
  %6781 = vmatmul.mubr.f32.gmra.mrb[0].mxu0 %v6685
  %v6782 = vpop.f32.mrb[0].mxu0
  %v6783 = vadd.f32 0.0, %v6782
  %v6784 = vpop.f32.mrb[0].mxu0
  %6785 = vmatprep.mubr.f32.mxu0 0.0
  %6786 = vmatmul.mubr.f32.gmra.mrb[0].mxu0 %v6688
  %v6787 = vpop.f32.mrb[0].mxu0
  %v6788 = vadd.f32 0.0, %v6787
  %v6789 = vpop.f32.mrb[0].mxu0
  %6790 = vmatprep.mubr.f32.mxu0 0.0
  %6791 = vmatmul.mubr.f32.gmra.mrb[0].mxu0 %v6691
  %v6792 = vpop.f32.mrb[0].mxu0
  %v6793 = vadd.f32 0.0, %v6792
  %v6794 = vpop.f32.mrb[0].mxu0
  %6795 = vmatprep.mubr.f32.mxu0 0.0
  %6796 = vmatmul.mubr.f32.gmra.mrb[0].mxu0 %v6694
  %v6797 = vpop.f32.mrb[0].mxu0
  %v6798 = vadd.f32 0.0, %v6797
  %v6799 = vpop.f32.mrb[0].mxu0
  %6800 = vmatprep.mubr.f32.mxu0 0.0
  %6801 = vmatmul.mubr.f32.gmra.mrb[0].mxu0 %v6697
  %v6802 = vpop.f32.mrb[0].mxu0
  %v6803 = vadd.f32 0.0, %v6802
  %v6804 = vpop.f32.mrb[0].mxu0
  %6805 = vmatprep.mubr.f32.mxu0 0.0
  %6806 = vmatmul.mubr.f32.gmra.mrb[0].mxu0 %v6700
  %v6807 = vpop.f32.mrb[0].mxu0
  %v6808 = vadd.f32 0.0, %v6807
  %v6809 = vpop.f32.mrb[0].mxu0
  %6810 = vmatprep.mubr.f32.mxu0 0.0
  %6811 = vmatmul.mubr.f32.gmra.mrb[0].mxu0 %v6703
  %v6812 = vpop.f32.mrb[0].mxu0
  %v6813 = vadd.f32 0.0, %v6812
  %v6814 = vpop.f32.mrb[0].mxu0
  %6815 = vmatprep.mubr.f32.mxu0 0.0
  %6816 = vmatmul.mubr.f32.gmra.mrb[0].mxu0 %v6706
  %v6817 = vpop.f32.mrb[0].mxu0
  %v6818 = vadd.f32 0.0, %v6817
  %v6819 = vpop.f32.mrb[0].mxu0
  %6820 = vmatprep.mubr.f32.mxu0 0.0
  %6821 = vmatmul.mubr.f32.gmra.mrb[0].mxu0 %v6709
  %v6822 = vpop.f32.mrb[0].mxu0
  %v6823 = vadd.f32 0.0, %v6822
  %v6824 = vpop.f32.mrb[0].mxu0
  %6825 = vdwg.mxu0
  %v6827 = vsel %vm668, %v5801, 0
  %v6830 = vsel %vm668, %v5806, 0
  %v6833 = vsel %vm668, %v5811, 0
  %v6836 = vsel %vm668, %v5816, 0
  %v6839 = vsel %vm668, %v5821, 0
  %v6842 = vsel %vm668, %v5826, 0
  %v6845 = vsel %vm668, %v5831, 0
  %v6848 = vsel %vm668, %v5836, 0
  %v6851 = vsel %vm668, %v5841, 0
  %v6854 = vsel %vm668, %v5846, 0
  %6856 = vmatprep.subr.mxu0 0.0
  %6857 = vmatpush1.msra.mxu0 %v5850
  %6858 = vmatprep.subr.mxu0 0.0
  %6859 = vmatpush1.msra.mxu0 %v5851
  %6860 = vmatprep.subr.mxu0 0.0
  %6861 = vmatpush1.msra.mxu0 0.0
  %6862 = vmatprep.subr.mxu0 0.0
  %6863 = vmatpush1.msra.mxu0 0.0
  %6864 = vmatprep.subr.mxu0 0.0
  %6865 = vmatpush1.msra.mxu0 0.0
  %6866 = vmatprep.subr.mxu0 0.0
  %6867 = vmatpush1.msra.mxu0 0.0
  %6868 = vmatprep.subr.mxu0 0.0
  %6869 = vmatpush1.msra.mxu0 0.0
  %6870 = vmatprep.subr.mxu0 0.0
  %6871 = vmatpush1.msra.mxu0 0.0
  %6872 = vmatprep.subr.mxu0 0.0
  %6873 = vmatpush1.msra.mxu0 0.0
  %6874 = vmatprep.subr.mxu0 0.0
  %6875 = vmatpush1.msra.mxu0 0.0
  %6876 = vmatprep.subr.mxu0 0.0
  %6877 = vmatpush1.msra.mxu0 0.0
  %6878 = vmatprep.subr.mxu0 0.0
  %6879 = vmatpush1.msra.mxu0 0.0
  %6880 = vmatprep.subr.mxu0 0.0
  %6881 = vmatpush1.msra.mxu0 0.0
  %6882 = vmatprep.subr.mxu0 0.0
  %6883 = vmatpush1.msra.mxu0 0.0
  %6884 = vmatprep.subr.mxu0 0.0
  %6885 = vmatpush1.msra.mxu0 0.0
  %6886 = vmatprep.subr.mxu0 0.0
  %6887 = vmatpush1.msra.mxu0 0.0
  %6888 = vmatprep.subr.mxu0 0.0
  %6889 = vmatpush1.msra.mxu0 0.0
  %6890 = vmatprep.subr.mxu0 0.0
  %6891 = vmatpush1.msra.mxu0 0.0
  %6892 = vmatprep.subr.mxu0 0.0
  %6893 = vmatpush1.msra.mxu0 0.0
  %6894 = vmatprep.subr.mxu0 0.0
  %6895 = vmatpush1.msra.mxu0 0.0
  %6896 = vmatprep.subr.mxu0 0.0
  %6897 = vmatpush1.msra.mxu0 0.0
  %6898 = vmatprep.subr.mxu0 0.0
  %6899 = vmatpush1.msra.mxu0 0.0
  %6900 = vmatprep.subr.mxu0 0.0
  %6901 = vmatpush1.msra.mxu0 0.0
  %6902 = vmatprep.subr.mxu0 0.0
  %6903 = vmatpush1.msra.mxu0 0.0
  %6904 = vmatprep.subr.mxu0 0.0
  %6905 = vmatpush1.msra.mxu0 0.0
  %6906 = vmatprep.subr.mxu0 0.0
  %6907 = vmatpush1.msra.mxu0 0.0
  %6908 = vmatprep.subr.mxu0 0.0
  %6909 = vmatpush1.msra.mxu0 0.0
  %6910 = vmatprep.subr.mxu0 0.0
  %6911 = vmatpush1.msra.mxu0 0.0
  %6912 = vmatprep.subr.mxu0 0.0
  %6913 = vmatpush1.msra.mxu0 0.0
  %6914 = vmatprep.subr.mxu0 0.0
  %6915 = vmatpush1.msra.mxu0 0.0
  %6916 = vmatprep.subr.mxu0 0.0
  %6917 = vmatpush1.msra.mxu0 0.0
  %6918 = vmatprep.subr.mxu0 0.0
  %6919 = vmatpush1.msra.mxu0 0.0
  %6920 = vmatprep.mubr.f32.mxu0 0.0
  %6921 = vmatmul.mubr.f32.gmra.mrb[0].mxu0 %v6827
  %v6922 = vpop.f32.mrb[0].mxu0
  %v6923 = vadd.f32 %v6778, %v6922
  %v6924 = vpop.f32.mrb[0].mxu0
  %6925 = vmatprep.mubr.f32.mxu0 0.0
  %6926 = vmatmul.mubr.f32.gmra.mrb[0].mxu0 %v6830
  %v6927 = vpop.f32.mrb[0].mxu0
  %v6928 = vadd.f32 %v6783, %v6927
  %v6929 = vpop.f32.mrb[0].mxu0
  %6930 = vmatprep.mubr.f32.mxu0 0.0
  %6931 = vmatmul.mubr.f32.gmra.mrb[0].mxu0 %v6833
  %v6932 = vpop.f32.mrb[0].mxu0
  %v6933 = vadd.f32 %v6788, %v6932
  %v6934 = vpop.f32.mrb[0].mxu0
  %6935 = vmatprep.mubr.f32.mxu0 0.0
  %6936 = vmatmul.mubr.f32.gmra.mrb[0].mxu0 %v6836
  %v6937 = vpop.f32.mrb[0].mxu0
  %v6938 = vadd.f32 %v6793, %v6937
  %v6939 = vpop.f32.mrb[0].mxu0
  %6940 = vmatprep.mubr.f32.mxu0 0.0
  %6941 = vmatmul.mubr.f32.gmra.mrb[0].mxu0 %v6839
  %v6942 = vpop.f32.mrb[0].mxu0
  %v6943 = vadd.f32 %v6798, %v6942
  %v6944 = vpop.f32.mrb[0].mxu0
  %6945 = vmatprep.mubr.f32.mxu0 0.0
  %6946 = vmatmul.mubr.f32.gmra.mrb[0].mxu0 %v6842
  %v6947 = vpop.f32.mrb[0].mxu0
  %v6948 = vadd.f32 %v6803, %v6947
  %v6949 = vpop.f32.mrb[0].mxu0
  %6950 = vmatprep.mubr.f32.mxu0 0.0
  %6951 = vmatmul.mubr.f32.gmra.mrb[0].mxu0 %v6845
  %v6952 = vpop.f32.mrb[0].mxu0
  %v6953 = vadd.f32 %v6808, %v6952
  %v6954 = vpop.f32.mrb[0].mxu0
  %6955 = vmatprep.mubr.f32.mxu0 0.0
  %6956 = vmatmul.mubr.f32.gmra.mrb[0].mxu0 %v6848
  %v6957 = vpop.f32.mrb[0].mxu0
  %v6958 = vadd.f32 %v6813, %v6957
  %v6959 = vpop.f32.mrb[0].mxu0
  %6960 = vmatprep.mubr.f32.mxu0 0.0
  %6961 = vmatmul.mubr.f32.gmra.mrb[0].mxu0 %v6851
  %v6962 = vpop.f32.mrb[0].mxu0
  %v6963 = vadd.f32 %v6818, %v6962
  %v6964 = vpop.f32.mrb[0].mxu0
  %6965 = vmatprep.mubr.f32.mxu0 0.0
  %6966 = vmatmul.mubr.f32.gmra.mrb[0].mxu0 %v6854
  %v6967 = vpop.f32.mrb[0].mxu0
  %v6968 = vadd.f32 %v6823, %v6967
  %v6969 = vpop.f32.mrb[0].mxu0
  %6970 = vdwg.mxu0
  %s6971 = scalar_lea.vmem %s3, 384
  %v6972 = vld [vmem:[%s6971] sm:$0xff]
  %v6973 = vld [vmem:[%s6971 + $0x8] sm:$0xff]
  %v6974 = vld [vmem:[%s6971 + $0x10] sm:$0xff]
  %v6975 = vld [vmem:[%s6971 + $0x18] sm:$0xff]
  %v6976 = vld [vmem:[%s6971 + $0x20] sm:$0xff]
  %v6977 = vld [vmem:[%s6971 + $0x28] sm:$0xff]
  %v6978 = vld [vmem:[%s6971 + $0x30] sm:$0xff]
  %v6979 = vld [vmem:[%s6971 + $0x38] sm:$0xff]
  %s6980 = scalar_lea.vmem %s4, 6
  %v6981 = vld [vmem:[%s6980] sm:$0x1]
  %v6983 = vlaneseq
  %v6984 = vshrl.u32 %v6983, 7
  %v6985 = vsub.s32 0, %v6984
  %v6986 = vrot.slane %v6981, %v6985
  %6988 = vmatprep.subr.mxu0 0.0
  %6989 = vmatpush1.msra.mxu0 %v6972
  %6990 = vmatprep.subr.mxu0 0.0
  %6991 = vmatpush1.msra.mxu0 %v6973
  %6992 = vmatprep.subr.mxu0 0.0
  %6993 = vmatpush1.msra.mxu0 %v6974
  %6994 = vmatprep.subr.mxu0 0.0
  %6995 = vmatpush1.msra.mxu0 %v6975
  %6996 = vmatprep.subr.mxu0 0.0
  %6997 = vmatpush1.msra.mxu0 %v6976
  %6998 = vmatprep.subr.mxu0 0.0
  %6999 = vmatpush1.msra.mxu0 %v6977
  %7000 = vmatprep.subr.mxu0 0.0
  %7001 = vmatpush1.msra.mxu0 %v6978
  %7002 = vmatprep.subr.mxu0 0.0
  %7003 = vmatpush1.msra.mxu0 %v6979
  %7004 = vmatprep.subr.mxu0 0.0
  %7005 = vmatpush1.msra.mxu0 0.0
  %7006 = vmatprep.subr.mxu0 0.0
  %7007 = vmatpush1.msra.mxu0 0.0
  %7008 = vmatprep.subr.mxu0 0.0
  %7009 = vmatpush1.msra.mxu0 0.0
  %7010 = vmatprep.subr.mxu0 0.0
  %7011 = vmatpush1.msra.mxu0 0.0
  %7012 = vmatprep.subr.mxu0 0.0
  %7013 = vmatpush1.msra.mxu0 0.0
  %7014 = vmatprep.subr.mxu0 0.0
  %7015 = vmatpush1.msra.mxu0 0.0
  %7016 = vmatprep.subr.mxu0 0.0
  %7017 = vmatpush1.msra.mxu0 0.0
  %7018 = vmatprep.subr.mxu0 0.0
  %7019 = vmatpush1.msra.mxu0 0.0
  %7020 = vmatprep.subr.mxu0 0.0
  %7021 = vmatpush1.msra.mxu0 0.0
  %7022 = vmatprep.subr.mxu0 0.0
  %7023 = vmatpush1.msra.mxu0 0.0
  %7024 = vmatprep.subr.mxu0 0.0
  %7025 = vmatpush1.msra.mxu0 0.0
  %7026 = vmatprep.subr.mxu0 0.0
  %7027 = vmatpush1.msra.mxu0 0.0
  %7028 = vmatprep.subr.mxu0 0.0
  %7029 = vmatpush1.msra.mxu0 0.0
  %7030 = vmatprep.subr.mxu0 0.0
  %7031 = vmatpush1.msra.mxu0 0.0
  %7032 = vmatprep.subr.mxu0 0.0
  %7033 = vmatpush1.msra.mxu0 0.0
  %7034 = vmatprep.subr.mxu0 0.0
  %7035 = vmatpush1.msra.mxu0 0.0
  %7036 = vmatprep.subr.mxu0 0.0
  %7037 = vmatpush1.msra.mxu0 0.0
  %7038 = vmatprep.subr.mxu0 0.0
  %7039 = vmatpush1.msra.mxu0 0.0
  %7040 = vmatprep.subr.mxu0 0.0
  %7041 = vmatpush1.msra.mxu0 0.0
  %7042 = vmatprep.subr.mxu0 0.0
  %7043 = vmatpush1.msra.mxu0 0.0
  %7044 = vmatprep.subr.mxu0 0.0
  %7045 = vmatpush1.msra.mxu0 0.0
  %7046 = vmatprep.subr.mxu0 0.0
  %7047 = vmatpush1.msra.mxu0 0.0
  %7048 = vmatprep.subr.mxu0 0.0
  %7049 = vmatpush1.msra.mxu0 0.0
  %7050 = vmatprep.subr.mxu0 0.0
  %7051 = vmatpush1.msra.mxu0 0.0
  %7052 = vmatprep.mubr.f32.mxu0 0.0
  %7053 = vmatmul.mubr.f32.gmra.mrb[0].mxu0 %v5011
  %v7054 = vpop.f32.mrb[0].mxu0
  %v7055 = vadd.f32 %v6986, %v7054
  %v7056 = vpop.f32.mrb[0].mxu0
  %7057 = vmatprep.mubr.f32.mxu0 0.0
  %7058 = vmatmul.mubr.f32.gmra.mrb[0].mxu0 %v5014
  %v7059 = vpop.f32.mrb[0].mxu0
  %v7060 = vadd.f32 %v6986, %v7059
  %v7061 = vpop.f32.mrb[0].mxu0
  %7062 = vmatprep.mubr.f32.mxu0 0.0
  %7063 = vmatmul.mubr.f32.gmra.mrb[0].mxu0 %v5017
  %v7064 = vpop.f32.mrb[0].mxu0
  %v7065 = vadd.f32 %v6986, %v7064
  %v7066 = vpop.f32.mrb[0].mxu0
  %7067 = vmatprep.mubr.f32.mxu0 0.0
  %7068 = vmatmul.mubr.f32.gmra.mrb[0].mxu0 %v5020
  %v7069 = vpop.f32.mrb[0].mxu0
  %v7070 = vadd.f32 %v6986, %v7069
  %v7071 = vpop.f32.mrb[0].mxu0
  %7072 = vmatprep.mubr.f32.mxu0 0.0
  %7073 = vmatmul.mubr.f32.gmra.mrb[0].mxu0 %v5023
  %v7074 = vpop.f32.mrb[0].mxu0
  %v7075 = vadd.f32 %v6986, %v7074
  %v7076 = vpop.f32.mrb[0].mxu0
  %7077 = vmatprep.mubr.f32.mxu0 0.0
  %7078 = vmatmul.mubr.f32.gmra.mrb[0].mxu0 %v5026
  %v7079 = vpop.f32.mrb[0].mxu0
  %v7080 = vadd.f32 %v6986, %v7079
  %v7081 = vpop.f32.mrb[0].mxu0
  %7082 = vmatprep.mubr.f32.mxu0 0.0
  %7083 = vmatmul.mubr.f32.gmra.mrb[0].mxu0 %v5029
  %v7084 = vpop.f32.mrb[0].mxu0
  %v7085 = vadd.f32 %v6986, %v7084
  %v7086 = vpop.f32.mrb[0].mxu0
  %7087 = vmatprep.mubr.f32.mxu0 0.0
  %7088 = vmatmul.mubr.f32.gmra.mrb[0].mxu0 %v5032
  %v7089 = vpop.f32.mrb[0].mxu0
  %v7090 = vadd.f32 %v6986, %v7089
  %v7091 = vpop.f32.mrb[0].mxu0
  %7092 = vmatprep.mubr.f32.mxu0 0.0
  %7093 = vmatmul.mubr.f32.gmra.mrb[0].mxu0 %v5035
  %v7094 = vpop.f32.mrb[0].mxu0
  %v7095 = vadd.f32 %v6986, %v7094
  %v7096 = vpop.f32.mrb[0].mxu0
  %7097 = vmatprep.mubr.f32.mxu0 0.0
  %7098 = vmatmul.mubr.f32.gmra.mrb[0].mxu0 %v5038
  %v7099 = vpop.f32.mrb[0].mxu0
  %v7100 = vadd.f32 %v6986, %v7099
  %v7101 = vpop.f32.mrb[0].mxu0
  %7102 = vdwg.mxu0
  %s7103 = scalar_lea.vmem %s5, 384
  %v7104 = vld [vmem:[%s7103] sm:$0xff]
  %v7105 = vld [vmem:[%s7103 + $0x8] sm:$0xff]
  %v7106 = vld [vmem:[%s7103 + $0x10] sm:$0xff]
  %v7107 = vld [vmem:[%s7103 + $0x18] sm:$0xff]
  %v7108 = vld [vmem:[%s7103 + $0x20] sm:$0xff]
  %v7109 = vld [vmem:[%s7103 + $0x28] sm:$0xff]
  %v7110 = vld [vmem:[%s7103 + $0x30] sm:$0xff]
  %v7111 = vld [vmem:[%s7103 + $0x38] sm:$0xff]
  %s7112 = scalar_lea.vmem %s6, 6
  %v7113 = vld [vmem:[%s7112] sm:$0x1]
  %v7115 = vlaneseq
  %v7116 = vshrl.u32 %v7115, 7
  %v7117 = vsub.s32 0, %v7116
  %v7118 = vrot.slane %v7113, %v7117
  %7120 = vmatprep.subr.mxu0 0.0
  %7121 = vmatpush1.msra.mxu0 %v7104
  %7122 = vmatprep.subr.mxu0 0.0
  %7123 = vmatpush1.msra.mxu0 %v7105
  %7124 = vmatprep.subr.mxu0 0.0
  %7125 = vmatpush1.msra.mxu0 %v7106
  %7126 = vmatprep.subr.mxu0 0.0
  %7127 = vmatpush1.msra.mxu0 %v7107
  %7128 = vmatprep.subr.mxu0 0.0
  %7129 = vmatpush1.msra.mxu0 %v7108
  %7130 = vmatprep.subr.mxu0 0.0
  %7131 = vmatpush1.msra.mxu0 %v7109
  %7132 = vmatprep.subr.mxu0 0.0
  %7133 = vmatpush1.msra.mxu0 %v7110
  %7134 = vmatprep.subr.mxu0 0.0
  %7135 = vmatpush1.msra.mxu0 %v7111
  %7136 = vmatprep.subr.mxu0 0.0
  %7137 = vmatpush1.msra.mxu0 0.0
  %7138 = vmatprep.subr.mxu0 0.0
  %7139 = vmatpush1.msra.mxu0 0.0
  %7140 = vmatprep.subr.mxu0 0.0
  %7141 = vmatpush1.msra.mxu0 0.0
  %7142 = vmatprep.subr.mxu0 0.0
  %7143 = vmatpush1.msra.mxu0 0.0
  %7144 = vmatprep.subr.mxu0 0.0
  %7145 = vmatpush1.msra.mxu0 0.0
  %7146 = vmatprep.subr.mxu0 0.0
  %7147 = vmatpush1.msra.mxu0 0.0
  %7148 = vmatprep.subr.mxu0 0.0
  %7149 = vmatpush1.msra.mxu0 0.0
  %7150 = vmatprep.subr.mxu0 0.0
  %7151 = vmatpush1.msra.mxu0 0.0
  %7152 = vmatprep.subr.mxu0 0.0
  %7153 = vmatpush1.msra.mxu0 0.0
  %7154 = vmatprep.subr.mxu0 0.0
  %7155 = vmatpush1.msra.mxu0 0.0
  %7156 = vmatprep.subr.mxu0 0.0
  %7157 = vmatpush1.msra.mxu0 0.0
  %7158 = vmatprep.subr.mxu0 0.0
  %7159 = vmatpush1.msra.mxu0 0.0
  %7160 = vmatprep.subr.mxu0 0.0
  %7161 = vmatpush1.msra.mxu0 0.0
  %7162 = vmatprep.subr.mxu0 0.0
  %7163 = vmatpush1.msra.mxu0 0.0
  %7164 = vmatprep.subr.mxu0 0.0
  %7165 = vmatpush1.msra.mxu0 0.0
  %7166 = vmatprep.subr.mxu0 0.0
  %7167 = vmatpush1.msra.mxu0 0.0
  %7168 = vmatprep.subr.mxu0 0.0
  %7169 = vmatpush1.msra.mxu0 0.0
  %7170 = vmatprep.subr.mxu0 0.0
  %7171 = vmatpush1.msra.mxu0 0.0
  %7172 = vmatprep.subr.mxu0 0.0
  %7173 = vmatpush1.msra.mxu0 0.0
  %7174 = vmatprep.subr.mxu0 0.0
  %7175 = vmatpush1.msra.mxu0 0.0
  %7176 = vmatprep.subr.mxu0 0.0
  %7177 = vmatpush1.msra.mxu0 0.0
  %7178 = vmatprep.subr.mxu0 0.0
  %7179 = vmatpush1.msra.mxu0 0.0
  %7180 = vmatprep.subr.mxu0 0.0
  %7181 = vmatpush1.msra.mxu0 0.0
  %7182 = vmatprep.subr.mxu0 0.0
  %7183 = vmatpush1.msra.mxu0 0.0
  %7184 = vmatprep.mubr.f32.mxu0 0.0
  %7185 = vmatmul.mubr.f32.gmra.mrb[0].mxu0 %v5011
  %v7186 = vpop.f32.mrb[0].mxu0
  %v7187 = vadd.f32 %v7118, %v7186
  %v7188 = vpop.f32.mrb[0].mxu0
  %7189 = vmatprep.mubr.f32.mxu0 0.0
  %7190 = vmatmul.mubr.f32.gmra.mrb[0].mxu0 %v5014
  %v7191 = vpop.f32.mrb[0].mxu0
  %v7192 = vadd.f32 %v7118, %v7191
  %v7193 = vpop.f32.mrb[0].mxu0
  %7194 = vmatprep.mubr.f32.mxu0 0.0
  %7195 = vmatmul.mubr.f32.gmra.mrb[0].mxu0 %v5017
  %v7196 = vpop.f32.mrb[0].mxu0
  %v7197 = vadd.f32 %v7118, %v7196
  %v7198 = vpop.f32.mrb[0].mxu0
  %7199 = vmatprep.mubr.f32.mxu0 0.0
  %7200 = vmatmul.mubr.f32.gmra.mrb[0].mxu0 %v5020
  %v7201 = vpop.f32.mrb[0].mxu0
  %v7202 = vadd.f32 %v7118, %v7201
  %v7203 = vpop.f32.mrb[0].mxu0
  %7204 = vmatprep.mubr.f32.mxu0 0.0
  %7205 = vmatmul.mubr.f32.gmra.mrb[0].mxu0 %v5023
  %v7206 = vpop.f32.mrb[0].mxu0
  %v7207 = vadd.f32 %v7118, %v7206
  %v7208 = vpop.f32.mrb[0].mxu0
  %7209 = vmatprep.mubr.f32.mxu0 0.0
  %7210 = vmatmul.mubr.f32.gmra.mrb[0].mxu0 %v5026
  %v7211 = vpop.f32.mrb[0].mxu0
  %v7212 = vadd.f32 %v7118, %v7211
  %v7213 = vpop.f32.mrb[0].mxu0
  %7214 = vmatprep.mubr.f32.mxu0 0.0
  %7215 = vmatmul.mubr.f32.gmra.mrb[0].mxu0 %v5029
  %v7216 = vpop.f32.mrb[0].mxu0
  %v7217 = vadd.f32 %v7118, %v7216
  %v7218 = vpop.f32.mrb[0].mxu0
  %7219 = vmatprep.mubr.f32.mxu0 0.0
  %7220 = vmatmul.mubr.f32.gmra.mrb[0].mxu0 %v5032
  %v7221 = vpop.f32.mrb[0].mxu0
  %v7222 = vadd.f32 %v7118, %v7221
  %v7223 = vpop.f32.mrb[0].mxu0
  %7224 = vmatprep.mubr.f32.mxu0 0.0
  %7225 = vmatmul.mubr.f32.gmra.mrb[0].mxu0 %v5035
  %v7226 = vpop.f32.mrb[0].mxu0
  %v7227 = vadd.f32 %v7118, %v7226
  %v7228 = vpop.f32.mrb[0].mxu0
  %7229 = vmatprep.mubr.f32.mxu0 0.0
  %7230 = vmatmul.mubr.f32.gmra.mrb[0].mxu0 %v5038
  %v7231 = vpop.f32.mrb[0].mxu0
  %v7232 = vadd.f32 %v7118, %v7231
  %v7233 = vpop.f32.mrb[0].mxu0
  %7234 = vdwg.mxu0
  %s7235 = scalar_lea.vmem %s7, 384
  %v7236 = vld [vmem:[%s7235] sm:$0xff]
  %v7237 = vld [vmem:[%s7235 + $0x8] sm:$0xff]
  %v7238 = vld [vmem:[%s7235 + $0x10] sm:$0xff]
  %v7239 = vld [vmem:[%s7235 + $0x18] sm:$0xff]
  %v7240 = vld [vmem:[%s7235 + $0x20] sm:$0xff]
  %v7241 = vld [vmem:[%s7235 + $0x28] sm:$0xff]
  %v7242 = vld [vmem:[%s7235 + $0x30] sm:$0xff]
  %v7243 = vld [vmem:[%s7235 + $0x38] sm:$0xff]
  %s7244 = scalar_lea.vmem %s8, 6
  %v7245 = vld [vmem:[%s7244] sm:$0x1]
  %v7247 = vlaneseq
  %v7248 = vshrl.u32 %v7247, 7
  %v7249 = vsub.s32 0, %v7248
  %v7250 = vrot.slane %v7245, %v7249
  %7252 = vmatprep.subr.mxu0 0.0
  %7253 = vmatpush1.msra.mxu0 %v7236
  %7254 = vmatprep.subr.mxu0 0.0
  %7255 = vmatpush1.msra.mxu0 %v7237
  %7256 = vmatprep.subr.mxu0 0.0
  %7257 = vmatpush1.msra.mxu0 %v7238
  %7258 = vmatprep.subr.mxu0 0.0
  %7259 = vmatpush1.msra.mxu0 %v7239
  %7260 = vmatprep.subr.mxu0 0.0
  %7261 = vmatpush1.msra.mxu0 %v7240
  %7262 = vmatprep.subr.mxu0 0.0
  %7263 = vmatpush1.msra.mxu0 %v7241
  %7264 = vmatprep.subr.mxu0 0.0
  %7265 = vmatpush1.msra.mxu0 %v7242
  %7266 = vmatprep.subr.mxu0 0.0
  %7267 = vmatpush1.msra.mxu0 %v7243
  %7268 = vmatprep.subr.mxu0 0.0
  %7269 = vmatpush1.msra.mxu0 0.0
  %7270 = vmatprep.subr.mxu0 0.0
  %7271 = vmatpush1.msra.mxu0 0.0
  %7272 = vmatprep.subr.mxu0 0.0
  %7273 = vmatpush1.msra.mxu0 0.0
  %7274 = vmatprep.subr.mxu0 0.0
  %7275 = vmatpush1.msra.mxu0 0.0
  %7276 = vmatprep.subr.mxu0 0.0
  %7277 = vmatpush1.msra.mxu0 0.0
  %7278 = vmatprep.subr.mxu0 0.0
  %7279 = vmatpush1.msra.mxu0 0.0
  %7280 = vmatprep.subr.mxu0 0.0
  %7281 = vmatpush1.msra.mxu0 0.0
  %7282 = vmatprep.subr.mxu0 0.0
  %7283 = vmatpush1.msra.mxu0 0.0
  %7284 = vmatprep.subr.mxu0 0.0
  %7285 = vmatpush1.msra.mxu0 0.0
  %7286 = vmatprep.subr.mxu0 0.0
  %7287 = vmatpush1.msra.mxu0 0.0
  %7288 = vmatprep.subr.mxu0 0.0
  %7289 = vmatpush1.msra.mxu0 0.0
  %7290 = vmatprep.subr.mxu0 0.0
  %7291 = vmatpush1.msra.mxu0 0.0
  %7292 = vmatprep.subr.mxu0 0.0
  %7293 = vmatpush1.msra.mxu0 0.0
  %7294 = vmatprep.subr.mxu0 0.0
  %7295 = vmatpush1.msra.mxu0 0.0
  %7296 = vmatprep.subr.mxu0 0.0
  %7297 = vmatpush1.msra.mxu0 0.0
  %7298 = vmatprep.subr.mxu0 0.0
  %7299 = vmatpush1.msra.mxu0 0.0
  %7300 = vmatprep.subr.mxu0 0.0
  %7301 = vmatpush1.msra.mxu0 0.0
  %7302 = vmatprep.subr.mxu0 0.0
  %7303 = vmatpush1.msra.mxu0 0.0
  %7304 = vmatprep.subr.mxu0 0.0
  %7305 = vmatpush1.msra.mxu0 0.0
  %7306 = vmatprep.subr.mxu0 0.0
  %7307 = vmatpush1.msra.mxu0 0.0
  %7308 = vmatprep.subr.mxu0 0.0
  %7309 = vmatpush1.msra.mxu0 0.0
  %7310 = vmatprep.subr.mxu0 0.0
  %7311 = vmatpush1.msra.mxu0 0.0
  %7312 = vmatprep.subr.mxu0 0.0
  %7313 = vmatpush1.msra.mxu0 0.0
  %7314 = vmatprep.subr.mxu0 0.0
  %7315 = vmatpush1.msra.mxu0 0.0
  %7316 = vmatprep.mubr.f32.mxu0 0.0
  %7317 = vmatmul.mubr.f32.gmra.mrb[0].mxu0 %v5011
  %v7318 = vpop.f32.mrb[0].mxu0
  %v7319 = vadd.f32 %v7250, %v7318
  %v7320 = vpop.f32.mrb[0].mxu0
  %7321 = vmatprep.mubr.f32.mxu0 0.0
  %7322 = vmatmul.mubr.f32.gmra.mrb[0].mxu0 %v5014
  %v7323 = vpop.f32.mrb[0].mxu0
  %v7324 = vadd.f32 %v7250, %v7323
  %v7325 = vpop.f32.mrb[0].mxu0
  %7326 = vmatprep.mubr.f32.mxu0 0.0
  %7327 = vmatmul.mubr.f32.gmra.mrb[0].mxu0 %v5017
  %v7328 = vpop.f32.mrb[0].mxu0
  %v7329 = vadd.f32 %v7250, %v7328
  %v7330 = vpop.f32.mrb[0].mxu0
  %7331 = vmatprep.mubr.f32.mxu0 0.0
  %7332 = vmatmul.mubr.f32.gmra.mrb[0].mxu0 %v5020
  %v7333 = vpop.f32.mrb[0].mxu0
  %v7334 = vadd.f32 %v7250, %v7333
  %v7335 = vpop.f32.mrb[0].mxu0
  %7336 = vmatprep.mubr.f32.mxu0 0.0
  %7337 = vmatmul.mubr.f32.gmra.mrb[0].mxu0 %v5023
  %v7338 = vpop.f32.mrb[0].mxu0
  %v7339 = vadd.f32 %v7250, %v7338
  %v7340 = vpop.f32.mrb[0].mxu0
  %7341 = vmatprep.mubr.f32.mxu0 0.0
  %7342 = vmatmul.mubr.f32.gmra.mrb[0].mxu0 %v5026
  %v7343 = vpop.f32.mrb[0].mxu0
  %v7344 = vadd.f32 %v7250, %v7343
  %v7345 = vpop.f32.mrb[0].mxu0
  %7346 = vmatprep.mubr.f32.mxu0 0.0
  %7347 = vmatmul.mubr.f32.gmra.mrb[0].mxu0 %v5029
  %v7348 = vpop.f32.mrb[0].mxu0
  %v7349 = vadd.f32 %v7250, %v7348
  %v7350 = vpop.f32.mrb[0].mxu0
  %7351 = vmatprep.mubr.f32.mxu0 0.0
  %7352 = vmatmul.mubr.f32.gmra.mrb[0].mxu0 %v5032
  %v7353 = vpop.f32.mrb[0].mxu0
  %v7354 = vadd.f32 %v7250, %v7353
  %v7355 = vpop.f32.mrb[0].mxu0
  %7356 = vmatprep.mubr.f32.mxu0 0.0
  %7357 = vmatmul.mubr.f32.gmra.mrb[0].mxu0 %v5035
  %v7358 = vpop.f32.mrb[0].mxu0
  %v7359 = vadd.f32 %v7250, %v7358
  %v7360 = vpop.f32.mrb[0].mxu0
  %7361 = vmatprep.mubr.f32.mxu0 0.0
  %7362 = vmatmul.mubr.f32.gmra.mrb[0].mxu0 %v5038
  %v7363 = vpop.f32.mrb[0].mxu0
  %v7364 = vadd.f32 %v7250, %v7363
  %v7365 = vpop.f32.mrb[0].mxu0
  %7366 = vdwg.mxu0
  %v7368 = vsel %vm668, %v7055, 0
  %v7371 = vsel %vm668, %v7060, 0
  %v7374 = vsel %vm668, %v7065, 0
  %v7377 = vsel %vm668, %v7070, 0
  %v7380 = vsel %vm668, %v7075, 0
  %v7383 = vsel %vm668, %v7080, 0
  %v7386 = vsel %vm668, %v7085, 0
  %v7389 = vsel %vm668, %v7090, 0
  %v7392 = vsel %vm668, %v7095, 0
  %v7395 = vsel %vm668, %v7100, 0
  %v7398 = vsel %vm668, %v7187, 0
  %v7401 = vsel %vm668, %v7192, 0
  %v7404 = vsel %vm668, %v7197, 0
  %v7407 = vsel %vm668, %v7202, 0
  %v7410 = vsel %vm668, %v7207, 0
  %v7413 = vsel %vm668, %v7212, 0
  %v7416 = vsel %vm668, %v7217, 0
  %v7419 = vsel %vm668, %v7222, 0
  %v7422 = vsel %vm668, %v7227, 0
  %v7425 = vsel %vm668, %v7232, 0
  %7427 = vmatprep.subr.mxu0 0.0
  %7428 = vmatpush1.xpose.msra.mxu0 %v7398
  %7429 = vmatprep.subr.mxu0 0.0
  %7430 = vmatpush1.xpose.msra.mxu0 %v7401
  %7431 = vmatprep.subr.mxu0 0.0
  %7432 = vmatpush1.xpose.msra.mxu0 %v7404
  %7433 = vmatprep.subr.mxu0 0.0
  %7434 = vmatpush1.xpose.msra.mxu0 %v7407
  %7435 = vmatprep.subr.mxu0 0.0
  %7436 = vmatpush1.xpose.msra.mxu0 %v7410
  %7437 = vmatprep.subr.mxu0 0.0
  %7438 = vmatpush1.xpose.msra.mxu0 %v7413
  %7439 = vmatprep.subr.mxu0 0.0
  %7440 = vmatpush1.xpose.msra.mxu0 %v7416
  %7441 = vmatprep.subr.mxu0 0.0
  %7442 = vmatpush1.xpose.msra.mxu0 %v7419
  %7443 = vmatprep.subr.mxu0 0.0
  %7444 = vmatpush1.xpose.msra.mxu0 %v7422
  %7445 = vmatprep.subr.mxu0 0.0
  %7446 = vmatpush1.xpose.msra.mxu0 %v7425
  %7447 = vmatprep.subr.mxu0 0.0
  %7448 = vmatpush1.xpose.msra.mxu0 0.0
  %7449 = vmatprep.subr.mxu0 0.0
  %7450 = vmatpush1.xpose.msra.mxu0 0.0
  %7451 = vmatprep.subr.mxu0 0.0
  %7452 = vmatpush1.xpose.msra.mxu0 0.0
  %7453 = vmatprep.subr.mxu0 0.0
  %7454 = vmatpush1.xpose.msra.mxu0 0.0
  %7455 = vmatprep.subr.mxu0 0.0
  %7456 = vmatpush1.xpose.msra.mxu0 0.0
  %7457 = vmatprep.subr.mxu0 0.0
  %7458 = vmatpush1.xpose.msra.mxu0 0.0
  %7459 = vmatprep.subr.mxu0 0.0
  %7460 = vmatpush1.xpose.msra.mxu0 0.0
  %7461 = vmatprep.subr.mxu0 0.0
  %7462 = vmatpush1.xpose.msra.mxu0 0.0
  %7463 = vmatprep.subr.mxu0 0.0
  %7464 = vmatpush1.xpose.msra.mxu0 0.0
  %7465 = vmatprep.subr.mxu0 0.0
  %7466 = vmatpush1.xpose.msra.mxu0 0.0
  %7467 = vmatprep.subr.mxu0 0.0
  %7468 = vmatpush1.xpose.msra.mxu0 0.0
  %7469 = vmatprep.subr.mxu0 0.0
  %7470 = vmatpush1.xpose.msra.mxu0 0.0
  %7471 = vmatprep.subr.mxu0 0.0
  %7472 = vmatpush1.xpose.msra.mxu0 0.0
  %7473 = vmatprep.subr.mxu0 0.0
  %7474 = vmatpush1.xpose.msra.mxu0 0.0
  %7475 = vmatprep.subr.mxu0 0.0
  %7476 = vmatpush1.xpose.msra.mxu0 0.0
  %7477 = vmatprep.subr.mxu0 0.0
  %7478 = vmatpush1.xpose.msra.mxu0 0.0
  %7479 = vmatprep.subr.mxu0 0.0
  %7480 = vmatpush1.xpose.msra.mxu0 0.0
  %7481 = vmatprep.subr.mxu0 0.0
  %7482 = vmatpush1.xpose.msra.mxu0 0.0
  %7483 = vmatprep.subr.mxu0 0.0
  %7484 = vmatpush1.xpose.msra.mxu0 0.0
  %7485 = vmatprep.subr.mxu0 0.0
  %7486 = vmatpush1.xpose.msra.mxu0 0.0
  %7487 = vmatprep.subr.mxu0 0.0
  %7488 = vmatpush1.xpose.msra.mxu0 0.0
  %7489 = vmatprep.subr.mxu0 0.0
  %7490 = vmatpush1.xpose.msra.mxu0 0.0
  %7491 = vmatprep.mubr.f32.mxu0 0.0
  %7492 = vmatmul.mubr.f32.gmra.mrb[0].mxu0 %v7368
  %v7493 = vpop.f32.mrb[0].mxu0
  %v7494 = vadd.f32 %v81, %v7493
  %v7495 = vpop.f32.mrb[0].mxu0
  %7496 = vmatprep.mubr.f32.mxu0 0.0
  %7497 = vmatmul.mubr.f32.gmra.mrb[0].mxu0 %v7371
  %v7498 = vpop.f32.mrb[0].mxu0
  %v7499 = vadd.f32 %v81, %v7498
  %v7500 = vpop.f32.mrb[0].mxu0
  %7501 = vmatprep.mubr.f32.mxu0 0.0
  %7502 = vmatmul.mubr.f32.gmra.mrb[0].mxu0 %v7374
  %v7503 = vpop.f32.mrb[0].mxu0
  %v7504 = vadd.f32 %v81, %v7503
  %v7505 = vpop.f32.mrb[0].mxu0
  %7506 = vmatprep.mubr.f32.mxu0 0.0
  %7507 = vmatmul.mubr.f32.gmra.mrb[0].mxu0 %v7377
  %v7508 = vpop.f32.mrb[0].mxu0
  %v7509 = vadd.f32 %v81, %v7508
  %v7510 = vpop.f32.mrb[0].mxu0
  %7511 = vmatprep.mubr.f32.mxu0 0.0
  %7512 = vmatmul.mubr.f32.gmra.mrb[0].mxu0 %v7380
  %v7513 = vpop.f32.mrb[0].mxu0
  %v7514 = vadd.f32 %v81, %v7513
  %v7515 = vpop.f32.mrb[0].mxu0
  %7516 = vmatprep.mubr.f32.mxu0 0.0
  %7517 = vmatmul.mubr.f32.gmra.mrb[0].mxu0 %v7383
  %v7518 = vpop.f32.mrb[0].mxu0
  %v7519 = vadd.f32 %v81, %v7518
  %v7520 = vpop.f32.mrb[0].mxu0
  %7521 = vmatprep.mubr.f32.mxu0 0.0
  %7522 = vmatmul.mubr.f32.gmra.mrb[0].mxu0 %v7386
  %v7523 = vpop.f32.mrb[0].mxu0
  %v7524 = vadd.f32 %v81, %v7523
  %v7525 = vpop.f32.mrb[0].mxu0
  %7526 = vmatprep.mubr.f32.mxu0 0.0
  %7527 = vmatmul.mubr.f32.gmra.mrb[0].mxu0 %v7389
  %v7528 = vpop.f32.mrb[0].mxu0
  %v7529 = vadd.f32 %v81, %v7528
  %v7530 = vpop.f32.mrb[0].mxu0
  %7531 = vmatprep.mubr.f32.mxu0 0.0
  %7532 = vmatmul.mubr.f32.gmra.mrb[0].mxu0 %v7392
  %v7533 = vpop.f32.mrb[0].mxu0
  %v7534 = vadd.f32 %v81, %v7533
  %v7535 = vpop.f32.mrb[0].mxu0
  %7536 = vmatprep.mubr.f32.mxu0 0.0
  %7537 = vmatmul.mubr.f32.gmra.mrb[0].mxu0 %v7395
  %v7538 = vpop.f32.mrb[0].mxu0
  %v7539 = vadd.f32 %v81, %v7538
  %v7540 = vpop.f32.mrb[0].mxu0
  %7541 = vdwg.mxu0
  %v7542 = vsel %vm844, %v7494, -inf
  %7543 = vmax.xlane.f32.xlu0 %v7542
  %v7544 = vpop.xlane.xlu0 %7543
  %v7545 = vsel %vm844, %v7499, -inf
  %7546 = vmax.xlane.f32.xlu0 %v7545
  %v7547 = vpop.xlane.xlu0 %7546
  %v7548 = vsel %vm844, %v7504, -inf
  %7549 = vmax.xlane.f32.xlu0 %v7548
  %v7550 = vpop.xlane.xlu0 %7549
  %v7551 = vsel %vm844, %v7509, -inf
  %7552 = vmax.xlane.f32.xlu0 %v7551
  %v7553 = vpop.xlane.xlu0 %7552
  %v7554 = vsel %vm844, %v7514, -inf
  %7555 = vmax.xlane.f32.xlu0 %v7554
  %v7556 = vpop.xlane.xlu0 %7555
  %v7557 = vsel %vm844, %v7519, -inf
  %7558 = vmax.xlane.f32.xlu0 %v7557
  %v7559 = vpop.xlane.xlu0 %7558
  %v7560 = vsel %vm844, %v7524, -inf
  %7561 = vmax.xlane.f32.xlu0 %v7560
  %v7562 = vpop.xlane.xlu0 %7561
  %v7563 = vsel %vm844, %v7529, -inf
  %7564 = vmax.xlane.f32.xlu0 %v7563
  %v7565 = vpop.xlane.xlu0 %7564
  %v7566 = vsel %vm844, %v7534, -inf
  %7567 = vmax.xlane.f32.xlu0 %v7566
  %v7568 = vpop.xlane.xlu0 %7567
  %v7569 = vsel %vm844, %v7539, -inf
  %7570 = vmax.xlane.f32.xlu0 %v7569
  %v7571 = vpop.xlane.xlu0 %7570
  %v7572 = vsub.f32 %v7494, %v7544
  %v7573 = vsub.f32 %v7499, %v7547
  %v7574 = vsub.f32 %v7504, %v7550
  %v7575 = vsub.f32 %v7509, %v7553
  %v7576 = vsub.f32 %v7514, %v7556
  %v7577 = vsub.f32 %v7519, %v7559
  %v7578 = vsub.f32 %v7524, %v7562
  %v7579 = vsub.f32 %v7529, %v7565
  %v7580 = vsub.f32 %v7534, %v7568
  %v7581 = vsub.f32 %v7539, %v7571
  %v7582 = vmul.f32 %v7572, 1.442695
  %v7583 = vpow.pop %v7582
  %v7584 = vmul.f32 %v7573, 1.442695
  %v7585 = vpow.pop %v7584
  %v7586 = vmul.f32 %v7574, 1.442695
  %v7587 = vpow.pop %v7586
  %v7588 = vmul.f32 %v7575, 1.442695
  %v7589 = vpow.pop %v7588
  %v7590 = vmul.f32 %v7576, 1.442695
  %v7591 = vpow.pop %v7590
  %v7592 = vmul.f32 %v7577, 1.442695
  %v7593 = vpow.pop %v7592
  %v7594 = vmul.f32 %v7578, 1.442695
  %v7595 = vpow.pop %v7594
  %v7596 = vmul.f32 %v7579, 1.442695
  %v7597 = vpow.pop %v7596
  %v7598 = vmul.f32 %v7580, 1.442695
  %v7599 = vpow.pop %v7598
  %v7600 = vmul.f32 %v7581, 1.442695
  %v7601 = vpow.pop %v7600
  %v7602 = vsel %vm844, %v7583, 0.0
  %7603 = vadd.xlane.f32.xlu0 %v7602
  %v7604 = vpop.xlane.xlu0 %7603
  %v7605 = vsel %vm844, %v7585, 0.0
  %7606 = vadd.xlane.f32.xlu0 %v7605
  %v7607 = vpop.xlane.xlu0 %7606
  %v7608 = vsel %vm844, %v7587, 0.0
  %7609 = vadd.xlane.f32.xlu0 %v7608
  %v7610 = vpop.xlane.xlu0 %7609
  %v7611 = vsel %vm844, %v7589, 0.0
  %7612 = vadd.xlane.f32.xlu0 %v7611
  %v7613 = vpop.xlane.xlu0 %7612
  %v7614 = vsel %vm844, %v7591, 0.0
  %7615 = vadd.xlane.f32.xlu0 %v7614
  %v7616 = vpop.xlane.xlu0 %7615
  %v7617 = vsel %vm844, %v7593, 0.0
  %7618 = vadd.xlane.f32.xlu0 %v7617
  %v7619 = vpop.xlane.xlu0 %7618
  %v7620 = vsel %vm844, %v7595, 0.0
  %7621 = vadd.xlane.f32.xlu0 %v7620
  %v7622 = vpop.xlane.xlu0 %7621
  %v7623 = vsel %vm844, %v7597, 0.0
  %7624 = vadd.xlane.f32.xlu0 %v7623
  %v7625 = vpop.xlane.xlu0 %7624
  %v7626 = vsel %vm844, %v7599, 0.0
  %7627 = vadd.xlane.f32.xlu0 %v7626
  %v7628 = vpop.xlane.xlu0 %7627
  %v7629 = vsel %vm844, %v7601, 0.0
  %7630 = vadd.xlane.f32.xlu0 %v7629
  %v7631 = vpop.xlane.xlu0 %7630
  %v7632 = vrcp.pop %v7604
  %v7633 = vrcp.pop %v7607
  %v7634 = vrcp.pop %v7610
  %v7635 = vrcp.pop %v7613
  %v7636 = vrcp.pop %v7616
  %v7637 = vrcp.pop %v7619
  %v7638 = vrcp.pop %v7622
  %v7639 = vrcp.pop %v7625
  %v7640 = vrcp.pop %v7628
  %v7641 = vrcp.pop %v7631
  %v7642 = vmul.f32 %v7583, %v7632
  %v7643 = vmul.f32 %v7585, %v7633
  %v7644 = vmul.f32 %v7587, %v7634
  %v7645 = vmul.f32 %v7589, %v7635
  %v7646 = vmul.f32 %v7591, %v7636
  %v7647 = vmul.f32 %v7593, %v7637
  %v7648 = vmul.f32 %v7595, %v7638
  %v7649 = vmul.f32 %v7597, %v7639
  %v7650 = vmul.f32 %v7599, %v7640
  %v7651 = vmul.f32 %v7601, %v7641
  %v7653 = vsel %vm844, %v7642, 0
  %v7656 = vsel %vm844, %v7643, 0
  %v7659 = vsel %vm844, %v7644, 0
  %v7662 = vsel %vm844, %v7645, 0
  %v7665 = vsel %vm844, %v7646, 0
  %v7668 = vsel %vm844, %v7647, 0
  %v7671 = vsel %vm844, %v7648, 0
  %v7674 = vsel %vm844, %v7649, 0
  %v7677 = vsel %vm844, %v7650, 0
  %v7680 = vsel %vm844, %v7651, 0
  %7682 = vmatprep.subr.mxu0 0.0
  %7683 = vmatpush1.msra.mxu0 %v7319
  %7684 = vmatprep.subr.mxu0 0.0
  %7685 = vmatpush1.msra.mxu0 %v7324
  %7686 = vmatprep.subr.mxu0 0.0
  %7687 = vmatpush1.msra.mxu0 %v7329
  %7688 = vmatprep.subr.mxu0 0.0
  %7689 = vmatpush1.msra.mxu0 %v7334
  %7690 = vmatprep.subr.mxu0 0.0
  %7691 = vmatpush1.msra.mxu0 %v7339
  %7692 = vmatprep.subr.mxu0 0.0
  %7693 = vmatpush1.msra.mxu0 %v7344
  %7694 = vmatprep.subr.mxu0 0.0
  %7695 = vmatpush1.msra.mxu0 %v7349
  %7696 = vmatprep.subr.mxu0 0.0
  %7697 = vmatpush1.msra.mxu0 %v7354
  %7698 = vmatprep.subr.mxu0 0.0
  %7699 = vmatpush1.msra.mxu0 %v7359
  %7700 = vmatprep.subr.mxu0 0.0
  %7701 = vmatpush1.msra.mxu0 %v7364
  %7702 = vmatprep.subr.mxu0 0.0
  %7703 = vmatpush1.msra.mxu0 0.0
  %7704 = vmatprep.subr.mxu0 0.0
  %7705 = vmatpush1.msra.mxu0 0.0
  %7706 = vmatprep.subr.mxu0 0.0
  %7707 = vmatpush1.msra.mxu0 0.0
  %7708 = vmatprep.subr.mxu0 0.0
  %7709 = vmatpush1.msra.mxu0 0.0
  %7710 = vmatprep.subr.mxu0 0.0
  %7711 = vmatpush1.msra.mxu0 0.0
  %7712 = vmatprep.subr.mxu0 0.0
  %7713 = vmatpush1.msra.mxu0 0.0
  %7714 = vmatprep.subr.mxu0 0.0
  %7715 = vmatpush1.msra.mxu0 0.0
  %7716 = vmatprep.subr.mxu0 0.0
  %7717 = vmatpush1.msra.mxu0 0.0
  %7718 = vmatprep.subr.mxu0 0.0
  %7719 = vmatpush1.msra.mxu0 0.0
  %7720 = vmatprep.subr.mxu0 0.0
  %7721 = vmatpush1.msra.mxu0 0.0
  %7722 = vmatprep.subr.mxu0 0.0
  %7723 = vmatpush1.msra.mxu0 0.0
  %7724 = vmatprep.subr.mxu0 0.0
  %7725 = vmatpush1.msra.mxu0 0.0
  %7726 = vmatprep.subr.mxu0 0.0
  %7727 = vmatpush1.msra.mxu0 0.0
  %7728 = vmatprep.subr.mxu0 0.0
  %7729 = vmatpush1.msra.mxu0 0.0
  %7730 = vmatprep.subr.mxu0 0.0
  %7731 = vmatpush1.msra.mxu0 0.0
  %7732 = vmatprep.subr.mxu0 0.0
  %7733 = vmatpush1.msra.mxu0 0.0
  %7734 = vmatprep.subr.mxu0 0.0
  %7735 = vmatpush1.msra.mxu0 0.0
  %7736 = vmatprep.subr.mxu0 0.0
  %7737 = vmatpush1.msra.mxu0 0.0
  %7738 = vmatprep.subr.mxu0 0.0
  %7739 = vmatpush1.msra.mxu0 0.0
  %7740 = vmatprep.subr.mxu0 0.0
  %7741 = vmatpush1.msra.mxu0 0.0
  %7742 = vmatprep.subr.mxu0 0.0
  %7743 = vmatpush1.msra.mxu0 0.0
  %7744 = vmatprep.subr.mxu0 0.0
  %7745 = vmatpush1.msra.mxu0 0.0
  %7746 = vmatprep.mubr.f32.mxu0 0.0
  %7747 = vmatmul.mubr.f32.gmra.mrb[0].mxu0 %v7653
  %v7748 = vpop.f32.mrb[0].mxu0
  %v7749 = vadd.f32 0.0, %v7748
  %v7750 = vpop.f32.mrb[0].mxu0
  %7751 = vmatprep.mubr.f32.mxu0 0.0
  %7752 = vmatmul.mubr.f32.gmra.mrb[0].mxu0 %v7656
  %v7753 = vpop.f32.mrb[0].mxu0
  %v7754 = vadd.f32 0.0, %v7753
  %v7755 = vpop.f32.mrb[0].mxu0
  %7756 = vmatprep.mubr.f32.mxu0 0.0
  %7757 = vmatmul.mubr.f32.gmra.mrb[0].mxu0 %v7659
  %v7758 = vpop.f32.mrb[0].mxu0
  %v7759 = vadd.f32 0.0, %v7758
  %v7760 = vpop.f32.mrb[0].mxu0
  %7761 = vmatprep.mubr.f32.mxu0 0.0
  %7762 = vmatmul.mubr.f32.gmra.mrb[0].mxu0 %v7662
  %v7763 = vpop.f32.mrb[0].mxu0
  %v7764 = vadd.f32 0.0, %v7763
  %v7765 = vpop.f32.mrb[0].mxu0
  %7766 = vmatprep.mubr.f32.mxu0 0.0
  %7767 = vmatmul.mubr.f32.gmra.mrb[0].mxu0 %v7665
  %v7768 = vpop.f32.mrb[0].mxu0
  %v7769 = vadd.f32 0.0, %v7768
  %v7770 = vpop.f32.mrb[0].mxu0
  %7771 = vmatprep.mubr.f32.mxu0 0.0
  %7772 = vmatmul.mubr.f32.gmra.mrb[0].mxu0 %v7668
  %v7773 = vpop.f32.mrb[0].mxu0
  %v7774 = vadd.f32 0.0, %v7773
  %v7775 = vpop.f32.mrb[0].mxu0
  %7776 = vmatprep.mubr.f32.mxu0 0.0
  %7777 = vmatmul.mubr.f32.gmra.mrb[0].mxu0 %v7671
  %v7778 = vpop.f32.mrb[0].mxu0
  %v7779 = vadd.f32 0.0, %v7778
  %v7780 = vpop.f32.mrb[0].mxu0
  %7781 = vmatprep.mubr.f32.mxu0 0.0
  %7782 = vmatmul.mubr.f32.gmra.mrb[0].mxu0 %v7674
  %v7783 = vpop.f32.mrb[0].mxu0
  %v7784 = vadd.f32 0.0, %v7783
  %v7785 = vpop.f32.mrb[0].mxu0
  %7786 = vmatprep.mubr.f32.mxu0 0.0
  %7787 = vmatmul.mubr.f32.gmra.mrb[0].mxu0 %v7677
  %v7788 = vpop.f32.mrb[0].mxu0
  %v7789 = vadd.f32 0.0, %v7788
  %v7790 = vpop.f32.mrb[0].mxu0
  %7791 = vmatprep.mubr.f32.mxu0 0.0
  %7792 = vmatmul.mubr.f32.gmra.mrb[0].mxu0 %v7680
  %v7793 = vpop.f32.mrb[0].mxu0
  %v7794 = vadd.f32 0.0, %v7793
  %v7795 = vpop.f32.mrb[0].mxu0
  %7796 = vdwg.mxu0
  %s7797 = scalar_lea.vmem %s9, 96
  %v7798 = vld [vmem:[%s7797] sm:$0xff]
  %v7799 = vld [vmem:[%s7797 + $0x8] sm:$0xff]
  %v7801 = vsel %vm668, %v7749, 0
  %v7804 = vsel %vm668, %v7754, 0
  %v7807 = vsel %vm668, %v7759, 0
  %v7810 = vsel %vm668, %v7764, 0
  %v7813 = vsel %vm668, %v7769, 0
  %v7816 = vsel %vm668, %v7774, 0
  %v7819 = vsel %vm668, %v7779, 0
  %v7822 = vsel %vm668, %v7784, 0
  %v7825 = vsel %vm668, %v7789, 0
  %v7828 = vsel %vm668, %v7794, 0
  %7830 = vmatprep.subr.mxu0 0.0
  %7831 = vmatpush1.msra.mxu0 %v7798
  %7832 = vmatprep.subr.mxu0 0.0
  %7833 = vmatpush1.msra.mxu0 %v7799
  %7834 = vmatprep.subr.mxu0 0.0
  %7835 = vmatpush1.msra.mxu0 0.0
  %7836 = vmatprep.subr.mxu0 0.0
  %7837 = vmatpush1.msra.mxu0 0.0
  %7838 = vmatprep.subr.mxu0 0.0
  %7839 = vmatpush1.msra.mxu0 0.0
  %7840 = vmatprep.subr.mxu0 0.0
  %7841 = vmatpush1.msra.mxu0 0.0
  %7842 = vmatprep.subr.mxu0 0.0
  %7843 = vmatpush1.msra.mxu0 0.0
  %7844 = vmatprep.subr.mxu0 0.0
  %7845 = vmatpush1.msra.mxu0 0.0
  %7846 = vmatprep.subr.mxu0 0.0
  %7847 = vmatpush1.msra.mxu0 0.0
  %7848 = vmatprep.subr.mxu0 0.0
  %7849 = vmatpush1.msra.mxu0 0.0
  %7850 = vmatprep.subr.mxu0 0.0
  %7851 = vmatpush1.msra.mxu0 0.0
  %7852 = vmatprep.subr.mxu0 0.0
  %7853 = vmatpush1.msra.mxu0 0.0
  %7854 = vmatprep.subr.mxu0 0.0
  %7855 = vmatpush1.msra.mxu0 0.0
  %7856 = vmatprep.subr.mxu0 0.0
  %7857 = vmatpush1.msra.mxu0 0.0
  %7858 = vmatprep.subr.mxu0 0.0
  %7859 = vmatpush1.msra.mxu0 0.0
  %7860 = vmatprep.subr.mxu0 0.0
  %7861 = vmatpush1.msra.mxu0 0.0
  %7862 = vmatprep.subr.mxu0 0.0
  %7863 = vmatpush1.msra.mxu0 0.0
  %7864 = vmatprep.subr.mxu0 0.0
  %7865 = vmatpush1.msra.mxu0 0.0
  %7866 = vmatprep.subr.mxu0 0.0
  %7867 = vmatpush1.msra.mxu0 0.0
  %7868 = vmatprep.subr.mxu0 0.0
  %7869 = vmatpush1.msra.mxu0 0.0
  %7870 = vmatprep.subr.mxu0 0.0
  %7871 = vmatpush1.msra.mxu0 0.0
  %7872 = vmatprep.subr.mxu0 0.0
  %7873 = vmatpush1.msra.mxu0 0.0
  %7874 = vmatprep.subr.mxu0 0.0
  %7875 = vmatpush1.msra.mxu0 0.0
  %7876 = vmatprep.subr.mxu0 0.0
  %7877 = vmatpush1.msra.mxu0 0.0
  %7878 = vmatprep.subr.mxu0 0.0
  %7879 = vmatpush1.msra.mxu0 0.0
  %7880 = vmatprep.subr.mxu0 0.0
  %7881 = vmatpush1.msra.mxu0 0.0
  %7882 = vmatprep.subr.mxu0 0.0
  %7883 = vmatpush1.msra.mxu0 0.0
  %7884 = vmatprep.subr.mxu0 0.0
  %7885 = vmatpush1.msra.mxu0 0.0
  %7886 = vmatprep.subr.mxu0 0.0
  %7887 = vmatpush1.msra.mxu0 0.0
  %7888 = vmatprep.subr.mxu0 0.0
  %7889 = vmatpush1.msra.mxu0 0.0
  %7890 = vmatprep.subr.mxu0 0.0
  %7891 = vmatpush1.msra.mxu0 0.0
  %7892 = vmatprep.subr.mxu0 0.0
  %7893 = vmatpush1.msra.mxu0 0.0
  %7894 = vmatprep.mubr.f32.mxu0 0.0
  %7895 = vmatmul.mubr.f32.gmra.mrb[0].mxu0 %v7801
  %v7896 = vpop.f32.mrb[0].mxu0
  %v7897 = vadd.f32 0.0, %v7896
  %v7898 = vpop.f32.mrb[0].mxu0
  %7899 = vmatprep.mubr.f32.mxu0 0.0
  %7900 = vmatmul.mubr.f32.gmra.mrb[0].mxu0 %v7804
  %v7901 = vpop.f32.mrb[0].mxu0
  %v7902 = vadd.f32 0.0, %v7901
  %v7903 = vpop.f32.mrb[0].mxu0
  %7904 = vmatprep.mubr.f32.mxu0 0.0
  %7905 = vmatmul.mubr.f32.gmra.mrb[0].mxu0 %v7807
  %v7906 = vpop.f32.mrb[0].mxu0
  %v7907 = vadd.f32 0.0, %v7906
  %v7908 = vpop.f32.mrb[0].mxu0
  %7909 = vmatprep.mubr.f32.mxu0 0.0
  %7910 = vmatmul.mubr.f32.gmra.mrb[0].mxu0 %v7810
  %v7911 = vpop.f32.mrb[0].mxu0
  %v7912 = vadd.f32 0.0, %v7911
  %v7913 = vpop.f32.mrb[0].mxu0
  %7914 = vmatprep.mubr.f32.mxu0 0.0
  %7915 = vmatmul.mubr.f32.gmra.mrb[0].mxu0 %v7813
  %v7916 = vpop.f32.mrb[0].mxu0
  %v7917 = vadd.f32 0.0, %v7916
  %v7918 = vpop.f32.mrb[0].mxu0
  %7919 = vmatprep.mubr.f32.mxu0 0.0
  %7920 = vmatmul.mubr.f32.gmra.mrb[0].mxu0 %v7816
  %v7921 = vpop.f32.mrb[0].mxu0
  %v7922 = vadd.f32 0.0, %v7921
  %v7923 = vpop.f32.mrb[0].mxu0
  %7924 = vmatprep.mubr.f32.mxu0 0.0
  %7925 = vmatmul.mubr.f32.gmra.mrb[0].mxu0 %v7819
  %v7926 = vpop.f32.mrb[0].mxu0
  %v7927 = vadd.f32 0.0, %v7926
  %v7928 = vpop.f32.mrb[0].mxu0
  %7929 = vmatprep.mubr.f32.mxu0 0.0
  %7930 = vmatmul.mubr.f32.gmra.mrb[0].mxu0 %v7822
  %v7931 = vpop.f32.mrb[0].mxu0
  %v7932 = vadd.f32 0.0, %v7931
  %v7933 = vpop.f32.mrb[0].mxu0
  %7934 = vmatprep.mubr.f32.mxu0 0.0
  %7935 = vmatmul.mubr.f32.gmra.mrb[0].mxu0 %v7825
  %v7936 = vpop.f32.mrb[0].mxu0
  %v7937 = vadd.f32 0.0, %v7936
  %v7938 = vpop.f32.mrb[0].mxu0
  %7939 = vmatprep.mubr.f32.mxu0 0.0
  %7940 = vmatmul.mubr.f32.gmra.mrb[0].mxu0 %v7828
  %v7941 = vpop.f32.mrb[0].mxu0
  %v7942 = vadd.f32 0.0, %v7941
  %v7943 = vpop.f32.mrb[0].mxu0
  %7944 = vdwg.mxu0
  %v7945 = vadd.f32 %v6923, %v7897
  %v7946 = vadd.f32 %v6928, %v7902
  %v7947 = vadd.f32 %v6933, %v7907
  %v7948 = vadd.f32 %v6938, %v7912
  %v7949 = vadd.f32 %v6943, %v7917
  %v7950 = vadd.f32 %v6948, %v7922
  %v7951 = vadd.f32 %v6953, %v7927
  %v7952 = vadd.f32 %v6958, %v7932
  %v7953 = vadd.f32 %v6963, %v7937
  %v7954 = vadd.f32 %v6968, %v7942
  %s7955 = scalar_lea.vmem %s3, 448
  %v7956 = vld [vmem:[%s7955] sm:$0xff]
  %v7957 = vld [vmem:[%s7955 + $0x8] sm:$0xff]
  %v7958 = vld [vmem:[%s7955 + $0x10] sm:$0xff]
  %v7959 = vld [vmem:[%s7955 + $0x18] sm:$0xff]
  %v7960 = vld [vmem:[%s7955 + $0x20] sm:$0xff]
  %v7961 = vld [vmem:[%s7955 + $0x28] sm:$0xff]
  %v7962 = vld [vmem:[%s7955 + $0x30] sm:$0xff]
  %v7963 = vld [vmem:[%s7955 + $0x38] sm:$0xff]
  %s7964 = scalar_lea.vmem %s4, 7
  %v7965 = vld [vmem:[%s7964] sm:$0x1]
  %v7967 = vlaneseq
  %v7968 = vshrl.u32 %v7967, 7
  %v7969 = vsub.s32 0, %v7968
  %v7970 = vrot.slane %v7965, %v7969
  %7972 = vmatprep.subr.mxu0 0.0
  %7973 = vmatpush1.msra.mxu0 %v7956
  %7974 = vmatprep.subr.mxu0 0.0
  %7975 = vmatpush1.msra.mxu0 %v7957
  %7976 = vmatprep.subr.mxu0 0.0
  %7977 = vmatpush1.msra.mxu0 %v7958
  %7978 = vmatprep.subr.mxu0 0.0
  %7979 = vmatpush1.msra.mxu0 %v7959
  %7980 = vmatprep.subr.mxu0 0.0
  %7981 = vmatpush1.msra.mxu0 %v7960
  %7982 = vmatprep.subr.mxu0 0.0
  %7983 = vmatpush1.msra.mxu0 %v7961
  %7984 = vmatprep.subr.mxu0 0.0
  %7985 = vmatpush1.msra.mxu0 %v7962
  %7986 = vmatprep.subr.mxu0 0.0
  %7987 = vmatpush1.msra.mxu0 %v7963
  %7988 = vmatprep.subr.mxu0 0.0
  %7989 = vmatpush1.msra.mxu0 0.0
  %7990 = vmatprep.subr.mxu0 0.0
  %7991 = vmatpush1.msra.mxu0 0.0
  %7992 = vmatprep.subr.mxu0 0.0
  %7993 = vmatpush1.msra.mxu0 0.0
  %7994 = vmatprep.subr.mxu0 0.0
  %7995 = vmatpush1.msra.mxu0 0.0
  %7996 = vmatprep.subr.mxu0 0.0
  %7997 = vmatpush1.msra.mxu0 0.0
  %7998 = vmatprep.subr.mxu0 0.0
  %7999 = vmatpush1.msra.mxu0 0.0
  %8000 = vmatprep.subr.mxu0 0.0
  %8001 = vmatpush1.msra.mxu0 0.0
  %8002 = vmatprep.subr.mxu0 0.0
  %8003 = vmatpush1.msra.mxu0 0.0
  %8004 = vmatprep.subr.mxu0 0.0
  %8005 = vmatpush1.msra.mxu0 0.0
  %8006 = vmatprep.subr.mxu0 0.0
  %8007 = vmatpush1.msra.mxu0 0.0
  %8008 = vmatprep.subr.mxu0 0.0
  %8009 = vmatpush1.msra.mxu0 0.0
  %8010 = vmatprep.subr.mxu0 0.0
  %8011 = vmatpush1.msra.mxu0 0.0
  %8012 = vmatprep.subr.mxu0 0.0
  %8013 = vmatpush1.msra.mxu0 0.0
  %8014 = vmatprep.subr.mxu0 0.0
  %8015 = vmatpush1.msra.mxu0 0.0
  %8016 = vmatprep.subr.mxu0 0.0
  %8017 = vmatpush1.msra.mxu0 0.0
  %8018 = vmatprep.subr.mxu0 0.0
  %8019 = vmatpush1.msra.mxu0 0.0
  %8020 = vmatprep.subr.mxu0 0.0
  %8021 = vmatpush1.msra.mxu0 0.0
  %8022 = vmatprep.subr.mxu0 0.0
  %8023 = vmatpush1.msra.mxu0 0.0
  %8024 = vmatprep.subr.mxu0 0.0
  %8025 = vmatpush1.msra.mxu0 0.0
  %8026 = vmatprep.subr.mxu0 0.0
  %8027 = vmatpush1.msra.mxu0 0.0
  %8028 = vmatprep.subr.mxu0 0.0
  %8029 = vmatpush1.msra.mxu0 0.0
  %8030 = vmatprep.subr.mxu0 0.0
  %8031 = vmatpush1.msra.mxu0 0.0
  %8032 = vmatprep.subr.mxu0 0.0
  %8033 = vmatpush1.msra.mxu0 0.0
  %8034 = vmatprep.subr.mxu0 0.0
  %8035 = vmatpush1.msra.mxu0 0.0
  %8036 = vmatprep.mubr.f32.mxu0 0.0
  %8037 = vmatmul.mubr.f32.gmra.mrb[0].mxu0 %v5011
  %v8038 = vpop.f32.mrb[0].mxu0
  %v8039 = vadd.f32 %v7970, %v8038
  %v8040 = vpop.f32.mrb[0].mxu0
  %8041 = vmatprep.mubr.f32.mxu0 0.0
  %8042 = vmatmul.mubr.f32.gmra.mrb[0].mxu0 %v5014
  %v8043 = vpop.f32.mrb[0].mxu0
  %v8044 = vadd.f32 %v7970, %v8043
  %v8045 = vpop.f32.mrb[0].mxu0
  %8046 = vmatprep.mubr.f32.mxu0 0.0
  %8047 = vmatmul.mubr.f32.gmra.mrb[0].mxu0 %v5017
  %v8048 = vpop.f32.mrb[0].mxu0
  %v8049 = vadd.f32 %v7970, %v8048
  %v8050 = vpop.f32.mrb[0].mxu0
  %8051 = vmatprep.mubr.f32.mxu0 0.0
  %8052 = vmatmul.mubr.f32.gmra.mrb[0].mxu0 %v5020
  %v8053 = vpop.f32.mrb[0].mxu0
  %v8054 = vadd.f32 %v7970, %v8053
  %v8055 = vpop.f32.mrb[0].mxu0
  %8056 = vmatprep.mubr.f32.mxu0 0.0
  %8057 = vmatmul.mubr.f32.gmra.mrb[0].mxu0 %v5023
  %v8058 = vpop.f32.mrb[0].mxu0
  %v8059 = vadd.f32 %v7970, %v8058
  %v8060 = vpop.f32.mrb[0].mxu0
  %8061 = vmatprep.mubr.f32.mxu0 0.0
  %8062 = vmatmul.mubr.f32.gmra.mrb[0].mxu0 %v5026
  %v8063 = vpop.f32.mrb[0].mxu0
  %v8064 = vadd.f32 %v7970, %v8063
  %v8065 = vpop.f32.mrb[0].mxu0
  %8066 = vmatprep.mubr.f32.mxu0 0.0
  %8067 = vmatmul.mubr.f32.gmra.mrb[0].mxu0 %v5029
  %v8068 = vpop.f32.mrb[0].mxu0
  %v8069 = vadd.f32 %v7970, %v8068
  %v8070 = vpop.f32.mrb[0].mxu0
  %8071 = vmatprep.mubr.f32.mxu0 0.0
  %8072 = vmatmul.mubr.f32.gmra.mrb[0].mxu0 %v5032
  %v8073 = vpop.f32.mrb[0].mxu0
  %v8074 = vadd.f32 %v7970, %v8073
  %v8075 = vpop.f32.mrb[0].mxu0
  %8076 = vmatprep.mubr.f32.mxu0 0.0
  %8077 = vmatmul.mubr.f32.gmra.mrb[0].mxu0 %v5035
  %v8078 = vpop.f32.mrb[0].mxu0
  %v8079 = vadd.f32 %v7970, %v8078
  %v8080 = vpop.f32.mrb[0].mxu0
  %8081 = vmatprep.mubr.f32.mxu0 0.0
  %8082 = vmatmul.mubr.f32.gmra.mrb[0].mxu0 %v5038
  %v8083 = vpop.f32.mrb[0].mxu0
  %v8084 = vadd.f32 %v7970, %v8083
  %v8085 = vpop.f32.mrb[0].mxu0
  %8086 = vdwg.mxu0
  %s8087 = scalar_lea.vmem %s5, 448
  %v8088 = vld [vmem:[%s8087] sm:$0xff]
  %v8089 = vld [vmem:[%s8087 + $0x8] sm:$0xff]
  %v8090 = vld [vmem:[%s8087 + $0x10] sm:$0xff]
  %v8091 = vld [vmem:[%s8087 + $0x18] sm:$0xff]
  %v8092 = vld [vmem:[%s8087 + $0x20] sm:$0xff]
  %v8093 = vld [vmem:[%s8087 + $0x28] sm:$0xff]
  %v8094 = vld [vmem:[%s8087 + $0x30] sm:$0xff]
  %v8095 = vld [vmem:[%s8087 + $0x38] sm:$0xff]
  %s8096 = scalar_lea.vmem %s6, 7
  %v8097 = vld [vmem:[%s8096] sm:$0x1]
  %v8099 = vlaneseq
  %v8100 = vshrl.u32 %v8099, 7
  %v8101 = vsub.s32 0, %v8100
  %v8102 = vrot.slane %v8097, %v8101
  %8104 = vmatprep.subr.mxu0 0.0
  %8105 = vmatpush1.msra.mxu0 %v8088
  %8106 = vmatprep.subr.mxu0 0.0
  %8107 = vmatpush1.msra.mxu0 %v8089
  %8108 = vmatprep.subr.mxu0 0.0
  %8109 = vmatpush1.msra.mxu0 %v8090
  %8110 = vmatprep.subr.mxu0 0.0
  %8111 = vmatpush1.msra.mxu0 %v8091
  %8112 = vmatprep.subr.mxu0 0.0
  %8113 = vmatpush1.msra.mxu0 %v8092
  %8114 = vmatprep.subr.mxu0 0.0
  %8115 = vmatpush1.msra.mxu0 %v8093
  %8116 = vmatprep.subr.mxu0 0.0
  %8117 = vmatpush1.msra.mxu0 %v8094
  %8118 = vmatprep.subr.mxu0 0.0
  %8119 = vmatpush1.msra.mxu0 %v8095
  %8120 = vmatprep.subr.mxu0 0.0
  %8121 = vmatpush1.msra.mxu0 0.0
  %8122 = vmatprep.subr.mxu0 0.0
  %8123 = vmatpush1.msra.mxu0 0.0
  %8124 = vmatprep.subr.mxu0 0.0
  %8125 = vmatpush1.msra.mxu0 0.0
  %8126 = vmatprep.subr.mxu0 0.0
  %8127 = vmatpush1.msra.mxu0 0.0
  %8128 = vmatprep.subr.mxu0 0.0
  %8129 = vmatpush1.msra.mxu0 0.0
  %8130 = vmatprep.subr.mxu0 0.0
  %8131 = vmatpush1.msra.mxu0 0.0
  %8132 = vmatprep.subr.mxu0 0.0
  %8133 = vmatpush1.msra.mxu0 0.0
  %8134 = vmatprep.subr.mxu0 0.0
  %8135 = vmatpush1.msra.mxu0 0.0
  %8136 = vmatprep.subr.mxu0 0.0
  %8137 = vmatpush1.msra.mxu0 0.0
  %8138 = vmatprep.subr.mxu0 0.0
  %8139 = vmatpush1.msra.mxu0 0.0
  %8140 = vmatprep.subr.mxu0 0.0
  %8141 = vmatpush1.msra.mxu0 0.0
  %8142 = vmatprep.subr.mxu0 0.0
  %8143 = vmatpush1.msra.mxu0 0.0
  %8144 = vmatprep.subr.mxu0 0.0
  %8145 = vmatpush1.msra.mxu0 0.0
  %8146 = vmatprep.subr.mxu0 0.0
  %8147 = vmatpush1.msra.mxu0 0.0
  %8148 = vmatprep.subr.mxu0 0.0
  %8149 = vmatpush1.msra.mxu0 0.0
  %8150 = vmatprep.subr.mxu0 0.0
  %8151 = vmatpush1.msra.mxu0 0.0
  %8152 = vmatprep.subr.mxu0 0.0
  %8153 = vmatpush1.msra.mxu0 0.0
  %8154 = vmatprep.subr.mxu0 0.0
  %8155 = vmatpush1.msra.mxu0 0.0
  %8156 = vmatprep.subr.mxu0 0.0
  %8157 = vmatpush1.msra.mxu0 0.0
  %8158 = vmatprep.subr.mxu0 0.0
  %8159 = vmatpush1.msra.mxu0 0.0
  %8160 = vmatprep.subr.mxu0 0.0
  %8161 = vmatpush1.msra.mxu0 0.0
  %8162 = vmatprep.subr.mxu0 0.0
  %8163 = vmatpush1.msra.mxu0 0.0
  %8164 = vmatprep.subr.mxu0 0.0
  %8165 = vmatpush1.msra.mxu0 0.0
  %8166 = vmatprep.subr.mxu0 0.0
  %8167 = vmatpush1.msra.mxu0 0.0
  %8168 = vmatprep.mubr.f32.mxu0 0.0
  %8169 = vmatmul.mubr.f32.gmra.mrb[0].mxu0 %v5011
  %v8170 = vpop.f32.mrb[0].mxu0
  %v8171 = vadd.f32 %v8102, %v8170
  %v8172 = vpop.f32.mrb[0].mxu0
  %8173 = vmatprep.mubr.f32.mxu0 0.0
  %8174 = vmatmul.mubr.f32.gmra.mrb[0].mxu0 %v5014
  %v8175 = vpop.f32.mrb[0].mxu0
  %v8176 = vadd.f32 %v8102, %v8175
  %v8177 = vpop.f32.mrb[0].mxu0
  %8178 = vmatprep.mubr.f32.mxu0 0.0
  %8179 = vmatmul.mubr.f32.gmra.mrb[0].mxu0 %v5017
  %v8180 = vpop.f32.mrb[0].mxu0
  %v8181 = vadd.f32 %v8102, %v8180
  %v8182 = vpop.f32.mrb[0].mxu0
  %8183 = vmatprep.mubr.f32.mxu0 0.0
  %8184 = vmatmul.mubr.f32.gmra.mrb[0].mxu0 %v5020
  %v8185 = vpop.f32.mrb[0].mxu0
  %v8186 = vadd.f32 %v8102, %v8185
  %v8187 = vpop.f32.mrb[0].mxu0
  %8188 = vmatprep.mubr.f32.mxu0 0.0
  %8189 = vmatmul.mubr.f32.gmra.mrb[0].mxu0 %v5023
  %v8190 = vpop.f32.mrb[0].mxu0
  %v8191 = vadd.f32 %v8102, %v8190
  %v8192 = vpop.f32.mrb[0].mxu0
  %8193 = vmatprep.mubr.f32.mxu0 0.0
  %8194 = vmatmul.mubr.f32.gmra.mrb[0].mxu0 %v5026
  %v8195 = vpop.f32.mrb[0].mxu0
  %v8196 = vadd.f32 %v8102, %v8195
  %v8197 = vpop.f32.mrb[0].mxu0
  %8198 = vmatprep.mubr.f32.mxu0 0.0
  %8199 = vmatmul.mubr.f32.gmra.mrb[0].mxu0 %v5029
  %v8200 = vpop.f32.mrb[0].mxu0
  %v8201 = vadd.f32 %v8102, %v8200
  %v8202 = vpop.f32.mrb[0].mxu0
  %8203 = vmatprep.mubr.f32.mxu0 0.0
  %8204 = vmatmul.mubr.f32.gmra.mrb[0].mxu0 %v5032
  %v8205 = vpop.f32.mrb[0].mxu0
  %v8206 = vadd.f32 %v8102, %v8205
  %v8207 = vpop.f32.mrb[0].mxu0
  %8208 = vmatprep.mubr.f32.mxu0 0.0
  %8209 = vmatmul.mubr.f32.gmra.mrb[0].mxu0 %v5035
  %v8210 = vpop.f32.mrb[0].mxu0
  %v8211 = vadd.f32 %v8102, %v8210
  %v8212 = vpop.f32.mrb[0].mxu0
  %8213 = vmatprep.mubr.f32.mxu0 0.0
  %8214 = vmatmul.mubr.f32.gmra.mrb[0].mxu0 %v5038
  %v8215 = vpop.f32.mrb[0].mxu0
  %v8216 = vadd.f32 %v8102, %v8215
  %v8217 = vpop.f32.mrb[0].mxu0
  %8218 = vdwg.mxu0
  %s8219 = scalar_lea.vmem %s7, 448
  %v8220 = vld [vmem:[%s8219] sm:$0xff]
  %v8221 = vld [vmem:[%s8219 + $0x8] sm:$0xff]
  %v8222 = vld [vmem:[%s8219 + $0x10] sm:$0xff]
  %v8223 = vld [vmem:[%s8219 + $0x18] sm:$0xff]
  %v8224 = vld [vmem:[%s8219 + $0x20] sm:$0xff]
  %v8225 = vld [vmem:[%s8219 + $0x28] sm:$0xff]
  %v8226 = vld [vmem:[%s8219 + $0x30] sm:$0xff]
  %v8227 = vld [vmem:[%s8219 + $0x38] sm:$0xff]
  %s8228 = scalar_lea.vmem %s8, 7
  %v8229 = vld [vmem:[%s8228] sm:$0x1]
  %v8231 = vlaneseq
  %v8232 = vshrl.u32 %v8231, 7
  %v8233 = vsub.s32 0, %v8232
  %v8234 = vrot.slane %v8229, %v8233
  %8236 = vmatprep.subr.mxu0 0.0
  %8237 = vmatpush1.msra.mxu0 %v8220
  %8238 = vmatprep.subr.mxu0 0.0
  %8239 = vmatpush1.msra.mxu0 %v8221
  %8240 = vmatprep.subr.mxu0 0.0
  %8241 = vmatpush1.msra.mxu0 %v8222
  %8242 = vmatprep.subr.mxu0 0.0
  %8243 = vmatpush1.msra.mxu0 %v8223
  %8244 = vmatprep.subr.mxu0 0.0
  %8245 = vmatpush1.msra.mxu0 %v8224
  %8246 = vmatprep.subr.mxu0 0.0
  %8247 = vmatpush1.msra.mxu0 %v8225
  %8248 = vmatprep.subr.mxu0 0.0
  %8249 = vmatpush1.msra.mxu0 %v8226
  %8250 = vmatprep.subr.mxu0 0.0
  %8251 = vmatpush1.msra.mxu0 %v8227
  %8252 = vmatprep.subr.mxu0 0.0
  %8253 = vmatpush1.msra.mxu0 0.0
  %8254 = vmatprep.subr.mxu0 0.0
  %8255 = vmatpush1.msra.mxu0 0.0
  %8256 = vmatprep.subr.mxu0 0.0
  %8257 = vmatpush1.msra.mxu0 0.0
  %8258 = vmatprep.subr.mxu0 0.0
  %8259 = vmatpush1.msra.mxu0 0.0
  %8260 = vmatprep.subr.mxu0 0.0
  %8261 = vmatpush1.msra.mxu0 0.0
  %8262 = vmatprep.subr.mxu0 0.0
  %8263 = vmatpush1.msra.mxu0 0.0
  %8264 = vmatprep.subr.mxu0 0.0
  %8265 = vmatpush1.msra.mxu0 0.0
  %8266 = vmatprep.subr.mxu0 0.0
  %8267 = vmatpush1.msra.mxu0 0.0
  %8268 = vmatprep.subr.mxu0 0.0
  %8269 = vmatpush1.msra.mxu0 0.0
  %8270 = vmatprep.subr.mxu0 0.0
  %8271 = vmatpush1.msra.mxu0 0.0
  %8272 = vmatprep.subr.mxu0 0.0
  %8273 = vmatpush1.msra.mxu0 0.0
  %8274 = vmatprep.subr.mxu0 0.0
  %8275 = vmatpush1.msra.mxu0 0.0
  %8276 = vmatprep.subr.mxu0 0.0
  %8277 = vmatpush1.msra.mxu0 0.0
  %8278 = vmatprep.subr.mxu0 0.0
  %8279 = vmatpush1.msra.mxu0 0.0
  %8280 = vmatprep.subr.mxu0 0.0
  %8281 = vmatpush1.msra.mxu0 0.0
  %8282 = vmatprep.subr.mxu0 0.0
  %8283 = vmatpush1.msra.mxu0 0.0
  %8284 = vmatprep.subr.mxu0 0.0
  %8285 = vmatpush1.msra.mxu0 0.0
  %8286 = vmatprep.subr.mxu0 0.0
  %8287 = vmatpush1.msra.mxu0 0.0
  %8288 = vmatprep.subr.mxu0 0.0
  %8289 = vmatpush1.msra.mxu0 0.0
  %8290 = vmatprep.subr.mxu0 0.0
  %8291 = vmatpush1.msra.mxu0 0.0
  %8292 = vmatprep.subr.mxu0 0.0
  %8293 = vmatpush1.msra.mxu0 0.0
  %8294 = vmatprep.subr.mxu0 0.0
  %8295 = vmatpush1.msra.mxu0 0.0
  %8296 = vmatprep.subr.mxu0 0.0
  %8297 = vmatpush1.msra.mxu0 0.0
  %8298 = vmatprep.subr.mxu0 0.0
  %8299 = vmatpush1.msra.mxu0 0.0
  %8300 = vmatprep.mubr.f32.mxu0 0.0
  %8301 = vmatmul.mubr.f32.gmra.mrb[0].mxu0 %v5011
  %v8302 = vpop.f32.mrb[0].mxu0
  %v8303 = vadd.f32 %v8234, %v8302
  %v8304 = vpop.f32.mrb[0].mxu0
  %8305 = vmatprep.mubr.f32.mxu0 0.0
  %8306 = vmatmul.mubr.f32.gmra.mrb[0].mxu0 %v5014
  %v8307 = vpop.f32.mrb[0].mxu0
  %v8308 = vadd.f32 %v8234, %v8307
  %v8309 = vpop.f32.mrb[0].mxu0
  %8310 = vmatprep.mubr.f32.mxu0 0.0
  %8311 = vmatmul.mubr.f32.gmra.mrb[0].mxu0 %v5017
  %v8312 = vpop.f32.mrb[0].mxu0
  %v8313 = vadd.f32 %v8234, %v8312
  %v8314 = vpop.f32.mrb[0].mxu0
  %8315 = vmatprep.mubr.f32.mxu0 0.0
  %8316 = vmatmul.mubr.f32.gmra.mrb[0].mxu0 %v5020
  %v8317 = vpop.f32.mrb[0].mxu0
  %v8318 = vadd.f32 %v8234, %v8317
  %v8319 = vpop.f32.mrb[0].mxu0
  %8320 = vmatprep.mubr.f32.mxu0 0.0
  %8321 = vmatmul.mubr.f32.gmra.mrb[0].mxu0 %v5023
  %v8322 = vpop.f32.mrb[0].mxu0
  %v8323 = vadd.f32 %v8234, %v8322
  %v8324 = vpop.f32.mrb[0].mxu0
  %8325 = vmatprep.mubr.f32.mxu0 0.0
  %8326 = vmatmul.mubr.f32.gmra.mrb[0].mxu0 %v5026
  %v8327 = vpop.f32.mrb[0].mxu0
  %v8328 = vadd.f32 %v8234, %v8327
  %v8329 = vpop.f32.mrb[0].mxu0
  %8330 = vmatprep.mubr.f32.mxu0 0.0
  %8331 = vmatmul.mubr.f32.gmra.mrb[0].mxu0 %v5029
  %v8332 = vpop.f32.mrb[0].mxu0
  %v8333 = vadd.f32 %v8234, %v8332
  %v8334 = vpop.f32.mrb[0].mxu0
  %8335 = vmatprep.mubr.f32.mxu0 0.0
  %8336 = vmatmul.mubr.f32.gmra.mrb[0].mxu0 %v5032
  %v8337 = vpop.f32.mrb[0].mxu0
  %v8338 = vadd.f32 %v8234, %v8337
  %v8339 = vpop.f32.mrb[0].mxu0
  %8340 = vmatprep.mubr.f32.mxu0 0.0
  %8341 = vmatmul.mubr.f32.gmra.mrb[0].mxu0 %v5035
  %v8342 = vpop.f32.mrb[0].mxu0
  %v8343 = vadd.f32 %v8234, %v8342
  %v8344 = vpop.f32.mrb[0].mxu0
  %8345 = vmatprep.mubr.f32.mxu0 0.0
  %8346 = vmatmul.mubr.f32.gmra.mrb[0].mxu0 %v5038
  %v8347 = vpop.f32.mrb[0].mxu0
  %v8348 = vadd.f32 %v8234, %v8347
  %v8349 = vpop.f32.mrb[0].mxu0
  %8350 = vdwg.mxu0
  %v8352 = vsel %vm668, %v8039, 0
  %v8355 = vsel %vm668, %v8044, 0
  %v8358 = vsel %vm668, %v8049, 0
  %v8361 = vsel %vm668, %v8054, 0
  %v8364 = vsel %vm668, %v8059, 0
  %v8367 = vsel %vm668, %v8064, 0
  %v8370 = vsel %vm668, %v8069, 0
  %v8373 = vsel %vm668, %v8074, 0
  %v8376 = vsel %vm668, %v8079, 0
  %v8379 = vsel %vm668, %v8084, 0
  %v8382 = vsel %vm668, %v8171, 0
  %v8385 = vsel %vm668, %v8176, 0
  %v8388 = vsel %vm668, %v8181, 0
  %v8391 = vsel %vm668, %v8186, 0
  %v8394 = vsel %vm668, %v8191, 0
  %v8397 = vsel %vm668, %v8196, 0
  %v8400 = vsel %vm668, %v8201, 0
  %v8403 = vsel %vm668, %v8206, 0
  %v8406 = vsel %vm668, %v8211, 0
  %v8409 = vsel %vm668, %v8216, 0
  %8411 = vmatprep.subr.mxu0 0.0
  %8412 = vmatpush1.xpose.msra.mxu0 %v8382
  %8413 = vmatprep.subr.mxu0 0.0
  %8414 = vmatpush1.xpose.msra.mxu0 %v8385
  %8415 = vmatprep.subr.mxu0 0.0
  %8416 = vmatpush1.xpose.msra.mxu0 %v8388
  %8417 = vmatprep.subr.mxu0 0.0
  %8418 = vmatpush1.xpose.msra.mxu0 %v8391
  %8419 = vmatprep.subr.mxu0 0.0
  %8420 = vmatpush1.xpose.msra.mxu0 %v8394
  %8421 = vmatprep.subr.mxu0 0.0
  %8422 = vmatpush1.xpose.msra.mxu0 %v8397
  %8423 = vmatprep.subr.mxu0 0.0
  %8424 = vmatpush1.xpose.msra.mxu0 %v8400
  %8425 = vmatprep.subr.mxu0 0.0
  %8426 = vmatpush1.xpose.msra.mxu0 %v8403
  %8427 = vmatprep.subr.mxu0 0.0
  %8428 = vmatpush1.xpose.msra.mxu0 %v8406
  %8429 = vmatprep.subr.mxu0 0.0
  %8430 = vmatpush1.xpose.msra.mxu0 %v8409
  %8431 = vmatprep.subr.mxu0 0.0
  %8432 = vmatpush1.xpose.msra.mxu0 0.0
  %8433 = vmatprep.subr.mxu0 0.0
  %8434 = vmatpush1.xpose.msra.mxu0 0.0
  %8435 = vmatprep.subr.mxu0 0.0
  %8436 = vmatpush1.xpose.msra.mxu0 0.0
  %8437 = vmatprep.subr.mxu0 0.0
  %8438 = vmatpush1.xpose.msra.mxu0 0.0
  %8439 = vmatprep.subr.mxu0 0.0
  %8440 = vmatpush1.xpose.msra.mxu0 0.0
  %8441 = vmatprep.subr.mxu0 0.0
  %8442 = vmatpush1.xpose.msra.mxu0 0.0
  %8443 = vmatprep.subr.mxu0 0.0
  %8444 = vmatpush1.xpose.msra.mxu0 0.0
  %8445 = vmatprep.subr.mxu0 0.0
  %8446 = vmatpush1.xpose.msra.mxu0 0.0
  %8447 = vmatprep.subr.mxu0 0.0
  %8448 = vmatpush1.xpose.msra.mxu0 0.0
  %8449 = vmatprep.subr.mxu0 0.0
  %8450 = vmatpush1.xpose.msra.mxu0 0.0
  %8451 = vmatprep.subr.mxu0 0.0
  %8452 = vmatpush1.xpose.msra.mxu0 0.0
  %8453 = vmatprep.subr.mxu0 0.0
  %8454 = vmatpush1.xpose.msra.mxu0 0.0
  %8455 = vmatprep.subr.mxu0 0.0
  %8456 = vmatpush1.xpose.msra.mxu0 0.0
  %8457 = vmatprep.subr.mxu0 0.0
  %8458 = vmatpush1.xpose.msra.mxu0 0.0
  %8459 = vmatprep.subr.mxu0 0.0
  %8460 = vmatpush1.xpose.msra.mxu0 0.0
  %8461 = vmatprep.subr.mxu0 0.0
  %8462 = vmatpush1.xpose.msra.mxu0 0.0
  %8463 = vmatprep.subr.mxu0 0.0
  %8464 = vmatpush1.xpose.msra.mxu0 0.0
  %8465 = vmatprep.subr.mxu0 0.0
  %8466 = vmatpush1.xpose.msra.mxu0 0.0
  %8467 = vmatprep.subr.mxu0 0.0
  %8468 = vmatpush1.xpose.msra.mxu0 0.0
  %8469 = vmatprep.subr.mxu0 0.0
  %8470 = vmatpush1.xpose.msra.mxu0 0.0
  %8471 = vmatprep.subr.mxu0 0.0
  %8472 = vmatpush1.xpose.msra.mxu0 0.0
  %8473 = vmatprep.subr.mxu0 0.0
  %8474 = vmatpush1.xpose.msra.mxu0 0.0
  %8475 = vmatprep.mubr.f32.mxu0 0.0
  %8476 = vmatmul.mubr.f32.gmra.mrb[0].mxu0 %v8352
  %v8477 = vpop.f32.mrb[0].mxu0
  %v8478 = vadd.f32 %v81, %v8477
  %v8479 = vpop.f32.mrb[0].mxu0
  %8480 = vmatprep.mubr.f32.mxu0 0.0
  %8481 = vmatmul.mubr.f32.gmra.mrb[0].mxu0 %v8355
  %v8482 = vpop.f32.mrb[0].mxu0
  %v8483 = vadd.f32 %v81, %v8482
  %v8484 = vpop.f32.mrb[0].mxu0
  %8485 = vmatprep.mubr.f32.mxu0 0.0
  %8486 = vmatmul.mubr.f32.gmra.mrb[0].mxu0 %v8358
  %v8487 = vpop.f32.mrb[0].mxu0
  %v8488 = vadd.f32 %v81, %v8487
  %v8489 = vpop.f32.mrb[0].mxu0
  %8490 = vmatprep.mubr.f32.mxu0 0.0
  %8491 = vmatmul.mubr.f32.gmra.mrb[0].mxu0 %v8361
  %v8492 = vpop.f32.mrb[0].mxu0
  %v8493 = vadd.f32 %v81, %v8492
  %v8494 = vpop.f32.mrb[0].mxu0
  %8495 = vmatprep.mubr.f32.mxu0 0.0
  %8496 = vmatmul.mubr.f32.gmra.mrb[0].mxu0 %v8364
  %v8497 = vpop.f32.mrb[0].mxu0
  %v8498 = vadd.f32 %v81, %v8497
  %v8499 = vpop.f32.mrb[0].mxu0
  %8500 = vmatprep.mubr.f32.mxu0 0.0
  %8501 = vmatmul.mubr.f32.gmra.mrb[0].mxu0 %v8367
  %v8502 = vpop.f32.mrb[0].mxu0
  %v8503 = vadd.f32 %v81, %v8502
  %v8504 = vpop.f32.mrb[0].mxu0
  %8505 = vmatprep.mubr.f32.mxu0 0.0
  %8506 = vmatmul.mubr.f32.gmra.mrb[0].mxu0 %v8370
  %v8507 = vpop.f32.mrb[0].mxu0
  %v8508 = vadd.f32 %v81, %v8507
  %v8509 = vpop.f32.mrb[0].mxu0
  %8510 = vmatprep.mubr.f32.mxu0 0.0
  %8511 = vmatmul.mubr.f32.gmra.mrb[0].mxu0 %v8373
  %v8512 = vpop.f32.mrb[0].mxu0
  %v8513 = vadd.f32 %v81, %v8512
  %v8514 = vpop.f32.mrb[0].mxu0
  %8515 = vmatprep.mubr.f32.mxu0 0.0
  %8516 = vmatmul.mubr.f32.gmra.mrb[0].mxu0 %v8376
  %v8517 = vpop.f32.mrb[0].mxu0
  %v8518 = vadd.f32 %v81, %v8517
  %v8519 = vpop.f32.mrb[0].mxu0
  %8520 = vmatprep.mubr.f32.mxu0 0.0
  %8521 = vmatmul.mubr.f32.gmra.mrb[0].mxu0 %v8379
  %v8522 = vpop.f32.mrb[0].mxu0
  %v8523 = vadd.f32 %v81, %v8522
  %v8524 = vpop.f32.mrb[0].mxu0
  %8525 = vdwg.mxu0
  %v8526 = vsel %vm844, %v8478, -inf
  %8527 = vmax.xlane.f32.xlu0 %v8526
  %v8528 = vpop.xlane.xlu0 %8527
  %v8529 = vsel %vm844, %v8483, -inf
  %8530 = vmax.xlane.f32.xlu0 %v8529
  %v8531 = vpop.xlane.xlu0 %8530
  %v8532 = vsel %vm844, %v8488, -inf
  %8533 = vmax.xlane.f32.xlu0 %v8532
  %v8534 = vpop.xlane.xlu0 %8533
  %v8535 = vsel %vm844, %v8493, -inf
  %8536 = vmax.xlane.f32.xlu0 %v8535
  %v8537 = vpop.xlane.xlu0 %8536
  %v8538 = vsel %vm844, %v8498, -inf
  %8539 = vmax.xlane.f32.xlu0 %v8538
  %v8540 = vpop.xlane.xlu0 %8539
  %v8541 = vsel %vm844, %v8503, -inf
  %8542 = vmax.xlane.f32.xlu0 %v8541
  %v8543 = vpop.xlane.xlu0 %8542
  %v8544 = vsel %vm844, %v8508, -inf
  %8545 = vmax.xlane.f32.xlu0 %v8544
  %v8546 = vpop.xlane.xlu0 %8545
  %v8547 = vsel %vm844, %v8513, -inf
  %8548 = vmax.xlane.f32.xlu0 %v8547
  %v8549 = vpop.xlane.xlu0 %8548
  %v8550 = vsel %vm844, %v8518, -inf
  %8551 = vmax.xlane.f32.xlu0 %v8550
  %v8552 = vpop.xlane.xlu0 %8551
  %v8553 = vsel %vm844, %v8523, -inf
  %8554 = vmax.xlane.f32.xlu0 %v8553
  %v8555 = vpop.xlane.xlu0 %8554
  %v8556 = vsub.f32 %v8478, %v8528
  %v8557 = vsub.f32 %v8483, %v8531
  %v8558 = vsub.f32 %v8488, %v8534
  %v8559 = vsub.f32 %v8493, %v8537
  %v8560 = vsub.f32 %v8498, %v8540
  %v8561 = vsub.f32 %v8503, %v8543
  %v8562 = vsub.f32 %v8508, %v8546
  %v8563 = vsub.f32 %v8513, %v8549
  %v8564 = vsub.f32 %v8518, %v8552
  %v8565 = vsub.f32 %v8523, %v8555
  %v8566 = vmul.f32 %v8556, 1.442695
  %v8567 = vpow.pop %v8566
  %v8568 = vmul.f32 %v8557, 1.442695
  %v8569 = vpow.pop %v8568
  %v8570 = vmul.f32 %v8558, 1.442695
  %v8571 = vpow.pop %v8570
  %v8572 = vmul.f32 %v8559, 1.442695
  %v8573 = vpow.pop %v8572
  %v8574 = vmul.f32 %v8560, 1.442695
  %v8575 = vpow.pop %v8574
  %v8576 = vmul.f32 %v8561, 1.442695
  %v8577 = vpow.pop %v8576
  %v8578 = vmul.f32 %v8562, 1.442695
  %v8579 = vpow.pop %v8578
  %v8580 = vmul.f32 %v8563, 1.442695
  %v8581 = vpow.pop %v8580
  %v8582 = vmul.f32 %v8564, 1.442695
  %v8583 = vpow.pop %v8582
  %v8584 = vmul.f32 %v8565, 1.442695
  %v8585 = vpow.pop %v8584
  %v8586 = vsel %vm844, %v8567, 0.0
  %8587 = vadd.xlane.f32.xlu0 %v8586
  %v8588 = vpop.xlane.xlu0 %8587
  %v8589 = vsel %vm844, %v8569, 0.0
  %8590 = vadd.xlane.f32.xlu0 %v8589
  %v8591 = vpop.xlane.xlu0 %8590
  %v8592 = vsel %vm844, %v8571, 0.0
  %8593 = vadd.xlane.f32.xlu0 %v8592
  %v8594 = vpop.xlane.xlu0 %8593
  %v8595 = vsel %vm844, %v8573, 0.0
  %8596 = vadd.xlane.f32.xlu0 %v8595
  %v8597 = vpop.xlane.xlu0 %8596
  %v8598 = vsel %vm844, %v8575, 0.0
  %8599 = vadd.xlane.f32.xlu0 %v8598
  %v8600 = vpop.xlane.xlu0 %8599
  %v8601 = vsel %vm844, %v8577, 0.0
  %8602 = vadd.xlane.f32.xlu0 %v8601
  %v8603 = vpop.xlane.xlu0 %8602
  %v8604 = vsel %vm844, %v8579, 0.0
  %8605 = vadd.xlane.f32.xlu0 %v8604
  %v8606 = vpop.xlane.xlu0 %8605
  %v8607 = vsel %vm844, %v8581, 0.0
  %8608 = vadd.xlane.f32.xlu0 %v8607
  %v8609 = vpop.xlane.xlu0 %8608
  %v8610 = vsel %vm844, %v8583, 0.0
  %8611 = vadd.xlane.f32.xlu0 %v8610
  %v8612 = vpop.xlane.xlu0 %8611
  %v8613 = vsel %vm844, %v8585, 0.0
  %8614 = vadd.xlane.f32.xlu0 %v8613
  %v8615 = vpop.xlane.xlu0 %8614
  %v8616 = vrcp.pop %v8588
  %v8617 = vrcp.pop %v8591
  %v8618 = vrcp.pop %v8594
  %v8619 = vrcp.pop %v8597
  %v8620 = vrcp.pop %v8600
  %v8621 = vrcp.pop %v8603
  %v8622 = vrcp.pop %v8606
  %v8623 = vrcp.pop %v8609
  %v8624 = vrcp.pop %v8612
  %v8625 = vrcp.pop %v8615
  %v8626 = vmul.f32 %v8567, %v8616
  %v8627 = vmul.f32 %v8569, %v8617
  %v8628 = vmul.f32 %v8571, %v8618
  %v8629 = vmul.f32 %v8573, %v8619
  %v8630 = vmul.f32 %v8575, %v8620
  %v8631 = vmul.f32 %v8577, %v8621
  %v8632 = vmul.f32 %v8579, %v8622
  %v8633 = vmul.f32 %v8581, %v8623
  %v8634 = vmul.f32 %v8583, %v8624
  %v8635 = vmul.f32 %v8585, %v8625
  %v8637 = vsel %vm844, %v8626, 0
  %v8640 = vsel %vm844, %v8627, 0
  %v8643 = vsel %vm844, %v8628, 0
  %v8646 = vsel %vm844, %v8629, 0
  %v8649 = vsel %vm844, %v8630, 0
  %v8652 = vsel %vm844, %v8631, 0
  %v8655 = vsel %vm844, %v8632, 0
  %v8658 = vsel %vm844, %v8633, 0
  %v8661 = vsel %vm844, %v8634, 0
  %v8664 = vsel %vm844, %v8635, 0
  %8666 = vmatprep.subr.mxu0 0.0
  %8667 = vmatpush1.msra.mxu0 %v8303
  %8668 = vmatprep.subr.mxu0 0.0
  %8669 = vmatpush1.msra.mxu0 %v8308
  %8670 = vmatprep.subr.mxu0 0.0
  %8671 = vmatpush1.msra.mxu0 %v8313
  %8672 = vmatprep.subr.mxu0 0.0
  %8673 = vmatpush1.msra.mxu0 %v8318
  %8674 = vmatprep.subr.mxu0 0.0
  %8675 = vmatpush1.msra.mxu0 %v8323
  %8676 = vmatprep.subr.mxu0 0.0
  %8677 = vmatpush1.msra.mxu0 %v8328
  %8678 = vmatprep.subr.mxu0 0.0
  %8679 = vmatpush1.msra.mxu0 %v8333
  %8680 = vmatprep.subr.mxu0 0.0
  %8681 = vmatpush1.msra.mxu0 %v8338
  %8682 = vmatprep.subr.mxu0 0.0
  %8683 = vmatpush1.msra.mxu0 %v8343
  %8684 = vmatprep.subr.mxu0 0.0
  %8685 = vmatpush1.msra.mxu0 %v8348
  %8686 = vmatprep.subr.mxu0 0.0
  %8687 = vmatpush1.msra.mxu0 0.0
  %8688 = vmatprep.subr.mxu0 0.0
  %8689 = vmatpush1.msra.mxu0 0.0
  %8690 = vmatprep.subr.mxu0 0.0
  %8691 = vmatpush1.msra.mxu0 0.0
  %8692 = vmatprep.subr.mxu0 0.0
  %8693 = vmatpush1.msra.mxu0 0.0
  %8694 = vmatprep.subr.mxu0 0.0
  %8695 = vmatpush1.msra.mxu0 0.0
  %8696 = vmatprep.subr.mxu0 0.0
  %8697 = vmatpush1.msra.mxu0 0.0
  %8698 = vmatprep.subr.mxu0 0.0
  %8699 = vmatpush1.msra.mxu0 0.0
  %8700 = vmatprep.subr.mxu0 0.0
  %8701 = vmatpush1.msra.mxu0 0.0
  %8702 = vmatprep.subr.mxu0 0.0
  %8703 = vmatpush1.msra.mxu0 0.0
  %8704 = vmatprep.subr.mxu0 0.0
  %8705 = vmatpush1.msra.mxu0 0.0
  %8706 = vmatprep.subr.mxu0 0.0
  %8707 = vmatpush1.msra.mxu0 0.0
  %8708 = vmatprep.subr.mxu0 0.0
  %8709 = vmatpush1.msra.mxu0 0.0
  %8710 = vmatprep.subr.mxu0 0.0
  %8711 = vmatpush1.msra.mxu0 0.0
  %8712 = vmatprep.subr.mxu0 0.0
  %8713 = vmatpush1.msra.mxu0 0.0
  %8714 = vmatprep.subr.mxu0 0.0
  %8715 = vmatpush1.msra.mxu0 0.0
  %8716 = vmatprep.subr.mxu0 0.0
  %8717 = vmatpush1.msra.mxu0 0.0
  %8718 = vmatprep.subr.mxu0 0.0
  %8719 = vmatpush1.msra.mxu0 0.0
  %8720 = vmatprep.subr.mxu0 0.0
  %8721 = vmatpush1.msra.mxu0 0.0
  %8722 = vmatprep.subr.mxu0 0.0
  %8723 = vmatpush1.msra.mxu0 0.0
  %8724 = vmatprep.subr.mxu0 0.0
  %8725 = vmatpush1.msra.mxu0 0.0
  %8726 = vmatprep.subr.mxu0 0.0
  %8727 = vmatpush1.msra.mxu0 0.0
  %8728 = vmatprep.subr.mxu0 0.0
  %8729 = vmatpush1.msra.mxu0 0.0
  %8730 = vmatprep.mubr.f32.mxu0 0.0
  %8731 = vmatmul.mubr.f32.gmra.mrb[0].mxu0 %v8637
  %v8732 = vpop.f32.mrb[0].mxu0
  %v8733 = vadd.f32 0.0, %v8732
  %v8734 = vpop.f32.mrb[0].mxu0
  %8735 = vmatprep.mubr.f32.mxu0 0.0
  %8736 = vmatmul.mubr.f32.gmra.mrb[0].mxu0 %v8640
  %v8737 = vpop.f32.mrb[0].mxu0
  %v8738 = vadd.f32 0.0, %v8737
  %v8739 = vpop.f32.mrb[0].mxu0
  %8740 = vmatprep.mubr.f32.mxu0 0.0
  %8741 = vmatmul.mubr.f32.gmra.mrb[0].mxu0 %v8643
  %v8742 = vpop.f32.mrb[0].mxu0
  %v8743 = vadd.f32 0.0, %v8742
  %v8744 = vpop.f32.mrb[0].mxu0
  %8745 = vmatprep.mubr.f32.mxu0 0.0
  %8746 = vmatmul.mubr.f32.gmra.mrb[0].mxu0 %v8646
  %v8747 = vpop.f32.mrb[0].mxu0
  %v8748 = vadd.f32 0.0, %v8747
  %v8749 = vpop.f32.mrb[0].mxu0
  %8750 = vmatprep.mubr.f32.mxu0 0.0
  %8751 = vmatmul.mubr.f32.gmra.mrb[0].mxu0 %v8649
  %v8752 = vpop.f32.mrb[0].mxu0
  %v8753 = vadd.f32 0.0, %v8752
  %v8754 = vpop.f32.mrb[0].mxu0
  %8755 = vmatprep.mubr.f32.mxu0 0.0
  %8756 = vmatmul.mubr.f32.gmra.mrb[0].mxu0 %v8652
  %v8757 = vpop.f32.mrb[0].mxu0
  %v8758 = vadd.f32 0.0, %v8757
  %v8759 = vpop.f32.mrb[0].mxu0
  %8760 = vmatprep.mubr.f32.mxu0 0.0
  %8761 = vmatmul.mubr.f32.gmra.mrb[0].mxu0 %v8655
  %v8762 = vpop.f32.mrb[0].mxu0
  %v8763 = vadd.f32 0.0, %v8762
  %v8764 = vpop.f32.mrb[0].mxu0
  %8765 = vmatprep.mubr.f32.mxu0 0.0
  %8766 = vmatmul.mubr.f32.gmra.mrb[0].mxu0 %v8658
  %v8767 = vpop.f32.mrb[0].mxu0
  %v8768 = vadd.f32 0.0, %v8767
  %v8769 = vpop.f32.mrb[0].mxu0
  %8770 = vmatprep.mubr.f32.mxu0 0.0
  %8771 = vmatmul.mubr.f32.gmra.mrb[0].mxu0 %v8661
  %v8772 = vpop.f32.mrb[0].mxu0
  %v8773 = vadd.f32 0.0, %v8772
  %v8774 = vpop.f32.mrb[0].mxu0
  %8775 = vmatprep.mubr.f32.mxu0 0.0
  %8776 = vmatmul.mubr.f32.gmra.mrb[0].mxu0 %v8664
  %v8777 = vpop.f32.mrb[0].mxu0
  %v8778 = vadd.f32 0.0, %v8777
  %v8779 = vpop.f32.mrb[0].mxu0
  %8780 = vdwg.mxu0
  %s8781 = scalar_lea.vmem %s9, 112
  %v8782 = vld [vmem:[%s8781] sm:$0xff]
  %v8783 = vld [vmem:[%s8781 + $0x8] sm:$0xff]
  %v8785 = vsel %vm668, %v8733, 0
  %v8788 = vsel %vm668, %v8738, 0
  %v8791 = vsel %vm668, %v8743, 0
  %v8794 = vsel %vm668, %v8748, 0
  %v8797 = vsel %vm668, %v8753, 0
  %v8800 = vsel %vm668, %v8758, 0
  %v8803 = vsel %vm668, %v8763, 0
  %v8806 = vsel %vm668, %v8768, 0
  %v8809 = vsel %vm668, %v8773, 0
  %v8812 = vsel %vm668, %v8778, 0
  %8814 = vmatprep.subr.mxu0 0.0
  %8815 = vmatpush1.msra.mxu0 %v8782
  %8816 = vmatprep.subr.mxu0 0.0
  %8817 = vmatpush1.msra.mxu0 %v8783
  %8818 = vmatprep.subr.mxu0 0.0
  %8819 = vmatpush1.msra.mxu0 0.0
  %8820 = vmatprep.subr.mxu0 0.0
  %8821 = vmatpush1.msra.mxu0 0.0
  %8822 = vmatprep.subr.mxu0 0.0
  %8823 = vmatpush1.msra.mxu0 0.0
  %8824 = vmatprep.subr.mxu0 0.0
  %8825 = vmatpush1.msra.mxu0 0.0
  %8826 = vmatprep.subr.mxu0 0.0
  %8827 = vmatpush1.msra.mxu0 0.0
  %8828 = vmatprep.subr.mxu0 0.0
  %8829 = vmatpush1.msra.mxu0 0.0
  %8830 = vmatprep.subr.mxu0 0.0
  %8831 = vmatpush1.msra.mxu0 0.0
  %8832 = vmatprep.subr.mxu0 0.0
  %8833 = vmatpush1.msra.mxu0 0.0
  %8834 = vmatprep.subr.mxu0 0.0
  %8835 = vmatpush1.msra.mxu0 0.0
  %8836 = vmatprep.subr.mxu0 0.0
  %8837 = vmatpush1.msra.mxu0 0.0
  %8838 = vmatprep.subr.mxu0 0.0
  %8839 = vmatpush1.msra.mxu0 0.0
  %8840 = vmatprep.subr.mxu0 0.0
  %8841 = vmatpush1.msra.mxu0 0.0
  %8842 = vmatprep.subr.mxu0 0.0
  %8843 = vmatpush1.msra.mxu0 0.0
  %8844 = vmatprep.subr.mxu0 0.0
  %8845 = vmatpush1.msra.mxu0 0.0
  %8846 = vmatprep.subr.mxu0 0.0
  %8847 = vmatpush1.msra.mxu0 0.0
  %8848 = vmatprep.subr.mxu0 0.0
  %8849 = vmatpush1.msra.mxu0 0.0
  %8850 = vmatprep.subr.mxu0 0.0
  %8851 = vmatpush1.msra.mxu0 0.0
  %8852 = vmatprep.subr.mxu0 0.0
  %8853 = vmatpush1.msra.mxu0 0.0
  %8854 = vmatprep.subr.mxu0 0.0
  %8855 = vmatpush1.msra.mxu0 0.0
  %8856 = vmatprep.subr.mxu0 0.0
  %8857 = vmatpush1.msra.mxu0 0.0
  %8858 = vmatprep.subr.mxu0 0.0
  %8859 = vmatpush1.msra.mxu0 0.0
  %8860 = vmatprep.subr.mxu0 0.0
  %8861 = vmatpush1.msra.mxu0 0.0
  %8862 = vmatprep.subr.mxu0 0.0
  %8863 = vmatpush1.msra.mxu0 0.0
  %8864 = vmatprep.subr.mxu0 0.0
  %8865 = vmatpush1.msra.mxu0 0.0
  %8866 = vmatprep.subr.mxu0 0.0
  %8867 = vmatpush1.msra.mxu0 0.0
  %8868 = vmatprep.subr.mxu0 0.0
  %8869 = vmatpush1.msra.mxu0 0.0
  %8870 = vmatprep.subr.mxu0 0.0
  %8871 = vmatpush1.msra.mxu0 0.0
  %8872 = vmatprep.subr.mxu0 0.0
  %8873 = vmatpush1.msra.mxu0 0.0
  %8874 = vmatprep.subr.mxu0 0.0
  %8875 = vmatpush1.msra.mxu0 0.0
  %8876 = vmatprep.subr.mxu0 0.0
  %8877 = vmatpush1.msra.mxu0 0.0
  %8878 = vmatprep.mubr.f32.mxu0 0.0
  %8879 = vmatmul.mubr.f32.gmra.mrb[0].mxu0 %v8785
  %v8880 = vpop.f32.mrb[0].mxu0
  %v8881 = vadd.f32 0.0, %v8880
  %v8882 = vpop.f32.mrb[0].mxu0
  %8883 = vmatprep.mubr.f32.mxu0 0.0
  %8884 = vmatmul.mubr.f32.gmra.mrb[0].mxu0 %v8788
  %v8885 = vpop.f32.mrb[0].mxu0
  %v8886 = vadd.f32 0.0, %v8885
  %v8887 = vpop.f32.mrb[0].mxu0
  %8888 = vmatprep.mubr.f32.mxu0 0.0
  %8889 = vmatmul.mubr.f32.gmra.mrb[0].mxu0 %v8791
  %v8890 = vpop.f32.mrb[0].mxu0
  %v8891 = vadd.f32 0.0, %v8890
  %v8892 = vpop.f32.mrb[0].mxu0
  %8893 = vmatprep.mubr.f32.mxu0 0.0
  %8894 = vmatmul.mubr.f32.gmra.mrb[0].mxu0 %v8794
  %v8895 = vpop.f32.mrb[0].mxu0
  %v8896 = vadd.f32 0.0, %v8895
  %v8897 = vpop.f32.mrb[0].mxu0
  %8898 = vmatprep.mubr.f32.mxu0 0.0
  %8899 = vmatmul.mubr.f32.gmra.mrb[0].mxu0 %v8797
  %v8900 = vpop.f32.mrb[0].mxu0
  %v8901 = vadd.f32 0.0, %v8900
  %v8902 = vpop.f32.mrb[0].mxu0
  %8903 = vmatprep.mubr.f32.mxu0 0.0
  %8904 = vmatmul.mubr.f32.gmra.mrb[0].mxu0 %v8800
  %v8905 = vpop.f32.mrb[0].mxu0
  %v8906 = vadd.f32 0.0, %v8905
  %v8907 = vpop.f32.mrb[0].mxu0
  %8908 = vmatprep.mubr.f32.mxu0 0.0
  %8909 = vmatmul.mubr.f32.gmra.mrb[0].mxu0 %v8803
  %v8910 = vpop.f32.mrb[0].mxu0
  %v8911 = vadd.f32 0.0, %v8910
  %v8912 = vpop.f32.mrb[0].mxu0
  %8913 = vmatprep.mubr.f32.mxu0 0.0
  %8914 = vmatmul.mubr.f32.gmra.mrb[0].mxu0 %v8806
  %v8915 = vpop.f32.mrb[0].mxu0
  %v8916 = vadd.f32 0.0, %v8915
  %v8917 = vpop.f32.mrb[0].mxu0
  %8918 = vmatprep.mubr.f32.mxu0 0.0
  %8919 = vmatmul.mubr.f32.gmra.mrb[0].mxu0 %v8809
  %v8920 = vpop.f32.mrb[0].mxu0
  %v8921 = vadd.f32 0.0, %v8920
  %v8922 = vpop.f32.mrb[0].mxu0
  %8923 = vmatprep.mubr.f32.mxu0 0.0
  %8924 = vmatmul.mubr.f32.gmra.mrb[0].mxu0 %v8812
  %v8925 = vpop.f32.mrb[0].mxu0
  %v8926 = vadd.f32 0.0, %v8925
  %v8927 = vpop.f32.mrb[0].mxu0
  %8928 = vdwg.mxu0
  %v8929 = vadd.f32 %v7945, %v8881
  %v8930 = vadd.f32 %v7946, %v8886
  %v8931 = vadd.f32 %v7947, %v8891
  %v8932 = vadd.f32 %v7948, %v8896
  %v8933 = vadd.f32 %v7949, %v8901
  %v8934 = vadd.f32 %v7950, %v8906
  %v8935 = vadd.f32 %v7951, %v8911
  %v8936 = vadd.f32 %v7952, %v8916
  %v8937 = vadd.f32 %v7953, %v8921
  %v8938 = vadd.f32 %v7954, %v8926
  %v8939 = vadd.f32 %v4817, %v8929
  %v8940 = vadd.f32 %v4818, %v8930
  %v8941 = vadd.f32 %v4819, %v8931
  %v8942 = vadd.f32 %v4820, %v8932
  %v8943 = vadd.f32 %v4821, %v8933
  %v8944 = vadd.f32 %v4822, %v8934
  %v8945 = vadd.f32 %v4823, %v8935
  %v8946 = vadd.f32 %v4824, %v8936
  %v8947 = vadd.f32 %v4825, %v8937
  %v8948 = vadd.f32 %v4826, %v8938
  %s8949 = scalar_lea.vmem %s10, 1
  %v8950 = vld [vmem:[%s8949] sm:$0x1]
  %v8952 = vlaneseq
  %v8953 = vshrl.u32 %v8952, 7
  %v8954 = vsub.s32 0, %v8953
  %v8955 = vrot.slane %v8950, %v8954
  %v8957 = vadd.f32 %v8939, %v8955
  %v8958 = vadd.f32 %v8940, %v8955
  %v8959 = vadd.f32 %v8941, %v8955
  %v8960 = vadd.f32 %v8942, %v8955
  %v8961 = vadd.f32 %v8943, %v8955
  %v8962 = vadd.f32 %v8944, %v8955
  %v8963 = vadd.f32 %v8945, %v8955
  %v8964 = vadd.f32 %v8946, %v8955
  %v8965 = vadd.f32 %v8947, %v8955
  %v8966 = vadd.f32 %v8948, %v8955
  %s8967 = scalar_lea.vmem %s11, 1
  %v8968 = vld [vmem:[%s8967] sm:$0x1]
  %s8969 = scalar_lea.vmem %s12, 1
  %v8970 = vld [vmem:[%s8969] sm:$0x1]
  %v8971 = vsel %vm84, %v8957, 0.0
  %8972 = vadd.xlane.f32.xlu0 %v8971
  %v8973 = vpop.xlane.xlu0 %8972
  %v8974 = vsel %vm84, %v8958, 0.0
  %8975 = vadd.xlane.f32.xlu0 %v8974
  %v8976 = vpop.xlane.xlu0 %8975
  %v8977 = vsel %vm84, %v8959, 0.0
  %8978 = vadd.xlane.f32.xlu0 %v8977
  %v8979 = vpop.xlane.xlu0 %8978
  %v8980 = vsel %vm84, %v8960, 0.0
  %8981 = vadd.xlane.f32.xlu0 %v8980
  %v8982 = vpop.xlane.xlu0 %8981
  %v8983 = vsel %vm84, %v8961, 0.0
  %8984 = vadd.xlane.f32.xlu0 %v8983
  %v8985 = vpop.xlane.xlu0 %8984
  %v8986 = vsel %vm84, %v8962, 0.0
  %8987 = vadd.xlane.f32.xlu0 %v8986
  %v8988 = vpop.xlane.xlu0 %8987
  %v8989 = vsel %vm84, %v8963, 0.0
  %8990 = vadd.xlane.f32.xlu0 %v8989
  %v8991 = vpop.xlane.xlu0 %8990
  %v8992 = vsel %vm84, %v8964, 0.0
  %8993 = vadd.xlane.f32.xlu0 %v8992
  %v8994 = vpop.xlane.xlu0 %8993
  %v8995 = vsel %vm84, %v8965, 0.0
  %8996 = vadd.xlane.f32.xlu0 %v8995
  %v8997 = vpop.xlane.xlu0 %8996
  %v8998 = vsel %vm84, %v8966, 0.0
  %8999 = vadd.xlane.f32.xlu0 %v8998
  %v9000 = vpop.xlane.xlu0 %8999
  %v9001 = vmul.f32 %v8973, %v115
  %v9002 = vmul.f32 %v8976, %v115
  %v9003 = vmul.f32 %v8979, %v115
  %v9004 = vmul.f32 %v8982, %v115
  %v9005 = vmul.f32 %v8985, %v115
  %v9006 = vmul.f32 %v8988, %v115
  %v9007 = vmul.f32 %v8991, %v115
  %v9008 = vmul.f32 %v8994, %v115
  %v9009 = vmul.f32 %v8997, %v115
  %v9010 = vmul.f32 %v9000, %v115
  %v9011 = vsub.f32 %v8957, %v9001
  %v9012 = vsub.f32 %v8958, %v9002
  %v9013 = vsub.f32 %v8959, %v9003
  %v9014 = vsub.f32 %v8960, %v9004
  %v9015 = vsub.f32 %v8961, %v9005
  %v9016 = vsub.f32 %v8962, %v9006
  %v9017 = vsub.f32 %v8963, %v9007
  %v9018 = vsub.f32 %v8964, %v9008
  %v9019 = vsub.f32 %v8965, %v9009
  %v9020 = vsub.f32 %v8966, %v9010
  %v9021 = vmul.f32 %v9011, %v9011
  %v9022 = vmul.f32 %v9012, %v9012
  %v9023 = vmul.f32 %v9013, %v9013
  %v9024 = vmul.f32 %v9014, %v9014
  %v9025 = vmul.f32 %v9015, %v9015
  %v9026 = vmul.f32 %v9016, %v9016
  %v9027 = vmul.f32 %v9017, %v9017
  %v9028 = vmul.f32 %v9018, %v9018
  %v9029 = vmul.f32 %v9019, %v9019
  %v9030 = vmul.f32 %v9020, %v9020
  %v9031 = vsel %vm84, %v9021, 0.0
  %9032 = vadd.xlane.f32.xlu0 %v9031
  %v9033 = vpop.xlane.xlu0 %9032
  %v9034 = vsel %vm84, %v9022, 0.0
  %9035 = vadd.xlane.f32.xlu0 %v9034
  %v9036 = vpop.xlane.xlu0 %9035
  %v9037 = vsel %vm84, %v9023, 0.0
  %9038 = vadd.xlane.f32.xlu0 %v9037
  %v9039 = vpop.xlane.xlu0 %9038
  %v9040 = vsel %vm84, %v9024, 0.0
  %9041 = vadd.xlane.f32.xlu0 %v9040
  %v9042 = vpop.xlane.xlu0 %9041
  %v9043 = vsel %vm84, %v9025, 0.0
  %9044 = vadd.xlane.f32.xlu0 %v9043
  %v9045 = vpop.xlane.xlu0 %9044
  %v9046 = vsel %vm84, %v9026, 0.0
  %9047 = vadd.xlane.f32.xlu0 %v9046
  %v9048 = vpop.xlane.xlu0 %9047
  %v9049 = vsel %vm84, %v9027, 0.0
  %9050 = vadd.xlane.f32.xlu0 %v9049
  %v9051 = vpop.xlane.xlu0 %9050
  %v9052 = vsel %vm84, %v9028, 0.0
  %9053 = vadd.xlane.f32.xlu0 %v9052
  %v9054 = vpop.xlane.xlu0 %9053
  %v9055 = vsel %vm84, %v9029, 0.0
  %9056 = vadd.xlane.f32.xlu0 %v9055
  %v9057 = vpop.xlane.xlu0 %9056
  %v9058 = vsel %vm84, %v9030, 0.0
  %9059 = vadd.xlane.f32.xlu0 %v9058
  %v9060 = vpop.xlane.xlu0 %9059
  %v9061 = vmul.f32 %v9033, %v115
  %v9062 = vmul.f32 %v9036, %v115
  %v9063 = vmul.f32 %v9039, %v115
  %v9064 = vmul.f32 %v9042, %v115
  %v9065 = vmul.f32 %v9045, %v115
  %v9066 = vmul.f32 %v9048, %v115
  %v9067 = vmul.f32 %v9051, %v115
  %v9068 = vmul.f32 %v9054, %v115
  %v9069 = vmul.f32 %v9057, %v115
  %v9070 = vmul.f32 %v9060, %v115
  %v9071 = vadd.f32 %v9061, 1e-05
  %v9072 = vadd.f32 %v9062, 1e-05
  %v9073 = vadd.f32 %v9063, 1e-05
  %v9074 = vadd.f32 %v9064, 1e-05
  %v9075 = vadd.f32 %v9065, 1e-05
  %v9076 = vadd.f32 %v9066, 1e-05
  %v9077 = vadd.f32 %v9067, 1e-05
  %v9078 = vadd.f32 %v9068, 1e-05
  %v9079 = vadd.f32 %v9069, 1e-05
  %v9080 = vadd.f32 %v9070, 1e-05
  %v9081 = vrsqrt.pop %v9071
  %v9082 = vrsqrt.pop %v9072
  %v9083 = vrsqrt.pop %v9073
  %v9084 = vrsqrt.pop %v9074
  %v9085 = vrsqrt.pop %v9075
  %v9086 = vrsqrt.pop %v9076
  %v9087 = vrsqrt.pop %v9077
  %v9088 = vrsqrt.pop %v9078
  %v9089 = vrsqrt.pop %v9079
  %v9090 = vrsqrt.pop %v9080
  %v9091 = vmul.f32 %v9011, %v9081
  %v9092 = vmul.f32 %v9012, %v9082
  %v9093 = vmul.f32 %v9013, %v9083
  %v9094 = vmul.f32 %v9014, %v9084
  %v9095 = vmul.f32 %v9015, %v9085
  %v9096 = vmul.f32 %v9016, %v9086
  %v9097 = vmul.f32 %v9017, %v9087
  %v9098 = vmul.f32 %v9018, %v9088
  %v9099 = vmul.f32 %v9019, %v9089
  %v9100 = vmul.f32 %v9020, %v9090
  %v9102 = vlaneseq
  %v9103 = vshrl.u32 %v9102, 7
  %v9104 = vsub.s32 0, %v9103
  %v9105 = vrot.slane %v8968, %v9104
  %v9107 = vmul.f32 %v9091, %v9105
  %v9108 = vmul.f32 %v9092, %v9105
  %v9109 = vmul.f32 %v9093, %v9105
  %v9110 = vmul.f32 %v9094, %v9105
  %v9111 = vmul.f32 %v9095, %v9105
  %v9112 = vmul.f32 %v9096, %v9105
  %v9113 = vmul.f32 %v9097, %v9105
  %v9114 = vmul.f32 %v9098, %v9105
  %v9115 = vmul.f32 %v9099, %v9105
  %v9116 = vmul.f32 %v9100, %v9105
  %v9118 = vlaneseq
  %v9119 = vshrl.u32 %v9118, 7
  %v9120 = vsub.s32 0, %v9119
  %v9121 = vrot.slane %v8970, %v9120
  %v9123 = vadd.f32 %v9107, %v9121
  %v9124 = vadd.f32 %v9108, %v9121
  %v9125 = vadd.f32 %v9109, %v9121
  %v9126 = vadd.f32 %v9110, %v9121
  %v9127 = vadd.f32 %v9111, %v9121
  %v9128 = vadd.f32 %v9112, %v9121
  %v9129 = vadd.f32 %v9113, %v9121
  %v9130 = vadd.f32 %v9114, %v9121
  %v9131 = vadd.f32 %v9115, %v9121
  %v9132 = vadd.f32 %v9116, %v9121
  %s9133 = scalar_lea.vmem %s13, 128
  %v9134 = vld [vmem:[%s9133] sm:$0xff]
  %v9135 = vld [vmem:[%s9133 + $0x8] sm:$0xff]
  %v9136 = vld [vmem:[%s9133 + $0x10] sm:$0xff]
  %v9137 = vld [vmem:[%s9133 + $0x18] sm:$0xff]
  %v9138 = vld [vmem:[%s9133 + $0x20] sm:$0xff]
  %v9139 = vld [vmem:[%s9133 + $0x28] sm:$0xff]
  %v9140 = vld [vmem:[%s9133 + $0x30] sm:$0xff]
  %v9141 = vld [vmem:[%s9133 + $0x38] sm:$0xff]
  %v9142 = vld [vmem:[%s9133 + $0x40] sm:$0xff]
  %v9143 = vld [vmem:[%s9133 + $0x48] sm:$0xff]
  %v9144 = vld [vmem:[%s9133 + $0x50] sm:$0xff]
  %v9145 = vld [vmem:[%s9133 + $0x58] sm:$0xff]
  %v9146 = vld [vmem:[%s9133 + $0x60] sm:$0xff]
  %v9147 = vld [vmem:[%s9133 + $0x68] sm:$0xff]
  %v9148 = vld [vmem:[%s9133 + $0x70] sm:$0xff]
  %v9149 = vld [vmem:[%s9133 + $0x78] sm:$0xff]
  %s9150 = scalar_lea.vmem %s14, 2
  %v9151 = vld [vmem:[%s9150] sm:$0x3]
  %v9153 = vlaneseq
  %v9154 = vshrl.u32 %v9153, 7
  %v9155 = vsub.s32 0, %v9154
  %v9156 = vrot.slane %v9151, %v9155
  %v9157 = vlaneseq
  %v9158 = vshrl.u32 %v9157, 7
  %v9159 = vsub.s32 1, %v9158
  %v9160 = vrot.slane %v9151, %v9159
  %v9164 = vsel %vm84, %v9123, 0
  %v9167 = vsel %vm84, %v9124, 0
  %v9170 = vsel %vm84, %v9125, 0
  %v9173 = vsel %vm84, %v9126, 0
  %v9176 = vsel %vm84, %v9127, 0
  %v9179 = vsel %vm84, %v9128, 0
  %v9182 = vsel %vm84, %v9129, 0
  %v9185 = vsel %vm84, %v9130, 0
  %v9188 = vsel %vm84, %v9131, 0
  %v9191 = vsel %vm84, %v9132, 0
  %9193 = vmatprep.subr.mxu0 %v9135
  %9194 = vmatpush1.msra.mxu0 %v9134
  %9195 = vmatprep.subr.mxu0 %v9137
  %9196 = vmatpush1.msra.mxu0 %v9136
  %9197 = vmatprep.subr.mxu0 %v9139
  %9198 = vmatpush1.msra.mxu0 %v9138
  %9199 = vmatprep.subr.mxu0 %v9141
  %9200 = vmatpush1.msra.mxu0 %v9140
  %9201 = vmatprep.subr.mxu0 %v9143
  %9202 = vmatpush1.msra.mxu0 %v9142
  %9203 = vmatprep.subr.mxu0 %v9145
  %9204 = vmatpush1.msra.mxu0 %v9144
  %9205 = vmatprep.subr.mxu0 %v9147
  %9206 = vmatpush1.msra.mxu0 %v9146
  %9207 = vmatprep.subr.mxu0 %v9149
  %9208 = vmatpush1.msra.mxu0 %v9148
  %9209 = vmatprep.subr.mxu0 0.0
  %9210 = vmatpush1.msra.mxu0 0.0
  %9211 = vmatprep.subr.mxu0 0.0
  %9212 = vmatpush1.msra.mxu0 0.0
  %9213 = vmatprep.subr.mxu0 0.0
  %9214 = vmatpush1.msra.mxu0 0.0
  %9215 = vmatprep.subr.mxu0 0.0
  %9216 = vmatpush1.msra.mxu0 0.0
  %9217 = vmatprep.subr.mxu0 0.0
  %9218 = vmatpush1.msra.mxu0 0.0
  %9219 = vmatprep.subr.mxu0 0.0
  %9220 = vmatpush1.msra.mxu0 0.0
  %9221 = vmatprep.subr.mxu0 0.0
  %9222 = vmatpush1.msra.mxu0 0.0
  %9223 = vmatprep.subr.mxu0 0.0
  %9224 = vmatpush1.msra.mxu0 0.0
  %9225 = vmatprep.subr.mxu0 0.0
  %9226 = vmatpush1.msra.mxu0 0.0
  %9227 = vmatprep.subr.mxu0 0.0
  %9228 = vmatpush1.msra.mxu0 0.0
  %9229 = vmatprep.subr.mxu0 0.0
  %9230 = vmatpush1.msra.mxu0 0.0
  %9231 = vmatprep.subr.mxu0 0.0
  %9232 = vmatpush1.msra.mxu0 0.0
  %9233 = vmatprep.subr.mxu0 0.0
  %9234 = vmatpush1.msra.mxu0 0.0
  %9235 = vmatprep.subr.mxu0 0.0
  %9236 = vmatpush1.msra.mxu0 0.0
  %9237 = vmatprep.subr.mxu0 0.0
  %9238 = vmatpush1.msra.mxu0 0.0
  %9239 = vmatprep.subr.mxu0 0.0
  %9240 = vmatpush1.msra.mxu0 0.0
  %9241 = vmatprep.subr.mxu0 0.0
  %9242 = vmatpush1.msra.mxu0 0.0
  %9243 = vmatprep.subr.mxu0 0.0
  %9244 = vmatpush1.msra.mxu0 0.0
  %9245 = vmatprep.subr.mxu0 0.0
  %9246 = vmatpush1.msra.mxu0 0.0
  %9247 = vmatprep.subr.mxu0 0.0
  %9248 = vmatpush1.msra.mxu0 0.0
  %9249 = vmatprep.subr.mxu0 0.0
  %9250 = vmatpush1.msra.mxu0 0.0
  %9251 = vmatprep.subr.mxu0 0.0
  %9252 = vmatpush1.msra.mxu0 0.0
  %9253 = vmatprep.subr.mxu0 0.0
  %9254 = vmatpush1.msra.mxu0 0.0
  %9255 = vmatprep.subr.mxu0 0.0
  %9256 = vmatpush1.msra.mxu0 0.0
  %9257 = vmatprep.mubr.f32.mxu0 0.0
  %9258 = vmatmul.mubr.f32.gmra.mrb[0].mxu0 %v9164
  %v9259 = vpop.f32.mrb[0].mxu0
  %v9260 = vadd.f32 %v9156, %v9259
  %v9261 = vpop.f32.mrb[0].mxu0
  %v9262 = vadd.f32 %v9160, %v9261
  %9263 = vmatprep.mubr.f32.mxu0 0.0
  %9264 = vmatmul.mubr.f32.gmra.mrb[0].mxu0 %v9167
  %v9265 = vpop.f32.mrb[0].mxu0
  %v9266 = vadd.f32 %v9156, %v9265
  %v9267 = vpop.f32.mrb[0].mxu0
  %v9268 = vadd.f32 %v9160, %v9267
  %9269 = vmatprep.mubr.f32.mxu0 0.0
  %9270 = vmatmul.mubr.f32.gmra.mrb[0].mxu0 %v9170
  %v9271 = vpop.f32.mrb[0].mxu0
  %v9272 = vadd.f32 %v9156, %v9271
  %v9273 = vpop.f32.mrb[0].mxu0
  %v9274 = vadd.f32 %v9160, %v9273
  %9275 = vmatprep.mubr.f32.mxu0 0.0
  %9276 = vmatmul.mubr.f32.gmra.mrb[0].mxu0 %v9173
  %v9277 = vpop.f32.mrb[0].mxu0
  %v9278 = vadd.f32 %v9156, %v9277
  %v9279 = vpop.f32.mrb[0].mxu0
  %v9280 = vadd.f32 %v9160, %v9279
  %9281 = vmatprep.mubr.f32.mxu0 0.0
  %9282 = vmatmul.mubr.f32.gmra.mrb[0].mxu0 %v9176
  %v9283 = vpop.f32.mrb[0].mxu0
  %v9284 = vadd.f32 %v9156, %v9283
  %v9285 = vpop.f32.mrb[0].mxu0
  %v9286 = vadd.f32 %v9160, %v9285
  %9287 = vmatprep.mubr.f32.mxu0 0.0
  %9288 = vmatmul.mubr.f32.gmra.mrb[0].mxu0 %v9179
  %v9289 = vpop.f32.mrb[0].mxu0
  %v9290 = vadd.f32 %v9156, %v9289
  %v9291 = vpop.f32.mrb[0].mxu0
  %v9292 = vadd.f32 %v9160, %v9291
  %9293 = vmatprep.mubr.f32.mxu0 0.0
  %9294 = vmatmul.mubr.f32.gmra.mrb[0].mxu0 %v9182
  %v9295 = vpop.f32.mrb[0].mxu0
  %v9296 = vadd.f32 %v9156, %v9295
  %v9297 = vpop.f32.mrb[0].mxu0
  %v9298 = vadd.f32 %v9160, %v9297
  %9299 = vmatprep.mubr.f32.mxu0 0.0
  %9300 = vmatmul.mubr.f32.gmra.mrb[0].mxu0 %v9185
  %v9301 = vpop.f32.mrb[0].mxu0
  %v9302 = vadd.f32 %v9156, %v9301
  %v9303 = vpop.f32.mrb[0].mxu0
  %v9304 = vadd.f32 %v9160, %v9303
  %9305 = vmatprep.mubr.f32.mxu0 0.0
  %9306 = vmatmul.mubr.f32.gmra.mrb[0].mxu0 %v9188
  %v9307 = vpop.f32.mrb[0].mxu0
  %v9308 = vadd.f32 %v9156, %v9307
  %v9309 = vpop.f32.mrb[0].mxu0
  %v9310 = vadd.f32 %v9160, %v9309
  %9311 = vmatprep.mubr.f32.mxu0 0.0
  %9312 = vmatmul.mubr.f32.gmra.mrb[0].mxu0 %v9191
  %v9313 = vpop.f32.mrb[0].mxu0
  %v9314 = vadd.f32 %v9156, %v9313
  %v9315 = vpop.f32.mrb[0].mxu0
  %v9316 = vadd.f32 %v9160, %v9315
  %9317 = vdwg.mxu0
  %v9318 = vmul.f32 %v9260, 0.5
  %v9319 = vmul.f32 %v9262, 0.5
  %v9320 = vmul.f32 %v9266, 0.5
  %v9321 = vmul.f32 %v9268, 0.5
  %v9322 = vmul.f32 %v9272, 0.5
  %v9323 = vmul.f32 %v9274, 0.5
  %v9324 = vmul.f32 %v9278, 0.5
  %v9325 = vmul.f32 %v9280, 0.5
  %v9326 = vmul.f32 %v9284, 0.5
  %v9327 = vmul.f32 %v9286, 0.5
  %v9328 = vmul.f32 %v9290, 0.5
  %v9329 = vmul.f32 %v9292, 0.5
  %v9330 = vmul.f32 %v9296, 0.5
  %v9331 = vmul.f32 %v9298, 0.5
  %v9332 = vmul.f32 %v9302, 0.5
  %v9333 = vmul.f32 %v9304, 0.5
  %v9334 = vmul.f32 %v9308, 0.5
  %v9335 = vmul.f32 %v9310, 0.5
  %v9336 = vmul.f32 %v9314, 0.5
  %v9337 = vmul.f32 %v9316, 0.5
  %v9338 = vmul.f32 %v9260, 0.70710677
  %v9339 = vmul.f32 %v9262, 0.70710677
  %v9340 = vmul.f32 %v9266, 0.70710677
  %v9341 = vmul.f32 %v9268, 0.70710677
  %v9342 = vmul.f32 %v9272, 0.70710677
  %v9343 = vmul.f32 %v9274, 0.70710677
  %v9344 = vmul.f32 %v9278, 0.70710677
  %v9345 = vmul.f32 %v9280, 0.70710677
  %v9346 = vmul.f32 %v9284, 0.70710677
  %v9347 = vmul.f32 %v9286, 0.70710677
  %v9348 = vmul.f32 %v9290, 0.70710677
  %v9349 = vmul.f32 %v9292, 0.70710677
  %v9350 = vmul.f32 %v9296, 0.70710677
  %v9351 = vmul.f32 %v9298, 0.70710677
  %v9352 = vmul.f32 %v9302, 0.70710677
  %v9353 = vmul.f32 %v9304, 0.70710677
  %v9354 = vmul.f32 %v9308, 0.70710677
  %v9355 = vmul.f32 %v9310, 0.70710677
  %v9356 = vmul.f32 %v9314, 0.70710677
  %v9357 = vmul.f32 %v9316, 0.70710677
  %v9358 = verf.f32.pop %v9338
  %v9359 = verf.f32.pop %v9339
  %v9360 = verf.f32.pop %v9340
  %v9361 = verf.f32.pop %v9341
  %v9362 = verf.f32.pop %v9342
  %v9363 = verf.f32.pop %v9343
  %v9364 = verf.f32.pop %v9344
  %v9365 = verf.f32.pop %v9345
  %v9366 = verf.f32.pop %v9346
  %v9367 = verf.f32.pop %v9347
  %v9368 = verf.f32.pop %v9348
  %v9369 = verf.f32.pop %v9349
  %v9370 = verf.f32.pop %v9350
  %v9371 = verf.f32.pop %v9351
  %v9372 = verf.f32.pop %v9352
  %v9373 = verf.f32.pop %v9353
  %v9374 = verf.f32.pop %v9354
  %v9375 = verf.f32.pop %v9355
  %v9376 = verf.f32.pop %v9356
  %v9377 = verf.f32.pop %v9357
  %v9378 = vadd.f32 %v9358, 1.0
  %v9379 = vadd.f32 %v9359, 1.0
  %v9380 = vadd.f32 %v9360, 1.0
  %v9381 = vadd.f32 %v9361, 1.0
  %v9382 = vadd.f32 %v9362, 1.0
  %v9383 = vadd.f32 %v9363, 1.0
  %v9384 = vadd.f32 %v9364, 1.0
  %v9385 = vadd.f32 %v9365, 1.0
  %v9386 = vadd.f32 %v9366, 1.0
  %v9387 = vadd.f32 %v9367, 1.0
  %v9388 = vadd.f32 %v9368, 1.0
  %v9389 = vadd.f32 %v9369, 1.0
  %v9390 = vadd.f32 %v9370, 1.0
  %v9391 = vadd.f32 %v9371, 1.0
  %v9392 = vadd.f32 %v9372, 1.0
  %v9393 = vadd.f32 %v9373, 1.0
  %v9394 = vadd.f32 %v9374, 1.0
  %v9395 = vadd.f32 %v9375, 1.0
  %v9396 = vadd.f32 %v9376, 1.0
  %v9397 = vadd.f32 %v9377, 1.0
  %v9398 = vmul.f32 %v9318, %v9378
  %v9399 = vmul.f32 %v9319, %v9379
  %v9400 = vmul.f32 %v9320, %v9380
  %v9401 = vmul.f32 %v9321, %v9381
  %v9402 = vmul.f32 %v9322, %v9382
  %v9403 = vmul.f32 %v9323, %v9383
  %v9404 = vmul.f32 %v9324, %v9384
  %v9405 = vmul.f32 %v9325, %v9385
  %v9406 = vmul.f32 %v9326, %v9386
  %v9407 = vmul.f32 %v9327, %v9387
  %v9408 = vmul.f32 %v9328, %v9388
  %v9409 = vmul.f32 %v9329, %v9389
  %v9410 = vmul.f32 %v9330, %v9390
  %v9411 = vmul.f32 %v9331, %v9391
  %v9412 = vmul.f32 %v9332, %v9392
  %v9413 = vmul.f32 %v9333, %v9393
  %v9414 = vmul.f32 %v9334, %v9394
  %v9415 = vmul.f32 %v9335, %v9395
  %v9416 = vmul.f32 %v9336, %v9396
  %v9417 = vmul.f32 %v9337, %v9397
  %s9418 = scalar_lea.vmem %s15, 256
  %v9419 = vld [vmem:[%s9418] sm:$0xff]
  %v9420 = vld [vmem:[%s9418 + $0x8] sm:$0xff]
  %v9421 = vld [vmem:[%s9418 + $0x10] sm:$0xff]
  %v9422 = vld [vmem:[%s9418 + $0x18] sm:$0xff]
  %v9423 = vld [vmem:[%s9418 + $0x20] sm:$0xff]
  %v9424 = vld [vmem:[%s9418 + $0x28] sm:$0xff]
  %v9425 = vld [vmem:[%s9418 + $0x30] sm:$0xff]
  %v9426 = vld [vmem:[%s9418 + $0x38] sm:$0xff]
  %v9427 = vld [vmem:[%s9418 + $0x40] sm:$0xff]
  %v9428 = vld [vmem:[%s9418 + $0x48] sm:$0xff]
  %v9429 = vld [vmem:[%s9418 + $0x50] sm:$0xff]
  %v9430 = vld [vmem:[%s9418 + $0x58] sm:$0xff]
  %v9431 = vld [vmem:[%s9418 + $0x60] sm:$0xff]
  %v9432 = vld [vmem:[%s9418 + $0x68] sm:$0xff]
  %v9433 = vld [vmem:[%s9418 + $0x70] sm:$0xff]
  %v9434 = vld [vmem:[%s9418 + $0x78] sm:$0xff]
  %v9435 = vld [vmem:[%s9418 + $0x80] sm:$0xff]
  %v9436 = vld [vmem:[%s9418 + $0x88] sm:$0xff]
  %v9437 = vld [vmem:[%s9418 + $0x90] sm:$0xff]
  %v9438 = vld [vmem:[%s9418 + $0x98] sm:$0xff]
  %v9439 = vld [vmem:[%s9418 + $0xa0] sm:$0xff]
  %v9440 = vld [vmem:[%s9418 + $0xa8] sm:$0xff]
  %v9441 = vld [vmem:[%s9418 + $0xb0] sm:$0xff]
  %v9442 = vld [vmem:[%s9418 + $0xb8] sm:$0xff]
  %v9443 = vld [vmem:[%s9418 + $0xc0] sm:$0xff]
  %v9444 = vld [vmem:[%s9418 + $0xc8] sm:$0xff]
  %v9445 = vld [vmem:[%s9418 + $0xd0] sm:$0xff]
  %v9446 = vld [vmem:[%s9418 + $0xd8] sm:$0xff]
  %v9447 = vld [vmem:[%s9418 + $0xe0] sm:$0xff]
  %v9448 = vld [vmem:[%s9418 + $0xe8] sm:$0xff]
  %v9449 = vld [vmem:[%s9418 + $0xf0] sm:$0xff]
  %v9450 = vld [vmem:[%s9418 + $0xf8] sm:$0xff]
  %s9451 = scalar_lea.vmem %s16, 1
  %v9452 = vld [vmem:[%s9451] sm:$0x1]
  %v9454 = vlaneseq
  %v9455 = vshrl.u32 %v9454, 7
  %v9456 = vsub.s32 0, %v9455
  %v9457 = vrot.slane %v9452, %v9456
  %9459 = vmatprep.subr.mxu0 0.0
  %9460 = vmatpush1.msra.mxu0 %v9419
  %9461 = vmatprep.subr.mxu0 0.0
  %9462 = vmatpush1.msra.mxu0 %v9420
  %9463 = vmatprep.subr.mxu0 0.0
  %9464 = vmatpush1.msra.mxu0 %v9421
  %9465 = vmatprep.subr.mxu0 0.0
  %9466 = vmatpush1.msra.mxu0 %v9422
  %9467 = vmatprep.subr.mxu0 0.0
  %9468 = vmatpush1.msra.mxu0 %v9423
  %9469 = vmatprep.subr.mxu0 0.0
  %9470 = vmatpush1.msra.mxu0 %v9424
  %9471 = vmatprep.subr.mxu0 0.0
  %9472 = vmatpush1.msra.mxu0 %v9425
  %9473 = vmatprep.subr.mxu0 0.0
  %9474 = vmatpush1.msra.mxu0 %v9426
  %9475 = vmatprep.subr.mxu0 0.0
  %9476 = vmatpush1.msra.mxu0 %v9427
  %9477 = vmatprep.subr.mxu0 0.0
  %9478 = vmatpush1.msra.mxu0 %v9428
  %9479 = vmatprep.subr.mxu0 0.0
  %9480 = vmatpush1.msra.mxu0 %v9429
  %9481 = vmatprep.subr.mxu0 0.0
  %9482 = vmatpush1.msra.mxu0 %v9430
  %9483 = vmatprep.subr.mxu0 0.0
  %9484 = vmatpush1.msra.mxu0 %v9431
  %9485 = vmatprep.subr.mxu0 0.0
  %9486 = vmatpush1.msra.mxu0 %v9432
  %9487 = vmatprep.subr.mxu0 0.0
  %9488 = vmatpush1.msra.mxu0 %v9433
  %9489 = vmatprep.subr.mxu0 0.0
  %9490 = vmatpush1.msra.mxu0 %v9434
  %9491 = vmatprep.subr.mxu0 0.0
  %9492 = vmatpush1.msra.mxu0 %v9435
  %9493 = vmatprep.subr.mxu0 0.0
  %9494 = vmatpush1.msra.mxu0 %v9436
  %9495 = vmatprep.subr.mxu0 0.0
  %9496 = vmatpush1.msra.mxu0 %v9437
  %9497 = vmatprep.subr.mxu0 0.0
  %9498 = vmatpush1.msra.mxu0 %v9438
  %9499 = vmatprep.subr.mxu0 0.0
  %9500 = vmatpush1.msra.mxu0 %v9439
  %9501 = vmatprep.subr.mxu0 0.0
  %9502 = vmatpush1.msra.mxu0 %v9440
  %9503 = vmatprep.subr.mxu0 0.0
  %9504 = vmatpush1.msra.mxu0 %v9441
  %9505 = vmatprep.subr.mxu0 0.0
  %9506 = vmatpush1.msra.mxu0 %v9442
  %9507 = vmatprep.subr.mxu0 0.0
  %9508 = vmatpush1.msra.mxu0 %v9443
  %9509 = vmatprep.subr.mxu0 0.0
  %9510 = vmatpush1.msra.mxu0 %v9444
  %9511 = vmatprep.subr.mxu0 0.0
  %9512 = vmatpush1.msra.mxu0 %v9445
  %9513 = vmatprep.subr.mxu0 0.0
  %9514 = vmatpush1.msra.mxu0 %v9446
  %9515 = vmatprep.subr.mxu0 0.0
  %9516 = vmatpush1.msra.mxu0 %v9447
  %9517 = vmatprep.subr.mxu0 0.0
  %9518 = vmatpush1.msra.mxu0 %v9448
  %9519 = vmatprep.subr.mxu0 0.0
  %9520 = vmatpush1.msra.mxu0 %v9449
  %9521 = vmatprep.subr.mxu0 0.0
  %9522 = vmatpush1.msra.mxu0 %v9450
  %9523 = vmatprep.mubr.f32.mxu0 %v9399
  %9524 = vmatmul.mubr.f32.gmra.mrb[0].mxu0 %v9398
  %v9525 = vpop.f32.mrb[0].mxu0
  %v9526 = vadd.f32 %v9457, %v9525
  %v9527 = vpop.f32.mrb[0].mxu0
  %9528 = vmatprep.mubr.f32.mxu0 %v9401
  %9529 = vmatmul.mubr.f32.gmra.mrb[0].mxu0 %v9400
  %v9530 = vpop.f32.mrb[0].mxu0
  %v9531 = vpop.f32.mrb[0].mxu0
  %9532 = vmatprep.mubr.f32.mxu0 %v9403
  %9533 = vmatmul.mubr.f32.gmra.mrb[0].mxu0 %v9402
  %v9534 = vpop.f32.mrb[0].mxu0
  %v9535 = vpop.f32.mrb[0].mxu0
  %9536 = vmatprep.mubr.f32.mxu0 %v9405
  %9537 = vmatmul.mubr.f32.gmra.mrb[0].mxu0 %v9404
  %v9538 = vpop.f32.mrb[0].mxu0
  %v9539 = vpop.f32.mrb[0].mxu0
  %9540 = vmatprep.mubr.f32.mxu0 %v9407
  %9541 = vmatmul.mubr.f32.gmra.mrb[0].mxu0 %v9406
  %v9542 = vpop.f32.mrb[0].mxu0
  %v9543 = vpop.f32.mrb[0].mxu0
  %9544 = vmatprep.mubr.f32.mxu0 %v9409
  %9545 = vmatmul.mubr.f32.gmra.mrb[0].mxu0 %v9408
  %v9546 = vpop.f32.mrb[0].mxu0
  %v9547 = vpop.f32.mrb[0].mxu0
  %9548 = vmatprep.mubr.f32.mxu0 %v9411
  %9549 = vmatmul.mubr.f32.gmra.mrb[0].mxu0 %v9410
  %v9550 = vpop.f32.mrb[0].mxu0
  %v9551 = vpop.f32.mrb[0].mxu0
  %9552 = vmatprep.mubr.f32.mxu0 %v9413
  %9553 = vmatmul.mubr.f32.gmra.mrb[0].mxu0 %v9412
  %v9554 = vpop.f32.mrb[0].mxu0
  %v9555 = vpop.f32.mrb[0].mxu0
  %9556 = vmatprep.mubr.f32.mxu0 %v9415
  %9557 = vmatmul.mubr.f32.gmra.mrb[0].mxu0 %v9414
  %v9558 = vpop.f32.mrb[0].mxu0
  %v9559 = vpop.f32.mrb[0].mxu0
  %9560 = vmatprep.mubr.f32.mxu0 %v9417
  %9561 = vmatmul.mubr.f32.gmra.mrb[0].mxu0 %v9416
  %v9562 = vpop.f32.mrb[0].mxu0
  %v9563 = vpop.f32.mrb[0].mxu0
  %9564 = vdwg.mxu0
  %v9565 = vadd.f32 %v8957, %v9526
  %v9566 = vld [vmem:[%s17] sm:$0x1]
  %v9567 = vld [vmem:[%s18] sm:$0x1]
  %vm9568 = vcmask 516096
  %v9569 = vsel %vm9568, %v9565, 0.0
  %9570 = vadd.xlane.f32.xlu0 %v9569
  %v9571 = vpop.xlane.xlu0 %9570
  %v9572 = vmul.f32 %v9571, %v115
  %v9573 = vsub.f32 %v9565, %v9572
  %v9574 = vmul.f32 %v9573, %v9573
  %v9575 = vsel %vm9568, %v9574, 0.0
  %9576 = vadd.xlane.f32.xlu0 %v9575
  %v9577 = vpop.xlane.xlu0 %9576
  %v9578 = vmul.f32 %v9577, %v115
  %v9579 = vadd.f32 %v9578, 1e-05
  %v9580 = vrsqrt.pop %v9579
  %v9581 = vmul.f32 %v9573, %v9580
  %v9582 = vmul.f32 %v9581, %v9566
  %v9583 = vadd.f32 %v9582, %v9567
  %v9584 = vld [vmem:[%s19] sm:$0xff]
  %v9585 = vld [vmem:[%s19 + $0x8] sm:$0xff]
  %v9586 = vld [vmem:[%s19 + $0x10] sm:$0xff]
  %v9587 = vld [vmem:[%s19 + $0x18] sm:$0xff]
  %v9588 = vld [vmem:[%s19 + $0x20] sm:$0xff]
  %v9589 = vld [vmem:[%s19 + $0x28] sm:$0xff]
  %v9590 = vld [vmem:[%s19 + $0x30] sm:$0xff]
  %v9591 = vld [vmem:[%s19 + $0x38] sm:$0xff]
  %v9592 = vld [vmem:[%s19 + $0x40] sm:$0xff]
  %v9593 = vld [vmem:[%s19 + $0x48] sm:$0xff]
  %v9594 = vld [vmem:[%s19 + $0x50] sm:$0xff]
  %v9595 = vld [vmem:[%s19 + $0x58] sm:$0xff]
  %v9596 = vld [vmem:[%s19 + $0x60] sm:$0xff]
  %v9597 = vld [vmem:[%s19 + $0x68] sm:$0xff]
  %v9598 = vld [vmem:[%s19 + $0x70] sm:$0xff]
  %v9599 = vld [vmem:[%s19 + $0x78] sm:$0xff]
  %v9600 = vld [vmem:[%s19 + $0x80] sm:$0xff]
  %v9601 = vld [vmem:[%s19 + $0x88] sm:$0xff]
  %v9602 = vld [vmem:[%s19 + $0x90] sm:$0xff]
  %v9603 = vld [vmem:[%s19 + $0x98] sm:$0xff]
  %v9604 = vld [vmem:[%s19 + $0xa0] sm:$0xff]
  %v9605 = vld [vmem:[%s19 + $0xa8] sm:$0xff]
  %v9606 = vld [vmem:[%s19 + $0xb0] sm:$0xff]
  %v9607 = vld [vmem:[%s19 + $0xb8] sm:$0xff]
  %v9608 = vld [vmem:[%s19 + $0xc0] sm:$0xff]
  %v9609 = vld [vmem:[%s19 + $0xc8] sm:$0xff]
  %v9610 = vld [vmem:[%s19 + $0xd0] sm:$0xff]
  %v9611 = vld [vmem:[%s19 + $0xd8] sm:$0xff]
  %v9612 = vld [vmem:[%s19 + $0xe0] sm:$0xff]
  %v9613 = vld [vmem:[%s19 + $0xe8] sm:$0xff]
  %v9614 = vld [vmem:[%s19 + $0xf0] sm:$0xff]
  %v9615 = vld [vmem:[%s19 + $0xf8] sm:$0xff]
  %v9616 = vld [vmem:[%s19 + $0x100] sm:$0xff]
  %v9617 = vld [vmem:[%s19 + $0x108] sm:$0xff]
  %v9618 = vld [vmem:[%s19 + $0x110] sm:$0xff]
  %v9619 = vld [vmem:[%s19 + $0x118] sm:$0xff]
  %v9620 = vld [vmem:[%s19 + $0x120] sm:$0xff]
  %v9621 = vld [vmem:[%s19 + $0x128] sm:$0xff]
  %v9622 = vld [vmem:[%s19 + $0x130] sm:$0xff]
  %v9623 = vld [vmem:[%s19 + $0x138] sm:$0xff]
  %v9624 = vld [vmem:[%s19 + $0x140] sm:$0xff]
  %v9625 = vld [vmem:[%s19 + $0x148] sm:$0xff]
  %v9626 = vld [vmem:[%s19 + $0x150] sm:$0xff]
  %v9627 = vld [vmem:[%s19 + $0x158] sm:$0xff]
  %v9628 = vld [vmem:[%s19 + $0x160] sm:$0xff]
  %v9629 = vld [vmem:[%s19 + $0x168] sm:$0xff]
  %v9630 = vld [vmem:[%s19 + $0x170] sm:$0xff]
  %v9631 = vld [vmem:[%s19 + $0x178] sm:$0xff]
  %v9632 = vld [vmem:[%s19 + $0x180] sm:$0xff]
  %v9633 = vld [vmem:[%s19 + $0x188] sm:$0xff]
  %v9634 = vld [vmem:[%s19 + $0x190] sm:$0xff]
  %v9635 = vld [vmem:[%s19 + $0x198] sm:$0xff]
  %v9636 = vld [vmem:[%s19 + $0x1a0] sm:$0xff]
  %v9637 = vld [vmem:[%s19 + $0x1a8] sm:$0xff]
  %v9638 = vld [vmem:[%s19 + $0x1b0] sm:$0xff]
  %v9639 = vld [vmem:[%s19 + $0x1b8] sm:$0xff]
  %v9640 = vld [vmem:[%s19 + $0x1c0] sm:$0xff]
  %v9641 = vld [vmem:[%s19 + $0x1c8] sm:$0xff]
  %v9642 = vld [vmem:[%s19 + $0x1d0] sm:$0xff]
  %v9643 = vld [vmem:[%s19 + $0x1d8] sm:$0xff]
  %v9644 = vld [vmem:[%s19 + $0x1e0] sm:$0xff]
  %v9645 = vld [vmem:[%s19 + $0x1e8] sm:$0xff]
  %v9646 = vld [vmem:[%s19 + $0x1f0] sm:$0xff]
  %v9647 = vld [vmem:[%s19 + $0x1f8] sm:$0xff]
  %v9648 = vld [vmem:[%s19 + $0x200] sm:$0xff]
  %v9649 = vld [vmem:[%s19 + $0x208] sm:$0xff]
  %v9650 = vld [vmem:[%s19 + $0x210] sm:$0xff]
  %v9651 = vld [vmem:[%s19 + $0x218] sm:$0xff]
  %v9652 = vld [vmem:[%s19 + $0x220] sm:$0xff]
  %v9653 = vld [vmem:[%s19 + $0x228] sm:$0xff]
  %v9654 = vld [vmem:[%s19 + $0x230] sm:$0xff]
  %v9655 = vld [vmem:[%s19 + $0x238] sm:$0xff]
  %v9656 = vld [vmem:[%s19 + $0x240] sm:$0xff]
  %v9657 = vld [vmem:[%s19 + $0x248] sm:$0xff]
  %v9658 = vld [vmem:[%s19 + $0x250] sm:$0xff]
  %v9659 = vld [vmem:[%s19 + $0x258] sm:$0xff]
  %v9660 = vld [vmem:[%s19 + $0x260] sm:$0xff]
  %v9661 = vld [vmem:[%s19 + $0x268] sm:$0xff]
  %v9662 = vld [vmem:[%s19 + $0x270] sm:$0xff]
  %v9663 = vld [vmem:[%s19 + $0x278] sm:$0xff]
  %v9664 = vld [vmem:[%s19 + $0x280] sm:$0xff]
  %v9665 = vld [vmem:[%s19 + $0x288] sm:$0xff]
  %v9666 = vld [vmem:[%s19 + $0x290] sm:$0xff]
  %v9667 = vld [vmem:[%s19 + $0x298] sm:$0xff]
  %v9668 = vld [vmem:[%s19 + $0x2a0] sm:$0xff]
  %v9669 = vld [vmem:[%s19 + $0x2a8] sm:$0xff]
  %v9670 = vld [vmem:[%s19 + $0x2b0] sm:$0xff]
  %v9671 = vld [vmem:[%s19 + $0x2b8] sm:$0xff]
  %v9672 = vld [vmem:[%s19 + $0x2c0] sm:$0xff]
  %v9673 = vld [vmem:[%s19 + $0x2c8] sm:$0xff]
  %v9674 = vld [vmem:[%s19 + $0x2d0] sm:$0xff]
  %v9675 = vld [vmem:[%s19 + $0x2d8] sm:$0xff]
  %v9676 = vld [vmem:[%s19 + $0x2e0] sm:$0xff]
  %v9677 = vld [vmem:[%s19 + $0x2e8] sm:$0xff]
  %v9678 = vld [vmem:[%s19 + $0x2f0] sm:$0xff]
  %v9679 = vld [vmem:[%s19 + $0x2f8] sm:$0xff]
  %v9680 = vld [vmem:[%s19 + $0x300] sm:$0xff]
  %v9681 = vld [vmem:[%s19 + $0x308] sm:$0xff]
  %v9682 = vld [vmem:[%s19 + $0x310] sm:$0xff]
  %v9683 = vld [vmem:[%s19 + $0x318] sm:$0xff]
  %v9684 = vld [vmem:[%s19 + $0x320] sm:$0xff]
  %v9685 = vld [vmem:[%s19 + $0x328] sm:$0xff]
  %v9686 = vld [vmem:[%s19 + $0x330] sm:$0xff]
  %v9687 = vld [vmem:[%s19 + $0x338] sm:$0xff]
  %v9688 = vld [vmem:[%s19 + $0x340] sm:$0xff]
  %v9689 = vld [vmem:[%s19 + $0x348] sm:$0xff]
  %v9690 = vld [vmem:[%s19 + $0x350] sm:$0xff]
  %v9691 = vld [vmem:[%s19 + $0x358] sm:$0xff]
  %v9692 = vld [vmem:[%s19 + $0x360] sm:$0xff]
  %v9693 = vld [vmem:[%s19 + $0x368] sm:$0xff]
  %v9694 = vld [vmem:[%s19 + $0x370] sm:$0xff]
  %v9695 = vld [vmem:[%s19 + $0x378] sm:$0xff]
  %v9696 = vld [vmem:[%s19 + $0x380] sm:$0xff]
  %v9697 = vld [vmem:[%s19 + $0x388] sm:$0xff]
  %v9698 = vld [vmem:[%s19 + $0x390] sm:$0xff]
  %v9699 = vld [vmem:[%s19 + $0x398] sm:$0xff]
  %v9700 = vld [vmem:[%s19 + $0x3a0] sm:$0xff]
  %v9701 = vld [vmem:[%s19 + $0x3a8] sm:$0xff]
  %v9702 = vld [vmem:[%s19 + $0x3b0] sm:$0xff]
  %v9703 = vld [vmem:[%s19 + $0x3b8] sm:$0xff]
  %v9704 = vld [vmem:[%s19 + $0x3c0] sm:$0xff]
  %v9705 = vld [vmem:[%s19 + $0x3c8] sm:$0xff]
  %v9706 = vld [vmem:[%s19 + $0x3d0] sm:$0xff]
  %v9707 = vld [vmem:[%s19 + $0x3d8] sm:$0xff]
  %v9708 = vld [vmem:[%s19 + $0x3e0] sm:$0xff]
  %v9709 = vld [vmem:[%s19 + $0x3e8] sm:$0xff]
  %v9710 = vld [vmem:[%s19 + $0x3f0] sm:$0xff]
  %v9711 = vld [vmem:[%s19 + $0x3f8] sm:$0xff]
  %v9712 = vld [vmem:[%s20] sm:$0xff]
  %v9713 = vld [vmem:[%s20 + $0x8] sm:$0xff]
  %v9716 = vlaneseq
  %v9717 = vshrl.u32 %v9716, 7
  %v9718 = vsub.s32 0, %v9717
  %v9719 = vrot.slane %v9712, %v9718
  %v9720 = vlaneseq
  %v9721 = vshrl.u32 %v9720, 7
  %v9722 = vsub.s32 1, %v9721
  %v9723 = vrot.slane %v9712, %v9722
  %v9724 = vlaneseq
  %v9725 = vshrl.u32 %v9724, 7
  %v9726 = vsub.s32 2, %v9725
  %v9727 = vrot.slane %v9712, %v9726
  %v9728 = vlaneseq
  %v9729 = vshrl.u32 %v9728, 7
  %v9730 = vsub.s32 3, %v9729
  %v9731 = vrot.slane %v9712, %v9730
  %v9732 = vlaneseq
  %v9733 = vshrl.u32 %v9732, 7
  %v9734 = vsub.s32 4, %v9733
  %v9735 = vrot.slane %v9712, %v9734
  %v9736 = vlaneseq
  %v9737 = vshrl.u32 %v9736, 7
  %v9738 = vsub.s32 5, %v9737
  %v9739 = vrot.slane %v9712, %v9738
  %v9740 = vlaneseq
  %v9741 = vshrl.u32 %v9740, 7
  %v9742 = vsub.s32 6, %v9741
  %v9743 = vrot.slane %v9712, %v9742
  %v9744 = vlaneseq
  %v9745 = vshrl.u32 %v9744, 7
  %v9746 = vsub.s32 7, %v9745
  %v9747 = vrot.slane %v9712, %v9746
  %v9748 = vlaneseq
  %v9749 = vshrl.u32 %v9748, 7
  %v9750 = vsub.s32 0, %v9749
  %v9751 = vrot.slane %v9713, %v9750
  %v9752 = vlaneseq
  %v9753 = vshrl.u32 %v9752, 7
  %v9754 = vsub.s32 1, %v9753
  %v9755 = vrot.slane %v9713, %v9754
  %v9756 = vlaneseq
  %v9757 = vshrl.u32 %v9756, 7
  %v9758 = vsub.s32 2, %v9757
  %v9759 = vrot.slane %v9713, %v9758
  %v9760 = vlaneseq
  %v9761 = vshrl.u32 %v9760, 7
  %v9762 = vsub.s32 3, %v9761
  %v9763 = vrot.slane %v9713, %v9762
  %v9764 = vlaneseq
  %v9765 = vshrl.u32 %v9764, 7
  %v9766 = vsub.s32 4, %v9765
  %v9767 = vrot.slane %v9713, %v9766
  %v9768 = vlaneseq
  %v9769 = vshrl.u32 %v9768, 7
  %v9770 = vsub.s32 5, %v9769
  %v9771 = vrot.slane %v9713, %v9770
  %v9772 = vlaneseq
  %v9773 = vshrl.u32 %v9772, 7
  %v9774 = vsub.s32 6, %v9773
  %v9775 = vrot.slane %v9713, %v9774
  %v9776 = vlaneseq
  %v9777 = vshrl.u32 %v9776, 7
  %v9778 = vsub.s32 7, %v9777
  %v9779 = vrot.slane %v9713, %v9778
  %v9797 = vsel %vm84, %v9583, 0
  %9799 = vmatprep.subr.mxu0 %v9585
  %9800 = vmatpush1.msra.mxu0 %v9584
  %9801 = vmatprep.subr.mxu0 %v9601
  %9802 = vmatpush1.msra.mxu0 %v9600
  %9803 = vmatprep.subr.mxu0 %v9617
  %9804 = vmatpush1.msra.mxu0 %v9616
  %9805 = vmatprep.subr.mxu0 %v9633
  %9806 = vmatpush1.msra.mxu0 %v9632
  %9807 = vmatprep.subr.mxu0 %v9649
  %9808 = vmatpush1.msra.mxu0 %v9648
  %9809 = vmatprep.subr.mxu0 %v9665
  %9810 = vmatpush1.msra.mxu0 %v9664
  %9811 = vmatprep.subr.mxu0 %v9681
  %9812 = vmatpush1.msra.mxu0 %v9680
  %9813 = vmatprep.subr.mxu0 %v9697
  %9814 = vmatpush1.msra.mxu0 %v9696
  %9815 = vmatprep.subr.mxu0 0.0
  %9816 = vmatpush1.msra.mxu0 0.0
  %9817 = vmatprep.subr.mxu0 0.0
  %9818 = vmatpush1.msra.mxu0 0.0
  %9819 = vmatprep.subr.mxu0 0.0
  %9820 = vmatpush1.msra.mxu0 0.0
  %9821 = vmatprep.subr.mxu0 0.0
  %9822 = vmatpush1.msra.mxu0 0.0
  %9823 = vmatprep.subr.mxu0 0.0
  %9824 = vmatpush1.msra.mxu0 0.0
  %9825 = vmatprep.subr.mxu0 0.0
  %9826 = vmatpush1.msra.mxu0 0.0
  %9827 = vmatprep.subr.mxu0 0.0
  %9828 = vmatpush1.msra.mxu0 0.0
  %9829 = vmatprep.subr.mxu0 0.0
  %9830 = vmatpush1.msra.mxu0 0.0
  %9831 = vmatprep.subr.mxu0 0.0
  %9832 = vmatpush1.msra.mxu0 0.0
  %9833 = vmatprep.subr.mxu0 0.0
  %9834 = vmatpush1.msra.mxu0 0.0
  %9835 = vmatprep.subr.mxu0 0.0
  %9836 = vmatpush1.msra.mxu0 0.0
  %9837 = vmatprep.subr.mxu0 0.0
  %9838 = vmatpush1.msra.mxu0 0.0
  %9839 = vmatprep.subr.mxu0 0.0
  %9840 = vmatpush1.msra.mxu0 0.0
  %9841 = vmatprep.subr.mxu0 0.0
  %9842 = vmatpush1.msra.mxu0 0.0
  %9843 = vmatprep.subr.mxu0 0.0
  %9844 = vmatpush1.msra.mxu0 0.0
  %9845 = vmatprep.subr.mxu0 0.0
  %9846 = vmatpush1.msra.mxu0 0.0
  %9847 = vmatprep.subr.mxu0 0.0
  %9848 = vmatpush1.msra.mxu0 0.0
  %9849 = vmatprep.subr.mxu0 0.0
  %9850 = vmatpush1.msra.mxu0 0.0
  %9851 = vmatprep.subr.mxu0 0.0
  %9852 = vmatpush1.msra.mxu0 0.0
  %9853 = vmatprep.subr.mxu0 0.0
  %9854 = vmatpush1.msra.mxu0 0.0
  %9855 = vmatprep.subr.mxu0 0.0
  %9856 = vmatpush1.msra.mxu0 0.0
  %9857 = vmatprep.subr.mxu0 0.0
  %9858 = vmatpush1.msra.mxu0 0.0
  %9859 = vmatprep.subr.mxu0 0.0
  %9860 = vmatpush1.msra.mxu0 0.0
  %9861 = vmatprep.subr.mxu0 0.0
  %9862 = vmatpush1.msra.mxu0 0.0
  %9863 = vmatprep.mubr.f32.mxu0 0.0
  %9864 = vmatmul.mubr.f32.gmra.mrb[0].mxu0 %v9797
  %v9865 = vpop.f32.mrb[0].mxu0
  %v9866 = vadd.f32 %v9719, %v9865
  %v9867 = vpop.f32.mrb[0].mxu0
  %v9868 = vadd.f32 %v9723, %v9867
  %9869 = vdwg.mxu0
  %9870 = vmatprep.subr.mxu0 %v9587
  %9871 = vmatpush1.msra.mxu0 %v9586
  %9872 = vmatprep.subr.mxu0 %v9603
  %9873 = vmatpush1.msra.mxu0 %v9602
  %9874 = vmatprep.subr.mxu0 %v9619
  %9875 = vmatpush1.msra.mxu0 %v9618
  %9876 = vmatprep.subr.mxu0 %v9635
  %9877 = vmatpush1.msra.mxu0 %v9634
  %9878 = vmatprep.subr.mxu0 %v9651
  %9879 = vmatpush1.msra.mxu0 %v9650
  %9880 = vmatprep.subr.mxu0 %v9667
  %9881 = vmatpush1.msra.mxu0 %v9666
  %9882 = vmatprep.subr.mxu0 %v9683
  %9883 = vmatpush1.msra.mxu0 %v9682
  %9884 = vmatprep.subr.mxu0 %v9699
  %9885 = vmatpush1.msra.mxu0 %v9698
  %9886 = vmatprep.subr.mxu0 0.0
  %9887 = vmatpush1.msra.mxu0 0.0
  %9888 = vmatprep.subr.mxu0 0.0
  %9889 = vmatpush1.msra.mxu0 0.0
  %9890 = vmatprep.subr.mxu0 0.0
  %9891 = vmatpush1.msra.mxu0 0.0
  %9892 = vmatprep.subr.mxu0 0.0
  %9893 = vmatpush1.msra.mxu0 0.0
  %9894 = vmatprep.subr.mxu0 0.0
  %9895 = vmatpush1.msra.mxu0 0.0
  %9896 = vmatprep.subr.mxu0 0.0
  %9897 = vmatpush1.msra.mxu0 0.0
  %9898 = vmatprep.subr.mxu0 0.0
  %9899 = vmatpush1.msra.mxu0 0.0
  %9900 = vmatprep.subr.mxu0 0.0
  %9901 = vmatpush1.msra.mxu0 0.0
  %9902 = vmatprep.subr.mxu0 0.0
  %9903 = vmatpush1.msra.mxu0 0.0
  %9904 = vmatprep.subr.mxu0 0.0
  %9905 = vmatpush1.msra.mxu0 0.0
  %9906 = vmatprep.subr.mxu0 0.0
  %9907 = vmatpush1.msra.mxu0 0.0
  %9908 = vmatprep.subr.mxu0 0.0
  %9909 = vmatpush1.msra.mxu0 0.0
  %9910 = vmatprep.subr.mxu0 0.0
  %9911 = vmatpush1.msra.mxu0 0.0
  %9912 = vmatprep.subr.mxu0 0.0
  %9913 = vmatpush1.msra.mxu0 0.0
  %9914 = vmatprep.subr.mxu0 0.0
  %9915 = vmatpush1.msra.mxu0 0.0
  %9916 = vmatprep.subr.mxu0 0.0
  %9917 = vmatpush1.msra.mxu0 0.0
  %9918 = vmatprep.subr.mxu0 0.0
  %9919 = vmatpush1.msra.mxu0 0.0
  %9920 = vmatprep.subr.mxu0 0.0
  %9921 = vmatpush1.msra.mxu0 0.0
  %9922 = vmatprep.subr.mxu0 0.0
  %9923 = vmatpush1.msra.mxu0 0.0
  %9924 = vmatprep.subr.mxu0 0.0
  %9925 = vmatpush1.msra.mxu0 0.0
  %9926 = vmatprep.subr.mxu0 0.0
  %9927 = vmatpush1.msra.mxu0 0.0
  %9928 = vmatprep.subr.mxu0 0.0
  %9929 = vmatpush1.msra.mxu0 0.0
  %9930 = vmatprep.subr.mxu0 0.0
  %9931 = vmatpush1.msra.mxu0 0.0
  %9932 = vmatprep.subr.mxu0 0.0
  %9933 = vmatpush1.msra.mxu0 0.0
  %9934 = vmatprep.mubr.f32.mxu0 0.0
  %9935 = vmatmul.mubr.f32.gmra.mrb[0].mxu0 %v9797
  %v9936 = vpop.f32.mrb[0].mxu0
  %v9937 = vadd.f32 %v9727, %v9936
  %v9938 = vpop.f32.mrb[0].mxu0
  %v9939 = vadd.f32 %v9731, %v9938
  %9940 = vdwg.mxu0
  %9941 = vmatprep.subr.mxu0 %v9589
  %9942 = vmatpush1.msra.mxu0 %v9588
  %9943 = vmatprep.subr.mxu0 %v9605
  %9944 = vmatpush1.msra.mxu0 %v9604
  %9945 = vmatprep.subr.mxu0 %v9621
  %9946 = vmatpush1.msra.mxu0 %v9620
  %9947 = vmatprep.subr.mxu0 %v9637
  %9948 = vmatpush1.msra.mxu0 %v9636
  %9949 = vmatprep.subr.mxu0 %v9653
  %9950 = vmatpush1.msra.mxu0 %v9652
  %9951 = vmatprep.subr.mxu0 %v9669
  %9952 = vmatpush1.msra.mxu0 %v9668
  %9953 = vmatprep.subr.mxu0 %v9685
  %9954 = vmatpush1.msra.mxu0 %v9684
  %9955 = vmatprep.subr.mxu0 %v9701
  %9956 = vmatpush1.msra.mxu0 %v9700
  %9957 = vmatprep.subr.mxu0 0.0
  %9958 = vmatpush1.msra.mxu0 0.0
  %9959 = vmatprep.subr.mxu0 0.0
  %9960 = vmatpush1.msra.mxu0 0.0
  %9961 = vmatprep.subr.mxu0 0.0
  %9962 = vmatpush1.msra.mxu0 0.0
  %9963 = vmatprep.subr.mxu0 0.0
  %9964 = vmatpush1.msra.mxu0 0.0
  %9965 = vmatprep.subr.mxu0 0.0
  %9966 = vmatpush1.msra.mxu0 0.0
  %9967 = vmatprep.subr.mxu0 0.0
  %9968 = vmatpush1.msra.mxu0 0.0
  %9969 = vmatprep.subr.mxu0 0.0
  %9970 = vmatpush1.msra.mxu0 0.0
  %9971 = vmatprep.subr.mxu0 0.0
  %9972 = vmatpush1.msra.mxu0 0.0
  %9973 = vmatprep.subr.mxu0 0.0
  %9974 = vmatpush1.msra.mxu0 0.0
  %9975 = vmatprep.subr.mxu0 0.0
  %9976 = vmatpush1.msra.mxu0 0.0
  %9977 = vmatprep.subr.mxu0 0.0
  %9978 = vmatpush1.msra.mxu0 0.0
  %9979 = vmatprep.subr.mxu0 0.0
  %9980 = vmatpush1.msra.mxu0 0.0
  %9981 = vmatprep.subr.mxu0 0.0
  %9982 = vmatpush1.msra.mxu0 0.0
  %9983 = vmatprep.subr.mxu0 0.0
  %9984 = vmatpush1.msra.mxu0 0.0
  %9985 = vmatprep.subr.mxu0 0.0
  %9986 = vmatpush1.msra.mxu0 0.0
  %9987 = vmatprep.subr.mxu0 0.0
  %9988 = vmatpush1.msra.mxu0 0.0
  %9989 = vmatprep.subr.mxu0 0.0
  %9990 = vmatpush1.msra.mxu0 0.0
  %9991 = vmatprep.subr.mxu0 0.0
  %9992 = vmatpush1.msra.mxu0 0.0
  %9993 = vmatprep.subr.mxu0 0.0
  %9994 = vmatpush1.msra.mxu0 0.0
  %9995 = vmatprep.subr.mxu0 0.0
  %9996 = vmatpush1.msra.mxu0 0.0
  %9997 = vmatprep.subr.mxu0 0.0
  %9998 = vmatpush1.msra.mxu0 0.0
  %9999 = vmatprep.subr.mxu0 0.0
  %10000 = vmatpush1.msra.mxu0 0.0
  %10001 = vmatprep.subr.mxu0 0.0
  %10002 = vmatpush1.msra.mxu0 0.0
  %10003 = vmatprep.subr.mxu0 0.0
  %10004 = vmatpush1.msra.mxu0 0.0
  %10005 = vmatprep.mubr.f32.mxu0 0.0
  %10006 = vmatmul.mubr.f32.gmra.mrb[0].mxu0 %v9797
  %v10007 = vpop.f32.mrb[0].mxu0
  %v10008 = vadd.f32 %v9735, %v10007
  %v10009 = vpop.f32.mrb[0].mxu0
  %v10010 = vadd.f32 %v9739, %v10009
  %10011 = vdwg.mxu0
  %10012 = vmatprep.subr.mxu0 %v9591
  %10013 = vmatpush1.msra.mxu0 %v9590
  %10014 = vmatprep.subr.mxu0 %v9607
  %10015 = vmatpush1.msra.mxu0 %v9606
  %10016 = vmatprep.subr.mxu0 %v9623
  %10017 = vmatpush1.msra.mxu0 %v9622
  %10018 = vmatprep.subr.mxu0 %v9639
  %10019 = vmatpush1.msra.mxu0 %v9638
  %10020 = vmatprep.subr.mxu0 %v9655
  %10021 = vmatpush1.msra.mxu0 %v9654
  %10022 = vmatprep.subr.mxu0 %v9671
  %10023 = vmatpush1.msra.mxu0 %v9670
  %10024 = vmatprep.subr.mxu0 %v9687
  %10025 = vmatpush1.msra.mxu0 %v9686
  %10026 = vmatprep.subr.mxu0 %v9703
  %10027 = vmatpush1.msra.mxu0 %v9702
  %10028 = vmatprep.subr.mxu0 0.0
  %10029 = vmatpush1.msra.mxu0 0.0
  %10030 = vmatprep.subr.mxu0 0.0
  %10031 = vmatpush1.msra.mxu0 0.0
  %10032 = vmatprep.subr.mxu0 0.0
  %10033 = vmatpush1.msra.mxu0 0.0
  %10034 = vmatprep.subr.mxu0 0.0
  %10035 = vmatpush1.msra.mxu0 0.0
  %10036 = vmatprep.subr.mxu0 0.0
  %10037 = vmatpush1.msra.mxu0 0.0
  %10038 = vmatprep.subr.mxu0 0.0
  %10039 = vmatpush1.msra.mxu0 0.0
  %10040 = vmatprep.subr.mxu0 0.0
  %10041 = vmatpush1.msra.mxu0 0.0
  %10042 = vmatprep.subr.mxu0 0.0
  %10043 = vmatpush1.msra.mxu0 0.0
  %10044 = vmatprep.subr.mxu0 0.0
  %10045 = vmatpush1.msra.mxu0 0.0
  %10046 = vmatprep.subr.mxu0 0.0
  %10047 = vmatpush1.msra.mxu0 0.0
  %10048 = vmatprep.subr.mxu0 0.0
  %10049 = vmatpush1.msra.mxu0 0.0
  %10050 = vmatprep.subr.mxu0 0.0
  %10051 = vmatpush1.msra.mxu0 0.0
  %10052 = vmatprep.subr.mxu0 0.0
  %10053 = vmatpush1.msra.mxu0 0.0
  %10054 = vmatprep.subr.mxu0 0.0
  %10055 = vmatpush1.msra.mxu0 0.0
  %10056 = vmatprep.subr.mxu0 0.0
  %10057 = vmatpush1.msra.mxu0 0.0
  %10058 = vmatprep.subr.mxu0 0.0
  %10059 = vmatpush1.msra.mxu0 0.0
  %10060 = vmatprep.subr.mxu0 0.0
  %10061 = vmatpush1.msra.mxu0 0.0
  %10062 = vmatprep.subr.mxu0 0.0
  %10063 = vmatpush1.msra.mxu0 0.0
  %10064 = vmatprep.subr.mxu0 0.0
  %10065 = vmatpush1.msra.mxu0 0.0
  %10066 = vmatprep.subr.mxu0 0.0
  %10067 = vmatpush1.msra.mxu0 0.0
  %10068 = vmatprep.subr.mxu0 0.0
  %10069 = vmatpush1.msra.mxu0 0.0
  %10070 = vmatprep.subr.mxu0 0.0
  %10071 = vmatpush1.msra.mxu0 0.0
  %10072 = vmatprep.subr.mxu0 0.0
  %10073 = vmatpush1.msra.mxu0 0.0
  %10074 = vmatprep.subr.mxu0 0.0
  %10075 = vmatpush1.msra.mxu0 0.0
  %10076 = vmatprep.mubr.f32.mxu0 0.0
  %10077 = vmatmul.mubr.f32.gmra.mrb[0].mxu0 %v9797
  %v10078 = vpop.f32.mrb[0].mxu0
  %v10079 = vadd.f32 %v9743, %v10078
  %v10080 = vpop.f32.mrb[0].mxu0
  %v10081 = vadd.f32 %v9747, %v10080
  %10082 = vdwg.mxu0
  %10083 = vmatprep.subr.mxu0 %v9593
  %10084 = vmatpush1.msra.mxu0 %v9592
  %10085 = vmatprep.subr.mxu0 %v9609
  %10086 = vmatpush1.msra.mxu0 %v9608
  %10087 = vmatprep.subr.mxu0 %v9625
  %10088 = vmatpush1.msra.mxu0 %v9624
  %10089 = vmatprep.subr.mxu0 %v9641
  %10090 = vmatpush1.msra.mxu0 %v9640
  %10091 = vmatprep.subr.mxu0 %v9657
  %10092 = vmatpush1.msra.mxu0 %v9656
  %10093 = vmatprep.subr.mxu0 %v9673
  %10094 = vmatpush1.msra.mxu0 %v9672
  %10095 = vmatprep.subr.mxu0 %v9689
  %10096 = vmatpush1.msra.mxu0 %v9688
  %10097 = vmatprep.subr.mxu0 %v9705
  %10098 = vmatpush1.msra.mxu0 %v9704
  %10099 = vmatprep.subr.mxu0 0.0
  %10100 = vmatpush1.msra.mxu0 0.0
  %10101 = vmatprep.subr.mxu0 0.0
  %10102 = vmatpush1.msra.mxu0 0.0
  %10103 = vmatprep.subr.mxu0 0.0
  %10104 = vmatpush1.msra.mxu0 0.0
  %10105 = vmatprep.subr.mxu0 0.0
  %10106 = vmatpush1.msra.mxu0 0.0
  %10107 = vmatprep.subr.mxu0 0.0
  %10108 = vmatpush1.msra.mxu0 0.0
  %10109 = vmatprep.subr.mxu0 0.0
  %10110 = vmatpush1.msra.mxu0 0.0
  %10111 = vmatprep.subr.mxu0 0.0
  %10112 = vmatpush1.msra.mxu0 0.0
  %10113 = vmatprep.subr.mxu0 0.0
  %10114 = vmatpush1.msra.mxu0 0.0
  %10115 = vmatprep.subr.mxu0 0.0
  %10116 = vmatpush1.msra.mxu0 0.0
  %10117 = vmatprep.subr.mxu0 0.0
  %10118 = vmatpush1.msra.mxu0 0.0
  %10119 = vmatprep.subr.mxu0 0.0
  %10120 = vmatpush1.msra.mxu0 0.0
  %10121 = vmatprep.subr.mxu0 0.0
  %10122 = vmatpush1.msra.mxu0 0.0
  %10123 = vmatprep.subr.mxu0 0.0
  %10124 = vmatpush1.msra.mxu0 0.0
  %10125 = vmatprep.subr.mxu0 0.0
  %10126 = vmatpush1.msra.mxu0 0.0
  %10127 = vmatprep.subr.mxu0 0.0
  %10128 = vmatpush1.msra.mxu0 0.0
  %10129 = vmatprep.subr.mxu0 0.0
  %10130 = vmatpush1.msra.mxu0 0.0
  %10131 = vmatprep.subr.mxu0 0.0
  %10132 = vmatpush1.msra.mxu0 0.0
  %10133 = vmatprep.subr.mxu0 0.0
  %10134 = vmatpush1.msra.mxu0 0.0
  %10135 = vmatprep.subr.mxu0 0.0
  %10136 = vmatpush1.msra.mxu0 0.0
  %10137 = vmatprep.subr.mxu0 0.0
  %10138 = vmatpush1.msra.mxu0 0.0
  %10139 = vmatprep.subr.mxu0 0.0
  %10140 = vmatpush1.msra.mxu0 0.0
  %10141 = vmatprep.subr.mxu0 0.0
  %10142 = vmatpush1.msra.mxu0 0.0
  %10143 = vmatprep.subr.mxu0 0.0
  %10144 = vmatpush1.msra.mxu0 0.0
  %10145 = vmatprep.subr.mxu0 0.0
  %10146 = vmatpush1.msra.mxu0 0.0
  %10147 = vmatprep.mubr.f32.mxu0 0.0
  %10148 = vmatmul.mubr.f32.gmra.mrb[0].mxu0 %v9797
  %v10149 = vpop.f32.mrb[0].mxu0
  %v10150 = vadd.f32 %v9751, %v10149
  %v10151 = vpop.f32.mrb[0].mxu0
  %v10152 = vadd.f32 %v9755, %v10151
  %10153 = vdwg.mxu0
  %10154 = vmatprep.subr.mxu0 %v9595
  %10155 = vmatpush1.msra.mxu0 %v9594
  %10156 = vmatprep.subr.mxu0 %v9611
  %10157 = vmatpush1.msra.mxu0 %v9610
  %10158 = vmatprep.subr.mxu0 %v9627
  %10159 = vmatpush1.msra.mxu0 %v9626
  %10160 = vmatprep.subr.mxu0 %v9643
  %10161 = vmatpush1.msra.mxu0 %v9642
  %10162 = vmatprep.subr.mxu0 %v9659
  %10163 = vmatpush1.msra.mxu0 %v9658
  %10164 = vmatprep.subr.mxu0 %v9675
  %10165 = vmatpush1.msra.mxu0 %v9674
  %10166 = vmatprep.subr.mxu0 %v9691
  %10167 = vmatpush1.msra.mxu0 %v9690
  %10168 = vmatprep.subr.mxu0 %v9707
  %10169 = vmatpush1.msra.mxu0 %v9706
  %10170 = vmatprep.subr.mxu0 0.0
  %10171 = vmatpush1.msra.mxu0 0.0
  %10172 = vmatprep.subr.mxu0 0.0
  %10173 = vmatpush1.msra.mxu0 0.0
  %10174 = vmatprep.subr.mxu0 0.0
  %10175 = vmatpush1.msra.mxu0 0.0
  %10176 = vmatprep.subr.mxu0 0.0
  %10177 = vmatpush1.msra.mxu0 0.0
  %10178 = vmatprep.subr.mxu0 0.0
  %10179 = vmatpush1.msra.mxu0 0.0
  %10180 = vmatprep.subr.mxu0 0.0
  %10181 = vmatpush1.msra.mxu0 0.0
  %10182 = vmatprep.subr.mxu0 0.0
  %10183 = vmatpush1.msra.mxu0 0.0
  %10184 = vmatprep.subr.mxu0 0.0
  %10185 = vmatpush1.msra.mxu0 0.0
  %10186 = vmatprep.subr.mxu0 0.0
  %10187 = vmatpush1.msra.mxu0 0.0
  %10188 = vmatprep.subr.mxu0 0.0
  %10189 = vmatpush1.msra.mxu0 0.0
  %10190 = vmatprep.subr.mxu0 0.0
  %10191 = vmatpush1.msra.mxu0 0.0
  %10192 = vmatprep.subr.mxu0 0.0
  %10193 = vmatpush1.msra.mxu0 0.0
  %10194 = vmatprep.subr.mxu0 0.0
  %10195 = vmatpush1.msra.mxu0 0.0
  %10196 = vmatprep.subr.mxu0 0.0
  %10197 = vmatpush1.msra.mxu0 0.0
  %10198 = vmatprep.subr.mxu0 0.0
  %10199 = vmatpush1.msra.mxu0 0.0
  %10200 = vmatprep.subr.mxu0 0.0
  %10201 = vmatpush1.msra.mxu0 0.0
  %10202 = vmatprep.subr.mxu0 0.0
  %10203 = vmatpush1.msra.mxu0 0.0
  %10204 = vmatprep.subr.mxu0 0.0
  %10205 = vmatpush1.msra.mxu0 0.0
  %10206 = vmatprep.subr.mxu0 0.0
  %10207 = vmatpush1.msra.mxu0 0.0
  %10208 = vmatprep.subr.mxu0 0.0
  %10209 = vmatpush1.msra.mxu0 0.0
  %10210 = vmatprep.subr.mxu0 0.0
  %10211 = vmatpush1.msra.mxu0 0.0
  %10212 = vmatprep.subr.mxu0 0.0
  %10213 = vmatpush1.msra.mxu0 0.0
  %10214 = vmatprep.subr.mxu0 0.0
  %10215 = vmatpush1.msra.mxu0 0.0
  %10216 = vmatprep.subr.mxu0 0.0
  %10217 = vmatpush1.msra.mxu0 0.0
  %10218 = vmatprep.mubr.f32.mxu0 0.0
  %10219 = vmatmul.mubr.f32.gmra.mrb[0].mxu0 %v9797
  %v10220 = vpop.f32.mrb[0].mxu0
  %v10221 = vadd.f32 %v9759, %v10220
  %v10222 = vpop.f32.mrb[0].mxu0
  %v10223 = vadd.f32 %v9763, %v10222
  %10224 = vdwg.mxu0
  %10225 = vmatprep.subr.mxu0 %v9597
  %10226 = vmatpush1.msra.mxu0 %v9596
  %10227 = vmatprep.subr.mxu0 %v9613
  %10228 = vmatpush1.msra.mxu0 %v9612
  %10229 = vmatprep.subr.mxu0 %v9629
  %10230 = vmatpush1.msra.mxu0 %v9628
  %10231 = vmatprep.subr.mxu0 %v9645
  %10232 = vmatpush1.msra.mxu0 %v9644
  %10233 = vmatprep.subr.mxu0 %v9661
  %10234 = vmatpush1.msra.mxu0 %v9660
  %10235 = vmatprep.subr.mxu0 %v9677
  %10236 = vmatpush1.msra.mxu0 %v9676
  %10237 = vmatprep.subr.mxu0 %v9693
  %10238 = vmatpush1.msra.mxu0 %v9692
  %10239 = vmatprep.subr.mxu0 %v9709
  %10240 = vmatpush1.msra.mxu0 %v9708
  %10241 = vmatprep.subr.mxu0 0.0
  %10242 = vmatpush1.msra.mxu0 0.0
  %10243 = vmatprep.subr.mxu0 0.0
  %10244 = vmatpush1.msra.mxu0 0.0
  %10245 = vmatprep.subr.mxu0 0.0
  %10246 = vmatpush1.msra.mxu0 0.0
  %10247 = vmatprep.subr.mxu0 0.0
  %10248 = vmatpush1.msra.mxu0 0.0
  %10249 = vmatprep.subr.mxu0 0.0
  %10250 = vmatpush1.msra.mxu0 0.0
  %10251 = vmatprep.subr.mxu0 0.0
  %10252 = vmatpush1.msra.mxu0 0.0
  %10253 = vmatprep.subr.mxu0 0.0
  %10254 = vmatpush1.msra.mxu0 0.0
  %10255 = vmatprep.subr.mxu0 0.0
  %10256 = vmatpush1.msra.mxu0 0.0
  %10257 = vmatprep.subr.mxu0 0.0
  %10258 = vmatpush1.msra.mxu0 0.0
  %10259 = vmatprep.subr.mxu0 0.0
  %10260 = vmatpush1.msra.mxu0 0.0
  %10261 = vmatprep.subr.mxu0 0.0
  %10262 = vmatpush1.msra.mxu0 0.0
  %10263 = vmatprep.subr.mxu0 0.0
  %10264 = vmatpush1.msra.mxu0 0.0
  %10265 = vmatprep.subr.mxu0 0.0
  %10266 = vmatpush1.msra.mxu0 0.0
  %10267 = vmatprep.subr.mxu0 0.0
  %10268 = vmatpush1.msra.mxu0 0.0
  %10269 = vmatprep.subr.mxu0 0.0
  %10270 = vmatpush1.msra.mxu0 0.0
  %10271 = vmatprep.subr.mxu0 0.0
  %10272 = vmatpush1.msra.mxu0 0.0
  %10273 = vmatprep.subr.mxu0 0.0
  %10274 = vmatpush1.msra.mxu0 0.0
  %10275 = vmatprep.subr.mxu0 0.0
  %10276 = vmatpush1.msra.mxu0 0.0
  %10277 = vmatprep.subr.mxu0 0.0
  %10278 = vmatpush1.msra.mxu0 0.0
  %10279 = vmatprep.subr.mxu0 0.0
  %10280 = vmatpush1.msra.mxu0 0.0
  %10281 = vmatprep.subr.mxu0 0.0
  %10282 = vmatpush1.msra.mxu0 0.0
  %10283 = vmatprep.subr.mxu0 0.0
  %10284 = vmatpush1.msra.mxu0 0.0
  %10285 = vmatprep.subr.mxu0 0.0
  %10286 = vmatpush1.msra.mxu0 0.0
  %10287 = vmatprep.subr.mxu0 0.0
  %10288 = vmatpush1.msra.mxu0 0.0
  %10289 = vmatprep.mubr.f32.mxu0 0.0
  %10290 = vmatmul.mubr.f32.gmra.mrb[0].mxu0 %v9797
  %v10291 = vpop.f32.mrb[0].mxu0
  %v10292 = vadd.f32 %v9767, %v10291
  %v10293 = vpop.f32.mrb[0].mxu0
  %v10294 = vadd.f32 %v9771, %v10293
  %10295 = vdwg.mxu0
  %10296 = vmatprep.subr.mxu0 %v9599
  %10297 = vmatpush1.msra.mxu0 %v9598
  %10298 = vmatprep.subr.mxu0 %v9615
  %10299 = vmatpush1.msra.mxu0 %v9614
  %10300 = vmatprep.subr.mxu0 %v9631
  %10301 = vmatpush1.msra.mxu0 %v9630
  %10302 = vmatprep.subr.mxu0 %v9647
  %10303 = vmatpush1.msra.mxu0 %v9646
  %10304 = vmatprep.subr.mxu0 %v9663
  %10305 = vmatpush1.msra.mxu0 %v9662
  %10306 = vmatprep.subr.mxu0 %v9679
  %10307 = vmatpush1.msra.mxu0 %v9678
  %10308 = vmatprep.subr.mxu0 %v9695
  %10309 = vmatpush1.msra.mxu0 %v9694
  %10310 = vmatprep.subr.mxu0 %v9711
  %10311 = vmatpush1.msra.mxu0 %v9710
  %10312 = vmatprep.subr.mxu0 0.0
  %10313 = vmatpush1.msra.mxu0 0.0
  %10314 = vmatprep.subr.mxu0 0.0
  %10315 = vmatpush1.msra.mxu0 0.0
  %10316 = vmatprep.subr.mxu0 0.0
  %10317 = vmatpush1.msra.mxu0 0.0
  %10318 = vmatprep.subr.mxu0 0.0
  %10319 = vmatpush1.msra.mxu0 0.0
  %10320 = vmatprep.subr.mxu0 0.0
  %10321 = vmatpush1.msra.mxu0 0.0
  %10322 = vmatprep.subr.mxu0 0.0
  %10323 = vmatpush1.msra.mxu0 0.0
  %10324 = vmatprep.subr.mxu0 0.0
  %10325 = vmatpush1.msra.mxu0 0.0
  %10326 = vmatprep.subr.mxu0 0.0
  %10327 = vmatpush1.msra.mxu0 0.0
  %10328 = vmatprep.subr.mxu0 0.0
  %10329 = vmatpush1.msra.mxu0 0.0
  %10330 = vmatprep.subr.mxu0 0.0
  %10331 = vmatpush1.msra.mxu0 0.0
  %10332 = vmatprep.subr.mxu0 0.0
  %10333 = vmatpush1.msra.mxu0 0.0
  %10334 = vmatprep.subr.mxu0 0.0
  %10335 = vmatpush1.msra.mxu0 0.0
  %10336 = vmatprep.subr.mxu0 0.0
  %10337 = vmatpush1.msra.mxu0 0.0
  %10338 = vmatprep.subr.mxu0 0.0
  %10339 = vmatpush1.msra.mxu0 0.0
  %10340 = vmatprep.subr.mxu0 0.0
  %10341 = vmatpush1.msra.mxu0 0.0
  %10342 = vmatprep.subr.mxu0 0.0
  %10343 = vmatpush1.msra.mxu0 0.0
  %10344 = vmatprep.subr.mxu0 0.0
  %10345 = vmatpush1.msra.mxu0 0.0
  %10346 = vmatprep.subr.mxu0 0.0
  %10347 = vmatpush1.msra.mxu0 0.0
  %10348 = vmatprep.subr.mxu0 0.0
  %10349 = vmatpush1.msra.mxu0 0.0
  %10350 = vmatprep.subr.mxu0 0.0
  %10351 = vmatpush1.msra.mxu0 0.0
  %10352 = vmatprep.subr.mxu0 0.0
  %10353 = vmatpush1.msra.mxu0 0.0
  %10354 = vmatprep.subr.mxu0 0.0
  %10355 = vmatpush1.msra.mxu0 0.0
  %10356 = vmatprep.subr.mxu0 0.0
  %10357 = vmatpush1.msra.mxu0 0.0
  %10358 = vmatprep.subr.mxu0 0.0
  %10359 = vmatpush1.msra.mxu0 0.0
  %10360 = vmatprep.mubr.f32.mxu0 0.0
  %10361 = vmatmul.mubr.f32.gmra.mrb[0].mxu0 %v9797
  %v10362 = vpop.f32.mrb[0].mxu0
  %v10363 = vadd.f32 %v9775, %v10362
  %v10364 = vpop.f32.mrb[0].mxu0
  %v10365 = vadd.f32 %v9779, %v10364
  %10366 = vdwg.mxu0
  %v10383 = vcombine.low %v9866, %v9868
  %v10384 = vcombine.low %v9937, %v9939
  %v10385 = vcombine.low %v10008, %v10010
  %v10386 = vcombine.low %v10079, %v10081
  %v10388 = vunpack.c.l.s4 1966171168
  %v10389 = vunpack.c.0.s8 %v10388
  %v10390 = vlaneseq
  %v10391 = vshrl.u32 %v10390, 7
  %v10392 = vsub.s32 %v10389, %v10391
  %v10393 = vrot.slane %v10383, %v10392
  %v10395 = vunpack.c.l.s4 1966171168
  %v10396 = vunpack.c.0.s8 %v10395
  %v10397 = vlaneseq
  %v10398 = vshrl.u32 %v10397, 7
  %v10399 = vsub.s32 %v10396, %v10398
  %v10400 = vrot.slane %v10384, %v10399
  %v10402 = vunpack.c.l.s4 1966171168
  %v10403 = vunpack.c.0.s8 %v10402
  %v10404 = vlaneseq
  %v10405 = vshrl.u32 %v10404, 7
  %v10406 = vsub.s32 %v10403, %v10405
  %v10407 = vrot.slane %v10385, %v10406
  %v10409 = vunpack.c.l.s4 1966171168
  %v10410 = vunpack.c.0.s8 %v10409
  %v10411 = vlaneseq
  %v10412 = vshrl.u32 %v10411, 7
  %v10413 = vsub.s32 %v10410, %v10412
  %v10414 = vrot.slane %v10386, %v10413
  %v10415 = vcombine.low %v10393, %v10400
  %v10416 = vcombine.low %v10407, %v10414
  %v10418 = vunpack.c.l.s4 1966171168
  %v10419 = vunpack.c.0.s8 %v10418
  %v10420 = vlaneseq
  %v10421 = vshrl.u32 %v10420, 7
  %v10422 = vsub.s32 %v10419, %v10421
  %v10423 = vrot.slane %v10415, %v10422
  %v10425 = vunpack.c.l.s4 1966171168
  %v10426 = vunpack.c.0.s8 %v10425
  %v10427 = vlaneseq
  %v10428 = vshrl.u32 %v10427, 7
  %v10429 = vsub.s32 %v10426, %v10428
  %v10430 = vrot.slane %v10416, %v10429
  %v10431 = vcombine.low %v10423, %v10430
  %v10432 = vcombine.low %v10150, %v10152
  %v10433 = vcombine.low %v10221, %v10223
  %v10434 = vcombine.low %v10292, %v10294
  %v10435 = vcombine.low %v10363, %v10365
  %v10437 = vunpack.c.l.s4 1966171168
  %v10438 = vunpack.c.0.s8 %v10437
  %v10439 = vlaneseq
  %v10440 = vshrl.u32 %v10439, 7
  %v10441 = vsub.s32 %v10438, %v10440
  %v10442 = vrot.slane %v10432, %v10441
  %v10444 = vunpack.c.l.s4 1966171168
  %v10445 = vunpack.c.0.s8 %v10444
  %v10446 = vlaneseq
  %v10447 = vshrl.u32 %v10446, 7
  %v10448 = vsub.s32 %v10445, %v10447
  %v10449 = vrot.slane %v10433, %v10448
  %v10451 = vunpack.c.l.s4 1966171168
  %v10452 = vunpack.c.0.s8 %v10451
  %v10453 = vlaneseq
  %v10454 = vshrl.u32 %v10453, 7
  %v10455 = vsub.s32 %v10452, %v10454
  %v10456 = vrot.slane %v10434, %v10455
  %v10458 = vunpack.c.l.s4 1966171168
  %v10459 = vunpack.c.0.s8 %v10458
  %v10460 = vlaneseq
  %v10461 = vshrl.u32 %v10460, 7
  %v10462 = vsub.s32 %v10459, %v10461
  %v10463 = vrot.slane %v10435, %v10462
  %v10464 = vcombine.low %v10442, %v10449
  %v10465 = vcombine.low %v10456, %v10463
  %v10467 = vunpack.c.l.s4 1966171168
  %v10468 = vunpack.c.0.s8 %v10467
  %v10469 = vlaneseq
  %v10470 = vshrl.u32 %v10469, 7
  %v10471 = vsub.s32 %v10468, %v10470
  %v10472 = vrot.slane %v10464, %v10471
  %v10474 = vunpack.c.l.s4 1966171168
  %v10475 = vunpack.c.0.s8 %v10474
  %v10476 = vlaneseq
  %v10477 = vshrl.u32 %v10476, 7
  %v10478 = vsub.s32 %v10475, %v10477
  %v10479 = vrot.slane %v10465, %v10478
  %v10480 = vcombine.low %v10472, %v10479
  %10483 = vst [vmem:[%s21] sm:$0xff] %v10431
  %10484 = vst [vmem:[%s21 + $0x8] sm:$0xff] %v10480
  // Predicated region
  $region86: #{_logits_and_topk.1} parent=0 // pred_check
    _
  $region87: #{_logits_and_topk.1} parent=0 // pred_check_branch
    %10486 = sbr.rel (0) target = $region89
  $region88: #{_logits_and_topk.1} parent=0 // pred_region
    _
  $region89: #{_logits_and_topk.1} parent=0 // pred_fallthru
    _
  // Predicated region
  $region90: #{_logits_and_topk.1} parent=0 // pred_check
    _
  $region91: #{_logits_and_topk.1} parent=0 // pred_check_branch
    %10488 = sbr.rel (0) target = $region93
  $region92: #{_logits_and_topk.1} parent=0 // pred_region
    _
  $region93: #{_logits_and_topk.1} parent=0 // pred_fallthru
    _

</llo_original>
